<compile_context>
chip_gen: v7x
topology: tpu7x:2x2x1
jax: 0.10.0
libtpu: 0.0.40
codegen_flags: <defaults>
</compile_context>

<pallas_src>
import jax
import jax.numpy as jnp
from jax.experimental import pallas as pl
from jax.experimental.pallas import tpu as pltpu

# 32 MiB scoped VMEM: plenty for all kernels here, leaves headroom on v7x
# (64 MiB physical per TC); fine on v5e/v6e (128 MiB physical).
_VMEM_LIMIT = 32 * 1024 * 1024
_CPARAMS = pltpu.CompilerParams(vmem_limit_bytes=_VMEM_LIMIT)

# Padded FC dims so streamed tiles are lane-aligned (128-multiples).  Padding
# is mathematically inert: zero weight cols/rows + zero bias + ReLU.
_N1_PAD = 2048   # fc1 out: 2000 -> 2048
_N2_PAD = 1024   # fc2 out: 1000 -> 1024
_TILE_N = 256    # streaming tile along the fc1-out / fc2-in axis


# ----------------------------------------------------------------------------
# Kernel 1: fused conv (as 4 pooling-tap im2col matmuls) + bias + ReLU +
# 2x2 maxpool + eval-mode BatchNorm affine.  ReLU/bias commute with the max
# over pooling taps, so pooling is a plain elementwise max of the 4 f32
# accumulators.  Elementwise epilogue stays in f32 (v5e-friendly).
# ----------------------------------------------------------------------------
def _conv_pool_bn_kernel(x0_ref, x1_ref, x2_ref, x3_ref, w_ref, b_ref,
                         scale_ref, shift_ref, o_ref):
    w = w_ref[...]

    def mm(x_ref):
        return jnp.dot(x_ref[...], w, preferred_element_type=jnp.float32)

    m = jnp.maximum(jnp.maximum(mm(x0_ref), mm(x1_ref)),
                    jnp.maximum(mm(x2_ref), mm(x3_ref)))
    y = jnp.maximum(m + b_ref[...], 0.0)                # conv bias + ReLU
    o_ref[...] = y * scale_ref[...] + shift_ref[...]    # BN eval-mode affine


def conv_relu_pool_bn(x_nhwc, w_mat, b, scale, shift, *, k, pad):
    """Conv(k, stride 1, pad) -> ReLU -> MaxPool2x2(floor) -> BN affine."""
    N, H, W, Cin = x_nhwc.shape
    xpad = jnp.pad(x_nhwc, ((0, 0), (pad, pad), (pad, pad), (0, 0)))
    Hc, Wc = H + 2 * pad - k + 1, W + 2 * pad - k + 1   # conv output size
    Ho, Wo = Hc // 2, Wc // 2                           # pooled (floor mode)
    Cout = w_mat.shape[1]
    K = k * k * Cin
    M = N * Ho * Wo

    def tap_patches(a, bb):
        # im2col rows for conv outputs at (2i+a, 2j+b); flatten order (di,dj,c)
        cols = []
        for di in range(k):
            for dj in range(k):
                r0, c0 = a + di, bb + dj
                cols.append(xpad[:, r0:r0 + 2 * (Ho - 1) + 1:2,
                                 c0:c0 + 2 * (Wo - 1) + 1:2, :])
        p = jnp.stack(cols, axis=3)                     # (N, Ho, Wo, k*k, Cin)
        return p.reshape(M, K).astype(jnp.bfloat16)

    taps = [tap_patches(a, bb) for a in (0, 1) for bb in (0, 1)]

    out = pl.pallas_call(
        _conv_pool_bn_kernel,
        out_shape=jax.ShapeDtypeStruct((M, Cout), jnp.float32),
        grid=(1,),
        in_specs=[pl.BlockSpec((M, K), lambda i: (0, 0))] * 4 + [
            pl.BlockSpec((K, Cout), lambda i: (0, 0)),
            pl.BlockSpec((1, Cout), lambda i: (0, 0)),
            pl.BlockSpec((1, Cout), lambda i: (0, 0)),
            pl.BlockSpec((1, Cout), lambda i: (0, 0)),
        ],
        out_specs=pl.BlockSpec((M, Cout), lambda i: (0, 0)),
        compiler_params=_CPARAMS,
    )(*taps, w_mat, b.reshape(1, Cout), scale.reshape(1, Cout),
      shift.reshape(1, Cout))
    return out.reshape(N, Ho, Wo, Cout)


# ----------------------------------------------------------------------------
# Kernel 2: fully fused FC stack (fc1 -> ReLU -> fc2 -> ReLU -> fc3 -> ReLU ->
# fc4 -> ReLU -> fc5) in a single pallas_call.
#
# Grid axis j streams matched tiles of the two big weights:
#   fc1 weight column-tile  W1[:, j*tn:(j+1)*tn]   (1600 x 256 bf16)
#   fc2 weight row-tile     W2[j*tn:(j+1)*tn, :]   ( 256 x 1024 bf16)
# and accumulates fc2 in a small f32 VMEM scratch.  fc3/fc4/fc5 weights use a
# constant index_map (fetched once, resident) and the tail runs on the last
# grid step.  Axis is "arbitrary" because of the scratch carry.
# ----------------------------------------------------------------------------
def _fc_stack_kernel(x_ref, w1_ref, b1_ref, w2_ref, b2_ref, w3_ref, b3_ref,
                     w4_ref, b4_ref, w5_ref, b5_ref, o_ref, acc_ref):
    j = pl.program_id(0)

    @pl.when(j == 0)
    def _():
        acc_ref[...] = jnp.zeros_like(acc_ref)

    # fc1 column-tile: (M, 1600) @ (1600, tn) + bias, ReLU
    h1 = jnp.dot(x_ref[...], w1_ref[...], preferred_element_type=jnp.float32)
    h1 = jnp.maximum(h1 + b1_ref[...], 0.0)
    # contribution of this fc1 column-tile to fc2 (matching w2 row-tile)
    acc_ref[...] += jnp.dot(h1.astype(jnp.bfloat16), w2_ref[...],
                            preferred_element_type=jnp.float32)

    @pl.when(j == pl.num_programs(0) - 1)
    def _():
        h2 = jnp.maximum(acc_ref[...] + b2_ref[...], 0.0)
        h3 = jnp.maximum(
            jnp.dot(h2.astype(jnp.bfloat16), w3_ref[...],
                    preferred_element_type=jnp.float32) + b3_ref[...], 0.0)
        h4 = jnp.maximum(
            jnp.dot(h3.astype(jnp.bfloat16), w4_ref[...],
                    preferred_element_type=jnp.float32) + b4_ref[...], 0.0)
        o_ref[...] = (jnp.dot(h4.astype(jnp.bfloat16), w5_ref[...],
                              preferred_element_type=jnp.float32)
                      + b5_ref[...]).astype(o_ref.dtype)


def fc_stack(flat_bf16, p, *, tn=_TILE_N):
    M, K1 = flat_bf16.shape
    N3 = p["fc3_w"].shape[1]
    N4 = p["fc4_w"].shape[1]
    N5 = p["fc5_w"].shape[1]
    assert _N1_PAD % tn == 0
    n_tiles = _N1_PAD // tn

    in_specs = [
        pl.BlockSpec((M, K1), lambda j: (0, 0)),          # activations resident
        pl.BlockSpec((K1, tn), lambda j: (0, j)),         # fc1 weight, streamed
        pl.BlockSpec((1, tn), lambda j: (0, j)),          # fc1 bias slab
        pl.BlockSpec((tn, _N2_PAD), lambda j: (j, 0)),    # fc2 weight, streamed
        pl.BlockSpec((1, _N2_PAD), lambda j: (0, 0)),     # fc2 bias
        pl.BlockSpec((_N2_PAD, N3), lambda j: (0, 0)),    # fc3 weight, resident
        pl.BlockSpec((1, N3), lambda j: (0, 0)),
        pl.BlockSpec((N3, N4), lambda j: (0, 0)),         # fc4 weight, resident
        pl.BlockSpec((1, N4), lambda j: (0, 0)),
        pl.BlockSpec((N4, N5), lambda j: (0, 0)),         # fc5 weight, resident
        pl.BlockSpec((1, N5), lambda j: (0, 0)),
    ]
    return pl.pallas_call(
        _fc_stack_kernel,
        out_shape=jax.ShapeDtypeStruct((M, N5), jnp.float32),
        grid=(n_tiles,),
        in_specs=in_specs,
        out_specs=pl.BlockSpec((M, N5), lambda j: (0, 0)),
        scratch_shapes=[pltpu.VMEM((M, _N2_PAD), jnp.float32)],
        compiler_params=pltpu.CompilerParams(
            dimension_semantics=("arbitrary",),
            vmem_limit_bytes=_VMEM_LIMIT),
    )(flat_bf16,
      p["fc1_w"], p["fc1_b"].reshape(1, _N1_PAD),
      p["fc2_w"], p["fc2_b"].reshape(1, _N2_PAD),
      p["fc3_w"], p["fc3_b"].reshape(1, N3),
      p["fc4_w"], p["fc4_b"].reshape(1, N4),
      p["fc5_w"], p["fc5_b"].reshape(1, N5))


# ----------------------------------------------------------------------------
# Parameter prep.
# ----------------------------------------------------------------------------
def conv_weight_to_matrix(w_oihw):
    # PyTorch conv weight (Cout, Cin, kh, kw) -> (kh*kw*Cin, Cout), matching
    # the im2col flatten order (di, dj, c).
    Cout, Cin, kh, kw = w_oihw.shape
    return jnp.transpose(w_oihw, (2, 3, 1, 0)).reshape(kh * kw * Cin, Cout)


def init_params(key):
    ks = jax.random.split(key, 18)
    p = {}
    # conv1: 1 -> 32, k=5 ; conv2: 32 -> 64, k=5  (weights stored bf16)
    w1 = jax.random.normal(ks[0], (32, 1, 5, 5), jnp.float32) * 0.1
    w2 = jax.random.normal(ks[1], (64, 32, 5, 5), jnp.float32) * 0.05
    p["w1m"] = conv_weight_to_matrix(w1).astype(jnp.bfloat16)   # (25, 32)
    p["b1"] = jax.random.normal(ks[2], (32,), jnp.float32) * 0.01
    p["w2m"] = conv_weight_to_matrix(w2).astype(jnp.bfloat16)   # (800, 64)
    p["b2"] = jax.random.normal(ks[3], (64,), jnp.float32) * 0.01

    # BatchNorm: eval-mode affine precomputed from gamma/beta/running stats.
    # TODO(synk): training-mode BatchNorm (batch statistics) not implemented;
    # eval-mode running-stats semantics are used.
    eps = 1e-5
    for name, c, kg, kb in (("bn1", 32, 4, 5), ("bn2", 64, 6, 7)):
        gamma = 1.0 + 0.1 * jax.random.normal(ks[kg], (c,), jnp.float32)
        beta = 0.1 * jax.random.normal(ks[kb], (c,), jnp.float32)
        r_mean = jnp.zeros((c,), jnp.float32)
        r_var = jnp.ones((c,), jnp.float32)
        scale = gamma / jnp.sqrt(r_var + eps)
        p[f"{name}_scale"] = scale
        p[f"{name}_shift"] = beta - r_mean * scale

    # FC stack (weights bf16, biases f32).
    # fc1 rows are in NHWC (h, w, c) flatten order so the forward pass needs
    # no pre-fc1 transpose; permute rows (C,H,W)->(H,W,C) if importing real
    # PyTorch weights.  fc1 output / fc2 input padded to 2048, fc2 output /
    # fc3 input padded to 1024 (zero pad + zero bias + ReLU -> inert).
    fc_dims = [(1600, 2000), (2000, 1000), (1000, 500), (500, 100), (100, 10)]
    padded_in = [1600, _N1_PAD, _N2_PAD, 500, 100]
    padded_out = [_N1_PAD, _N2_PAD, 500, 100, 10]
    for idx, ((din, dout), pin, pout) in enumerate(
            zip(fc_dims, padded_in, padded_out), start=1):
        kw_, kb_ = ks[6 + 2 * idx], ks[7 + 2 * idx]
        w = jax.random.normal(kw_, (din, dout), jnp.float32) * (
            1.0 / jnp.sqrt(din))
        b = jax.random.normal(kb_, (dout,), jnp.float32) * 0.01
        w = jnp.pad(w, ((0, pin - din), (0, pout - dout)))
        b = jnp.pad(b, ((0, pout - dout),))
        p[f"fc{idx}_w"] = w.astype(jnp.bfloat16)
        p[f"fc{idx}_b"] = b
    return p


# ----------------------------------------------------------------------------
# Forward pass.
# ----------------------------------------------------------------------------
@jax.jit
def mnist_cnn_forward(x_nchw, params):
    # NCHW -> NHWC
    x = jnp.transpose(x_nchw, (0, 2, 3, 1)).astype(jnp.float32)

    # conv1 (k=5,s=1,p=1) + ReLU + pool2x2 + BN1 : 28 -> 26 -> 13
    y = conv_relu_pool_bn(x, params["w1m"], params["b1"],
                          params["bn1_scale"], params["bn1_shift"],
                          k=5, pad=1)                    # (N, 13, 13, 32)
    # conv2 (k=5,s=1,p=1) + ReLU + pool2x2 + BN2 : 13 -> 11 -> 5
    y = conv_relu_pool_bn(y, params["w2m"], params["b2"],
                          params["bn2_scale"], params["bn2_shift"],
                          k=5, pad=1)                    # (N, 5, 5, 64)

    # Flatten in NHWC order; fc1 weight rows are laid out to match.
    flat = y.reshape(y.shape[0], 5 * 5 * 64).astype(jnp.bfloat16)

    # Whole FC stack in one pallas_call.
    return fc_stack(flat, params)


if __name__ == "__main__":
    key = jax.random.PRNGKey(0)
    k_x, k_p = jax.random.split(key)
    # MNIST-shaped input (spatial size is pinned to 28x28 by fc1 = 5*5*64).
    x = jax.random.normal(k_x, (2, 1, 28, 28), jnp.float32)
    params = init_params(k_p)

    logits = mnist_cnn_forward(x, params)
    jax.block_until_ready(logits)
    assert logits.shape == (2, 10), logits.shape
    assert logits.dtype == jnp.float32
    print("KERNEL_OK")
</pallas_src>

<mosaic_0001>
module attributes {stable_mosaic.version = 11 : i64} {
  func.func @_conv_pool_bn_kernel(%arg0: i32, %arg1: memref<338x25xbf16, #tpu.memory_space<vmem>>, %arg2: memref<338x25xbf16, #tpu.memory_space<vmem>>, %arg3: memref<338x25xbf16, #tpu.memory_space<vmem>>, %arg4: memref<338x25xbf16, #tpu.memory_space<vmem>>, %arg5: memref<25x32xbf16, #tpu.memory_space<vmem>>, %arg6: memref<1x32xf32, #tpu.memory_space<vmem>>, %arg7: memref<1x32xf32, #tpu.memory_space<vmem>>, %arg8: memref<1x32xf32, #tpu.memory_space<vmem>>, %arg9: memref<338x32xf32, #tpu.memory_space<vmem>>) attributes {dimension_semantics = [#tpu.dimension_semantics<arbitrary>], iteration_bounds = array<i64: 1>, scalar_prefetch = 0 : i64, scratch_operands = 0 : i64, tpu.core_type = #tpu.core_type<tc>, window_params = [{pipeline_mode = #tpu.pipeline_mode<synchronous>, transform_indices = @transform_0, window_bounds = array<i64: 338, 25>}, {pipeline_mode = #tpu.pipeline_mode<synchronous>, transform_indices = @transform_1, window_bounds = array<i64: 338, 25>}, {pipeline_mode = #tpu.pipeline_mode<synchronous>, transform_indices = @transform_2, window_bounds = array<i64: 338, 25>}, {pipeline_mode = #tpu.pipeline_mode<synchronous>, transform_indices = @transform_3, window_bounds = array<i64: 338, 25>}, {pipeline_mode = #tpu.pipeline_mode<synchronous>, transform_indices = @transform_4, window_bounds = array<i64: 25, 32>}, {pipeline_mode = #tpu.pipeline_mode<synchronous>, transform_indices = @transform_5, window_bounds = array<i64: 1, 32>}, {pipeline_mode = #tpu.pipeline_mode<synchronous>, transform_indices = @transform_6, window_bounds = array<i64: 1, 32>}, {pipeline_mode = #tpu.pipeline_mode<synchronous>, transform_indices = @transform_7, window_bounds = array<i64: 1, 32>}, {pipeline_mode = #tpu.pipeline_mode<synchronous>, transform_indices = @transform_8, window_bounds = array<i64: 338, 32>}]} {
    %c0 = arith.constant 0 : index
    %c0_0 = arith.constant 0 : index
    %0 = vector.load %arg5[%c0, %c0_0] : memref<25x32xbf16, #tpu.memory_space<vmem>>, vector<25x32xbf16>
    %c0_1 = arith.constant 0 : index
    %c0_2 = arith.constant 0 : index
    %1 = vector.load %arg1[%c0_1, %c0_2] : memref<338x25xbf16, #tpu.memory_space<vmem>>, vector<338x25xbf16>
    %cst = arith.constant dense<0.000000e+00> : vector<338x32xf32>
    %2 = tpu.matmul %1, %0, %cst {dimension_numbers = #tpu.dot_dimension_numbers<[1], [0], [0], [1], [0, 0, 1, 1], [], []>} : vector<338x25xbf16>, vector<25x32xbf16>, vector<338x32xf32> -> vector<338x32xf32>
    %c0_3 = arith.constant 0 : index
    %c0_4 = arith.constant 0 : index
    %3 = vector.load %arg2[%c0_3, %c0_4] : memref<338x25xbf16, #tpu.memory_space<vmem>>, vector<338x25xbf16>
    %cst_5 = arith.constant dense<0.000000e+00> : vector<338x32xf32>
    %4 = tpu.matmul %3, %0, %cst_5 {dimension_numbers = #tpu.dot_dimension_numbers<[1], [0], [0], [1], [0, 0, 1, 1], [], []>} : vector<338x25xbf16>, vector<25x32xbf16>, vector<338x32xf32> -> vector<338x32xf32>
    %5 = arith.maximumf %2, %4 : vector<338x32xf32>
    %c0_6 = arith.constant 0 : index
    %c0_7 = arith.constant 0 : index
    %6 = vector.load %arg3[%c0_6, %c0_7] : memref<338x25xbf16, #tpu.memory_space<vmem>>, vector<338x25xbf16>
    %cst_8 = arith.constant dense<0.000000e+00> : vector<338x32xf32>
    %7 = tpu.matmul %6, %0, %cst_8 {dimension_numbers = #tpu.dot_dimension_numbers<[1], [0], [0], [1], [0, 0, 1, 1], [], []>} : vector<338x25xbf16>, vector<25x32xbf16>, vector<338x32xf32> -> vector<338x32xf32>
    %c0_9 = arith.constant 0 : index
    %c0_10 = arith.constant 0 : index
    %8 = vector.load %arg4[%c0_9, %c0_10] : memref<338x25xbf16, #tpu.memory_space<vmem>>, vector<338x25xbf16>
    %cst_11 = arith.constant dense<0.000000e+00> : vector<338x32xf32>
    %9 = tpu.matmul %8, %0, %cst_11 {dimension_numbers = #tpu.dot_dimension_numbers<[1], [0], [0], [1], [0, 0, 1, 1], [], []>} : vector<338x25xbf16>, vector<25x32xbf16>, vector<338x32xf32> -> vector<338x32xf32>
    %10 = arith.maximumf %7, %9 : vector<338x32xf32>
    %11 = arith.maximumf %5, %10 : vector<338x32xf32>
    %c0_12 = arith.constant 0 : index
    %c0_13 = arith.constant 0 : index
    %12 = vector.load %arg6[%c0_12, %c0_13] : memref<1x32xf32, #tpu.memory_space<vmem>>, vector<1x32xf32>
    %13 = vector.broadcast %12 : vector<1x32xf32> to vector<338x32xf32>
    %14 = arith.addf %11, %13 : vector<338x32xf32>
    %cst_14 = arith.constant 0.000000e+00 : f32
    %15 = vector.broadcast %cst_14 : f32 to vector<338x32xf32>
    %16 = arith.maximumf %14, %15 : vector<338x32xf32>
    %c0_15 = arith.constant 0 : index
    %c0_16 = arith.constant 0 : index
    %17 = vector.load %arg7[%c0_15, %c0_16] : memref<1x32xf32, #tpu.memory_space<vmem>>, vector<1x32xf32>
    %18 = vector.broadcast %17 : vector<1x32xf32> to vector<338x32xf32>
    %19 = arith.mulf %16, %18 : vector<338x32xf32>
    %c0_17 = arith.constant 0 : index
    %c0_18 = arith.constant 0 : index
    %20 = vector.load %arg8[%c0_17, %c0_18] : memref<1x32xf32, #tpu.memory_space<vmem>>, vector<1x32xf32>
    %21 = vector.broadcast %20 : vector<1x32xf32> to vector<338x32xf32>
    %22 = arith.addf %19, %21 : vector<338x32xf32>
    %c0_19 = arith.constant 0 : index
    %c0_20 = arith.constant 0 : index
    %23 = vector.load %arg9[%c0_19, %c0_20] : memref<338x32xf32, #tpu.memory_space<vmem>>, vector<338x32xf32>
    tpu.vector_store %arg9[%c0_19, %c0_20], %22 {strides = array<i32>} : memref<338x32xf32, #tpu.memory_space<vmem>>, vector<338x32xf32>,
    return
  }
  func.func @transform_0(%arg0: i32) -> (i32, i32) {
    %c0_i32 = arith.constant 0 : i32
    %c0_i32_0 = arith.constant 0 : i32
    %c0_i32_1 = arith.constant 0 : i32
    return %c0_i32, %c0_i32_0 : i32, i32
  }
  func.func @transform_1(%arg0: i32) -> (i32, i32) {
    %c0_i32 = arith.constant 0 : i32
    %c0_i32_0 = arith.constant 0 : i32
    %c0_i32_1 = arith.constant 0 : i32
    return %c0_i32, %c0_i32_0 : i32, i32
  }
  func.func @transform_2(%arg0: i32) -> (i32, i32) {
    %c0_i32 = arith.constant 0 : i32
    %c0_i32_0 = arith.constant 0 : i32
    %c0_i32_1 = arith.constant 0 : i32
    return %c0_i32, %c0_i32_0 : i32, i32
  }
  func.func @transform_3(%arg0: i32) -> (i32, i32) {
    %c0_i32 = arith.constant 0 : i32
    %c0_i32_0 = arith.constant 0 : i32
    %c0_i32_1 = arith.constant 0 : i32
    return %c0_i32, %c0_i32_0 : i32, i32
  }
  func.func @transform_4(%arg0: i32) -> (i32, i32) {
    %c0_i32 = arith.constant 0 : i32
    %c0_i32_0 = arith.constant 0 : i32
    %c0_i32_1 = arith.constant 0 : i32
    return %c0_i32, %c0_i32_0 : i32, i32
  }
  func.func @transform_5(%arg0: i32) -> (i32, i32) {
    %c0_i32 = arith.constant 0 : i32
    %c0_i32_0 = arith.constant 0 : i32
    %c0_i32_1 = arith.constant 0 : i32
    return %c0_i32, %c0_i32_0 : i32, i32
  }
  func.func @transform_6(%arg0: i32) -> (i32, i32) {
    %c0_i32 = arith.constant 0 : i32
    %c0_i32_0 = arith.constant 0 : i32
    %c0_i32_1 = arith.constant 0 : i32
    return %c0_i32, %c0_i32_0 : i32, i32
  }
  func.func @transform_7(%arg0: i32) -> (i32, i32) {
    %c0_i32 = arith.constant 0 : i32
    %c0_i32_0 = arith.constant 0 : i32
    %c0_i32_1 = arith.constant 0 : i32
    return %c0_i32, %c0_i32_0 : i32, i32
  }
  func.func @transform_8(%arg0: i32) -> (i32, i32) {
    %c0_i32 = arith.constant 0 : i32
    %c0_i32_0 = arith.constant 0 : i32
    %c0_i32_1 = arith.constant 0 : i32
    return %c0_i32, %c0_i32_0 : i32, i32
  }
}

module attributes {stable_mosaic.version = 11 : i64} {
  func.func @_conv_pool_bn_kernel(%arg0: i32, %arg1: memref<50x800xbf16, #tpu.memory_space<vmem>>, %arg2: memref<50x800xbf16, #tpu.memory_space<vmem>>, %arg3: memref<50x800xbf16, #tpu.memory_space<vmem>>, %arg4: memref<50x800xbf16, #tpu.memory_space<vmem>>, %arg5: memref<800x64xbf16, #tpu.memory_space<vmem>>, %arg6: memref<1x64xf32, #tpu.memory_space<vmem>>, %arg7: memref<1x64xf32, #tpu.memory_space<vmem>>, %arg8: memref<1x64xf32, #tpu.memory_space<vmem>>, %arg9: memref<50x64xf32, #tpu.memory_space<vmem>>) attributes {dimension_semantics = [#tpu.dimension_semantics<arbitrary>], iteration_bounds = array<i64: 1>, scalar_prefetch = 0 : i64, scratch_operands = 0 : i64, tpu.core_type = #tpu.core_type<tc>, window_params = [{pipeline_mode = #tpu.pipeline_mode<synchronous>, transform_indices = @transform_0, window_bounds = array<i64: 50, 800>}, {pipeline_mode = #tpu.pipeline_mode<synchronous>, transform_indices = @transform_1, window_bounds = array<i64: 50, 800>}, {pipeline_mode = #tpu.pipeline_mode<synchronous>, transform_indices = @transform_2, window_bounds = array<i64: 50, 800>}, {pipeline_mode = #tpu.pipeline_mode<synchronous>, transform_indices = @transform_3, window_bounds = array<i64: 50, 800>}, {pipeline_mode = #tpu.pipeline_mode<synchronous>, transform_indices = @transform_4, window_bounds = array<i64: 800, 64>}, {pipeline_mode = #tpu.pipeline_mode<synchronous>, transform_indices = @transform_5, window_bounds = array<i64: 1, 64>}, {pipeline_mode = #tpu.pipeline_mode<synchronous>, transform_indices = @transform_6, window_bounds = array<i64: 1, 64>}, {pipeline_mode = #tpu.pipeline_mode<synchronous>, transform_indices = @transform_7, window_bounds = array<i64: 1, 64>}, {pipeline_mode = #tpu.pipeline_mode<synchronous>, transform_indices = @transform_8, window_bounds = array<i64: 50, 64>}]} {
    %c0 = arith.constant 0 : index
    %c0_0 = arith.constant 0 : index
    %0 = vector.load %arg5[%c0, %c0_0] : memref<800x64xbf16, #tpu.memory_space<vmem>>, vector<800x64xbf16>
    %c0_1 = arith.constant 0 : index
    %c0_2 = arith.constant 0 : index
    %1 = vector.load %arg1[%c0_1, %c0_2] : memref<50x800xbf16, #tpu.memory_space<vmem>>, vector<50x800xbf16>
    %cst = arith.constant dense<0.000000e+00> : vector<50x64xf32>
    %2 = tpu.matmul %1, %0, %cst {dimension_numbers = #tpu.dot_dimension_numbers<[1], [0], [0], [1], [0, 0, 1, 1], [], []>} : vector<50x800xbf16>, vector<800x64xbf16>, vector<50x64xf32> -> vector<50x64xf32>
    %c0_3 = arith.constant 0 : index
    %c0_4 = arith.constant 0 : index
    %3 = vector.load %arg2[%c0_3, %c0_4] : memref<50x800xbf16, #tpu.memory_space<vmem>>, vector<50x800xbf16>
    %cst_5 = arith.constant dense<0.000000e+00> : vector<50x64xf32>
    %4 = tpu.matmul %3, %0, %cst_5 {dimension_numbers = #tpu.dot_dimension_numbers<[1], [0], [0], [1], [0, 0, 1, 1], [], []>} : vector<50x800xbf16>, vector<800x64xbf16>, vector<50x64xf32> -> vector<50x64xf32>
    %5 = arith.maximumf %2, %4 : vector<50x64xf32>
    %c0_6 = arith.constant 0 : index
    %c0_7 = arith.constant 0 : index
    %6 = vector.load %arg3[%c0_6, %c0_7] : memref<50x800xbf16, #tpu.memory_space<vmem>>, vector<50x800xbf16>
    %cst_8 = arith.constant dense<0.000000e+00> : vector<50x64xf32>
    %7 = tpu.matmul %6, %0, %cst_8 {dimension_numbers = #tpu.dot_dimension_numbers<[1], [0], [0], [1], [0, 0, 1, 1], [], []>} : vector<50x800xbf16>, vector<800x64xbf16>, vector<50x64xf32> -> vector<50x64xf32>
    %c0_9 = arith.constant 0 : index
    %c0_10 = arith.constant 0 : index
    %8 = vector.load %arg4[%c0_9, %c0_10] : memref<50x800xbf16, #tpu.memory_space<vmem>>, vector<50x800xbf16>
    %cst_11 = arith.constant dense<0.000000e+00> : vector<50x64xf32>
    %9 = tpu.matmul %8, %0, %cst_11 {dimension_numbers = #tpu.dot_dimension_numbers<[1], [0], [0], [1], [0, 0, 1, 1], [], []>} : vector<50x800xbf16>, vector<800x64xbf16>, vector<50x64xf32> -> vector<50x64xf32>
    %10 = arith.maximumf %7, %9 : vector<50x64xf32>
    %11 = arith.maximumf %5, %10 : vector<50x64xf32>
    %c0_12 = arith.constant 0 : index
    %c0_13 = arith.constant 0 : index
    %12 = vector.load %arg6[%c0_12, %c0_13] : memref<1x64xf32, #tpu.memory_space<vmem>>, vector<1x64xf32>
    %13 = vector.broadcast %12 : vector<1x64xf32> to vector<50x64xf32>
    %14 = arith.addf %11, %13 : vector<50x64xf32>
    %cst_14 = arith.constant 0.000000e+00 : f32
    %15 = vector.broadcast %cst_14 : f32 to vector<50x64xf32>
    %16 = arith.maximumf %14, %15 : vector<50x64xf32>
    %c0_15 = arith.constant 0 : index
    %c0_16 = arith.constant 0 : index
    %17 = vector.load %arg7[%c0_15, %c0_16] : memref<1x64xf32, #tpu.memory_space<vmem>>, vector<1x64xf32>
    %18 = vector.broadcast %17 : vector<1x64xf32> to vector<50x64xf32>
    %19 = arith.mulf %16, %18 : vector<50x64xf32>
    %c0_17 = arith.constant 0 : index
    %c0_18 = arith.constant 0 : index
    %20 = vector.load %arg8[%c0_17, %c0_18] : memref<1x64xf32, #tpu.memory_space<vmem>>, vector<1x64xf32>
    %21 = vector.broadcast %20 : vector<1x64xf32> to vector<50x64xf32>
    %22 = arith.addf %19, %21 : vector<50x64xf32>
    %c0_19 = arith.constant 0 : index
    %c0_20 = arith.constant 0 : index
    %23 = vector.load %arg9[%c0_19, %c0_20] : memref<50x64xf32, #tpu.memory_space<vmem>>, vector<50x64xf32>
    tpu.vector_store %arg9[%c0_19, %c0_20], %22 {strides = array<i32>} : memref<50x64xf32, #tpu.memory_space<vmem>>, vector<50x64xf32>,
    return
  }
  func.func @transform_0(%arg0: i32) -> (i32, i32) {
    %c0_i32 = arith.constant 0 : i32
    %c0_i32_0 = arith.constant 0 : i32
    %c0_i32_1 = arith.constant 0 : i32
    return %c0_i32, %c0_i32_0 : i32, i32
  }
  func.func @transform_1(%arg0: i32) -> (i32, i32) {
    %c0_i32 = arith.constant 0 : i32
    %c0_i32_0 = arith.constant 0 : i32
    %c0_i32_1 = arith.constant 0 : i32
    return %c0_i32, %c0_i32_0 : i32, i32
  }
  func.func @transform_2(%arg0: i32) -> (i32, i32) {
    %c0_i32 = arith.constant 0 : i32
    %c0_i32_0 = arith.constant 0 : i32
    %c0_i32_1 = arith.constant 0 : i32
    return %c0_i32, %c0_i32_0 : i32, i32
  }
  func.func @transform_3(%arg0: i32) -> (i32, i32) {
    %c0_i32 = arith.constant 0 : i32
    %c0_i32_0 = arith.constant 0 : i32
    %c0_i32_1 = arith.constant 0 : i32
    return %c0_i32, %c0_i32_0 : i32, i32
  }
  func.func @transform_4(%arg0: i32) -> (i32, i32) {
    %c0_i32 = arith.constant 0 : i32
    %c0_i32_0 = arith.constant 0 : i32
    %c0_i32_1 = arith.constant 0 : i32
    return %c0_i32, %c0_i32_0 : i32, i32
  }
  func.func @transform_5(%arg0: i32) -> (i32, i32) {
    %c0_i32 = arith.constant 0 : i32
    %c0_i32_0 = arith.constant 0 : i32
    %c0_i32_1 = arith.constant 0 : i32
    return %c0_i32, %c0_i32_0 : i32, i32
  }
  func.func @transform_6(%arg0: i32) -> (i32, i32) {
    %c0_i32 = arith.constant 0 : i32
    %c0_i32_0 = arith.constant 0 : i32
    %c0_i32_1 = arith.constant 0 : i32
    return %c0_i32, %c0_i32_0 : i32, i32
  }
  func.func @transform_7(%arg0: i32) -> (i32, i32) {
    %c0_i32 = arith.constant 0 : i32
    %c0_i32_0 = arith.constant 0 : i32
    %c0_i32_1 = arith.constant 0 : i32
    return %c0_i32, %c0_i32_0 : i32, i32
  }
  func.func @transform_8(%arg0: i32) -> (i32, i32) {
    %c0_i32 = arith.constant 0 : i32
    %c0_i32_0 = arith.constant 0 : i32
    %c0_i32_1 = arith.constant 0 : i32
    return %c0_i32, %c0_i32_0 : i32, i32
  }
}

module attributes {stable_mosaic.version = 11 : i64} {
  func.func @_fc_stack_kernel(%arg0: i32, %arg1: memref<2x1600xbf16, #tpu.memory_space<vmem>>, %arg2: memref<1600x256xbf16, #tpu.memory_space<vmem>>, %arg3: memref<1x256xf32, #tpu.memory_space<vmem>>, %arg4: memref<256x1024xbf16, #tpu.memory_space<vmem>>, %arg5: memref<1x1024xf32, #tpu.memory_space<vmem>>, %arg6: memref<1024x500xbf16, #tpu.memory_space<vmem>>, %arg7: memref<1x500xf32, #tpu.memory_space<vmem>>, %arg8: memref<500x100xbf16, #tpu.memory_space<vmem>>, %arg9: memref<1x100xf32, #tpu.memory_space<vmem>>, %arg10: memref<100x10xbf16, #tpu.memory_space<vmem>>, %arg11: memref<1x10xf32, #tpu.memory_space<vmem>>, %arg12: memref<2x10xf32, #tpu.memory_space<vmem>>, %arg13: memref<2x1024xf32, #tpu.memory_space<vmem>>) attributes {dimension_semantics = [#tpu.dimension_semantics<arbitrary>], iteration_bounds = array<i64: 8>, scalar_prefetch = 0 : i64, scratch_operands = 1 : i64, tpu.core_type = #tpu.core_type<tc>, window_params = [{pipeline_mode = #tpu.pipeline_mode<synchronous>, transform_indices = @transform_0, window_bounds = array<i64: 2, 1600>}, {transform_indices = @transform_1, window_bounds = array<i64: 1600, 256>}, {transform_indices = @transform_2, window_bounds = array<i64: 1, 256>}, {transform_indices = @transform_3, window_bounds = array<i64: 256, 1024>}, {pipeline_mode = #tpu.pipeline_mode<synchronous>, transform_indices = @transform_4, window_bounds = array<i64: 1, 1024>}, {pipeline_mode = #tpu.pipeline_mode<synchronous>, transform_indices = @transform_5, window_bounds = array<i64: 1024, 500>}, {pipeline_mode = #tpu.pipeline_mode<synchronous>, transform_indices = @transform_6, window_bounds = array<i64: 1, 500>}, {pipeline_mode = #tpu.pipeline_mode<synchronous>, transform_indices = @transform_7, window_bounds = array<i64: 500, 100>}, {pipeline_mode = #tpu.pipeline_mode<synchronous>, transform_indices = @transform_8, window_bounds = array<i64: 1, 100>}, {pipeline_mode = #tpu.pipeline_mode<synchronous>, transform_indices = @transform_9, window_bounds = array<i64: 100, 10>}, {pipeline_mode = #tpu.pipeline_mode<synchronous>, transform_indices = @transform_10, window_bounds = array<i64: 1, 10>}, {pipeline_mode = #tpu.pipeline_mode<synchronous>, transform_indices = @transform_11, window_bounds = array<i64: 2, 10>}]} {
    %c0_i32 = arith.constant 0 : i32
    %0 = arith.cmpi eq, %arg0, %c0_i32 : i32
    %1 = arith.extui %0 : i1 to i32
    %c0_i32_0 = arith.constant 0 : i32
    %2 = arith.cmpi ne, %1, %c0_i32_0 : i32
    scf.if %2 {
      %cst_15 = arith.constant 0.000000e+00 : f32
      %20 = vector.broadcast %cst_15 : f32 to vector<2x1024xf32>
      %c0_16 = arith.constant 0 : index
      %c0_17 = arith.constant 0 : index
      %21 = vector.load %arg13[%c0_16, %c0_17] : memref<2x1024xf32, #tpu.memory_space<vmem>>, vector<2x1024xf32>
      tpu.vector_store %arg13[%c0_16, %c0_17], %20 {strides = array<i32>} : memref<2x1024xf32, #tpu.memory_space<vmem>>, vector<2x1024xf32>,
    } else {
    }
    %c0 = arith.constant 0 : index
    %c0_1 = arith.constant 0 : index
    %3 = vector.load %arg1[%c0, %c0_1] : memref<2x1600xbf16, #tpu.memory_space<vmem>>, vector<2x1600xbf16>
    %c0_2 = arith.constant 0 : index
    %c0_3 = arith.constant 0 : index
    %4 = vector.load %arg2[%c0_2, %c0_3] : memref<1600x256xbf16, #tpu.memory_space<vmem>>, vector<1600x256xbf16>
    %cst = arith.constant dense<0.000000e+00> : vector<2x256xf32>
    %5 = tpu.matmul %3, %4, %cst {dimension_numbers = #tpu.dot_dimension_numbers<[1], [0], [0], [1], [0, 0, 1, 1], [], []>} : vector<2x1600xbf16>, vector<1600x256xbf16>, vector<2x256xf32> -> vector<2x256xf32>
    %c0_4 = arith.constant 0 : index
    %c0_5 = arith.constant 0 : index
    %6 = vector.load %arg3[%c0_4, %c0_5] : memref<1x256xf32, #tpu.memory_space<vmem>>, vector<1x256xf32>
    %7 = vector.broadcast %6 : vector<1x256xf32> to vector<2x256xf32>
    %8 = arith.addf %5, %7 : vector<2x256xf32>
    %cst_6 = arith.constant 0.000000e+00 : f32
    %9 = vector.broadcast %cst_6 : f32 to vector<2x256xf32>
    %10 = arith.maximumf %8, %9 : vector<2x256xf32>
    %c0_7 = arith.constant 0 : index
    %c0_8 = arith.constant 0 : index
    %11 = vector.load %arg13[%c0_7, %c0_8] : memref<2x1024xf32, #tpu.memory_space<vmem>>, vector<2x1024xf32>
    %12 = arith.truncf %10 : vector<2x256xf32> to vector<2x256xbf16>
    %c0_9 = arith.constant 0 : index
    %c0_10 = arith.constant 0 : index
    %13 = vector.load %arg4[%c0_9, %c0_10] : memref<256x1024xbf16, #tpu.memory_space<vmem>>, vector<256x1024xbf16>
    %cst_11 = arith.constant dense<0.000000e+00> : vector<2x1024xf32>
    %14 = tpu.matmul %12, %13, %cst_11 {dimension_numbers = #tpu.dot_dimension_numbers<[1], [0], [0], [1], [0, 0, 1, 1], [], []>} : vector<2x256xbf16>, vector<256x1024xbf16>, vector<2x1024xf32> -> vector<2x1024xf32>
    %15 = arith.addf %11, %14 : vector<2x1024xf32>
    %c0_12 = arith.constant 0 : index
    %c0_13 = arith.constant 0 : index
    %16 = vector.load %arg13[%c0_12, %c0_13] : memref<2x1024xf32, #tpu.memory_space<vmem>>, vector<2x1024xf32>
    tpu.vector_store %arg13[%c0_12, %c0_13], %15 {strides = array<i32>} : memref<2x1024xf32, #tpu.memory_space<vmem>>, vector<2x1024xf32>,
    %c7_i32 = arith.constant 7 : i32
    %17 = arith.cmpi eq, %arg0, %c7_i32 : i32
    %18 = arith.extui %17 : i1 to i32
    %c0_i32_14 = arith.constant 0 : i32
    %19 = arith.cmpi ne, %18, %c0_i32_14 : i32
    scf.if %19 {
      %c0_15 = arith.constant 0 : index
      %c0_16 = arith.constant 0 : index
      %20 = vector.load %arg13[%c0_15, %c0_16] : memref<2x1024xf32, #tpu.memory_space<vmem>>, vector<2x1024xf32>
      %c0_17 = arith.constant 0 : index
      %c0_18 = arith.constant 0 : index
      %21 = vector.load %arg5[%c0_17, %c0_18] : memref<1x1024xf32, #tpu.memory_space<vmem>>, vector<1x1024xf32>
      %22 = vector.broadcast %21 : vector<1x1024xf32> to vector<2x1024xf32>
      %23 = arith.addf %20, %22 : vector<2x1024xf32>
      %cst_19 = arith.constant 0.000000e+00 : f32
      %24 = vector.broadcast %cst_19 : f32 to vector<2x1024xf32>
      %25 = arith.maximumf %23, %24 : vector<2x1024xf32>
      %26 = arith.truncf %25 : vector<2x1024xf32> to vector<2x1024xbf16>
      %c0_20 = arith.constant 0 : index
      %c0_21 = arith.constant 0 : index
      %27 = vector.load %arg6[%c0_20, %c0_21] : memref<1024x500xbf16, #tpu.memory_space<vmem>>, vector<1024x500xbf16>
      %cst_22 = arith.constant dense<0.000000e+00> : vector<2x500xf32>
      %28 = tpu.matmul %26, %27, %cst_22 {dimension_numbers = #tpu.dot_dimension_numbers<[1], [0], [0], [1], [0, 0, 1, 1], [], []>} : vector<2x1024xbf16>, vector<1024x500xbf16>, vector<2x500xf32> -> vector<2x500xf32>
      %c0_23 = arith.constant 0 : index
      %c0_24 = arith.constant 0 : index
      %29 = vector.load %arg7[%c0_23, %c0_24] : memref<1x500xf32, #tpu.memory_space<vmem>>, vector<1x500xf32>
      %30 = vector.broadcast %29 : vector<1x500xf32> to vector<2x500xf32>
      %31 = arith.addf %28, %30 : vector<2x500xf32>
      %cst_25 = arith.constant 0.000000e+00 : f32
      %32 = vector.broadcast %cst_25 : f32 to vector<2x500xf32>
      %33 = arith.maximumf %31, %32 : vector<2x500xf32>
      %34 = arith.truncf %33 : vector<2x500xf32> to vector<2x500xbf16>
      %c0_26 = arith.constant 0 : index
      %c0_27 = arith.constant 0 : index
      %35 = vector.load %arg8[%c0_26, %c0_27] : memref<500x100xbf16, #tpu.memory_space<vmem>>, vector<500x100xbf16>
      %cst_28 = arith.constant dense<0.000000e+00> : vector<2x100xf32>
      %36 = tpu.matmul %34, %35, %cst_28 {dimension_numbers = #tpu.dot_dimension_numbers<[1], [0], [0], [1], [0, 0, 1, 1], [], []>} : vector<2x500xbf16>, vector<500x100xbf16>, vector<2x100xf32> -> vector<2x100xf32>
      %c0_29 = arith.constant 0 : index
      %c0_30 = arith.constant 0 : index
      %37 = vector.load %arg9[%c0_29, %c0_30] : memref<1x100xf32, #tpu.memory_space<vmem>>, vector<1x100xf32>
      %38 = vector.broadcast %37 : vector<1x100xf32> to vector<2x100xf32>
      %39 = arith.addf %36, %38 : vector<2x100xf32>
      %cst_31 = arith.constant 0.000000e+00 : f32
      %40 = vector.broadcast %cst_31 : f32 to vector<2x100xf32>
      %41 = arith.maximumf %39, %40 : vector<2x100xf32>
      %42 = arith.truncf %41 : vector<2x100xf32> to vector<2x100xbf16>
      %c0_32 = arith.constant 0 : index
      %c0_33 = arith.constant 0 : index
      %43 = vector.load %arg10[%c0_32, %c0_33] : memref<100x10xbf16, #tpu.memory_space<vmem>>, vector<100x10xbf16>
      %cst_34 = arith.constant dense<0.000000e+00> : vector<2x10xf32>
      %44 = tpu.matmul %42, %43, %cst_34 {dimension_numbers = #tpu.dot_dimension_numbers<[1], [0], [0], [1], [0, 0, 1, 1], [], []>} : vector<2x100xbf16>, vector<100x10xbf16>, vector<2x10xf32> -> vector<2x10xf32>
      %c0_35 = arith.constant 0 : index
      %c0_36 = arith.constant 0 : index
      %45 = vector.load %arg11[%c0_35, %c0_36] : memref<1x10xf32, #tpu.memory_space<vmem>>, vector<1x10xf32>
      %46 = vector.broadcast %45 : vector<1x10xf32> to vector<2x10xf32>
      %47 = arith.addf %44, %46 : vector<2x10xf32>
      %c0_37 = arith.constant 0 : index
      %c0_38 = arith.constant 0 : index
      %48 = vector.load %arg12[%c0_37, %c0_38] : memref<2x10xf32, #tpu.memory_space<vmem>>, vector<2x10xf32>
      tpu.vector_store %arg12[%c0_37, %c0_38], %47 {strides = array<i32>} : memref<2x10xf32, #tpu.memory_space<vmem>>, vector<2x10xf32>,
    } else {
    }
    return
  }
  func.func @transform_0(%arg0: i32) -> (i32, i32) {
    %c0_i32 = arith.constant 0 : i32
    %c0_i32_0 = arith.constant 0 : i32
    %c0_i32_1 = arith.constant 0 : i32
    return %c0_i32, %c0_i32_0 : i32, i32
  }
  func.func @transform_1(%arg0: i32) -> (i32, i32) {
    %c0_i32 = arith.constant 0 : i32
    %c0_i32_0 = arith.constant 0 : i32
    return %c0_i32, %arg0 : i32, i32
  }
  func.func @transform_2(%arg0: i32) -> (i32, i32) {
    %c0_i32 = arith.constant 0 : i32
    %c0_i32_0 = arith.constant 0 : i32
    return %c0_i32, %arg0 : i32, i32
  }
  func.func @transform_3(%arg0: i32) -> (i32, i32) {
    %c0_i32 = arith.constant 0 : i32
    %c0_i32_0 = arith.constant 0 : i32
    return %arg0, %c0_i32 : i32, i32
  }
  func.func @transform_4(%arg0: i32) -> (i32, i32) {
    %c0_i32 = arith.constant 0 : i32
    %c0_i32_0 = arith.constant 0 : i32
    %c0_i32_1 = arith.constant 0 : i32
    return %c0_i32, %c0_i32_0 : i32, i32
  }
  func.func @transform_5(%arg0: i32) -> (i32, i32) {
    %c0_i32 = arith.constant 0 : i32
    %c0_i32_0 = arith.constant 0 : i32
    %c0_i32_1 = arith.constant 0 : i32
    return %c0_i32, %c0_i32_0 : i32, i32
  }
  func.func @transform_6(%arg0: i32) -> (i32, i32) {
    %c0_i32 = arith.constant 0 : i32
    %c0_i32_0 = arith.constant 0 : i32
    %c0_i32_1 = arith.constant 0 : i32
    return %c0_i32, %c0_i32_0 : i32, i32
  }
  func.func @transform_7(%arg0: i32) -> (i32, i32) {
    %c0_i32 = arith.constant 0 : i32
    %c0_i32_0 = arith.constant 0 : i32
    %c0_i32_1 = arith.constant 0 : i32
    return %c0_i32, %c0_i32_0 : i32, i32
  }
  func.func @transform_8(%arg0: i32) -> (i32, i32) {
    %c0_i32 = arith.constant 0 : i32
    %c0_i32_0 = arith.constant 0 : i32
    %c0_i32_1 = arith.constant 0 : i32
    return %c0_i32, %c0_i32_0 : i32, i32
  }
  func.func @transform_9(%arg0: i32) -> (i32, i32) {
    %c0_i32 = arith.constant 0 : i32
    %c0_i32_0 = arith.constant 0 : i32
    %c0_i32_1 = arith.constant 0 : i32
    return %c0_i32, %c0_i32_0 : i32, i32
  }
  func.func @transform_10(%arg0: i32) -> (i32, i32) {
    %c0_i32 = arith.constant 0 : i32
    %c0_i32_0 = arith.constant 0 : i32
    %c0_i32_1 = arith.constant 0 : i32
    return %c0_i32, %c0_i32_0 : i32, i32
  }
  func.func @transform_11(%arg0: i32) -> (i32, i32) {
    %c0_i32 = arith.constant 0 : i32
    %c0_i32_0 = arith.constant 0 : i32
    %c0_i32_1 = arith.constant 0 : i32
    return %c0_i32, %c0_i32_0 : i32, i32
  }
}

</mosaic_0001>

<llo_original>
// kernel: mnist_cnn_forward.3
$region0: #{mnist_cnn_forward.3}
  #allocation0 [shape = 'u32[]', space=smem, size = 0x4, offset = 0x4, fixed_abs, tag = 'smem constant byte address 0x4 - core index']
  #allocation1 [shape = 'u32[144,128]{1,0:T(1,128)}', space=vmem, size = 0x12000, scoped, tag = 'internal scratch']
  %s0 = inlined_call_operand.vmem [shape: bf16[338,25], index: 0, kind: input, shape index: {}]
  %s1 = inlined_call_operand.vmem [shape: bf16[338,25], index: 1, kind: input, shape index: {}]
  %s2 = inlined_call_operand.vmem [shape: bf16[338,25], index: 2, kind: input, shape index: {}]
  %s3 = inlined_call_operand.vmem [shape: bf16[338,25], index: 3, kind: input, shape index: {}]
  %s4 = inlined_call_operand.hbm [shape: bf16[25,32], index: 4, kind: input, shape index: {}]
  %s5 = inlined_call_operand.hbm [shape: f32[1,32], index: 5, kind: input, shape index: {}]
  %s6 = inlined_call_operand.hbm [shape: f32[1,32], index: 6, kind: input, shape index: {}]
  %s7 = inlined_call_operand.hbm [shape: f32[1,32], index: 7, kind: input, shape index: {}]
  %s8 = inlined_call_operand.vmem [shape: f32[338,32], index: 8, kind: output, shape index: {}]
  %s9 = sld [smem:[#allocation0]]
  $region58: #{mnist_cnn_forward.3} parent=0
    _
  %s11 = ssub.s32 1, %s9
  %s12 = scalar_select 0, %s11, %s9
  $region1: #{mnist_cnn_forward.3} parent=0
    #allocation2 [shape = 'u8[8192]{0}', space=vmem, size = 0x2000, scoped, tag = 'input window, operand 4, single buffered']
    #allocation3 [shape = 's32[1]{0}', space=sflag, size = 0x4, scoped, tag = 'scoped memory for mnist_cnn_forward.3']
    #allocation4 [shape = 'u8[512]{0}', space=vmem, size = 0x400, scoped, tag = 'input window, operand 5, single buffered']
    #allocation5 [shape = 's32[1]{0}', space=sflag, size = 0x4, scoped, tag = 'scoped memory for mnist_cnn_forward.3']
    #allocation6 [shape = 'u8[512]{0}', space=vmem, size = 0x400, scoped, tag = 'input window, operand 6, single buffered']
    #allocation7 [shape = 'u8[512]{0}', space=vmem, size = 0x400, scoped, tag = 'input window, operand 7, single buffered']
    #allocation8 [shape = 's32[1]{0}', space=sflag, size = 0x4, scoped, tag = 'scoped memory for mnist_cnn_forward.3']
    %13 = vsyncpa [#allocation3], 0
    %14 = vsyncpa [#allocation5], 0
    %15 = vsyncpa [#allocation8], 0
    // Predicated region
    $region2: #{mnist_cnn_forward.3} parent=1 // pred_check
      _
    $region3: #{mnist_cnn_forward.3} parent=1 // pred_check_branch
      %17 = sbr.rel (0) target = $region5
    $region4: #{mnist_cnn_forward.3} parent=1 // pred_region
      _
    $region5: #{mnist_cnn_forward.3} parent=1 // pred_fallthru
      _
    // Predicated region
    $region6: #{mnist_cnn_forward.3} parent=1 // pred_check
      _
    $region7: #{mnist_cnn_forward.3} parent=1 // pred_check_branch
      %19 = sbr.rel (0) target = $region9
    $region8: #{mnist_cnn_forward.3} parent=1 // pred_region
      _
    $region9: #{mnist_cnn_forward.3} parent=1 // pred_fallthru
      _
    // Predicated region
    $region10: #{mnist_cnn_forward.3} parent=1 // pred_check
      _
    $region11: #{mnist_cnn_forward.3} parent=1 // pred_check_branch
      %21 = sbr.rel (0) target = $region13
    $region12: #{mnist_cnn_forward.3} parent=1 // pred_region
      _
    $region13: #{mnist_cnn_forward.3} parent=1 // pred_fallthru
      _
    // Predicated region
    $region14: #{mnist_cnn_forward.3} parent=1 // pred_check
      _
    $region15: #{mnist_cnn_forward.3} parent=1 // pred_check_branch
      %23 = sbr.rel (0) target = $region17
    $region16: #{mnist_cnn_forward.3} parent=1 // pred_region
      _
    $region17: #{mnist_cnn_forward.3} parent=1 // pred_fallthru
      _
    // Predicated region
    $region18: #{mnist_cnn_forward.3} parent=1 // pred_check
      _
    $region19: #{mnist_cnn_forward.3} parent=1 // pred_check_branch
      %25 = sbr.rel (0) target = $region21
    $region20: #{mnist_cnn_forward.3} parent=1 // pred_region
      %s27 = ssub.s32 256, 256
      %28 = vsyncadd [#allocation3], %s27
      %s29 = sshll.u32 [#allocation2], 4
      %s30 = int_to_ptr.vmem [resolvable:$true] %s29
      %35 = dma.hbm_to_vmem [thread:$0]  %s4, 256, %s30, [#allocation3], 64, 64, 4
    $region21: #{mnist_cnn_forward.3} parent=1 // pred_fallthru
      _
    // Predicated region
    $region22: #{mnist_cnn_forward.3} parent=1 // pred_check
      _
    $region23: #{mnist_cnn_forward.3} parent=1 // pred_check_branch
      %37 = sbr.rel (0) target = $region25
    $region24: #{mnist_cnn_forward.3} parent=1 // pred_region
      %s39 = ssub.s32 16, 16
      %40 = vsyncadd [#allocation5], %s39
      %s42 = sshll.u32 [#allocation4], 4
      %s43 = int_to_ptr.vmem [resolvable:$true] %s42
      %45 = dma.hbm_to_vmem [thread:$0]  %s5, 16, %s43, [#allocation5]
    $region25: #{mnist_cnn_forward.3} parent=1 // pred_fallthru
      _
    // Predicated region
    $region26: #{mnist_cnn_forward.3} parent=1 // pred_check
      _
    $region27: #{mnist_cnn_forward.3} parent=1 // pred_check_branch
      %47 = sbr.rel (0) target = $region29
    $region28: #{mnist_cnn_forward.3} parent=1 // pred_region
      %s49 = ssub.s32 16, 16
      %50 = vsyncadd [#allocation5], %s49
      %s52 = sshll.u32 [#allocation6], 4
      %s53 = int_to_ptr.vmem [resolvable:$true] %s52
      %55 = dma.hbm_to_vmem [thread:$0]  %s6, 16, %s53, [#allocation5]
    $region29: #{mnist_cnn_forward.3} parent=1 // pred_fallthru
      _
    // Predicated region
    $region30: #{mnist_cnn_forward.3} parent=1 // pred_check
      _
    $region31: #{mnist_cnn_forward.3} parent=1 // pred_check_branch
      %57 = sbr.rel (0) target = $region33
    $region32: #{mnist_cnn_forward.3} parent=1 // pred_region
      %s59 = ssub.s32 16, 16
      %60 = vsyncadd [#allocation8], %s59
      %s62 = sshll.u32 [#allocation7], 4
      %s63 = int_to_ptr.vmem [resolvable:$true] %s62
      %65 = dma.hbm_to_vmem [thread:$0]  %s7, 16, %s63, [#allocation8]
    $region33: #{mnist_cnn_forward.3} parent=1 // pred_fallthru
      _
    // Predicated region
    $region34: #{mnist_cnn_forward.3} parent=1 // pred_check
      _
    $region35: #{mnist_cnn_forward.3} parent=1 // pred_check_branch
      %67 = sbr.rel (0) target = $region37
    $region36: #{mnist_cnn_forward.3} parent=1 // pred_region
      %68 = dma.done [#allocation3], 256
    $region37: #{mnist_cnn_forward.3} parent=1 // pred_fallthru
      _
    // Predicated region
    $region38: #{mnist_cnn_forward.3} parent=1 // pred_check
      _
    $region39: #{mnist_cnn_forward.3} parent=1 // pred_check_branch
      %70 = sbr.rel (0) target = $region41
    $region40: #{mnist_cnn_forward.3} parent=1 // pred_region
      %71 = dma.done [#allocation5], 16
    $region41: #{mnist_cnn_forward.3} parent=1 // pred_fallthru
      _
    // Predicated region
    $region42: #{mnist_cnn_forward.3} parent=1 // pred_check
      _
    $region43: #{mnist_cnn_forward.3} parent=1 // pred_check_branch
      %73 = sbr.rel (0) target = $region45
    $region44: #{mnist_cnn_forward.3} parent=1 // pred_region
      %74 = dma.done [#allocation5], 16
    $region45: #{mnist_cnn_forward.3} parent=1 // pred_fallthru
      _
    // Predicated region
    $region46: #{mnist_cnn_forward.3} parent=1 // pred_check
      _
    $region47: #{mnist_cnn_forward.3} parent=1 // pred_check_branch
      %76 = sbr.rel (0) target = $region49
    $region48: #{mnist_cnn_forward.3} parent=1 // pred_region
      %77 = dma.done [#allocation8], 16
    $region49: #{mnist_cnn_forward.3} parent=1 // pred_fallthru
      _
    %v79 = vld [vmem:[#allocation2] sm:$0xf]
    %v80 = vld [vmem:[#allocation2 + $0x4] sm:$0xf]
    %v81 = vld [vmem:[#allocation2 + $0x8] sm:$0xf]
    %v82 = vld [vmem:[#allocation2 + $0xc] sm:$0x1]
    %v83 = vld [vmem:[%s0] sm:$0xf]
    %v84 = vld [vmem:[%s0 + $0x4] sm:$0xf]
    %v85 = vld [vmem:[%s0 + $0x8] sm:$0xf]
    %v86 = vld [vmem:[%s0 + $0xc] sm:$0xf]
    %v87 = vld [vmem:[%s0 + $0x10] sm:$0xf]
    %v88 = vld [vmem:[%s0 + $0x14] sm:$0xf]
    %v89 = vld [vmem:[%s0 + $0x18] sm:$0xf]
    %v90 = vld [vmem:[%s0 + $0x1c] sm:$0xf]
    %v91 = vld [vmem:[%s0 + $0x20] sm:$0xf]
    %v92 = vld [vmem:[%s0 + $0x24] sm:$0xf]
    %v93 = vld [vmem:[%s0 + $0x28] sm:$0xf]
    %v94 = vld [vmem:[%s0 + $0x2c] sm:$0xf]
    %v95 = vld [vmem:[%s0 + $0x30] sm:$0xf]
    %v96 = vld [vmem:[%s0 + $0x34] sm:$0xf]
    %v97 = vld [vmem:[%s0 + $0x38] sm:$0xf]
    %v98 = vld [vmem:[%s0 + $0x3c] sm:$0xf]
    %v99 = vld [vmem:[%s0 + $0x40] sm:$0xf]
    %v100 = vld [vmem:[%s0 + $0x44] sm:$0xf]
    %v101 = vld [vmem:[%s0 + $0x48] sm:$0xf]
    %v102 = vld [vmem:[%s0 + $0x4c] sm:$0xf]
    %v103 = vld [vmem:[%s0 + $0x50] sm:$0xf]
    %v104 = vld [vmem:[%s0 + $0x54] sm:$0xf]
    %v105 = vld [vmem:[%s0 + $0x58] sm:$0xf]
    %v106 = vld [vmem:[%s0 + $0x5c] sm:$0xf]
    %v107 = vld [vmem:[%s0 + $0x60] sm:$0xf]
    %v108 = vld [vmem:[%s0 + $0x64] sm:$0xf]
    %v109 = vld [vmem:[%s0 + $0x68] sm:$0xf]
    %v110 = vld [vmem:[%s0 + $0x6c] sm:$0xf]
    %v111 = vld [vmem:[%s0 + $0x70] sm:$0xf]
    %v112 = vld [vmem:[%s0 + $0x74] sm:$0xf]
    %v113 = vld [vmem:[%s0 + $0x78] sm:$0xf]
    %v114 = vld [vmem:[%s0 + $0x7c] sm:$0xf]
    %v115 = vld [vmem:[%s0 + $0x80] sm:$0xf]
    %v116 = vld [vmem:[%s0 + $0x84] sm:$0xf]
    %v117 = vld [vmem:[%s0 + $0x88] sm:$0xf]
    %v118 = vld [vmem:[%s0 + $0x8c] sm:$0xf]
    %v119 = vld [vmem:[%s0 + $0x90] sm:$0xf]
    %v120 = vld [vmem:[%s0 + $0x94] sm:$0xf]
    %v121 = vld [vmem:[%s0 + $0x98] sm:$0xf]
    %v122 = vld [vmem:[%s0 + $0x9c] sm:$0xf]
    %v123 = vld [vmem:[%s0 + $0xa0] sm:$0xf]
    %v124 = vld [vmem:[%s0 + $0xa4] sm:$0xf]
    %v125 = vld [vmem:[%s0 + $0xa8] sm:$0x1]
    %v169 = vunpack.c.l.b16 %v83
    %v170 = vunpack.c.l.b16 %v84
    %v171 = vunpack.c.l.b16 %v85
    %v172 = vunpack.c.l.b16 %v86
    %v173 = vunpack.c.l.b16 %v87
    %v174 = vunpack.c.l.b16 %v88
    %v175 = vunpack.c.l.b16 %v89
    %v176 = vunpack.c.l.b16 %v90
    %v177 = vunpack.c.l.b16 %v91
    %v178 = vunpack.c.l.b16 %v92
    %v179 = vunpack.c.l.b16 %v93
    %v180 = vunpack.c.l.b16 %v94
    %v181 = vunpack.c.l.b16 %v95
    %v182 = vunpack.c.l.b16 %v96
    %v183 = vunpack.c.l.b16 %v97
    %v184 = vunpack.c.l.b16 %v98
    %v185 = vunpack.c.l.b16 %v99
    %v186 = vunpack.c.l.b16 %v100
    %v187 = vunpack.c.l.b16 %v101
    %v188 = vunpack.c.l.b16 %v102
    %v189 = vunpack.c.l.b16 %v103
    %v190 = vunpack.c.l.b16 %v104
    %v191 = vunpack.c.l.b16 %v105
    %v192 = vunpack.c.l.b16 %v106
    %v193 = vunpack.c.l.b16 %v107
    %v194 = vunpack.c.l.b16 %v108
    %v195 = vunpack.c.l.b16 %v109
    %v196 = vunpack.c.l.b16 %v110
    %v197 = vunpack.c.l.b16 %v111
    %v198 = vunpack.c.l.b16 %v112
    %v199 = vunpack.c.l.b16 %v113
    %v200 = vunpack.c.l.b16 %v114
    %v201 = vunpack.c.l.b16 %v115
    %v202 = vunpack.c.l.b16 %v116
    %v203 = vunpack.c.l.b16 %v117
    %v204 = vunpack.c.l.b16 %v118
    %v205 = vunpack.c.l.b16 %v119
    %v206 = vunpack.c.l.b16 %v120
    %v207 = vunpack.c.l.b16 %v121
    %v208 = vunpack.c.l.b16 %v122
    %v209 = vunpack.c.l.b16 %v123
    %v210 = vunpack.c.l.b16 %v124
    %v211 = vunpack.c.l.b16 %v125
    %v212 = vpack.c.b16 %v170, %v169
    %v213 = vpack.c.b16 %v172, %v171
    %v214 = vpack.c.b16 %v174, %v173
    %v215 = vpack.c.b16 %v176, %v175
    %v216 = vpack.c.b16 %v178, %v177
    %v217 = vpack.c.b16 %v180, %v179
    %v218 = vpack.c.b16 %v182, %v181
    %v219 = vpack.c.b16 %v184, %v183
    %v220 = vpack.c.b16 %v186, %v185
    %v221 = vpack.c.b16 %v188, %v187
    %v222 = vpack.c.b16 %v190, %v189
    %v223 = vpack.c.b16 %v192, %v191
    %v224 = vpack.c.b16 %v194, %v193
    %v225 = vpack.c.b16 %v196, %v195
    %v226 = vpack.c.b16 %v198, %v197
    %v227 = vpack.c.b16 %v200, %v199
    %v228 = vpack.c.b16 %v202, %v201
    %v229 = vpack.c.b16 %v204, %v203
    %v230 = vpack.c.b16 %v206, %v205
    %v231 = vpack.c.b16 %v208, %v207
    %v232 = vpack.c.b16 %v210, %v209
    %v233 = vpack.c.b16 %v211, %v211
    %v238 = vunpack.c.l.b16 %v79
    %v239 = vunpack.c.l.b16 %v80
    %v240 = vunpack.c.l.b16 %v81
    %v241 = vunpack.c.l.b16 %v82
    %v242 = vpack.c.b16 %v239, %v238
    %v243 = vpack.c.b16 %v241, %v240
    %vm245 = vcmask 203776
    %v247 = vsel %vm245, %v212, 0
    %v250 = vsel %vm245, %v213, 0
    %v253 = vsel %vm245, %v214, 0
    %v256 = vsel %vm245, %v215, 0
    %v259 = vsel %vm245, %v216, 0
    %v262 = vsel %vm245, %v217, 0
    %v265 = vsel %vm245, %v218, 0
    %v268 = vsel %vm245, %v219, 0
    %v271 = vsel %vm245, %v220, 0
    %v274 = vsel %vm245, %v221, 0
    %v277 = vsel %vm245, %v222, 0
    %v280 = vsel %vm245, %v223, 0
    %v283 = vsel %vm245, %v224, 0
    %v286 = vsel %vm245, %v225, 0
    %v289 = vsel %vm245, %v226, 0
    %v292 = vsel %vm245, %v227, 0
    %v295 = vsel %vm245, %v228, 0
    %v298 = vsel %vm245, %v229, 0
    %v301 = vsel %vm245, %v230, 0
    %v304 = vsel %vm245, %v231, 0
    %v307 = vsel %vm245, %v232, 0
    %v310 = vsel %vm245, %v233, 0
    %vm312 = vcmask 1043456
    %vm313 = vcmask 1044480
    %v314 = vsel %vm312, 4294967295, 65535
    %v315 = vsel %vm313, %v314, 0
    %v317 = vand.u32 %v243, %v315
    %319 = vmatprep.subr.bf16.mxu0 0
    %320 = vmatpush1.bf16.msra.mxu0 %v242
    %321 = vmatprep.subr.bf16.mxu0 0
    %322 = vmatpush1.bf16.msra.mxu0 %v317
    %323 = vmatprep.subr.bf16.mxu0 0
    %324 = vmatpush1.bf16.msra.mxu0 0
    %325 = vmatprep.subr.bf16.mxu0 0
    %326 = vmatpush1.bf16.msra.mxu0 0
    %327 = vmatprep.subr.bf16.mxu0 0
    %328 = vmatpush1.bf16.msra.mxu0 0
    %329 = vmatprep.subr.bf16.mxu0 0
    %330 = vmatpush1.bf16.msra.mxu0 0
    %331 = vmatprep.subr.bf16.mxu0 0
    %332 = vmatpush1.bf16.msra.mxu0 0
    %333 = vmatprep.subr.bf16.mxu0 0
    %334 = vmatpush1.bf16.msra.mxu0 0
    %335 = vmatprep.subr.bf16.mxu0 0
    %336 = vmatpush1.bf16.msra.mxu0 0
    %337 = vmatprep.subr.bf16.mxu0 0
    %338 = vmatpush1.bf16.msra.mxu0 0
    %339 = vmatprep.subr.bf16.mxu0 0
    %340 = vmatpush1.bf16.msra.mxu0 0
    %341 = vmatprep.subr.bf16.mxu0 0
    %342 = vmatpush1.bf16.msra.mxu0 0
    %343 = vmatprep.subr.bf16.mxu0 0
    %344 = vmatpush1.bf16.msra.mxu0 0
    %345 = vmatprep.subr.bf16.mxu0 0
    %346 = vmatpush1.bf16.msra.mxu0 0
    %347 = vmatprep.subr.bf16.mxu0 0
    %348 = vmatpush1.bf16.msra.mxu0 0
    %349 = vmatprep.subr.bf16.mxu0 0
    %350 = vmatpush1.bf16.msra.mxu0 0
    %351 = vmatprep.mubr.bf16.mxu0 0
    %352 = vmatmul.mubr.bf16.gmra.mrb[0].mxu0 %v247
    %v353 = vpop.f32.mrb[0].mxu0
    %v354 = vadd.f32 0.0, %v353
    %v355 = vpop.f32.mrb[0].mxu0
    %v356 = vpop.f32.mrb[0].mxu0
    %v357 = vadd.f32 0.0, %v356
    %v358 = vpop.f32.mrb[0].mxu0
    %359 = vmatprep.mubr.bf16.mxu0 0
    %360 = vmatmul.mubr.bf16.gmra.mrb[0].mxu0 %v250
    %v361 = vpop.f32.mrb[0].mxu0
    %v362 = vadd.f32 0.0, %v361
    %v363 = vpop.f32.mrb[0].mxu0
    %v364 = vpop.f32.mrb[0].mxu0
    %v365 = vadd.f32 0.0, %v364
    %v366 = vpop.f32.mrb[0].mxu0
    %367 = vmatprep.mubr.bf16.mxu0 0
    %368 = vmatmul.mubr.bf16.gmra.mrb[0].mxu0 %v253
    %v369 = vpop.f32.mrb[0].mxu0
    %v370 = vadd.f32 0.0, %v369
    %v371 = vpop.f32.mrb[0].mxu0
    %v372 = vpop.f32.mrb[0].mxu0
    %v373 = vadd.f32 0.0, %v372
    %v374 = vpop.f32.mrb[0].mxu0
    %375 = vmatprep.mubr.bf16.mxu0 0
    %376 = vmatmul.mubr.bf16.gmra.mrb[0].mxu0 %v256
    %v377 = vpop.f32.mrb[0].mxu0
    %v378 = vadd.f32 0.0, %v377
    %v379 = vpop.f32.mrb[0].mxu0
    %v380 = vpop.f32.mrb[0].mxu0
    %v381 = vadd.f32 0.0, %v380
    %v382 = vpop.f32.mrb[0].mxu0
    %383 = vmatprep.mubr.bf16.mxu0 0
    %384 = vmatmul.mubr.bf16.gmra.mrb[0].mxu0 %v259
    %v385 = vpop.f32.mrb[0].mxu0
    %v386 = vadd.f32 0.0, %v385
    %v387 = vpop.f32.mrb[0].mxu0
    %v388 = vpop.f32.mrb[0].mxu0
    %v389 = vadd.f32 0.0, %v388
    %v390 = vpop.f32.mrb[0].mxu0
    %391 = vmatprep.mubr.bf16.mxu0 0
    %392 = vmatmul.mubr.bf16.gmra.mrb[0].mxu0 %v262
    %v393 = vpop.f32.mrb[0].mxu0
    %v394 = vadd.f32 0.0, %v393
    %v395 = vpop.f32.mrb[0].mxu0
    %v396 = vpop.f32.mrb[0].mxu0
    %v397 = vadd.f32 0.0, %v396
    %v398 = vpop.f32.mrb[0].mxu0
    %399 = vmatprep.mubr.bf16.mxu0 0
    %400 = vmatmul.mubr.bf16.gmra.mrb[0].mxu0 %v265
    %v401 = vpop.f32.mrb[0].mxu0
    %v402 = vadd.f32 0.0, %v401
    %v403 = vpop.f32.mrb[0].mxu0
    %v404 = vpop.f32.mrb[0].mxu0
    %v405 = vadd.f32 0.0, %v404
    %v406 = vpop.f32.mrb[0].mxu0
    %407 = vmatprep.mubr.bf16.mxu0 0
    %408 = vmatmul.mubr.bf16.gmra.mrb[0].mxu0 %v268
    %v409 = vpop.f32.mrb[0].mxu0
    %v410 = vadd.f32 0.0, %v409
    %v411 = vpop.f32.mrb[0].mxu0
    %v412 = vpop.f32.mrb[0].mxu0
    %v413 = vadd.f32 0.0, %v412
    %v414 = vpop.f32.mrb[0].mxu0
    %415 = vmatprep.mubr.bf16.mxu0 0
    %416 = vmatmul.mubr.bf16.gmra.mrb[0].mxu0 %v271
    %v417 = vpop.f32.mrb[0].mxu0
    %v418 = vadd.f32 0.0, %v417
    %v419 = vpop.f32.mrb[0].mxu0
    %v420 = vpop.f32.mrb[0].mxu0
    %v421 = vadd.f32 0.0, %v420
    %v422 = vpop.f32.mrb[0].mxu0
    %423 = vmatprep.mubr.bf16.mxu0 0
    %424 = vmatmul.mubr.bf16.gmra.mrb[0].mxu0 %v274
    %v425 = vpop.f32.mrb[0].mxu0
    %v426 = vadd.f32 0.0, %v425
    %v427 = vpop.f32.mrb[0].mxu0
    %v428 = vpop.f32.mrb[0].mxu0
    %v429 = vadd.f32 0.0, %v428
    %v430 = vpop.f32.mrb[0].mxu0
    %431 = vmatprep.mubr.bf16.mxu0 0
    %432 = vmatmul.mubr.bf16.gmra.mrb[0].mxu0 %v277
    %v433 = vpop.f32.mrb[0].mxu0
    %v434 = vadd.f32 0.0, %v433
    %v435 = vpop.f32.mrb[0].mxu0
    %v436 = vpop.f32.mrb[0].mxu0
    %v437 = vadd.f32 0.0, %v436
    %v438 = vpop.f32.mrb[0].mxu0
    %439 = vmatprep.mubr.bf16.mxu0 0
    %440 = vmatmul.mubr.bf16.gmra.mrb[0].mxu0 %v280
    %v441 = vpop.f32.mrb[0].mxu0
    %v442 = vadd.f32 0.0, %v441
    %v443 = vpop.f32.mrb[0].mxu0
    %v444 = vpop.f32.mrb[0].mxu0
    %v445 = vadd.f32 0.0, %v444
    %v446 = vpop.f32.mrb[0].mxu0
    %447 = vmatprep.mubr.bf16.mxu0 0
    %448 = vmatmul.mubr.bf16.gmra.mrb[0].mxu0 %v283
    %v449 = vpop.f32.mrb[0].mxu0
    %v450 = vadd.f32 0.0, %v449
    %v451 = vpop.f32.mrb[0].mxu0
    %v452 = vpop.f32.mrb[0].mxu0
    %v453 = vadd.f32 0.0, %v452
    %v454 = vpop.f32.mrb[0].mxu0
    %455 = vmatprep.mubr.bf16.mxu0 0
    %456 = vmatmul.mubr.bf16.gmra.mrb[0].mxu0 %v286
    %v457 = vpop.f32.mrb[0].mxu0
    %v458 = vadd.f32 0.0, %v457
    %v459 = vpop.f32.mrb[0].mxu0
    %v460 = vpop.f32.mrb[0].mxu0
    %v461 = vadd.f32 0.0, %v460
    %v462 = vpop.f32.mrb[0].mxu0
    %463 = vmatprep.mubr.bf16.mxu0 0
    %464 = vmatmul.mubr.bf16.gmra.mrb[0].mxu0 %v289
    %v465 = vpop.f32.mrb[0].mxu0
    %v466 = vadd.f32 0.0, %v465
    %v467 = vpop.f32.mrb[0].mxu0
    %v468 = vpop.f32.mrb[0].mxu0
    %v469 = vadd.f32 0.0, %v468
    %v470 = vpop.f32.mrb[0].mxu0
    %471 = vmatprep.mubr.bf16.mxu0 0
    %472 = vmatmul.mubr.bf16.gmra.mrb[0].mxu0 %v292
    %v473 = vpop.f32.mrb[0].mxu0
    %v474 = vadd.f32 0.0, %v473
    %v475 = vpop.f32.mrb[0].mxu0
    %v476 = vpop.f32.mrb[0].mxu0
    %v477 = vadd.f32 0.0, %v476
    %v478 = vpop.f32.mrb[0].mxu0
    %479 = vmatprep.mubr.bf16.mxu0 0
    %480 = vmatmul.mubr.bf16.gmra.mrb[0].mxu0 %v295
    %v481 = vpop.f32.mrb[0].mxu0
    %v482 = vadd.f32 0.0, %v481
    %v483 = vpop.f32.mrb[0].mxu0
    %v484 = vpop.f32.mrb[0].mxu0
    %v485 = vadd.f32 0.0, %v484
    %v486 = vpop.f32.mrb[0].mxu0
    %487 = vmatprep.mubr.bf16.mxu0 0
    %488 = vmatmul.mubr.bf16.gmra.mrb[0].mxu0 %v298
    %v489 = vpop.f32.mrb[0].mxu0
    %v490 = vadd.f32 0.0, %v489
    %v491 = vpop.f32.mrb[0].mxu0
    %v492 = vpop.f32.mrb[0].mxu0
    %v493 = vadd.f32 0.0, %v492
    %v494 = vpop.f32.mrb[0].mxu0
    %495 = vmatprep.mubr.bf16.mxu0 0
    %496 = vmatmul.mubr.bf16.gmra.mrb[0].mxu0 %v301
    %v497 = vpop.f32.mrb[0].mxu0
    %v498 = vadd.f32 0.0, %v497
    %v499 = vpop.f32.mrb[0].mxu0
    %v500 = vpop.f32.mrb[0].mxu0
    %v501 = vadd.f32 0.0, %v500
    %v502 = vpop.f32.mrb[0].mxu0
    %503 = vmatprep.mubr.bf16.mxu0 0
    %504 = vmatmul.mubr.bf16.gmra.mrb[0].mxu0 %v304
    %v505 = vpop.f32.mrb[0].mxu0
    %v506 = vadd.f32 0.0, %v505
    %v507 = vpop.f32.mrb[0].mxu0
    %v508 = vpop.f32.mrb[0].mxu0
    %v509 = vadd.f32 0.0, %v508
    %v510 = vpop.f32.mrb[0].mxu0
    %511 = vmatprep.mubr.bf16.mxu0 0
    %512 = vmatmul.mubr.bf16.gmra.mrb[0].mxu0 %v307
    %v513 = vpop.f32.mrb[0].mxu0
    %v514 = vadd.f32 0.0, %v513
    %v515 = vpop.f32.mrb[0].mxu0
    %v516 = vpop.f32.mrb[0].mxu0
    %v517 = vadd.f32 0.0, %v516
    %v518 = vpop.f32.mrb[0].mxu0
    %519 = vmatprep.mubr.bf16.mxu0 0
    %520 = vmatmul.mubr.bf16.gmra.mrb[0].mxu0 %v310
    %v521 = vpop.f32.mrb[0].mxu0
    %v522 = vadd.f32 0.0, %v521
    %v523 = vpop.f32.mrb[0].mxu0
    %v524 = vpop.f32.mrb[0].mxu0
    %v525 = vpop.f32.mrb[0].mxu0
    %526 = vdwg.mxu0
    %v527 = vld [vmem:[%s1] sm:$0xf]
    %v528 = vld [vmem:[%s1 + $0x4] sm:$0xf]
    %v529 = vld [vmem:[%s1 + $0x8] sm:$0xf]
    %v530 = vld [vmem:[%s1 + $0xc] sm:$0xf]
    %v531 = vld [vmem:[%s1 + $0x10] sm:$0xf]
    %v532 = vld [vmem:[%s1 + $0x14] sm:$0xf]
    %v533 = vld [vmem:[%s1 + $0x18] sm:$0xf]
    %v534 = vld [vmem:[%s1 + $0x1c] sm:$0xf]
    %v535 = vld [vmem:[%s1 + $0x20] sm:$0xf]
    %v536 = vld [vmem:[%s1 + $0x24] sm:$0xf]
    %v537 = vld [vmem:[%s1 + $0x28] sm:$0xf]
    %v538 = vld [vmem:[%s1 + $0x2c] sm:$0xf]
    %v539 = vld [vmem:[%s1 + $0x30] sm:$0xf]
    %v540 = vld [vmem:[%s1 + $0x34] sm:$0xf]
    %v541 = vld [vmem:[%s1 + $0x38] sm:$0xf]
    %v542 = vld [vmem:[%s1 + $0x3c] sm:$0xf]
    %v543 = vld [vmem:[%s1 + $0x40] sm:$0xf]
    %v544 = vld [vmem:[%s1 + $0x44] sm:$0xf]
    %v545 = vld [vmem:[%s1 + $0x48] sm:$0xf]
    %v546 = vld [vmem:[%s1 + $0x4c] sm:$0xf]
    %v547 = vld [vmem:[%s1 + $0x50] sm:$0xf]
    %v548 = vld [vmem:[%s1 + $0x54] sm:$0xf]
    %v549 = vld [vmem:[%s1 + $0x58] sm:$0xf]
    %v550 = vld [vmem:[%s1 + $0x5c] sm:$0xf]
    %v551 = vld [vmem:[%s1 + $0x60] sm:$0xf]
    %v552 = vld [vmem:[%s1 + $0x64] sm:$0xf]
    %v553 = vld [vmem:[%s1 + $0x68] sm:$0xf]
    %v554 = vld [vmem:[%s1 + $0x6c] sm:$0xf]
    %v555 = vld [vmem:[%s1 + $0x70] sm:$0xf]
    %v556 = vld [vmem:[%s1 + $0x74] sm:$0xf]
    %v557 = vld [vmem:[%s1 + $0x78] sm:$0xf]
    %v558 = vld [vmem:[%s1 + $0x7c] sm:$0xf]
    %v559 = vld [vmem:[%s1 + $0x80] sm:$0xf]
    %v560 = vld [vmem:[%s1 + $0x84] sm:$0xf]
    %v561 = vld [vmem:[%s1 + $0x88] sm:$0xf]
    %v562 = vld [vmem:[%s1 + $0x8c] sm:$0xf]
    %v563 = vld [vmem:[%s1 + $0x90] sm:$0xf]
    %v564 = vld [vmem:[%s1 + $0x94] sm:$0xf]
    %v565 = vld [vmem:[%s1 + $0x98] sm:$0xf]
    %v566 = vld [vmem:[%s1 + $0x9c] sm:$0xf]
    %v567 = vld [vmem:[%s1 + $0xa0] sm:$0xf]
    %v568 = vld [vmem:[%s1 + $0xa4] sm:$0xf]
    %v569 = vld [vmem:[%s1 + $0xa8] sm:$0x1]
    %v613 = vunpack.c.l.b16 %v527
    %v614 = vunpack.c.l.b16 %v528
    %v615 = vunpack.c.l.b16 %v529
    %v616 = vunpack.c.l.b16 %v530
    %v617 = vunpack.c.l.b16 %v531
    %v618 = vunpack.c.l.b16 %v532
    %v619 = vunpack.c.l.b16 %v533
    %v620 = vunpack.c.l.b16 %v534
    %v621 = vunpack.c.l.b16 %v535
    %v622 = vunpack.c.l.b16 %v536
    %v623 = vunpack.c.l.b16 %v537
    %v624 = vunpack.c.l.b16 %v538
    %v625 = vunpack.c.l.b16 %v539
    %v626 = vunpack.c.l.b16 %v540
    %v627 = vunpack.c.l.b16 %v541
    %v628 = vunpack.c.l.b16 %v542
    %v629 = vunpack.c.l.b16 %v543
    %v630 = vunpack.c.l.b16 %v544
    %v631 = vunpack.c.l.b16 %v545
    %v632 = vunpack.c.l.b16 %v546
    %v633 = vunpack.c.l.b16 %v547
    %v634 = vunpack.c.l.b16 %v548
    %v635 = vunpack.c.l.b16 %v549
    %v636 = vunpack.c.l.b16 %v550
    %v637 = vunpack.c.l.b16 %v551
    %v638 = vunpack.c.l.b16 %v552
    %v639 = vunpack.c.l.b16 %v553
    %v640 = vunpack.c.l.b16 %v554
    %v641 = vunpack.c.l.b16 %v555
    %v642 = vunpack.c.l.b16 %v556
    %v643 = vunpack.c.l.b16 %v557
    %v644 = vunpack.c.l.b16 %v558
    %v645 = vunpack.c.l.b16 %v559
    %v646 = vunpack.c.l.b16 %v560
    %v647 = vunpack.c.l.b16 %v561
    %v648 = vunpack.c.l.b16 %v562
    %v649 = vunpack.c.l.b16 %v563
    %v650 = vunpack.c.l.b16 %v564
    %v651 = vunpack.c.l.b16 %v565
    %v652 = vunpack.c.l.b16 %v566
    %v653 = vunpack.c.l.b16 %v567
    %v654 = vunpack.c.l.b16 %v568
    %v655 = vunpack.c.l.b16 %v569
    %v656 = vpack.c.b16 %v614, %v613
    %v657 = vpack.c.b16 %v616, %v615
    %v658 = vpack.c.b16 %v618, %v617
    %v659 = vpack.c.b16 %v620, %v619
    %v660 = vpack.c.b16 %v622, %v621
    %v661 = vpack.c.b16 %v624, %v623
    %v662 = vpack.c.b16 %v626, %v625
    %v663 = vpack.c.b16 %v628, %v627
    %v664 = vpack.c.b16 %v630, %v629
    %v665 = vpack.c.b16 %v632, %v631
    %v666 = vpack.c.b16 %v634, %v633
    %v667 = vpack.c.b16 %v636, %v635
    %v668 = vpack.c.b16 %v638, %v637
    %v669 = vpack.c.b16 %v640, %v639
    %v670 = vpack.c.b16 %v642, %v641
    %v671 = vpack.c.b16 %v644, %v643
    %v672 = vpack.c.b16 %v646, %v645
    %v673 = vpack.c.b16 %v648, %v647
    %v674 = vpack.c.b16 %v650, %v649
    %v675 = vpack.c.b16 %v652, %v651
    %v676 = vpack.c.b16 %v654, %v653
    %v677 = vpack.c.b16 %v655, %v655
    %v679 = vsel %vm245, %v656, 0
    %v682 = vsel %vm245, %v657, 0
    %v685 = vsel %vm245, %v658, 0
    %v688 = vsel %vm245, %v659, 0
    %v691 = vsel %vm245, %v660, 0
    %v694 = vsel %vm245, %v661, 0
    %v697 = vsel %vm245, %v662, 0
    %v700 = vsel %vm245, %v663, 0
    %v703 = vsel %vm245, %v664, 0
    %v706 = vsel %vm245, %v665, 0
    %v709 = vsel %vm245, %v666, 0
    %v712 = vsel %vm245, %v667, 0
    %v715 = vsel %vm245, %v668, 0
    %v718 = vsel %vm245, %v669, 0
    %v721 = vsel %vm245, %v670, 0
    %v724 = vsel %vm245, %v671, 0
    %v727 = vsel %vm245, %v672, 0
    %v730 = vsel %vm245, %v673, 0
    %v733 = vsel %vm245, %v674, 0
    %v736 = vsel %vm245, %v675, 0
    %v739 = vsel %vm245, %v676, 0
    %v742 = vsel %vm245, %v677, 0
    %744 = vmatprep.subr.bf16.mxu0 0
    %745 = vmatpush1.bf16.msra.mxu0 %v242
    %746 = vmatprep.subr.bf16.mxu0 0
    %747 = vmatpush1.bf16.msra.mxu0 %v317
    %748 = vmatprep.subr.bf16.mxu0 0
    %749 = vmatpush1.bf16.msra.mxu0 0
    %750 = vmatprep.subr.bf16.mxu0 0
    %751 = vmatpush1.bf16.msra.mxu0 0
    %752 = vmatprep.subr.bf16.mxu0 0
    %753 = vmatpush1.bf16.msra.mxu0 0
    %754 = vmatprep.subr.bf16.mxu0 0
    %755 = vmatpush1.bf16.msra.mxu0 0
    %756 = vmatprep.subr.bf16.mxu0 0
    %757 = vmatpush1.bf16.msra.mxu0 0
    %758 = vmatprep.subr.bf16.mxu0 0
    %759 = vmatpush1.bf16.msra.mxu0 0
    %760 = vmatprep.subr.bf16.mxu0 0
    %761 = vmatpush1.bf16.msra.mxu0 0
    %762 = vmatprep.subr.bf16.mxu0 0
    %763 = vmatpush1.bf16.msra.mxu0 0
    %764 = vmatprep.subr.bf16.mxu0 0
    %765 = vmatpush1.bf16.msra.mxu0 0
    %766 = vmatprep.subr.bf16.mxu0 0
    %767 = vmatpush1.bf16.msra.mxu0 0
    %768 = vmatprep.subr.bf16.mxu0 0
    %769 = vmatpush1.bf16.msra.mxu0 0
    %770 = vmatprep.subr.bf16.mxu0 0
    %771 = vmatpush1.bf16.msra.mxu0 0
    %772 = vmatprep.subr.bf16.mxu0 0
    %773 = vmatpush1.bf16.msra.mxu0 0
    %774 = vmatprep.subr.bf16.mxu0 0
    %775 = vmatpush1.bf16.msra.mxu0 0
    %776 = vmatprep.mubr.bf16.mxu0 0
    %777 = vmatmul.mubr.bf16.gmra.mrb[0].mxu0 %v679
    %v778 = vpop.f32.mrb[0].mxu0
    %v779 = vadd.f32 0.0, %v778
    %v780 = vpop.f32.mrb[0].mxu0
    %v781 = vpop.f32.mrb[0].mxu0
    %v782 = vadd.f32 0.0, %v781
    %v783 = vpop.f32.mrb[0].mxu0
    %784 = vmatprep.mubr.bf16.mxu0 0
    %785 = vmatmul.mubr.bf16.gmra.mrb[0].mxu0 %v682
    %v786 = vpop.f32.mrb[0].mxu0
    %v787 = vadd.f32 0.0, %v786
    %v788 = vpop.f32.mrb[0].mxu0
    %v789 = vpop.f32.mrb[0].mxu0
    %v790 = vadd.f32 0.0, %v789
    %v791 = vpop.f32.mrb[0].mxu0
    %792 = vmatprep.mubr.bf16.mxu0 0
    %793 = vmatmul.mubr.bf16.gmra.mrb[0].mxu0 %v685
    %v794 = vpop.f32.mrb[0].mxu0
    %v795 = vadd.f32 0.0, %v794
    %v796 = vpop.f32.mrb[0].mxu0
    %v797 = vpop.f32.mrb[0].mxu0
    %v798 = vadd.f32 0.0, %v797
    %v799 = vpop.f32.mrb[0].mxu0
    %800 = vmatprep.mubr.bf16.mxu0 0
    %801 = vmatmul.mubr.bf16.gmra.mrb[0].mxu0 %v688
    %v802 = vpop.f32.mrb[0].mxu0
    %v803 = vadd.f32 0.0, %v802
    %v804 = vpop.f32.mrb[0].mxu0
    %v805 = vpop.f32.mrb[0].mxu0
    %v806 = vadd.f32 0.0, %v805
    %v807 = vpop.f32.mrb[0].mxu0
    %808 = vmatprep.mubr.bf16.mxu0 0
    %809 = vmatmul.mubr.bf16.gmra.mrb[0].mxu0 %v691
    %v810 = vpop.f32.mrb[0].mxu0
    %v811 = vadd.f32 0.0, %v810
    %v812 = vpop.f32.mrb[0].mxu0
    %v813 = vpop.f32.mrb[0].mxu0
    %v814 = vadd.f32 0.0, %v813
    %v815 = vpop.f32.mrb[0].mxu0
    %816 = vmatprep.mubr.bf16.mxu0 0
    %817 = vmatmul.mubr.bf16.gmra.mrb[0].mxu0 %v694
    %v818 = vpop.f32.mrb[0].mxu0
    %v819 = vadd.f32 0.0, %v818
    %v820 = vpop.f32.mrb[0].mxu0
    %v821 = vpop.f32.mrb[0].mxu0
    %v822 = vadd.f32 0.0, %v821
    %v823 = vpop.f32.mrb[0].mxu0
    %824 = vmatprep.mubr.bf16.mxu0 0
    %825 = vmatmul.mubr.bf16.gmra.mrb[0].mxu0 %v697
    %v826 = vpop.f32.mrb[0].mxu0
    %v827 = vadd.f32 0.0, %v826
    %v828 = vpop.f32.mrb[0].mxu0
    %v829 = vpop.f32.mrb[0].mxu0
    %v830 = vadd.f32 0.0, %v829
    %v831 = vpop.f32.mrb[0].mxu0
    %832 = vmatprep.mubr.bf16.mxu0 0
    %833 = vmatmul.mubr.bf16.gmra.mrb[0].mxu0 %v700
    %v834 = vpop.f32.mrb[0].mxu0
    %v835 = vadd.f32 0.0, %v834
    %v836 = vpop.f32.mrb[0].mxu0
    %v837 = vpop.f32.mrb[0].mxu0
    %v838 = vadd.f32 0.0, %v837
    %v839 = vpop.f32.mrb[0].mxu0
    %840 = vmatprep.mubr.bf16.mxu0 0
    %841 = vmatmul.mubr.bf16.gmra.mrb[0].mxu0 %v703
    %v842 = vpop.f32.mrb[0].mxu0
    %v843 = vadd.f32 0.0, %v842
    %v844 = vpop.f32.mrb[0].mxu0
    %v845 = vpop.f32.mrb[0].mxu0
    %v846 = vadd.f32 0.0, %v845
    %v847 = vpop.f32.mrb[0].mxu0
    %848 = vmatprep.mubr.bf16.mxu0 0
    %849 = vmatmul.mubr.bf16.gmra.mrb[0].mxu0 %v706
    %v850 = vpop.f32.mrb[0].mxu0
    %v851 = vadd.f32 0.0, %v850
    %v852 = vpop.f32.mrb[0].mxu0
    %v853 = vpop.f32.mrb[0].mxu0
    %v854 = vadd.f32 0.0, %v853
    %v855 = vpop.f32.mrb[0].mxu0
    %856 = vmatprep.mubr.bf16.mxu0 0
    %857 = vmatmul.mubr.bf16.gmra.mrb[0].mxu0 %v709
    %v858 = vpop.f32.mrb[0].mxu0
    %v859 = vadd.f32 0.0, %v858
    %v860 = vpop.f32.mrb[0].mxu0
    %v861 = vpop.f32.mrb[0].mxu0
    %v862 = vadd.f32 0.0, %v861
    %v863 = vpop.f32.mrb[0].mxu0
    %864 = vmatprep.mubr.bf16.mxu0 0
    %865 = vmatmul.mubr.bf16.gmra.mrb[0].mxu0 %v712
    %v866 = vpop.f32.mrb[0].mxu0
    %v867 = vadd.f32 0.0, %v866
    %v868 = vpop.f32.mrb[0].mxu0
    %v869 = vpop.f32.mrb[0].mxu0
    %v870 = vadd.f32 0.0, %v869
    %v871 = vpop.f32.mrb[0].mxu0
    %872 = vmatprep.mubr.bf16.mxu0 0
    %873 = vmatmul.mubr.bf16.gmra.mrb[0].mxu0 %v715
    %v874 = vpop.f32.mrb[0].mxu0
    %v875 = vadd.f32 0.0, %v874
    %v876 = vpop.f32.mrb[0].mxu0
    %v877 = vpop.f32.mrb[0].mxu0
    %v878 = vadd.f32 0.0, %v877
    %v879 = vpop.f32.mrb[0].mxu0
    %880 = vmatprep.mubr.bf16.mxu0 0
    %881 = vmatmul.mubr.bf16.gmra.mrb[0].mxu0 %v718
    %v882 = vpop.f32.mrb[0].mxu0
    %v883 = vadd.f32 0.0, %v882
    %v884 = vpop.f32.mrb[0].mxu0
    %v885 = vpop.f32.mrb[0].mxu0
    %v886 = vadd.f32 0.0, %v885
    %v887 = vpop.f32.mrb[0].mxu0
    %888 = vmatprep.mubr.bf16.mxu0 0
    %889 = vmatmul.mubr.bf16.gmra.mrb[0].mxu0 %v721
    %v890 = vpop.f32.mrb[0].mxu0
    %v891 = vadd.f32 0.0, %v890
    %v892 = vpop.f32.mrb[0].mxu0
    %v893 = vpop.f32.mrb[0].mxu0
    %v894 = vadd.f32 0.0, %v893
    %v895 = vpop.f32.mrb[0].mxu0
    %896 = vmatprep.mubr.bf16.mxu0 0
    %897 = vmatmul.mubr.bf16.gmra.mrb[0].mxu0 %v724
    %v898 = vpop.f32.mrb[0].mxu0
    %v899 = vadd.f32 0.0, %v898
    %v900 = vpop.f32.mrb[0].mxu0
    %v901 = vpop.f32.mrb[0].mxu0
    %v902 = vadd.f32 0.0, %v901
    %v903 = vpop.f32.mrb[0].mxu0
    %904 = vmatprep.mubr.bf16.mxu0 0
    %905 = vmatmul.mubr.bf16.gmra.mrb[0].mxu0 %v727
    %v906 = vpop.f32.mrb[0].mxu0
    %v907 = vadd.f32 0.0, %v906
    %v908 = vpop.f32.mrb[0].mxu0
    %v909 = vpop.f32.mrb[0].mxu0
    %v910 = vadd.f32 0.0, %v909
    %v911 = vpop.f32.mrb[0].mxu0
    %912 = vmatprep.mubr.bf16.mxu0 0
    %913 = vmatmul.mubr.bf16.gmra.mrb[0].mxu0 %v730
    %v914 = vpop.f32.mrb[0].mxu0
    %v915 = vadd.f32 0.0, %v914
    %v916 = vpop.f32.mrb[0].mxu0
    %v917 = vpop.f32.mrb[0].mxu0
    %v918 = vadd.f32 0.0, %v917
    %v919 = vpop.f32.mrb[0].mxu0
    %920 = vmatprep.mubr.bf16.mxu0 0
    %921 = vmatmul.mubr.bf16.gmra.mrb[0].mxu0 %v733
    %v922 = vpop.f32.mrb[0].mxu0
    %v923 = vadd.f32 0.0, %v922
    %v924 = vpop.f32.mrb[0].mxu0
    %v925 = vpop.f32.mrb[0].mxu0
    %v926 = vadd.f32 0.0, %v925
    %v927 = vpop.f32.mrb[0].mxu0
    %928 = vmatprep.mubr.bf16.mxu0 0
    %929 = vmatmul.mubr.bf16.gmra.mrb[0].mxu0 %v736
    %v930 = vpop.f32.mrb[0].mxu0
    %v931 = vadd.f32 0.0, %v930
    %v932 = vpop.f32.mrb[0].mxu0
    %v933 = vpop.f32.mrb[0].mxu0
    %v934 = vadd.f32 0.0, %v933
    %v935 = vpop.f32.mrb[0].mxu0
    %936 = vmatprep.mubr.bf16.mxu0 0
    %937 = vmatmul.mubr.bf16.gmra.mrb[0].mxu0 %v739
    %v938 = vpop.f32.mrb[0].mxu0
    %v939 = vadd.f32 0.0, %v938
    %v940 = vpop.f32.mrb[0].mxu0
    %v941 = vpop.f32.mrb[0].mxu0
    %v942 = vadd.f32 0.0, %v941
    %v943 = vpop.f32.mrb[0].mxu0
    %944 = vmatprep.mubr.bf16.mxu0 0
    %945 = vmatmul.mubr.bf16.gmra.mrb[0].mxu0 %v742
    %v946 = vpop.f32.mrb[0].mxu0
    %v947 = vadd.f32 0.0, %v946
    %v948 = vpop.f32.mrb[0].mxu0
    %v949 = vpop.f32.mrb[0].mxu0
    %v950 = vpop.f32.mrb[0].mxu0
    %951 = vdwg.mxu0
    %v952 = vmax.f32 %v354, %v779
    %v953 = vmax.f32 %v357, %v782
    %v954 = vmax.f32 %v362, %v787
    %v955 = vmax.f32 %v365, %v790
    %v956 = vmax.f32 %v370, %v795
    %v957 = vmax.f32 %v373, %v798
    %v958 = vmax.f32 %v378, %v803
    %v959 = vmax.f32 %v381, %v806
    %v960 = vmax.f32 %v386, %v811
    %v961 = vmax.f32 %v389, %v814
    %v962 = vmax.f32 %v394, %v819
    %v963 = vmax.f32 %v397, %v822
    %v964 = vmax.f32 %v402, %v827
    %v965 = vmax.f32 %v405, %v830
    %v966 = vmax.f32 %v410, %v835
    %v967 = vmax.f32 %v413, %v838
    %v968 = vmax.f32 %v418, %v843
    %v969 = vmax.f32 %v421, %v846
    %v970 = vmax.f32 %v426, %v851
    %v971 = vmax.f32 %v429, %v854
    %v972 = vmax.f32 %v434, %v859
    %v973 = vmax.f32 %v437, %v862
    %v974 = vmax.f32 %v442, %v867
    %v975 = vmax.f32 %v445, %v870
    %v976 = vmax.f32 %v450, %v875
    %v977 = vmax.f32 %v453, %v878
    %v978 = vmax.f32 %v458, %v883
    %v979 = vmax.f32 %v461, %v886
    %v980 = vmax.f32 %v466, %v891
    %v981 = vmax.f32 %v469, %v894
    %v982 = vmax.f32 %v474, %v899
    %v983 = vmax.f32 %v477, %v902
    %v984 = vmax.f32 %v482, %v907
    %v985 = vmax.f32 %v485, %v910
    %v986 = vmax.f32 %v490, %v915
    %v987 = vmax.f32 %v493, %v918
    %v988 = vmax.f32 %v498, %v923
    %v989 = vmax.f32 %v501, %v926
    %v990 = vmax.f32 %v506, %v931
    %v991 = vmax.f32 %v509, %v934
    %v992 = vmax.f32 %v514, %v939
    %v993 = vmax.f32 %v517, %v942
    %v994 = vmax.f32 %v522, %v947
    %v995 = vld [vmem:[%s2] sm:$0xf]
    %v996 = vld [vmem:[%s2 + $0x4] sm:$0xf]
    %v997 = vld [vmem:[%s2 + $0x8] sm:$0xf]
    %v998 = vld [vmem:[%s2 + $0xc] sm:$0xf]
    %v999 = vld [vmem:[%s2 + $0x10] sm:$0xf]
    %v1000 = vld [vmem:[%s2 + $0x14] sm:$0xf]
    %v1001 = vld [vmem:[%s2 + $0x18] sm:$0xf]
    %v1002 = vld [vmem:[%s2 + $0x1c] sm:$0xf]
    %v1003 = vld [vmem:[%s2 + $0x20] sm:$0xf]
    %v1004 = vld [vmem:[%s2 + $0x24] sm:$0xf]
    %v1005 = vld [vmem:[%s2 + $0x28] sm:$0xf]
    %v1006 = vld [vmem:[%s2 + $0x2c] sm:$0xf]
    %v1007 = vld [vmem:[%s2 + $0x30] sm:$0xf]
    %v1008 = vld [vmem:[%s2 + $0x34] sm:$0xf]
    %v1009 = vld [vmem:[%s2 + $0x38] sm:$0xf]
    %v1010 = vld [vmem:[%s2 + $0x3c] sm:$0xf]
    %v1011 = vld [vmem:[%s2 + $0x40] sm:$0xf]
    %v1012 = vld [vmem:[%s2 + $0x44] sm:$0xf]
    %v1013 = vld [vmem:[%s2 + $0x48] sm:$0xf]
    %v1014 = vld [vmem:[%s2 + $0x4c] sm:$0xf]
    %v1015 = vld [vmem:[%s2 + $0x50] sm:$0xf]
    %v1016 = vld [vmem:[%s2 + $0x54] sm:$0xf]
    %v1017 = vld [vmem:[%s2 + $0x58] sm:$0xf]
    %v1018 = vld [vmem:[%s2 + $0x5c] sm:$0xf]
    %v1019 = vld [vmem:[%s2 + $0x60] sm:$0xf]
    %v1020 = vld [vmem:[%s2 + $0x64] sm:$0xf]
    %v1021 = vld [vmem:[%s2 + $0x68] sm:$0xf]
    %v1022 = vld [vmem:[%s2 + $0x6c] sm:$0xf]
    %v1023 = vld [vmem:[%s2 + $0x70] sm:$0xf]
    %v1024 = vld [vmem:[%s2 + $0x74] sm:$0xf]
    %v1025 = vld [vmem:[%s2 + $0x78] sm:$0xf]
    %v1026 = vld [vmem:[%s2 + $0x7c] sm:$0xf]
    %v1027 = vld [vmem:[%s2 + $0x80] sm:$0xf]
    %v1028 = vld [vmem:[%s2 + $0x84] sm:$0xf]
    %v1029 = vld [vmem:[%s2 + $0x88] sm:$0xf]
    %v1030 = vld [vmem:[%s2 + $0x8c] sm:$0xf]
    %v1031 = vld [vmem:[%s2 + $0x90] sm:$0xf]
    %v1032 = vld [vmem:[%s2 + $0x94] sm:$0xf]
    %v1033 = vld [vmem:[%s2 + $0x98] sm:$0xf]
    %v1034 = vld [vmem:[%s2 + $0x9c] sm:$0xf]
    %v1035 = vld [vmem:[%s2 + $0xa0] sm:$0xf]
    %v1036 = vld [vmem:[%s2 + $0xa4] sm:$0xf]
    %v1037 = vld [vmem:[%s2 + $0xa8] sm:$0x1]
    %v1081 = vunpack.c.l.b16 %v995
    %v1082 = vunpack.c.l.b16 %v996
    %v1083 = vunpack.c.l.b16 %v997
    %v1084 = vunpack.c.l.b16 %v998
    %v1085 = vunpack.c.l.b16 %v999
    %v1086 = vunpack.c.l.b16 %v1000
    %v1087 = vunpack.c.l.b16 %v1001
    %v1088 = vunpack.c.l.b16 %v1002
    %v1089 = vunpack.c.l.b16 %v1003
    %v1090 = vunpack.c.l.b16 %v1004
    %v1091 = vunpack.c.l.b16 %v1005
    %v1092 = vunpack.c.l.b16 %v1006
    %v1093 = vunpack.c.l.b16 %v1007
    %v1094 = vunpack.c.l.b16 %v1008
    %v1095 = vunpack.c.l.b16 %v1009
    %v1096 = vunpack.c.l.b16 %v1010
    %v1097 = vunpack.c.l.b16 %v1011
    %v1098 = vunpack.c.l.b16 %v1012
    %v1099 = vunpack.c.l.b16 %v1013
    %v1100 = vunpack.c.l.b16 %v1014
    %v1101 = vunpack.c.l.b16 %v1015
    %v1102 = vunpack.c.l.b16 %v1016
    %v1103 = vunpack.c.l.b16 %v1017
    %v1104 = vunpack.c.l.b16 %v1018
    %v1105 = vunpack.c.l.b16 %v1019
    %v1106 = vunpack.c.l.b16 %v1020
    %v1107 = vunpack.c.l.b16 %v1021
    %v1108 = vunpack.c.l.b16 %v1022
    %v1109 = vunpack.c.l.b16 %v1023
    %v1110 = vunpack.c.l.b16 %v1024
    %v1111 = vunpack.c.l.b16 %v1025
    %v1112 = vunpack.c.l.b16 %v1026
    %v1113 = vunpack.c.l.b16 %v1027
    %v1114 = vunpack.c.l.b16 %v1028
    %v1115 = vunpack.c.l.b16 %v1029
    %v1116 = vunpack.c.l.b16 %v1030
    %v1117 = vunpack.c.l.b16 %v1031
    %v1118 = vunpack.c.l.b16 %v1032
    %v1119 = vunpack.c.l.b16 %v1033
    %v1120 = vunpack.c.l.b16 %v1034
    %v1121 = vunpack.c.l.b16 %v1035
    %v1122 = vunpack.c.l.b16 %v1036
    %v1123 = vunpack.c.l.b16 %v1037
    %v1124 = vpack.c.b16 %v1082, %v1081
    %v1125 = vpack.c.b16 %v1084, %v1083
    %v1126 = vpack.c.b16 %v1086, %v1085
    %v1127 = vpack.c.b16 %v1088, %v1087
    %v1128 = vpack.c.b16 %v1090, %v1089
    %v1129 = vpack.c.b16 %v1092, %v1091
    %v1130 = vpack.c.b16 %v1094, %v1093
    %v1131 = vpack.c.b16 %v1096, %v1095
    %v1132 = vpack.c.b16 %v1098, %v1097
    %v1133 = vpack.c.b16 %v1100, %v1099
    %v1134 = vpack.c.b16 %v1102, %v1101
    %v1135 = vpack.c.b16 %v1104, %v1103
    %v1136 = vpack.c.b16 %v1106, %v1105
    %v1137 = vpack.c.b16 %v1108, %v1107
    %v1138 = vpack.c.b16 %v1110, %v1109
    %v1139 = vpack.c.b16 %v1112, %v1111
    %v1140 = vpack.c.b16 %v1114, %v1113
    %v1141 = vpack.c.b16 %v1116, %v1115
    %v1142 = vpack.c.b16 %v1118, %v1117
    %v1143 = vpack.c.b16 %v1120, %v1119
    %v1144 = vpack.c.b16 %v1122, %v1121
    %v1145 = vpack.c.b16 %v1123, %v1123
    %v1147 = vsel %vm245, %v1124, 0
    %v1150 = vsel %vm245, %v1125, 0
    %v1153 = vsel %vm245, %v1126, 0
    %v1156 = vsel %vm245, %v1127, 0
    %v1159 = vsel %vm245, %v1128, 0
    %v1162 = vsel %vm245, %v1129, 0
    %v1165 = vsel %vm245, %v1130, 0
    %v1168 = vsel %vm245, %v1131, 0
    %v1171 = vsel %vm245, %v1132, 0
    %v1174 = vsel %vm245, %v1133, 0
    %v1177 = vsel %vm245, %v1134, 0
    %v1180 = vsel %vm245, %v1135, 0
    %v1183 = vsel %vm245, %v1136, 0
    %v1186 = vsel %vm245, %v1137, 0
    %v1189 = vsel %vm245, %v1138, 0
    %v1192 = vsel %vm245, %v1139, 0
    %v1195 = vsel %vm245, %v1140, 0
    %v1198 = vsel %vm245, %v1141, 0
    %v1201 = vsel %vm245, %v1142, 0
    %v1204 = vsel %vm245, %v1143, 0
    %v1207 = vsel %vm245, %v1144, 0
    %v1210 = vsel %vm245, %v1145, 0
    %1212 = vmatprep.subr.bf16.mxu0 0
    %1213 = vmatpush1.bf16.msra.mxu0 %v242
    %1214 = vmatprep.subr.bf16.mxu0 0
    %1215 = vmatpush1.bf16.msra.mxu0 %v317
    %1216 = vmatprep.subr.bf16.mxu0 0
    %1217 = vmatpush1.bf16.msra.mxu0 0
    %1218 = vmatprep.subr.bf16.mxu0 0
    %1219 = vmatpush1.bf16.msra.mxu0 0
    %1220 = vmatprep.subr.bf16.mxu0 0
    %1221 = vmatpush1.bf16.msra.mxu0 0
    %1222 = vmatprep.subr.bf16.mxu0 0
    %1223 = vmatpush1.bf16.msra.mxu0 0
    %1224 = vmatprep.subr.bf16.mxu0 0
    %1225 = vmatpush1.bf16.msra.mxu0 0
    %1226 = vmatprep.subr.bf16.mxu0 0
    %1227 = vmatpush1.bf16.msra.mxu0 0
    %1228 = vmatprep.subr.bf16.mxu0 0
    %1229 = vmatpush1.bf16.msra.mxu0 0
    %1230 = vmatprep.subr.bf16.mxu0 0
    %1231 = vmatpush1.bf16.msra.mxu0 0
    %1232 = vmatprep.subr.bf16.mxu0 0
    %1233 = vmatpush1.bf16.msra.mxu0 0
    %1234 = vmatprep.subr.bf16.mxu0 0
    %1235 = vmatpush1.bf16.msra.mxu0 0
    %1236 = vmatprep.subr.bf16.mxu0 0
    %1237 = vmatpush1.bf16.msra.mxu0 0
    %1238 = vmatprep.subr.bf16.mxu0 0
    %1239 = vmatpush1.bf16.msra.mxu0 0
    %1240 = vmatprep.subr.bf16.mxu0 0
    %1241 = vmatpush1.bf16.msra.mxu0 0
    %1242 = vmatprep.subr.bf16.mxu0 0
    %1243 = vmatpush1.bf16.msra.mxu0 0
    %1244 = vmatprep.mubr.bf16.mxu0 0
    %1245 = vmatmul.mubr.bf16.gmra.mrb[0].mxu0 %v1147
    %v1246 = vpop.f32.mrb[0].mxu0
    %v1247 = vadd.f32 0.0, %v1246
    %v1248 = vpop.f32.mrb[0].mxu0
    %v1249 = vpop.f32.mrb[0].mxu0
    %v1250 = vadd.f32 0.0, %v1249
    %v1251 = vpop.f32.mrb[0].mxu0
    %1252 = vmatprep.mubr.bf16.mxu0 0
    %1253 = vmatmul.mubr.bf16.gmra.mrb[0].mxu0 %v1150
    %v1254 = vpop.f32.mrb[0].mxu0
    %v1255 = vadd.f32 0.0, %v1254
    %v1256 = vpop.f32.mrb[0].mxu0
    %v1257 = vpop.f32.mrb[0].mxu0
    %v1258 = vadd.f32 0.0, %v1257
    %v1259 = vpop.f32.mrb[0].mxu0
    %1260 = vmatprep.mubr.bf16.mxu0 0
    %1261 = vmatmul.mubr.bf16.gmra.mrb[0].mxu0 %v1153
    %v1262 = vpop.f32.mrb[0].mxu0
    %v1263 = vadd.f32 0.0, %v1262
    %v1264 = vpop.f32.mrb[0].mxu0
    %v1265 = vpop.f32.mrb[0].mxu0
    %v1266 = vadd.f32 0.0, %v1265
    %v1267 = vpop.f32.mrb[0].mxu0
    %1268 = vmatprep.mubr.bf16.mxu0 0
    %1269 = vmatmul.mubr.bf16.gmra.mrb[0].mxu0 %v1156
    %v1270 = vpop.f32.mrb[0].mxu0
    %v1271 = vadd.f32 0.0, %v1270
    %v1272 = vpop.f32.mrb[0].mxu0
    %v1273 = vpop.f32.mrb[0].mxu0
    %v1274 = vadd.f32 0.0, %v1273
    %v1275 = vpop.f32.mrb[0].mxu0
    %1276 = vmatprep.mubr.bf16.mxu0 0
    %1277 = vmatmul.mubr.bf16.gmra.mrb[0].mxu0 %v1159
    %v1278 = vpop.f32.mrb[0].mxu0
    %v1279 = vadd.f32 0.0, %v1278
    %v1280 = vpop.f32.mrb[0].mxu0
    %v1281 = vpop.f32.mrb[0].mxu0
    %v1282 = vadd.f32 0.0, %v1281
    %v1283 = vpop.f32.mrb[0].mxu0
    %1284 = vmatprep.mubr.bf16.mxu0 0
    %1285 = vmatmul.mubr.bf16.gmra.mrb[0].mxu0 %v1162
    %v1286 = vpop.f32.mrb[0].mxu0
    %v1287 = vadd.f32 0.0, %v1286
    %v1288 = vpop.f32.mrb[0].mxu0
    %v1289 = vpop.f32.mrb[0].mxu0
    %v1290 = vadd.f32 0.0, %v1289
    %v1291 = vpop.f32.mrb[0].mxu0
    %1292 = vmatprep.mubr.bf16.mxu0 0
    %1293 = vmatmul.mubr.bf16.gmra.mrb[0].mxu0 %v1165
    %v1294 = vpop.f32.mrb[0].mxu0
    %v1295 = vadd.f32 0.0, %v1294
    %v1296 = vpop.f32.mrb[0].mxu0
    %v1297 = vpop.f32.mrb[0].mxu0
    %v1298 = vadd.f32 0.0, %v1297
    %v1299 = vpop.f32.mrb[0].mxu0
    %1300 = vmatprep.mubr.bf16.mxu0 0
    %1301 = vmatmul.mubr.bf16.gmra.mrb[0].mxu0 %v1168
    %v1302 = vpop.f32.mrb[0].mxu0
    %v1303 = vadd.f32 0.0, %v1302
    %v1304 = vpop.f32.mrb[0].mxu0
    %v1305 = vpop.f32.mrb[0].mxu0
    %v1306 = vadd.f32 0.0, %v1305
    %v1307 = vpop.f32.mrb[0].mxu0
    %1308 = vmatprep.mubr.bf16.mxu0 0
    %1309 = vmatmul.mubr.bf16.gmra.mrb[0].mxu0 %v1171
    %v1310 = vpop.f32.mrb[0].mxu0
    %v1311 = vadd.f32 0.0, %v1310
    %v1312 = vpop.f32.mrb[0].mxu0
    %v1313 = vpop.f32.mrb[0].mxu0
    %v1314 = vadd.f32 0.0, %v1313
    %v1315 = vpop.f32.mrb[0].mxu0
    %1316 = vmatprep.mubr.bf16.mxu0 0
    %1317 = vmatmul.mubr.bf16.gmra.mrb[0].mxu0 %v1174
    %v1318 = vpop.f32.mrb[0].mxu0
    %v1319 = vadd.f32 0.0, %v1318
    %v1320 = vpop.f32.mrb[0].mxu0
    %v1321 = vpop.f32.mrb[0].mxu0
    %v1322 = vadd.f32 0.0, %v1321
    %v1323 = vpop.f32.mrb[0].mxu0
    %1324 = vmatprep.mubr.bf16.mxu0 0
    %1325 = vmatmul.mubr.bf16.gmra.mrb[0].mxu0 %v1177
    %v1326 = vpop.f32.mrb[0].mxu0
    %v1327 = vadd.f32 0.0, %v1326
    %v1328 = vpop.f32.mrb[0].mxu0
    %v1329 = vpop.f32.mrb[0].mxu0
    %v1330 = vadd.f32 0.0, %v1329
    %v1331 = vpop.f32.mrb[0].mxu0
    %1332 = vmatprep.mubr.bf16.mxu0 0
    %1333 = vmatmul.mubr.bf16.gmra.mrb[0].mxu0 %v1180
    %v1334 = vpop.f32.mrb[0].mxu0
    %v1335 = vadd.f32 0.0, %v1334
    %v1336 = vpop.f32.mrb[0].mxu0
    %v1337 = vpop.f32.mrb[0].mxu0
    %v1338 = vadd.f32 0.0, %v1337
    %v1339 = vpop.f32.mrb[0].mxu0
    %1340 = vmatprep.mubr.bf16.mxu0 0
    %1341 = vmatmul.mubr.bf16.gmra.mrb[0].mxu0 %v1183
    %v1342 = vpop.f32.mrb[0].mxu0
    %v1343 = vadd.f32 0.0, %v1342
    %v1344 = vpop.f32.mrb[0].mxu0
    %v1345 = vpop.f32.mrb[0].mxu0
    %v1346 = vadd.f32 0.0, %v1345
    %v1347 = vpop.f32.mrb[0].mxu0
    %1348 = vmatprep.mubr.bf16.mxu0 0
    %1349 = vmatmul.mubr.bf16.gmra.mrb[0].mxu0 %v1186
    %v1350 = vpop.f32.mrb[0].mxu0
    %v1351 = vadd.f32 0.0, %v1350
    %v1352 = vpop.f32.mrb[0].mxu0
    %v1353 = vpop.f32.mrb[0].mxu0
    %v1354 = vadd.f32 0.0, %v1353
    %v1355 = vpop.f32.mrb[0].mxu0
    %1356 = vmatprep.mubr.bf16.mxu0 0
    %1357 = vmatmul.mubr.bf16.gmra.mrb[0].mxu0 %v1189
    %v1358 = vpop.f32.mrb[0].mxu0
    %v1359 = vadd.f32 0.0, %v1358
    %v1360 = vpop.f32.mrb[0].mxu0
    %v1361 = vpop.f32.mrb[0].mxu0
    %v1362 = vadd.f32 0.0, %v1361
    %v1363 = vpop.f32.mrb[0].mxu0
    %1364 = vmatprep.mubr.bf16.mxu0 0
    %1365 = vmatmul.mubr.bf16.gmra.mrb[0].mxu0 %v1192
    %v1366 = vpop.f32.mrb[0].mxu0
    %v1367 = vadd.f32 0.0, %v1366
    %v1368 = vpop.f32.mrb[0].mxu0
    %v1369 = vpop.f32.mrb[0].mxu0
    %v1370 = vadd.f32 0.0, %v1369
    %v1371 = vpop.f32.mrb[0].mxu0
    %1372 = vmatprep.mubr.bf16.mxu0 0
    %1373 = vmatmul.mubr.bf16.gmra.mrb[0].mxu0 %v1195
    %v1374 = vpop.f32.mrb[0].mxu0
    %v1375 = vadd.f32 0.0, %v1374
    %v1376 = vpop.f32.mrb[0].mxu0
    %v1377 = vpop.f32.mrb[0].mxu0
    %v1378 = vadd.f32 0.0, %v1377
    %v1379 = vpop.f32.mrb[0].mxu0
    %1380 = vmatprep.mubr.bf16.mxu0 0
    %1381 = vmatmul.mubr.bf16.gmra.mrb[0].mxu0 %v1198
    %v1382 = vpop.f32.mrb[0].mxu0
    %v1383 = vadd.f32 0.0, %v1382
    %v1384 = vpop.f32.mrb[0].mxu0
    %v1385 = vpop.f32.mrb[0].mxu0
    %v1386 = vadd.f32 0.0, %v1385
    %v1387 = vpop.f32.mrb[0].mxu0
    %1388 = vmatprep.mubr.bf16.mxu0 0
    %1389 = vmatmul.mubr.bf16.gmra.mrb[0].mxu0 %v1201
    %v1390 = vpop.f32.mrb[0].mxu0
    %v1391 = vadd.f32 0.0, %v1390
    %v1392 = vpop.f32.mrb[0].mxu0
    %v1393 = vpop.f32.mrb[0].mxu0
    %v1394 = vadd.f32 0.0, %v1393
    %v1395 = vpop.f32.mrb[0].mxu0
    %1396 = vmatprep.mubr.bf16.mxu0 0
    %1397 = vmatmul.mubr.bf16.gmra.mrb[0].mxu0 %v1204
    %v1398 = vpop.f32.mrb[0].mxu0
    %v1399 = vadd.f32 0.0, %v1398
    %v1400 = vpop.f32.mrb[0].mxu0
    %v1401 = vpop.f32.mrb[0].mxu0
    %v1402 = vadd.f32 0.0, %v1401
    %v1403 = vpop.f32.mrb[0].mxu0
    %1404 = vmatprep.mubr.bf16.mxu0 0
    %1405 = vmatmul.mubr.bf16.gmra.mrb[0].mxu0 %v1207
    %v1406 = vpop.f32.mrb[0].mxu0
    %v1407 = vadd.f32 0.0, %v1406
    %v1408 = vpop.f32.mrb[0].mxu0
    %v1409 = vpop.f32.mrb[0].mxu0
    %v1410 = vadd.f32 0.0, %v1409
    %v1411 = vpop.f32.mrb[0].mxu0
    %1412 = vmatprep.mubr.bf16.mxu0 0
    %1413 = vmatmul.mubr.bf16.gmra.mrb[0].mxu0 %v1210
    %v1414 = vpop.f32.mrb[0].mxu0
    %v1415 = vadd.f32 0.0, %v1414
    %v1416 = vpop.f32.mrb[0].mxu0
    %v1417 = vpop.f32.mrb[0].mxu0
    %v1418 = vpop.f32.mrb[0].mxu0
    %1419 = vdwg.mxu0
    %v1420 = vld [vmem:[%s3] sm:$0xf]
    %v1421 = vld [vmem:[%s3 + $0x4] sm:$0xf]
    %v1422 = vld [vmem:[%s3 + $0x8] sm:$0xf]
    %v1423 = vld [vmem:[%s3 + $0xc] sm:$0xf]
    %v1424 = vld [vmem:[%s3 + $0x10] sm:$0xf]
    %v1425 = vld [vmem:[%s3 + $0x14] sm:$0xf]
    %v1426 = vld [vmem:[%s3 + $0x18] sm:$0xf]
    %v1427 = vld [vmem:[%s3 + $0x1c] sm:$0xf]
    %v1428 = vld [vmem:[%s3 + $0x20] sm:$0xf]
    %v1429 = vld [vmem:[%s3 + $0x24] sm:$0xf]
    %v1430 = vld [vmem:[%s3 + $0x28] sm:$0xf]
    %v1431 = vld [vmem:[%s3 + $0x2c] sm:$0xf]
    %v1432 = vld [vmem:[%s3 + $0x30] sm:$0xf]
    %v1433 = vld [vmem:[%s3 + $0x34] sm:$0xf]
    %v1434 = vld [vmem:[%s3 + $0x38] sm:$0xf]
    %v1435 = vld [vmem:[%s3 + $0x3c] sm:$0xf]
    %v1436 = vld [vmem:[%s3 + $0x40] sm:$0xf]
    %v1437 = vld [vmem:[%s3 + $0x44] sm:$0xf]
    %v1438 = vld [vmem:[%s3 + $0x48] sm:$0xf]
    %v1439 = vld [vmem:[%s3 + $0x4c] sm:$0xf]
    %v1440 = vld [vmem:[%s3 + $0x50] sm:$0xf]
    %v1441 = vld [vmem:[%s3 + $0x54] sm:$0xf]
    %v1442 = vld [vmem:[%s3 + $0x58] sm:$0xf]
    %v1443 = vld [vmem:[%s3 + $0x5c] sm:$0xf]
    %v1444 = vld [vmem:[%s3 + $0x60] sm:$0xf]
    %v1445 = vld [vmem:[%s3 + $0x64] sm:$0xf]
    %v1446 = vld [vmem:[%s3 + $0x68] sm:$0xf]
    %v1447 = vld [vmem:[%s3 + $0x6c] sm:$0xf]
    %v1448 = vld [vmem:[%s3 + $0x70] sm:$0xf]
    %v1449 = vld [vmem:[%s3 + $0x74] sm:$0xf]
    %v1450 = vld [vmem:[%s3 + $0x78] sm:$0xf]
    %v1451 = vld [vmem:[%s3 + $0x7c] sm:$0xf]
    %v1452 = vld [vmem:[%s3 + $0x80] sm:$0xf]
    %v1453 = vld [vmem:[%s3 + $0x84] sm:$0xf]
    %v1454 = vld [vmem:[%s3 + $0x88] sm:$0xf]
    %v1455 = vld [vmem:[%s3 + $0x8c] sm:$0xf]
    %v1456 = vld [vmem:[%s3 + $0x90] sm:$0xf]
    %v1457 = vld [vmem:[%s3 + $0x94] sm:$0xf]
    %v1458 = vld [vmem:[%s3 + $0x98] sm:$0xf]
    %v1459 = vld [vmem:[%s3 + $0x9c] sm:$0xf]
    %v1460 = vld [vmem:[%s3 + $0xa0] sm:$0xf]
    %v1461 = vld [vmem:[%s3 + $0xa4] sm:$0xf]
    %v1462 = vld [vmem:[%s3 + $0xa8] sm:$0x1]
    %v1506 = vunpack.c.l.b16 %v1420
    %v1507 = vunpack.c.l.b16 %v1421
    %v1508 = vunpack.c.l.b16 %v1422
    %v1509 = vunpack.c.l.b16 %v1423
    %v1510 = vunpack.c.l.b16 %v1424
    %v1511 = vunpack.c.l.b16 %v1425
    %v1512 = vunpack.c.l.b16 %v1426
    %v1513 = vunpack.c.l.b16 %v1427
    %v1514 = vunpack.c.l.b16 %v1428
    %v1515 = vunpack.c.l.b16 %v1429
    %v1516 = vunpack.c.l.b16 %v1430
    %v1517 = vunpack.c.l.b16 %v1431
    %v1518 = vunpack.c.l.b16 %v1432
    %v1519 = vunpack.c.l.b16 %v1433
    %v1520 = vunpack.c.l.b16 %v1434
    %v1521 = vunpack.c.l.b16 %v1435
    %v1522 = vunpack.c.l.b16 %v1436
    %v1523 = vunpack.c.l.b16 %v1437
    %v1524 = vunpack.c.l.b16 %v1438
    %v1525 = vunpack.c.l.b16 %v1439
    %v1526 = vunpack.c.l.b16 %v1440
    %v1527 = vunpack.c.l.b16 %v1441
    %v1528 = vunpack.c.l.b16 %v1442
    %v1529 = vunpack.c.l.b16 %v1443
    %v1530 = vunpack.c.l.b16 %v1444
    %v1531 = vunpack.c.l.b16 %v1445
    %v1532 = vunpack.c.l.b16 %v1446
    %v1533 = vunpack.c.l.b16 %v1447
    %v1534 = vunpack.c.l.b16 %v1448
    %v1535 = vunpack.c.l.b16 %v1449
    %v1536 = vunpack.c.l.b16 %v1450
    %v1537 = vunpack.c.l.b16 %v1451
    %v1538 = vunpack.c.l.b16 %v1452
    %v1539 = vunpack.c.l.b16 %v1453
    %v1540 = vunpack.c.l.b16 %v1454
    %v1541 = vunpack.c.l.b16 %v1455
    %v1542 = vunpack.c.l.b16 %v1456
    %v1543 = vunpack.c.l.b16 %v1457
    %v1544 = vunpack.c.l.b16 %v1458
    %v1545 = vunpack.c.l.b16 %v1459
    %v1546 = vunpack.c.l.b16 %v1460
    %v1547 = vunpack.c.l.b16 %v1461
    %v1548 = vunpack.c.l.b16 %v1462
    %v1549 = vpack.c.b16 %v1507, %v1506
    %v1550 = vpack.c.b16 %v1509, %v1508
    %v1551 = vpack.c.b16 %v1511, %v1510
    %v1552 = vpack.c.b16 %v1513, %v1512
    %v1553 = vpack.c.b16 %v1515, %v1514
    %v1554 = vpack.c.b16 %v1517, %v1516
    %v1555 = vpack.c.b16 %v1519, %v1518
    %v1556 = vpack.c.b16 %v1521, %v1520
    %v1557 = vpack.c.b16 %v1523, %v1522
    %v1558 = vpack.c.b16 %v1525, %v1524
    %v1559 = vpack.c.b16 %v1527, %v1526
    %v1560 = vpack.c.b16 %v1529, %v1528
    %v1561 = vpack.c.b16 %v1531, %v1530
    %v1562 = vpack.c.b16 %v1533, %v1532
    %v1563 = vpack.c.b16 %v1535, %v1534
    %v1564 = vpack.c.b16 %v1537, %v1536
    %v1565 = vpack.c.b16 %v1539, %v1538
    %v1566 = vpack.c.b16 %v1541, %v1540
    %v1567 = vpack.c.b16 %v1543, %v1542
    %v1568 = vpack.c.b16 %v1545, %v1544
    %v1569 = vpack.c.b16 %v1547, %v1546
    %v1570 = vpack.c.b16 %v1548, %v1548
    %v1572 = vsel %vm245, %v1549, 0
    %v1575 = vsel %vm245, %v1550, 0
    %v1578 = vsel %vm245, %v1551, 0
    %v1581 = vsel %vm245, %v1552, 0
    %v1584 = vsel %vm245, %v1553, 0
    %v1587 = vsel %vm245, %v1554, 0
    %v1590 = vsel %vm245, %v1555, 0
    %v1593 = vsel %vm245, %v1556, 0
    %v1596 = vsel %vm245, %v1557, 0
    %v1599 = vsel %vm245, %v1558, 0
    %v1602 = vsel %vm245, %v1559, 0
    %v1605 = vsel %vm245, %v1560, 0
    %v1608 = vsel %vm245, %v1561, 0
    %v1611 = vsel %vm245, %v1562, 0
    %v1614 = vsel %vm245, %v1563, 0
    %v1617 = vsel %vm245, %v1564, 0
    %v1620 = vsel %vm245, %v1565, 0
    %v1623 = vsel %vm245, %v1566, 0
    %v1626 = vsel %vm245, %v1567, 0
    %v1629 = vsel %vm245, %v1568, 0
    %v1632 = vsel %vm245, %v1569, 0
    %v1635 = vsel %vm245, %v1570, 0
    %1637 = vmatprep.subr.bf16.mxu0 0
    %1638 = vmatpush1.bf16.msra.mxu0 %v242
    %1639 = vmatprep.subr.bf16.mxu0 0
    %1640 = vmatpush1.bf16.msra.mxu0 %v317
    %1641 = vmatprep.subr.bf16.mxu0 0
    %1642 = vmatpush1.bf16.msra.mxu0 0
    %1643 = vmatprep.subr.bf16.mxu0 0
    %1644 = vmatpush1.bf16.msra.mxu0 0
    %1645 = vmatprep.subr.bf16.mxu0 0
    %1646 = vmatpush1.bf16.msra.mxu0 0
    %1647 = vmatprep.subr.bf16.mxu0 0
    %1648 = vmatpush1.bf16.msra.mxu0 0
    %1649 = vmatprep.subr.bf16.mxu0 0
    %1650 = vmatpush1.bf16.msra.mxu0 0
    %1651 = vmatprep.subr.bf16.mxu0 0
    %1652 = vmatpush1.bf16.msra.mxu0 0
    %1653 = vmatprep.subr.bf16.mxu0 0
    %1654 = vmatpush1.bf16.msra.mxu0 0
    %1655 = vmatprep.subr.bf16.mxu0 0
    %1656 = vmatpush1.bf16.msra.mxu0 0
    %1657 = vmatprep.subr.bf16.mxu0 0
    %1658 = vmatpush1.bf16.msra.mxu0 0
    %1659 = vmatprep.subr.bf16.mxu0 0
    %1660 = vmatpush1.bf16.msra.mxu0 0
    %1661 = vmatprep.subr.bf16.mxu0 0
    %1662 = vmatpush1.bf16.msra.mxu0 0
    %1663 = vmatprep.subr.bf16.mxu0 0
    %1664 = vmatpush1.bf16.msra.mxu0 0
    %1665 = vmatprep.subr.bf16.mxu0 0
    %1666 = vmatpush1.bf16.msra.mxu0 0
    %1667 = vmatprep.subr.bf16.mxu0 0
    %1668 = vmatpush1.bf16.msra.mxu0 0
    %1669 = vmatprep.mubr.bf16.mxu0 0
    %1670 = vmatmul.mubr.bf16.gmra.mrb[0].mxu0 %v1572
    %v1671 = vpop.f32.mrb[0].mxu0
    %v1672 = vadd.f32 0.0, %v1671
    %v1673 = vpop.f32.mrb[0].mxu0
    %v1674 = vpop.f32.mrb[0].mxu0
    %v1675 = vadd.f32 0.0, %v1674
    %v1676 = vpop.f32.mrb[0].mxu0
    %1677 = vmatprep.mubr.bf16.mxu0 0
    %1678 = vmatmul.mubr.bf16.gmra.mrb[0].mxu0 %v1575
    %v1679 = vpop.f32.mrb[0].mxu0
    %v1680 = vadd.f32 0.0, %v1679
    %v1681 = vpop.f32.mrb[0].mxu0
    %v1682 = vpop.f32.mrb[0].mxu0
    %v1683 = vadd.f32 0.0, %v1682
    %v1684 = vpop.f32.mrb[0].mxu0
    %1685 = vmatprep.mubr.bf16.mxu0 0
    %1686 = vmatmul.mubr.bf16.gmra.mrb[0].mxu0 %v1578
    %v1687 = vpop.f32.mrb[0].mxu0
    %v1688 = vadd.f32 0.0, %v1687
    %v1689 = vpop.f32.mrb[0].mxu0
    %v1690 = vpop.f32.mrb[0].mxu0
    %v1691 = vadd.f32 0.0, %v1690
    %v1692 = vpop.f32.mrb[0].mxu0
    %1693 = vmatprep.mubr.bf16.mxu0 0
    %1694 = vmatmul.mubr.bf16.gmra.mrb[0].mxu0 %v1581
    %v1695 = vpop.f32.mrb[0].mxu0
    %v1696 = vadd.f32 0.0, %v1695
    %v1697 = vpop.f32.mrb[0].mxu0
    %v1698 = vpop.f32.mrb[0].mxu0
    %v1699 = vadd.f32 0.0, %v1698
    %v1700 = vpop.f32.mrb[0].mxu0
    %1701 = vmatprep.mubr.bf16.mxu0 0
    %1702 = vmatmul.mubr.bf16.gmra.mrb[0].mxu0 %v1584
    %v1703 = vpop.f32.mrb[0].mxu0
    %v1704 = vadd.f32 0.0, %v1703
    %v1705 = vpop.f32.mrb[0].mxu0
    %v1706 = vpop.f32.mrb[0].mxu0
    %v1707 = vadd.f32 0.0, %v1706
    %v1708 = vpop.f32.mrb[0].mxu0
    %1709 = vmatprep.mubr.bf16.mxu0 0
    %1710 = vmatmul.mubr.bf16.gmra.mrb[0].mxu0 %v1587
    %v1711 = vpop.f32.mrb[0].mxu0
    %v1712 = vadd.f32 0.0, %v1711
    %v1713 = vpop.f32.mrb[0].mxu0
    %v1714 = vpop.f32.mrb[0].mxu0
    %v1715 = vadd.f32 0.0, %v1714
    %v1716 = vpop.f32.mrb[0].mxu0
    %1717 = vmatprep.mubr.bf16.mxu0 0
    %1718 = vmatmul.mubr.bf16.gmra.mrb[0].mxu0 %v1590
    %v1719 = vpop.f32.mrb[0].mxu0
    %v1720 = vadd.f32 0.0, %v1719
    %v1721 = vpop.f32.mrb[0].mxu0
    %v1722 = vpop.f32.mrb[0].mxu0
    %v1723 = vadd.f32 0.0, %v1722
    %v1724 = vpop.f32.mrb[0].mxu0
    %1725 = vmatprep.mubr.bf16.mxu0 0
    %1726 = vmatmul.mubr.bf16.gmra.mrb[0].mxu0 %v1593
    %v1727 = vpop.f32.mrb[0].mxu0
    %v1728 = vadd.f32 0.0, %v1727
    %v1729 = vpop.f32.mrb[0].mxu0
    %v1730 = vpop.f32.mrb[0].mxu0
    %v1731 = vadd.f32 0.0, %v1730
    %v1732 = vpop.f32.mrb[0].mxu0
    %1733 = vmatprep.mubr.bf16.mxu0 0
    %1734 = vmatmul.mubr.bf16.gmra.mrb[0].mxu0 %v1596
    %v1735 = vpop.f32.mrb[0].mxu0
    %v1736 = vadd.f32 0.0, %v1735
    %v1737 = vpop.f32.mrb[0].mxu0
    %v1738 = vpop.f32.mrb[0].mxu0
    %v1739 = vadd.f32 0.0, %v1738
    %v1740 = vpop.f32.mrb[0].mxu0
    %1741 = vmatprep.mubr.bf16.mxu0 0
    %1742 = vmatmul.mubr.bf16.gmra.mrb[0].mxu0 %v1599
    %v1743 = vpop.f32.mrb[0].mxu0
    %v1744 = vadd.f32 0.0, %v1743
    %v1745 = vpop.f32.mrb[0].mxu0
    %v1746 = vpop.f32.mrb[0].mxu0
    %v1747 = vadd.f32 0.0, %v1746
    %v1748 = vpop.f32.mrb[0].mxu0
    %1749 = vmatprep.mubr.bf16.mxu0 0
    %1750 = vmatmul.mubr.bf16.gmra.mrb[0].mxu0 %v1602
    %v1751 = vpop.f32.mrb[0].mxu0
    %v1752 = vadd.f32 0.0, %v1751
    %v1753 = vpop.f32.mrb[0].mxu0
    %v1754 = vpop.f32.mrb[0].mxu0
    %v1755 = vadd.f32 0.0, %v1754
    %v1756 = vpop.f32.mrb[0].mxu0
    %1757 = vmatprep.mubr.bf16.mxu0 0
    %1758 = vmatmul.mubr.bf16.gmra.mrb[0].mxu0 %v1605
    %v1759 = vpop.f32.mrb[0].mxu0
    %v1760 = vadd.f32 0.0, %v1759
    %v1761 = vpop.f32.mrb[0].mxu0
    %v1762 = vpop.f32.mrb[0].mxu0
    %v1763 = vadd.f32 0.0, %v1762
    %v1764 = vpop.f32.mrb[0].mxu0
    %1765 = vmatprep.mubr.bf16.mxu0 0
    %1766 = vmatmul.mubr.bf16.gmra.mrb[0].mxu0 %v1608
    %v1767 = vpop.f32.mrb[0].mxu0
    %v1768 = vadd.f32 0.0, %v1767
    %v1769 = vpop.f32.mrb[0].mxu0
    %v1770 = vpop.f32.mrb[0].mxu0
    %v1771 = vadd.f32 0.0, %v1770
    %v1772 = vpop.f32.mrb[0].mxu0
    %1773 = vmatprep.mubr.bf16.mxu0 0
    %1774 = vmatmul.mubr.bf16.gmra.mrb[0].mxu0 %v1611
    %v1775 = vpop.f32.mrb[0].mxu0
    %v1776 = vadd.f32 0.0, %v1775
    %v1777 = vpop.f32.mrb[0].mxu0
    %v1778 = vpop.f32.mrb[0].mxu0
    %v1779 = vadd.f32 0.0, %v1778
    %v1780 = vpop.f32.mrb[0].mxu0
    %1781 = vmatprep.mubr.bf16.mxu0 0
    %1782 = vmatmul.mubr.bf16.gmra.mrb[0].mxu0 %v1614
    %v1783 = vpop.f32.mrb[0].mxu0
    %v1784 = vadd.f32 0.0, %v1783
    %v1785 = vpop.f32.mrb[0].mxu0
    %v1786 = vpop.f32.mrb[0].mxu0
    %v1787 = vadd.f32 0.0, %v1786
    %v1788 = vpop.f32.mrb[0].mxu0
    %1789 = vmatprep.mubr.bf16.mxu0 0
    %1790 = vmatmul.mubr.bf16.gmra.mrb[0].mxu0 %v1617
    %v1791 = vpop.f32.mrb[0].mxu0
    %v1792 = vadd.f32 0.0, %v1791
    %v1793 = vpop.f32.mrb[0].mxu0
    %v1794 = vpop.f32.mrb[0].mxu0
    %v1795 = vadd.f32 0.0, %v1794
    %v1796 = vpop.f32.mrb[0].mxu0
    %1797 = vmatprep.mubr.bf16.mxu0 0
    %1798 = vmatmul.mubr.bf16.gmra.mrb[0].mxu0 %v1620
    %v1799 = vpop.f32.mrb[0].mxu0
    %v1800 = vadd.f32 0.0, %v1799
    %v1801 = vpop.f32.mrb[0].mxu0
    %v1802 = vpop.f32.mrb[0].mxu0
    %v1803 = vadd.f32 0.0, %v1802
    %v1804 = vpop.f32.mrb[0].mxu0
    %1805 = vmatprep.mubr.bf16.mxu0 0
    %1806 = vmatmul.mubr.bf16.gmra.mrb[0].mxu0 %v1623
    %v1807 = vpop.f32.mrb[0].mxu0
    %v1808 = vadd.f32 0.0, %v1807
    %v1809 = vpop.f32.mrb[0].mxu0
    %v1810 = vpop.f32.mrb[0].mxu0
    %v1811 = vadd.f32 0.0, %v1810
    %v1812 = vpop.f32.mrb[0].mxu0
    %1813 = vmatprep.mubr.bf16.mxu0 0
    %1814 = vmatmul.mubr.bf16.gmra.mrb[0].mxu0 %v1626
    %v1815 = vpop.f32.mrb[0].mxu0
    %v1816 = vadd.f32 0.0, %v1815
    %v1817 = vpop.f32.mrb[0].mxu0
    %v1818 = vpop.f32.mrb[0].mxu0
    %v1819 = vadd.f32 0.0, %v1818
    %v1820 = vpop.f32.mrb[0].mxu0
    %1821 = vmatprep.mubr.bf16.mxu0 0
    %1822 = vmatmul.mubr.bf16.gmra.mrb[0].mxu0 %v1629
    %v1823 = vpop.f32.mrb[0].mxu0
    %v1824 = vadd.f32 0.0, %v1823
    %v1825 = vpop.f32.mrb[0].mxu0
    %v1826 = vpop.f32.mrb[0].mxu0
    %v1827 = vadd.f32 0.0, %v1826
    %v1828 = vpop.f32.mrb[0].mxu0
    %1829 = vmatprep.mubr.bf16.mxu0 0
    %1830 = vmatmul.mubr.bf16.gmra.mrb[0].mxu0 %v1632
    %v1831 = vpop.f32.mrb[0].mxu0
    %v1832 = vadd.f32 0.0, %v1831
    %v1833 = vpop.f32.mrb[0].mxu0
    %v1834 = vpop.f32.mrb[0].mxu0
    %v1835 = vadd.f32 0.0, %v1834
    %v1836 = vpop.f32.mrb[0].mxu0
    %1837 = vmatprep.mubr.bf16.mxu0 0
    %1838 = vmatmul.mubr.bf16.gmra.mrb[0].mxu0 %v1635
    %v1839 = vpop.f32.mrb[0].mxu0
    %v1840 = vadd.f32 0.0, %v1839
    %v1841 = vpop.f32.mrb[0].mxu0
    %v1842 = vpop.f32.mrb[0].mxu0
    %v1843 = vpop.f32.mrb[0].mxu0
    %1844 = vdwg.mxu0
    %v1845 = vmax.f32 %v1247, %v1672
    %v1846 = vmax.f32 %v1250, %v1675
    %v1847 = vmax.f32 %v1255, %v1680
    %v1848 = vmax.f32 %v1258, %v1683
    %v1849 = vmax.f32 %v1263, %v1688
    %v1850 = vmax.f32 %v1266, %v1691
    %v1851 = vmax.f32 %v1271, %v1696
    %v1852 = vmax.f32 %v1274, %v1699
    %v1853 = vmax.f32 %v1279, %v1704
    %v1854 = vmax.f32 %v1282, %v1707
    %v1855 = vmax.f32 %v1287, %v1712
    %v1856 = vmax.f32 %v1290, %v1715
    %v1857 = vmax.f32 %v1295, %v1720
    %v1858 = vmax.f32 %v1298, %v1723
    %v1859 = vmax.f32 %v1303, %v1728
    %v1860 = vmax.f32 %v1306, %v1731
    %v1861 = vmax.f32 %v1311, %v1736
    %v1862 = vmax.f32 %v1314, %v1739
    %v1863 = vmax.f32 %v1319, %v1744
    %v1864 = vmax.f32 %v1322, %v1747
    %v1865 = vmax.f32 %v1327, %v1752
    %v1866 = vmax.f32 %v1330, %v1755
    %v1867 = vmax.f32 %v1335, %v1760
    %v1868 = vmax.f32 %v1338, %v1763
    %v1869 = vmax.f32 %v1343, %v1768
    %v1870 = vmax.f32 %v1346, %v1771
    %v1871 = vmax.f32 %v1351, %v1776
    %v1872 = vmax.f32 %v1354, %v1779
    %v1873 = vmax.f32 %v1359, %v1784
    %v1874 = vmax.f32 %v1362, %v1787
    %v1875 = vmax.f32 %v1367, %v1792
    %v1876 = vmax.f32 %v1370, %v1795
    %v1877 = vmax.f32 %v1375, %v1800
    %v1878 = vmax.f32 %v1378, %v1803
    %v1879 = vmax.f32 %v1383, %v1808
    %v1880 = vmax.f32 %v1386, %v1811
    %v1881 = vmax.f32 %v1391, %v1816
    %v1882 = vmax.f32 %v1394, %v1819
    %v1883 = vmax.f32 %v1399, %v1824
    %v1884 = vmax.f32 %v1402, %v1827
    %v1885 = vmax.f32 %v1407, %v1832
    %v1886 = vmax.f32 %v1410, %v1835
    %v1887 = vmax.f32 %v1415, %v1840
    %v1888 = vmax.f32 %v952, %v1845
    %v1889 = vmax.f32 %v953, %v1846
    %v1890 = vmax.f32 %v954, %v1847
    %v1891 = vmax.f32 %v955, %v1848
    %v1892 = vmax.f32 %v956, %v1849
    %v1893 = vmax.f32 %v957, %v1850
    %v1894 = vmax.f32 %v958, %v1851
    %v1895 = vmax.f32 %v959, %v1852
    %v1896 = vmax.f32 %v960, %v1853
    %v1897 = vmax.f32 %v961, %v1854
    %v1898 = vmax.f32 %v962, %v1855
    %v1899 = vmax.f32 %v963, %v1856
    %v1900 = vmax.f32 %v964, %v1857
    %v1901 = vmax.f32 %v965, %v1858
    %v1902 = vmax.f32 %v966, %v1859
    %v1903 = vmax.f32 %v967, %v1860
    %v1904 = vmax.f32 %v968, %v1861
    %v1905 = vmax.f32 %v969, %v1862
    %v1906 = vmax.f32 %v970, %v1863
    %v1907 = vmax.f32 %v971, %v1864
    %v1908 = vmax.f32 %v972, %v1865
    %v1909 = vmax.f32 %v973, %v1866
    %v1910 = vmax.f32 %v974, %v1867
    %v1911 = vmax.f32 %v975, %v1868
    %v1912 = vmax.f32 %v976, %v1869
    %v1913 = vmax.f32 %v977, %v1870
    %v1914 = vmax.f32 %v978, %v1871
    %v1915 = vmax.f32 %v979, %v1872
    %v1916 = vmax.f32 %v980, %v1873
    %v1917 = vmax.f32 %v981, %v1874
    %v1918 = vmax.f32 %v982, %v1875
    %v1919 = vmax.f32 %v983, %v1876
    %v1920 = vmax.f32 %v984, %v1877
    %v1921 = vmax.f32 %v985, %v1878
    %v1922 = vmax.f32 %v986, %v1879
    %v1923 = vmax.f32 %v987, %v1880
    %v1924 = vmax.f32 %v988, %v1881
    %v1925 = vmax.f32 %v989, %v1882
    %v1926 = vmax.f32 %v990, %v1883
    %v1927 = vmax.f32 %v991, %v1884
    %v1928 = vmax.f32 %v992, %v1885
    %v1929 = vmax.f32 %v993, %v1886
    %v1930 = vmax.f32 %v994, %v1887
    %v1931 = vld [vmem:[#allocation4] sm:$0x1]
    %v1933 = vlaneseq
    %v1934 = vshrl.u32 %v1933, 7
    %v1935 = vsub.s32 0, %v1934
    %v1936 = vrot.slane %v1931, %v1935
    %v1938 = vadd.f32 %v1888, %v1936
    %v1939 = vadd.f32 %v1889, %v1936
    %v1940 = vadd.f32 %v1890, %v1936
    %v1941 = vadd.f32 %v1891, %v1936
    %v1942 = vadd.f32 %v1892, %v1936
    %v1943 = vadd.f32 %v1893, %v1936
    %v1944 = vadd.f32 %v1894, %v1936
    %v1945 = vadd.f32 %v1895, %v1936
    %v1946 = vadd.f32 %v1896, %v1936
    %v1947 = vadd.f32 %v1897, %v1936
    %v1948 = vadd.f32 %v1898, %v1936
    %v1949 = vadd.f32 %v1899, %v1936
    %v1950 = vadd.f32 %v1900, %v1936
    %v1951 = vadd.f32 %v1901, %v1936
    %v1952 = vadd.f32 %v1902, %v1936
    %v1953 = vadd.f32 %v1903, %v1936
    %v1954 = vadd.f32 %v1904, %v1936
    %v1955 = vadd.f32 %v1905, %v1936
    %v1956 = vadd.f32 %v1906, %v1936
    %v1957 = vadd.f32 %v1907, %v1936
    %v1958 = vadd.f32 %v1908, %v1936
    %v1959 = vadd.f32 %v1909, %v1936
    %v1960 = vadd.f32 %v1910, %v1936
    %v1961 = vadd.f32 %v1911, %v1936
    %v1962 = vadd.f32 %v1912, %v1936
    %v1963 = vadd.f32 %v1913, %v1936
    %v1964 = vadd.f32 %v1914, %v1936
    %v1965 = vadd.f32 %v1915, %v1936
    %v1966 = vadd.f32 %v1916, %v1936
    %v1967 = vadd.f32 %v1917, %v1936
    %v1968 = vadd.f32 %v1918, %v1936
    %v1969 = vadd.f32 %v1919, %v1936
    %v1970 = vadd.f32 %v1920, %v1936
    %v1971 = vadd.f32 %v1921, %v1936
    %v1972 = vadd.f32 %v1922, %v1936
    %v1973 = vadd.f32 %v1923, %v1936
    %v1974 = vadd.f32 %v1924, %v1936
    %v1975 = vadd.f32 %v1925, %v1936
    %v1976 = vadd.f32 %v1926, %v1936
    %v1977 = vadd.f32 %v1927, %v1936
    %v1978 = vadd.f32 %v1928, %v1936
    %v1979 = vadd.f32 %v1929, %v1936
    %v1980 = vadd.f32 %v1930, %v1936
    %v1981 = vmax.f32 %v1938, 0.0
    %v1982 = vmax.f32 %v1939, 0.0
    %v1983 = vmax.f32 %v1940, 0.0
    %v1984 = vmax.f32 %v1941, 0.0
    %v1985 = vmax.f32 %v1942, 0.0
    %v1986 = vmax.f32 %v1943, 0.0
    %v1987 = vmax.f32 %v1944, 0.0
    %v1988 = vmax.f32 %v1945, 0.0
    %v1989 = vmax.f32 %v1946, 0.0
    %v1990 = vmax.f32 %v1947, 0.0
    %v1991 = vmax.f32 %v1948, 0.0
    %v1992 = vmax.f32 %v1949, 0.0
    %v1993 = vmax.f32 %v1950, 0.0
    %v1994 = vmax.f32 %v1951, 0.0
    %v1995 = vmax.f32 %v1952, 0.0
    %v1996 = vmax.f32 %v1953, 0.0
    %v1997 = vmax.f32 %v1954, 0.0
    %v1998 = vmax.f32 %v1955, 0.0
    %v1999 = vmax.f32 %v1956, 0.0
    %v2000 = vmax.f32 %v1957, 0.0
    %v2001 = vmax.f32 %v1958, 0.0
    %v2002 = vmax.f32 %v1959, 0.0
    %v2003 = vmax.f32 %v1960, 0.0
    %v2004 = vmax.f32 %v1961, 0.0
    %v2005 = vmax.f32 %v1962, 0.0
    %v2006 = vmax.f32 %v1963, 0.0
    %v2007 = vmax.f32 %v1964, 0.0
    %v2008 = vmax.f32 %v1965, 0.0
    %v2009 = vmax.f32 %v1966, 0.0
    %v2010 = vmax.f32 %v1967, 0.0
    %v2011 = vmax.f32 %v1968, 0.0
    %v2012 = vmax.f32 %v1969, 0.0
    %v2013 = vmax.f32 %v1970, 0.0
    %v2014 = vmax.f32 %v1971, 0.0
    %v2015 = vmax.f32 %v1972, 0.0
    %v2016 = vmax.f32 %v1973, 0.0
    %v2017 = vmax.f32 %v1974, 0.0
    %v2018 = vmax.f32 %v1975, 0.0
    %v2019 = vmax.f32 %v1976, 0.0
    %v2020 = vmax.f32 %v1977, 0.0
    %v2021 = vmax.f32 %v1978, 0.0
    %v2022 = vmax.f32 %v1979, 0.0
    %v2023 = vmax.f32 %v1980, 0.0
    %v2024 = vld [vmem:[#allocation6] sm:$0x1]
    %v2026 = vlaneseq
    %v2027 = vshrl.u32 %v2026, 7
    %v2028 = vsub.s32 0, %v2027
    %v2029 = vrot.slane %v2024, %v2028
    %v2031 = vmul.f32 %v1981, %v2029
    %v2032 = vmul.f32 %v1982, %v2029
    %v2033 = vmul.f32 %v1983, %v2029
    %v2034 = vmul.f32 %v1984, %v2029
    %v2035 = vmul.f32 %v1985, %v2029
    %v2036 = vmul.f32 %v1986, %v2029
    %v2037 = vmul.f32 %v1987, %v2029
    %v2038 = vmul.f32 %v1988, %v2029
    %v2039 = vmul.f32 %v1989, %v2029
    %v2040 = vmul.f32 %v1990, %v2029
    %v2041 = vmul.f32 %v1991, %v2029
    %v2042 = vmul.f32 %v1992, %v2029
    %v2043 = vmul.f32 %v1993, %v2029
    %v2044 = vmul.f32 %v1994, %v2029
    %v2045 = vmul.f32 %v1995, %v2029
    %v2046 = vmul.f32 %v1996, %v2029
    %v2047 = vmul.f32 %v1997, %v2029
    %v2048 = vmul.f32 %v1998, %v2029
    %v2049 = vmul.f32 %v1999, %v2029
    %v2050 = vmul.f32 %v2000, %v2029
    %v2051 = vmul.f32 %v2001, %v2029
    %v2052 = vmul.f32 %v2002, %v2029
    %v2053 = vmul.f32 %v2003, %v2029
    %v2054 = vmul.f32 %v2004, %v2029
    %v2055 = vmul.f32 %v2005, %v2029
    %v2056 = vmul.f32 %v2006, %v2029
    %v2057 = vmul.f32 %v2007, %v2029
    %v2058 = vmul.f32 %v2008, %v2029
    %v2059 = vmul.f32 %v2009, %v2029
    %v2060 = vmul.f32 %v2010, %v2029
    %v2061 = vmul.f32 %v2011, %v2029
    %v2062 = vmul.f32 %v2012, %v2029
    %v2063 = vmul.f32 %v2013, %v2029
    %v2064 = vmul.f32 %v2014, %v2029
    %v2065 = vmul.f32 %v2015, %v2029
    %v2066 = vmul.f32 %v2016, %v2029
    %v2067 = vmul.f32 %v2017, %v2029
    %v2068 = vmul.f32 %v2018, %v2029
    %v2069 = vmul.f32 %v2019, %v2029
    %v2070 = vmul.f32 %v2020, %v2029
    %v2071 = vmul.f32 %v2021, %v2029
    %v2072 = vmul.f32 %v2022, %v2029
    %v2073 = vmul.f32 %v2023, %v2029
    %v2074 = vld [vmem:[#allocation7] sm:$0x1]
    %v2076 = vlaneseq
    %v2077 = vshrl.u32 %v2076, 7
    %v2078 = vsub.s32 0, %v2077
    %v2079 = vrot.slane %v2074, %v2078
    %v2081 = vadd.f32 %v2031, %v2079
    %v2082 = vadd.f32 %v2032, %v2079
    %v2083 = vadd.f32 %v2033, %v2079
    %v2084 = vadd.f32 %v2034, %v2079
    %v2085 = vadd.f32 %v2035, %v2079
    %v2086 = vadd.f32 %v2036, %v2079
    %v2087 = vadd.f32 %v2037, %v2079
    %v2088 = vadd.f32 %v2038, %v2079
    %v2089 = vadd.f32 %v2039, %v2079
    %v2090 = vadd.f32 %v2040, %v2079
    %v2091 = vadd.f32 %v2041, %v2079
    %v2092 = vadd.f32 %v2042, %v2079
    %v2093 = vadd.f32 %v2043, %v2079
    %v2094 = vadd.f32 %v2044, %v2079
    %v2095 = vadd.f32 %v2045, %v2079
    %v2096 = vadd.f32 %v2046, %v2079
    %v2097 = vadd.f32 %v2047, %v2079
    %v2098 = vadd.f32 %v2048, %v2079
    %v2099 = vadd.f32 %v2049, %v2079
    %v2100 = vadd.f32 %v2050, %v2079
    %v2101 = vadd.f32 %v2051, %v2079
    %v2102 = vadd.f32 %v2052, %v2079
    %v2103 = vadd.f32 %v2053, %v2079
    %v2104 = vadd.f32 %v2054, %v2079
    %v2105 = vadd.f32 %v2055, %v2079
    %v2106 = vadd.f32 %v2056, %v2079
    %v2107 = vadd.f32 %v2057, %v2079
    %v2108 = vadd.f32 %v2058, %v2079
    %v2109 = vadd.f32 %v2059, %v2079
    %v2110 = vadd.f32 %v2060, %v2079
    %v2111 = vadd.f32 %v2061, %v2079
    %v2112 = vadd.f32 %v2062, %v2079
    %v2113 = vadd.f32 %v2063, %v2079
    %v2114 = vadd.f32 %v2064, %v2079
    %v2115 = vadd.f32 %v2065, %v2079
    %v2116 = vadd.f32 %v2066, %v2079
    %v2117 = vadd.f32 %v2067, %v2079
    %v2118 = vadd.f32 %v2068, %v2079
    %v2119 = vadd.f32 %v2069, %v2079
    %v2120 = vadd.f32 %v2070, %v2079
    %v2121 = vadd.f32 %v2071, %v2079
    %v2122 = vadd.f32 %v2072, %v2079
    %v2123 = vadd.f32 %v2073, %v2079
    %vm2124 = vcmask 261120
    %2125 = vst.msk [vmem:[%s8] sm:$0xff] %vm2124, %v2081
    %2126 = vst.msk [vmem:[%s8 + $0x8] sm:$0xff] %vm2124, %v2082
    %2127 = vst.msk [vmem:[%s8 + $0x10] sm:$0xff] %vm2124, %v2083
    %2128 = vst.msk [vmem:[%s8 + $0x18] sm:$0xff] %vm2124, %v2084
    %2129 = vst.msk [vmem:[%s8 + $0x20] sm:$0xff] %vm2124, %v2085
    %2130 = vst.msk [vmem:[%s8 + $0x28] sm:$0xff] %vm2124, %v2086
    %2131 = vst.msk [vmem:[%s8 + $0x30] sm:$0xff] %vm2124, %v2087
    %2132 = vst.msk [vmem:[%s8 + $0x38] sm:$0xff] %vm2124, %v2088
    %2133 = vst.msk [vmem:[%s8 + $0x40] sm:$0xff] %vm2124, %v2089
    %2134 = vst.msk [vmem:[%s8 + $0x48] sm:$0xff] %vm2124, %v2090
    %2135 = vst.msk [vmem:[%s8 + $0x50] sm:$0xff] %vm2124, %v2091
    %2136 = vst.msk [vmem:[%s8 + $0x58] sm:$0xff] %vm2124, %v2092
    %2137 = vst.msk [vmem:[%s8 + $0x60] sm:$0xff] %vm2124, %v2093
    %2138 = vst.msk [vmem:[%s8 + $0x68] sm:$0xff] %vm2124, %v2094
    %2139 = vst.msk [vmem:[%s8 + $0x70] sm:$0xff] %vm2124, %v2095
    %2140 = vst.msk [vmem:[%s8 + $0x78] sm:$0xff] %vm2124, %v2096
    %2141 = vst.msk [vmem:[%s8 + $0x80] sm:$0xff] %vm2124, %v2097
    %2142 = vst.msk [vmem:[%s8 + $0x88] sm:$0xff] %vm2124, %v2098
    %2143 = vst.msk [vmem:[%s8 + $0x90] sm:$0xff] %vm2124, %v2099
    %2144 = vst.msk [vmem:[%s8 + $0x98] sm:$0xff] %vm2124, %v2100
    %2145 = vst.msk [vmem:[%s8 + $0xa0] sm:$0xff] %vm2124, %v2101
    %2146 = vst.msk [vmem:[%s8 + $0xa8] sm:$0xff] %vm2124, %v2102
    %2147 = vst.msk [vmem:[%s8 + $0xb0] sm:$0xff] %vm2124, %v2103
    %2148 = vst.msk [vmem:[%s8 + $0xb8] sm:$0xff] %vm2124, %v2104
    %2149 = vst.msk [vmem:[%s8 + $0xc0] sm:$0xff] %vm2124, %v2105
    %2150 = vst.msk [vmem:[%s8 + $0xc8] sm:$0xff] %vm2124, %v2106
    %2151 = vst.msk [vmem:[%s8 + $0xd0] sm:$0xff] %vm2124, %v2107
    %2152 = vst.msk [vmem:[%s8 + $0xd8] sm:$0xff] %vm2124, %v2108
    %2153 = vst.msk [vmem:[%s8 + $0xe0] sm:$0xff] %vm2124, %v2109
    %2154 = vst.msk [vmem:[%s8 + $0xe8] sm:$0xff] %vm2124, %v2110
    %2155 = vst.msk [vmem:[%s8 + $0xf0] sm:$0xff] %vm2124, %v2111
    %2156 = vst.msk [vmem:[%s8 + $0xf8] sm:$0xff] %vm2124, %v2112
    %2157 = vst.msk [vmem:[%s8 + $0x100] sm:$0xff] %vm2124, %v2113
    %2158 = vst.msk [vmem:[%s8 + $0x108] sm:$0xff] %vm2124, %v2114
    %2159 = vst.msk [vmem:[%s8 + $0x110] sm:$0xff] %vm2124, %v2115
    %2160 = vst.msk [vmem:[%s8 + $0x118] sm:$0xff] %vm2124, %v2116
    %2161 = vst.msk [vmem:[%s8 + $0x120] sm:$0xff] %vm2124, %v2117
    %2162 = vst.msk [vmem:[%s8 + $0x128] sm:$0xff] %vm2124, %v2118
    %2163 = vst.msk [vmem:[%s8 + $0x130] sm:$0xff] %vm2124, %v2119
    %2164 = vst.msk [vmem:[%s8 + $0x138] sm:$0xff] %vm2124, %v2120
    %2165 = vst.msk [vmem:[%s8 + $0x140] sm:$0xff] %vm2124, %v2121
    %2166 = vst.msk [vmem:[%s8 + $0x148] sm:$0xff] %vm2124, %v2122
    %vm2167 = vcmask 254976
    %2168 = vst.msk [vmem:[%s8 + $0x150] sm:$0x3] %vm2167, %v2123
    // Predicated region
    $region50: #{mnist_cnn_forward.3} parent=1 // pred_check
      _
    $region51: #{mnist_cnn_forward.3} parent=1 // pred_check_branch
      %2170 = sbr.rel (0) target = $region53
    $region52: #{mnist_cnn_forward.3} parent=1 // pred_region
      _
    $region53: #{mnist_cnn_forward.3} parent=1 // pred_fallthru
      _
    // Predicated region
    $region54: #{mnist_cnn_forward.3} parent=1 // pred_check
      _
    $region55: #{mnist_cnn_forward.3} parent=1 // pred_check_branch
      %2172 = sbr.rel (0) target = $region57
    $region56: #{mnist_cnn_forward.3} parent=1 // pred_region
      _
    $region57: #{mnist_cnn_forward.3} parent=1 // pred_fallthru
      _
    %2173 = vsyncpa [#allocation3], 1
    %2174 = vsyncpa [#allocation5], 1
    %2175 = vsyncpa [#allocation8], 1

// kernel: mnist_cnn_forward.4
$region0: #{mnist_cnn_forward.4}
  #allocation0 [shape = 'u32[]', space=smem, size = 0x4, offset = 0x4, fixed_abs, tag = 'smem constant byte address 0x4 - core index']
  #allocation1 [shape = 'u32[144,128]{1,0:T(1,128)}', space=vmem, size = 0x12000, scoped, tag = 'internal scratch']
  %s0 = inlined_call_operand.vmem [shape: bf16[50,800], index: 0, kind: input, shape index: {}]
  %s1 = inlined_call_operand.vmem [shape: bf16[50,800], index: 1, kind: input, shape index: {}]
  %s2 = inlined_call_operand.vmem [shape: bf16[50,800], index: 2, kind: input, shape index: {}]
  %s3 = inlined_call_operand.vmem [shape: bf16[50,800], index: 3, kind: input, shape index: {}]
  %s4 = inlined_call_operand.vmem [shape: bf16[800,64], index: 4, kind: input, shape index: {}]
  %s5 = inlined_call_operand.vmem [shape: f32[1,64], index: 5, kind: input, shape index: {}]
  %s6 = inlined_call_operand.vmem [shape: f32[1,64], index: 6, kind: input, shape index: {}]
  %s7 = inlined_call_operand.vmem [shape: f32[1,64], index: 7, kind: input, shape index: {}]
  %s8 = inlined_call_operand.vmem [shape: f32[50,64], index: 8, kind: output, shape index: {}]
  %s9 = sld [smem:[#allocation0]]
  $region42: #{mnist_cnn_forward.4} parent=0
    _
  %s11 = ssub.s32 1, %s9
  %s12 = scalar_select 0, %s11, %s9
  // Predicated region
  $region2: #{mnist_cnn_forward.4} parent=0 // pred_check
    _
  $region3: #{mnist_cnn_forward.4} parent=0 // pred_check_branch
    %14 = sbr.rel (0) target = $region5
  $region4: #{mnist_cnn_forward.4} parent=0 // pred_region
    _
  $region5: #{mnist_cnn_forward.4} parent=0 // pred_fallthru
    _
  // Predicated region
  $region6: #{mnist_cnn_forward.4} parent=0 // pred_check
    _
  $region7: #{mnist_cnn_forward.4} parent=0 // pred_check_branch
    %16 = sbr.rel (0) target = $region9
  $region8: #{mnist_cnn_forward.4} parent=0 // pred_region
    _
  $region9: #{mnist_cnn_forward.4} parent=0 // pred_fallthru
    _
  // Predicated region
  $region10: #{mnist_cnn_forward.4} parent=0 // pred_check
    _
  $region11: #{mnist_cnn_forward.4} parent=0 // pred_check_branch
    %18 = sbr.rel (0) target = $region13
  $region12: #{mnist_cnn_forward.4} parent=0 // pred_region
    _
  $region13: #{mnist_cnn_forward.4} parent=0 // pred_fallthru
    _
  // Predicated region
  $region14: #{mnist_cnn_forward.4} parent=0 // pred_check
    _
  $region15: #{mnist_cnn_forward.4} parent=0 // pred_check_branch
    %20 = sbr.rel (0) target = $region17
  $region16: #{mnist_cnn_forward.4} parent=0 // pred_region
    _
  $region17: #{mnist_cnn_forward.4} parent=0 // pred_fallthru
    _
  // Predicated region
  $region18: #{mnist_cnn_forward.4} parent=0 // pred_check
    _
  $region19: #{mnist_cnn_forward.4} parent=0 // pred_check_branch
    %22 = sbr.rel (0) target = $region21
  $region20: #{mnist_cnn_forward.4} parent=0 // pred_region
    _
  $region21: #{mnist_cnn_forward.4} parent=0 // pred_fallthru
    _
  // Predicated region
  $region22: #{mnist_cnn_forward.4} parent=0 // pred_check
    _
  $region23: #{mnist_cnn_forward.4} parent=0 // pred_check_branch
    %24 = sbr.rel (0) target = $region25
  $region24: #{mnist_cnn_forward.4} parent=0 // pred_region
    _
  $region25: #{mnist_cnn_forward.4} parent=0 // pred_fallthru
    _
  // Predicated region
  $region26: #{mnist_cnn_forward.4} parent=0 // pred_check
    _
  $region27: #{mnist_cnn_forward.4} parent=0 // pred_check_branch
    %26 = sbr.rel (0) target = $region29
  $region28: #{mnist_cnn_forward.4} parent=0 // pred_region
    _
  $region29: #{mnist_cnn_forward.4} parent=0 // pred_fallthru
    _
  // Predicated region
  $region30: #{mnist_cnn_forward.4} parent=0 // pred_check
    _
  $region31: #{mnist_cnn_forward.4} parent=0 // pred_check_branch
    %28 = sbr.rel (0) target = $region33
  $region32: #{mnist_cnn_forward.4} parent=0 // pred_region
    _
  $region33: #{mnist_cnn_forward.4} parent=0 // pred_fallthru
    _
  %v30 = vld [vmem:[%s4] sm:$0xf]
  %v31 = vld [vmem:[%s4 + $0x4] sm:$0xf]
  %v32 = vld [vmem:[%s4 + $0x8] sm:$0xf]
  %v33 = vld [vmem:[%s4 + $0xc] sm:$0xf]
  %v34 = vld [vmem:[%s4 + $0x10] sm:$0xf]
  %v35 = vld [vmem:[%s4 + $0x14] sm:$0xf]
  %v36 = vld [vmem:[%s4 + $0x18] sm:$0xf]
  %v37 = vld [vmem:[%s4 + $0x1c] sm:$0xf]
  %v38 = vld [vmem:[%s4 + $0x20] sm:$0xf]
  %v39 = vld [vmem:[%s4 + $0x24] sm:$0xf]
  %v40 = vld [vmem:[%s4 + $0x28] sm:$0xf]
  %v41 = vld [vmem:[%s4 + $0x2c] sm:$0xf]
  %v42 = vld [vmem:[%s4 + $0x30] sm:$0xf]
  %v43 = vld [vmem:[%s4 + $0x34] sm:$0xf]
  %v44 = vld [vmem:[%s4 + $0x38] sm:$0xf]
  %v45 = vld [vmem:[%s4 + $0x3c] sm:$0xf]
  %v46 = vld [vmem:[%s4 + $0x40] sm:$0xf]
  %v47 = vld [vmem:[%s4 + $0x44] sm:$0xf]
  %v48 = vld [vmem:[%s4 + $0x48] sm:$0xf]
  %v49 = vld [vmem:[%s4 + $0x4c] sm:$0xf]
  %v50 = vld [vmem:[%s4 + $0x50] sm:$0xf]
  %v51 = vld [vmem:[%s4 + $0x54] sm:$0xf]
  %v52 = vld [vmem:[%s4 + $0x58] sm:$0xf]
  %v53 = vld [vmem:[%s4 + $0x5c] sm:$0xf]
  %v54 = vld [vmem:[%s4 + $0x60] sm:$0xf]
  %v55 = vld [vmem:[%s4 + $0x64] sm:$0xf]
  %v56 = vld [vmem:[%s4 + $0x68] sm:$0xf]
  %v57 = vld [vmem:[%s4 + $0x6c] sm:$0xf]
  %v58 = vld [vmem:[%s4 + $0x70] sm:$0xf]
  %v59 = vld [vmem:[%s4 + $0x74] sm:$0xf]
  %v60 = vld [vmem:[%s4 + $0x78] sm:$0xf]
  %v61 = vld [vmem:[%s4 + $0x7c] sm:$0xf]
  %v62 = vld [vmem:[%s4 + $0x80] sm:$0xf]
  %v63 = vld [vmem:[%s4 + $0x84] sm:$0xf]
  %v64 = vld [vmem:[%s4 + $0x88] sm:$0xf]
  %v65 = vld [vmem:[%s4 + $0x8c] sm:$0xf]
  %v66 = vld [vmem:[%s4 + $0x90] sm:$0xf]
  %v67 = vld [vmem:[%s4 + $0x94] sm:$0xf]
  %v68 = vld [vmem:[%s4 + $0x98] sm:$0xf]
  %v69 = vld [vmem:[%s4 + $0x9c] sm:$0xf]
  %v70 = vld [vmem:[%s4 + $0xa0] sm:$0xf]
  %v71 = vld [vmem:[%s4 + $0xa4] sm:$0xf]
  %v72 = vld [vmem:[%s4 + $0xa8] sm:$0xf]
  %v73 = vld [vmem:[%s4 + $0xac] sm:$0xf]
  %v74 = vld [vmem:[%s4 + $0xb0] sm:$0xf]
  %v75 = vld [vmem:[%s4 + $0xb4] sm:$0xf]
  %v76 = vld [vmem:[%s4 + $0xb8] sm:$0xf]
  %v77 = vld [vmem:[%s4 + $0xbc] sm:$0xf]
  %v78 = vld [vmem:[%s4 + $0xc0] sm:$0xf]
  %v79 = vld [vmem:[%s4 + $0xc4] sm:$0xf]
  %v80 = vld [vmem:[%s4 + $0xc8] sm:$0xf]
  %v81 = vld [vmem:[%s4 + $0xcc] sm:$0xf]
  %v82 = vld [vmem:[%s4 + $0xd0] sm:$0xf]
  %v83 = vld [vmem:[%s4 + $0xd4] sm:$0xf]
  %v84 = vld [vmem:[%s4 + $0xd8] sm:$0xf]
  %v85 = vld [vmem:[%s4 + $0xdc] sm:$0xf]
  %v86 = vld [vmem:[%s4 + $0xe0] sm:$0xf]
  %v87 = vld [vmem:[%s4 + $0xe4] sm:$0xf]
  %v88 = vld [vmem:[%s4 + $0xe8] sm:$0xf]
  %v89 = vld [vmem:[%s4 + $0xec] sm:$0xf]
  %v90 = vld [vmem:[%s4 + $0xf0] sm:$0xf]
  %v91 = vld [vmem:[%s4 + $0xf4] sm:$0xf]
  %v92 = vld [vmem:[%s4 + $0xf8] sm:$0xf]
  %v93 = vld [vmem:[%s4 + $0xfc] sm:$0xf]
  %v94 = vld [vmem:[%s4 + $0x100] sm:$0xf]
  %v95 = vld [vmem:[%s4 + $0x104] sm:$0xf]
  %v96 = vld [vmem:[%s4 + $0x108] sm:$0xf]
  %v97 = vld [vmem:[%s4 + $0x10c] sm:$0xf]
  %v98 = vld [vmem:[%s4 + $0x110] sm:$0xf]
  %v99 = vld [vmem:[%s4 + $0x114] sm:$0xf]
  %v100 = vld [vmem:[%s4 + $0x118] sm:$0xf]
  %v101 = vld [vmem:[%s4 + $0x11c] sm:$0xf]
  %v102 = vld [vmem:[%s4 + $0x120] sm:$0xf]
  %v103 = vld [vmem:[%s4 + $0x124] sm:$0xf]
  %v104 = vld [vmem:[%s4 + $0x128] sm:$0xf]
  %v105 = vld [vmem:[%s4 + $0x12c] sm:$0xf]
  %v106 = vld [vmem:[%s4 + $0x130] sm:$0xf]
  %v107 = vld [vmem:[%s4 + $0x134] sm:$0xf]
  %v108 = vld [vmem:[%s4 + $0x138] sm:$0xf]
  %v109 = vld [vmem:[%s4 + $0x13c] sm:$0xf]
  %v110 = vld [vmem:[%s4 + $0x140] sm:$0xf]
  %v111 = vld [vmem:[%s4 + $0x144] sm:$0xf]
  %v112 = vld [vmem:[%s4 + $0x148] sm:$0xf]
  %v113 = vld [vmem:[%s4 + $0x14c] sm:$0xf]
  %v114 = vld [vmem:[%s4 + $0x150] sm:$0xf]
  %v115 = vld [vmem:[%s4 + $0x154] sm:$0xf]
  %v116 = vld [vmem:[%s4 + $0x158] sm:$0xf]
  %v117 = vld [vmem:[%s4 + $0x15c] sm:$0xf]
  %v118 = vld [vmem:[%s4 + $0x160] sm:$0xf]
  %v119 = vld [vmem:[%s4 + $0x164] sm:$0xf]
  %v120 = vld [vmem:[%s4 + $0x168] sm:$0xf]
  %v121 = vld [vmem:[%s4 + $0x16c] sm:$0xf]
  %v122 = vld [vmem:[%s4 + $0x170] sm:$0xf]
  %v123 = vld [vmem:[%s4 + $0x174] sm:$0xf]
  %v124 = vld [vmem:[%s4 + $0x178] sm:$0xf]
  %v125 = vld [vmem:[%s4 + $0x17c] sm:$0xf]
  %v126 = vld [vmem:[%s4 + $0x180] sm:$0xf]
  %v127 = vld [vmem:[%s4 + $0x184] sm:$0xf]
  %v128 = vld [vmem:[%s4 + $0x188] sm:$0xf]
  %v129 = vld [vmem:[%s4 + $0x18c] sm:$0xf]
  %v130 = vld [vmem:[%s0] sm:$0xff]
  %v131 = vld [vmem:[%s0 + $0x8] sm:$0xff]
  %v132 = vld [vmem:[%s0 + $0x10] sm:$0xff]
  %v133 = vld [vmem:[%s0 + $0x18] sm:$0xf]
  %v134 = vld [vmem:[%s0 + $0x1c] sm:$0xff]
  %v135 = vld [vmem:[%s0 + $0x24] sm:$0xff]
  %v136 = vld [vmem:[%s0 + $0x2c] sm:$0xff]
  %v137 = vld [vmem:[%s0 + $0x34] sm:$0xf]
  %v138 = vld [vmem:[%s0 + $0x38] sm:$0xff]
  %v139 = vld [vmem:[%s0 + $0x40] sm:$0xff]
  %v140 = vld [vmem:[%s0 + $0x48] sm:$0xff]
  %v141 = vld [vmem:[%s0 + $0x50] sm:$0xf]
  %v142 = vld [vmem:[%s0 + $0x54] sm:$0xff]
  %v143 = vld [vmem:[%s0 + $0x5c] sm:$0xff]
  %v144 = vld [vmem:[%s0 + $0x64] sm:$0xff]
  %v145 = vld [vmem:[%s0 + $0x6c] sm:$0xf]
  %v146 = vld [vmem:[%s0 + $0x70] sm:$0xff]
  %v147 = vld [vmem:[%s0 + $0x78] sm:$0xff]
  %v148 = vld [vmem:[%s0 + $0x80] sm:$0xff]
  %v149 = vld [vmem:[%s0 + $0x88] sm:$0xf]
  %v150 = vld [vmem:[%s0 + $0x8c] sm:$0xff]
  %v151 = vld [vmem:[%s0 + $0x94] sm:$0xff]
  %v152 = vld [vmem:[%s0 + $0x9c] sm:$0xff]
  %v153 = vld [vmem:[%s0 + $0xa4] sm:$0xf]
  %v154 = vld [vmem:[%s0 + $0xa8] sm:$0x11]
  %v155 = vld [vmem:[%s0 + $0xb0] sm:$0x11]
  %v156 = vld [vmem:[%s0 + $0xb8] sm:$0x11]
  %v157 = vld [vmem:[%s0 + $0xc0] sm:$0x1]
  %v186 = vunpack.c.l.b16 %v130
  %v187 = vunpack.c.h.b16 %v130
  %v188 = vunpack.c.l.b16 %v131
  %v189 = vunpack.c.h.b16 %v131
  %v190 = vunpack.c.l.b16 %v132
  %v191 = vunpack.c.h.b16 %v132
  %v192 = vunpack.c.l.b16 %v133
  %v193 = vunpack.c.l.b16 %v134
  %v194 = vunpack.c.h.b16 %v134
  %v195 = vunpack.c.l.b16 %v135
  %v196 = vunpack.c.h.b16 %v135
  %v197 = vunpack.c.l.b16 %v136
  %v198 = vunpack.c.h.b16 %v136
  %v199 = vunpack.c.l.b16 %v137
  %v200 = vunpack.c.l.b16 %v138
  %v201 = vunpack.c.h.b16 %v138
  %v202 = vunpack.c.l.b16 %v139
  %v203 = vunpack.c.h.b16 %v139
  %v204 = vunpack.c.l.b16 %v140
  %v205 = vunpack.c.h.b16 %v140
  %v206 = vunpack.c.l.b16 %v141
  %v207 = vunpack.c.l.b16 %v142
  %v208 = vunpack.c.h.b16 %v142
  %v209 = vunpack.c.l.b16 %v143
  %v210 = vunpack.c.h.b16 %v143
  %v211 = vunpack.c.l.b16 %v144
  %v212 = vunpack.c.h.b16 %v144
  %v213 = vunpack.c.l.b16 %v145
  %v214 = vunpack.c.l.b16 %v146
  %v215 = vunpack.c.h.b16 %v146
  %v216 = vunpack.c.l.b16 %v147
  %v217 = vunpack.c.h.b16 %v147
  %v218 = vunpack.c.l.b16 %v148
  %v219 = vunpack.c.h.b16 %v148
  %v220 = vunpack.c.l.b16 %v149
  %v221 = vunpack.c.l.b16 %v150
  %v222 = vunpack.c.h.b16 %v150
  %v223 = vunpack.c.l.b16 %v151
  %v224 = vunpack.c.h.b16 %v151
  %v225 = vunpack.c.l.b16 %v152
  %v226 = vunpack.c.h.b16 %v152
  %v227 = vunpack.c.l.b16 %v153
  %v228 = vunpack.c.l.b16 %v154
  %v229 = vunpack.c.h.b16 %v154
  %v230 = vunpack.c.l.b16 %v155
  %v231 = vunpack.c.h.b16 %v155
  %v232 = vunpack.c.l.b16 %v156
  %v233 = vunpack.c.h.b16 %v156
  %v234 = vunpack.c.l.b16 %v157
  %v235 = vpack.c.b16 %v193, %v186
  %v236 = vpack.c.b16 %v194, %v187
  %v237 = vpack.c.b16 %v195, %v188
  %v238 = vpack.c.b16 %v196, %v189
  %v239 = vpack.c.b16 %v197, %v190
  %v240 = vpack.c.b16 %v198, %v191
  %v241 = vpack.c.b16 %v199, %v192
  %v242 = vpack.c.b16 %v207, %v200
  %v243 = vpack.c.b16 %v208, %v201
  %v244 = vpack.c.b16 %v209, %v202
  %v245 = vpack.c.b16 %v210, %v203
  %v246 = vpack.c.b16 %v211, %v204
  %v247 = vpack.c.b16 %v212, %v205
  %v248 = vpack.c.b16 %v213, %v206
  %v249 = vpack.c.b16 %v221, %v214
  %v250 = vpack.c.b16 %v222, %v215
  %v251 = vpack.c.b16 %v223, %v216
  %v252 = vpack.c.b16 %v224, %v217
  %v253 = vpack.c.b16 %v225, %v218
  %v254 = vpack.c.b16 %v226, %v219
  %v255 = vpack.c.b16 %v227, %v220
  %v256 = vpack.c.b16 %v228, %v228
  %v257 = vpack.c.b16 %v229, %v229
  %v258 = vpack.c.b16 %v230, %v230
  %v259 = vpack.c.b16 %v231, %v231
  %v260 = vpack.c.b16 %v232, %v232
  %v261 = vpack.c.b16 %v233, %v233
  %v262 = vpack.c.b16 %v234, %v234
  %v387 = vunpack.c.l.b16 %v30
  %v388 = vunpack.c.l.b16 %v31
  %v389 = vunpack.c.l.b16 %v32
  %v390 = vunpack.c.l.b16 %v33
  %v391 = vunpack.c.l.b16 %v34
  %v392 = vunpack.c.l.b16 %v35
  %v393 = vunpack.c.l.b16 %v36
  %v394 = vunpack.c.l.b16 %v37
  %v395 = vunpack.c.l.b16 %v38
  %v396 = vunpack.c.l.b16 %v39
  %v397 = vunpack.c.l.b16 %v40
  %v398 = vunpack.c.l.b16 %v41
  %v399 = vunpack.c.l.b16 %v42
  %v400 = vunpack.c.l.b16 %v43
  %v401 = vunpack.c.l.b16 %v44
  %v402 = vunpack.c.l.b16 %v45
  %v403 = vunpack.c.l.b16 %v46
  %v404 = vunpack.c.l.b16 %v47
  %v405 = vunpack.c.l.b16 %v48
  %v406 = vunpack.c.l.b16 %v49
  %v407 = vunpack.c.l.b16 %v50
  %v408 = vunpack.c.l.b16 %v51
  %v409 = vunpack.c.l.b16 %v52
  %v410 = vunpack.c.l.b16 %v53
  %v411 = vunpack.c.l.b16 %v54
  %v412 = vunpack.c.l.b16 %v55
  %v413 = vunpack.c.l.b16 %v56
  %v414 = vunpack.c.l.b16 %v57
  %v415 = vunpack.c.l.b16 %v58
  %v416 = vunpack.c.l.b16 %v59
  %v417 = vunpack.c.l.b16 %v60
  %v418 = vunpack.c.l.b16 %v61
  %v419 = vunpack.c.l.b16 %v62
  %v420 = vunpack.c.l.b16 %v63
  %v421 = vunpack.c.l.b16 %v64
  %v422 = vunpack.c.l.b16 %v65
  %v423 = vunpack.c.l.b16 %v66
  %v424 = vunpack.c.l.b16 %v67
  %v425 = vunpack.c.l.b16 %v68
  %v426 = vunpack.c.l.b16 %v69
  %v427 = vunpack.c.l.b16 %v70
  %v428 = vunpack.c.l.b16 %v71
  %v429 = vunpack.c.l.b16 %v72
  %v430 = vunpack.c.l.b16 %v73
  %v431 = vunpack.c.l.b16 %v74
  %v432 = vunpack.c.l.b16 %v75
  %v433 = vunpack.c.l.b16 %v76
  %v434 = vunpack.c.l.b16 %v77
  %v435 = vunpack.c.l.b16 %v78
  %v436 = vunpack.c.l.b16 %v79
  %v437 = vunpack.c.l.b16 %v80
  %v438 = vunpack.c.l.b16 %v81
  %v439 = vunpack.c.l.b16 %v82
  %v440 = vunpack.c.l.b16 %v83
  %v441 = vunpack.c.l.b16 %v84
  %v442 = vunpack.c.l.b16 %v85
  %v443 = vunpack.c.l.b16 %v86
  %v444 = vunpack.c.l.b16 %v87
  %v445 = vunpack.c.l.b16 %v88
  %v446 = vunpack.c.l.b16 %v89
  %v447 = vunpack.c.l.b16 %v90
  %v448 = vunpack.c.l.b16 %v91
  %v449 = vunpack.c.l.b16 %v92
  %v450 = vunpack.c.l.b16 %v93
  %v451 = vunpack.c.l.b16 %v94
  %v452 = vunpack.c.l.b16 %v95
  %v453 = vunpack.c.l.b16 %v96
  %v454 = vunpack.c.l.b16 %v97
  %v455 = vunpack.c.l.b16 %v98
  %v456 = vunpack.c.l.b16 %v99
  %v457 = vunpack.c.l.b16 %v100
  %v458 = vunpack.c.l.b16 %v101
  %v459 = vunpack.c.l.b16 %v102
  %v460 = vunpack.c.l.b16 %v103
  %v461 = vunpack.c.l.b16 %v104
  %v462 = vunpack.c.l.b16 %v105
  %v463 = vunpack.c.l.b16 %v106
  %v464 = vunpack.c.l.b16 %v107
  %v465 = vunpack.c.l.b16 %v108
  %v466 = vunpack.c.l.b16 %v109
  %v467 = vunpack.c.l.b16 %v110
  %v468 = vunpack.c.l.b16 %v111
  %v469 = vunpack.c.l.b16 %v112
  %v470 = vunpack.c.l.b16 %v113
  %v471 = vunpack.c.l.b16 %v114
  %v472 = vunpack.c.l.b16 %v115
  %v473 = vunpack.c.l.b16 %v116
  %v474 = vunpack.c.l.b16 %v117
  %v475 = vunpack.c.l.b16 %v118
  %v476 = vunpack.c.l.b16 %v119
  %v477 = vunpack.c.l.b16 %v120
  %v478 = vunpack.c.l.b16 %v121
  %v479 = vunpack.c.l.b16 %v122
  %v480 = vunpack.c.l.b16 %v123
  %v481 = vunpack.c.l.b16 %v124
  %v482 = vunpack.c.l.b16 %v125
  %v483 = vunpack.c.l.b16 %v126
  %v484 = vunpack.c.l.b16 %v127
  %v485 = vunpack.c.l.b16 %v128
  %v486 = vunpack.c.l.b16 %v129
  %v487 = vpack.c.b16 %v388, %v387
  %v488 = vpack.c.b16 %v390, %v389
  %v489 = vpack.c.b16 %v392, %v391
  %v490 = vpack.c.b16 %v394, %v393
  %v491 = vpack.c.b16 %v396, %v395
  %v492 = vpack.c.b16 %v398, %v397
  %v493 = vpack.c.b16 %v400, %v399
  %v494 = vpack.c.b16 %v402, %v401
  %v495 = vpack.c.b16 %v404, %v403
  %v496 = vpack.c.b16 %v406, %v405
  %v497 = vpack.c.b16 %v408, %v407
  %v498 = vpack.c.b16 %v410, %v409
  %v499 = vpack.c.b16 %v412, %v411
  %v500 = vpack.c.b16 %v414, %v413
  %v501 = vpack.c.b16 %v416, %v415
  %v502 = vpack.c.b16 %v418, %v417
  %v503 = vpack.c.b16 %v420, %v419
  %v504 = vpack.c.b16 %v422, %v421
  %v505 = vpack.c.b16 %v424, %v423
  %v506 = vpack.c.b16 %v426, %v425
  %v507 = vpack.c.b16 %v428, %v427
  %v508 = vpack.c.b16 %v430, %v429
  %v509 = vpack.c.b16 %v432, %v431
  %v510 = vpack.c.b16 %v434, %v433
  %v511 = vpack.c.b16 %v436, %v435
  %v512 = vpack.c.b16 %v438, %v437
  %v513 = vpack.c.b16 %v440, %v439
  %v514 = vpack.c.b16 %v442, %v441
  %v515 = vpack.c.b16 %v444, %v443
  %v516 = vpack.c.b16 %v446, %v445
  %v517 = vpack.c.b16 %v448, %v447
  %v518 = vpack.c.b16 %v450, %v449
  %v519 = vpack.c.b16 %v452, %v451
  %v520 = vpack.c.b16 %v454, %v453
  %v521 = vpack.c.b16 %v456, %v455
  %v522 = vpack.c.b16 %v458, %v457
  %v523 = vpack.c.b16 %v460, %v459
  %v524 = vpack.c.b16 %v462, %v461
  %v525 = vpack.c.b16 %v464, %v463
  %v526 = vpack.c.b16 %v466, %v465
  %v527 = vpack.c.b16 %v468, %v467
  %v528 = vpack.c.b16 %v470, %v469
  %v529 = vpack.c.b16 %v472, %v471
  %v530 = vpack.c.b16 %v474, %v473
  %v531 = vpack.c.b16 %v476, %v475
  %v532 = vpack.c.b16 %v478, %v477
  %v533 = vpack.c.b16 %v480, %v479
  %v534 = vpack.c.b16 %v482, %v481
  %v535 = vpack.c.b16 %v484, %v483
  %v536 = vpack.c.b16 %v486, %v485
  %vm587 = vcmask 261120
  %v589 = vsel %vm587, %v241, 0
  %v592 = vsel %vm587, %v248, 0
  %v595 = vsel %vm587, %v255, 0
  %v598 = vsel %vm587, %v262, 0
  %600 = vmatprep.subr.bf16.mxu0 0
  %601 = vmatpush1.bf16.msra.mxu0 %v487
  %602 = vmatprep.subr.bf16.mxu0 0
  %603 = vmatpush1.bf16.msra.mxu0 %v488
  %604 = vmatprep.subr.bf16.mxu0 0
  %605 = vmatpush1.bf16.msra.mxu0 %v489
  %606 = vmatprep.subr.bf16.mxu0 0
  %607 = vmatpush1.bf16.msra.mxu0 %v490
  %608 = vmatprep.subr.bf16.mxu0 0
  %609 = vmatpush1.bf16.msra.mxu0 %v491
  %610 = vmatprep.subr.bf16.mxu0 0
  %611 = vmatpush1.bf16.msra.mxu0 %v492
  %612 = vmatprep.subr.bf16.mxu0 0
  %613 = vmatpush1.bf16.msra.mxu0 %v493
  %614 = vmatprep.subr.bf16.mxu0 0
  %615 = vmatpush1.bf16.msra.mxu0 %v494
  %616 = vmatprep.subr.bf16.mxu0 0
  %617 = vmatpush1.bf16.msra.mxu0 %v495
  %618 = vmatprep.subr.bf16.mxu0 0
  %619 = vmatpush1.bf16.msra.mxu0 %v496
  %620 = vmatprep.subr.bf16.mxu0 0
  %621 = vmatpush1.bf16.msra.mxu0 %v497
  %622 = vmatprep.subr.bf16.mxu0 0
  %623 = vmatpush1.bf16.msra.mxu0 %v498
  %624 = vmatprep.subr.bf16.mxu0 0
  %625 = vmatpush1.bf16.msra.mxu0 %v499
  %626 = vmatprep.subr.bf16.mxu0 0
  %627 = vmatpush1.bf16.msra.mxu0 %v500
  %628 = vmatprep.subr.bf16.mxu0 0
  %629 = vmatpush1.bf16.msra.mxu0 %v501
  %630 = vmatprep.subr.bf16.mxu0 0
  %631 = vmatpush1.bf16.msra.mxu0 %v502
  %632 = vmatprep.mubr.bf16.mxu0 %v236
  %633 = vmatmul.mubr.bf16.gmra.mrb[0].mxu0 %v235
  %v634 = vpop.f32.mrb[0].mxu0
  %v635 = vadd.f32 0.0, %v634
  %v636 = vpop.f32.mrb[0].mxu0
  %v637 = vpop.f32.mrb[0].mxu0
  %v638 = vadd.f32 0.0, %v637
  %v639 = vpop.f32.mrb[0].mxu0
  %640 = vmatprep.mubr.bf16.mxu0 %v243
  %641 = vmatmul.mubr.bf16.gmra.mrb[0].mxu0 %v242
  %v642 = vpop.f32.mrb[0].mxu0
  %v643 = vadd.f32 0.0, %v642
  %v644 = vpop.f32.mrb[0].mxu0
  %v645 = vpop.f32.mrb[0].mxu0
  %v646 = vadd.f32 0.0, %v645
  %v647 = vpop.f32.mrb[0].mxu0
  %648 = vmatprep.mubr.bf16.mxu0 %v250
  %649 = vmatmul.mubr.bf16.gmra.mrb[0].mxu0 %v249
  %v650 = vpop.f32.mrb[0].mxu0
  %v651 = vadd.f32 0.0, %v650
  %v652 = vpop.f32.mrb[0].mxu0
  %v653 = vpop.f32.mrb[0].mxu0
  %v654 = vadd.f32 0.0, %v653
  %v655 = vpop.f32.mrb[0].mxu0
  %656 = vmatprep.mubr.bf16.mxu0 %v257
  %657 = vmatmul.mubr.bf16.gmra.mrb[0].mxu0 %v256
  %v658 = vpop.f32.mrb[0].mxu0
  %v659 = vadd.f32 0.0, %v658
  %v660 = vpop.f32.mrb[0].mxu0
  %v661 = vpop.f32.mrb[0].mxu0
  %v662 = vpop.f32.mrb[0].mxu0
  %663 = vdwg.mxu0
  %664 = vmatprep.subr.bf16.mxu0 0
  %665 = vmatpush1.bf16.msra.mxu0 %v503
  %666 = vmatprep.subr.bf16.mxu0 0
  %667 = vmatpush1.bf16.msra.mxu0 %v504
  %668 = vmatprep.subr.bf16.mxu0 0
  %669 = vmatpush1.bf16.msra.mxu0 %v505
  %670 = vmatprep.subr.bf16.mxu0 0
  %671 = vmatpush1.bf16.msra.mxu0 %v506
  %672 = vmatprep.subr.bf16.mxu0 0
  %673 = vmatpush1.bf16.msra.mxu0 %v507
  %674 = vmatprep.subr.bf16.mxu0 0
  %675 = vmatpush1.bf16.msra.mxu0 %v508
  %676 = vmatprep.subr.bf16.mxu0 0
  %677 = vmatpush1.bf16.msra.mxu0 %v509
  %678 = vmatprep.subr.bf16.mxu0 0
  %679 = vmatpush1.bf16.msra.mxu0 %v510
  %680 = vmatprep.subr.bf16.mxu0 0
  %681 = vmatpush1.bf16.msra.mxu0 %v511
  %682 = vmatprep.subr.bf16.mxu0 0
  %683 = vmatpush1.bf16.msra.mxu0 %v512
  %684 = vmatprep.subr.bf16.mxu0 0
  %685 = vmatpush1.bf16.msra.mxu0 %v513
  %686 = vmatprep.subr.bf16.mxu0 0
  %687 = vmatpush1.bf16.msra.mxu0 %v514
  %688 = vmatprep.subr.bf16.mxu0 0
  %689 = vmatpush1.bf16.msra.mxu0 %v515
  %690 = vmatprep.subr.bf16.mxu0 0
  %691 = vmatpush1.bf16.msra.mxu0 %v516
  %692 = vmatprep.subr.bf16.mxu0 0
  %693 = vmatpush1.bf16.msra.mxu0 %v517
  %694 = vmatprep.subr.bf16.mxu0 0
  %695 = vmatpush1.bf16.msra.mxu0 %v518
  %696 = vmatprep.mubr.bf16.mxu0 %v238
  %697 = vmatmul.mubr.bf16.gmra.mrb[0].mxu0 %v237
  %v698 = vpop.f32.mrb[0].mxu0
  %v699 = vadd.f32 %v635, %v698
  %v700 = vpop.f32.mrb[0].mxu0
  %v701 = vpop.f32.mrb[0].mxu0
  %v702 = vadd.f32 %v638, %v701
  %v703 = vpop.f32.mrb[0].mxu0
  %704 = vmatprep.mubr.bf16.mxu0 %v245
  %705 = vmatmul.mubr.bf16.gmra.mrb[0].mxu0 %v244
  %v706 = vpop.f32.mrb[0].mxu0
  %v707 = vadd.f32 %v643, %v706
  %v708 = vpop.f32.mrb[0].mxu0
  %v709 = vpop.f32.mrb[0].mxu0
  %v710 = vadd.f32 %v646, %v709
  %v711 = vpop.f32.mrb[0].mxu0
  %712 = vmatprep.mubr.bf16.mxu0 %v252
  %713 = vmatmul.mubr.bf16.gmra.mrb[0].mxu0 %v251
  %v714 = vpop.f32.mrb[0].mxu0
  %v715 = vadd.f32 %v651, %v714
  %v716 = vpop.f32.mrb[0].mxu0
  %v717 = vpop.f32.mrb[0].mxu0
  %v718 = vadd.f32 %v654, %v717
  %v719 = vpop.f32.mrb[0].mxu0
  %720 = vmatprep.mubr.bf16.mxu0 %v259
  %721 = vmatmul.mubr.bf16.gmra.mrb[0].mxu0 %v258
  %v722 = vpop.f32.mrb[0].mxu0
  %v723 = vadd.f32 %v659, %v722
  %v724 = vpop.f32.mrb[0].mxu0
  %v725 = vpop.f32.mrb[0].mxu0
  %v726 = vpop.f32.mrb[0].mxu0
  %727 = vdwg.mxu0
  %728 = vmatprep.subr.bf16.mxu0 0
  %729 = vmatpush1.bf16.msra.mxu0 %v519
  %730 = vmatprep.subr.bf16.mxu0 0
  %731 = vmatpush1.bf16.msra.mxu0 %v520
  %732 = vmatprep.subr.bf16.mxu0 0
  %733 = vmatpush1.bf16.msra.mxu0 %v521
  %734 = vmatprep.subr.bf16.mxu0 0
  %735 = vmatpush1.bf16.msra.mxu0 %v522
  %736 = vmatprep.subr.bf16.mxu0 0
  %737 = vmatpush1.bf16.msra.mxu0 %v523
  %738 = vmatprep.subr.bf16.mxu0 0
  %739 = vmatpush1.bf16.msra.mxu0 %v524
  %740 = vmatprep.subr.bf16.mxu0 0
  %741 = vmatpush1.bf16.msra.mxu0 %v525
  %742 = vmatprep.subr.bf16.mxu0 0
  %743 = vmatpush1.bf16.msra.mxu0 %v526
  %744 = vmatprep.subr.bf16.mxu0 0
  %745 = vmatpush1.bf16.msra.mxu0 %v527
  %746 = vmatprep.subr.bf16.mxu0 0
  %747 = vmatpush1.bf16.msra.mxu0 %v528
  %748 = vmatprep.subr.bf16.mxu0 0
  %749 = vmatpush1.bf16.msra.mxu0 %v529
  %750 = vmatprep.subr.bf16.mxu0 0
  %751 = vmatpush1.bf16.msra.mxu0 %v530
  %752 = vmatprep.subr.bf16.mxu0 0
  %753 = vmatpush1.bf16.msra.mxu0 %v531
  %754 = vmatprep.subr.bf16.mxu0 0
  %755 = vmatpush1.bf16.msra.mxu0 %v532
  %756 = vmatprep.subr.bf16.mxu0 0
  %757 = vmatpush1.bf16.msra.mxu0 %v533
  %758 = vmatprep.subr.bf16.mxu0 0
  %759 = vmatpush1.bf16.msra.mxu0 %v534
  %760 = vmatprep.mubr.bf16.mxu0 %v240
  %761 = vmatmul.mubr.bf16.gmra.mrb[0].mxu0 %v239
  %v762 = vpop.f32.mrb[0].mxu0
  %v763 = vadd.f32 %v699, %v762
  %v764 = vpop.f32.mrb[0].mxu0
  %v765 = vpop.f32.mrb[0].mxu0
  %v766 = vadd.f32 %v702, %v765
  %v767 = vpop.f32.mrb[0].mxu0
  %768 = vmatprep.mubr.bf16.mxu0 %v247
  %769 = vmatmul.mubr.bf16.gmra.mrb[0].mxu0 %v246
  %v770 = vpop.f32.mrb[0].mxu0
  %v771 = vadd.f32 %v707, %v770
  %v772 = vpop.f32.mrb[0].mxu0
  %v773 = vpop.f32.mrb[0].mxu0
  %v774 = vadd.f32 %v710, %v773
  %v775 = vpop.f32.mrb[0].mxu0
  %776 = vmatprep.mubr.bf16.mxu0 %v254
  %777 = vmatmul.mubr.bf16.gmra.mrb[0].mxu0 %v253
  %v778 = vpop.f32.mrb[0].mxu0
  %v779 = vadd.f32 %v715, %v778
  %v780 = vpop.f32.mrb[0].mxu0
  %v781 = vpop.f32.mrb[0].mxu0
  %v782 = vadd.f32 %v718, %v781
  %v783 = vpop.f32.mrb[0].mxu0
  %784 = vmatprep.mubr.bf16.mxu0 %v261
  %785 = vmatmul.mubr.bf16.gmra.mrb[0].mxu0 %v260
  %v786 = vpop.f32.mrb[0].mxu0
  %v787 = vadd.f32 %v723, %v786
  %v788 = vpop.f32.mrb[0].mxu0
  %v789 = vpop.f32.mrb[0].mxu0
  %v790 = vpop.f32.mrb[0].mxu0
  %791 = vdwg.mxu0
  %792 = vmatprep.subr.bf16.mxu0 0
  %793 = vmatpush1.bf16.msra.mxu0 %v535
  %794 = vmatprep.subr.bf16.mxu0 0
  %795 = vmatpush1.bf16.msra.mxu0 %v536
  %796 = vmatprep.subr.bf16.mxu0 0
  %797 = vmatpush1.bf16.msra.mxu0 0
  %798 = vmatprep.subr.bf16.mxu0 0
  %799 = vmatpush1.bf16.msra.mxu0 0
  %800 = vmatprep.subr.bf16.mxu0 0
  %801 = vmatpush1.bf16.msra.mxu0 0
  %802 = vmatprep.subr.bf16.mxu0 0
  %803 = vmatpush1.bf16.msra.mxu0 0
  %804 = vmatprep.subr.bf16.mxu0 0
  %805 = vmatpush1.bf16.msra.mxu0 0
  %806 = vmatprep.subr.bf16.mxu0 0
  %807 = vmatpush1.bf16.msra.mxu0 0
  %808 = vmatprep.subr.bf16.mxu0 0
  %809 = vmatpush1.bf16.msra.mxu0 0
  %810 = vmatprep.subr.bf16.mxu0 0
  %811 = vmatpush1.bf16.msra.mxu0 0
  %812 = vmatprep.subr.bf16.mxu0 0
  %813 = vmatpush1.bf16.msra.mxu0 0
  %814 = vmatprep.subr.bf16.mxu0 0
  %815 = vmatpush1.bf16.msra.mxu0 0
  %816 = vmatprep.subr.bf16.mxu0 0
  %817 = vmatpush1.bf16.msra.mxu0 0
  %818 = vmatprep.subr.bf16.mxu0 0
  %819 = vmatpush1.bf16.msra.mxu0 0
  %820 = vmatprep.subr.bf16.mxu0 0
  %821 = vmatpush1.bf16.msra.mxu0 0
  %822 = vmatprep.subr.bf16.mxu0 0
  %823 = vmatpush1.bf16.msra.mxu0 0
  %824 = vmatprep.mubr.bf16.mxu0 0
  %825 = vmatmul.mubr.bf16.gmra.mrb[0].mxu0 %v589
  %v826 = vpop.f32.mrb[0].mxu0
  %v827 = vadd.f32 %v763, %v826
  %v828 = vpop.f32.mrb[0].mxu0
  %v829 = vpop.f32.mrb[0].mxu0
  %v830 = vadd.f32 %v766, %v829
  %v831 = vpop.f32.mrb[0].mxu0
  %832 = vmatprep.mubr.bf16.mxu0 0
  %833 = vmatmul.mubr.bf16.gmra.mrb[0].mxu0 %v592
  %v834 = vpop.f32.mrb[0].mxu0
  %v835 = vadd.f32 %v771, %v834
  %v836 = vpop.f32.mrb[0].mxu0
  %v837 = vpop.f32.mrb[0].mxu0
  %v838 = vadd.f32 %v774, %v837
  %v839 = vpop.f32.mrb[0].mxu0
  %840 = vmatprep.mubr.bf16.mxu0 0
  %841 = vmatmul.mubr.bf16.gmra.mrb[0].mxu0 %v595
  %v842 = vpop.f32.mrb[0].mxu0
  %v843 = vadd.f32 %v779, %v842
  %v844 = vpop.f32.mrb[0].mxu0
  %v845 = vpop.f32.mrb[0].mxu0
  %v846 = vadd.f32 %v782, %v845
  %v847 = vpop.f32.mrb[0].mxu0
  %848 = vmatprep.mubr.bf16.mxu0 0
  %849 = vmatmul.mubr.bf16.gmra.mrb[0].mxu0 %v598
  %v850 = vpop.f32.mrb[0].mxu0
  %v851 = vadd.f32 %v787, %v850
  %v852 = vpop.f32.mrb[0].mxu0
  %v853 = vpop.f32.mrb[0].mxu0
  %v854 = vpop.f32.mrb[0].mxu0
  %855 = vdwg.mxu0
  %v856 = vld [vmem:[%s1] sm:$0xff]
  %v857 = vld [vmem:[%s1 + $0x8] sm:$0xff]
  %v858 = vld [vmem:[%s1 + $0x10] sm:$0xff]
  %v859 = vld [vmem:[%s1 + $0x18] sm:$0xf]
  %v860 = vld [vmem:[%s1 + $0x1c] sm:$0xff]
  %v861 = vld [vmem:[%s1 + $0x24] sm:$0xff]
  %v862 = vld [vmem:[%s1 + $0x2c] sm:$0xff]
  %v863 = vld [vmem:[%s1 + $0x34] sm:$0xf]
  %v864 = vld [vmem:[%s1 + $0x38] sm:$0xff]
  %v865 = vld [vmem:[%s1 + $0x40] sm:$0xff]
  %v866 = vld [vmem:[%s1 + $0x48] sm:$0xff]
  %v867 = vld [vmem:[%s1 + $0x50] sm:$0xf]
  %v868 = vld [vmem:[%s1 + $0x54] sm:$0xff]
  %v869 = vld [vmem:[%s1 + $0x5c] sm:$0xff]
  %v870 = vld [vmem:[%s1 + $0x64] sm:$0xff]
  %v871 = vld [vmem:[%s1 + $0x6c] sm:$0xf]
  %v872 = vld [vmem:[%s1 + $0x70] sm:$0xff]
  %v873 = vld [vmem:[%s1 + $0x78] sm:$0xff]
  %v874 = vld [vmem:[%s1 + $0x80] sm:$0xff]
  %v875 = vld [vmem:[%s1 + $0x88] sm:$0xf]
  %v876 = vld [vmem:[%s1 + $0x8c] sm:$0xff]
  %v877 = vld [vmem:[%s1 + $0x94] sm:$0xff]
  %v878 = vld [vmem:[%s1 + $0x9c] sm:$0xff]
  %v879 = vld [vmem:[%s1 + $0xa4] sm:$0xf]
  %v880 = vld [vmem:[%s1 + $0xa8] sm:$0x11]
  %v881 = vld [vmem:[%s1 + $0xb0] sm:$0x11]
  %v882 = vld [vmem:[%s1 + $0xb8] sm:$0x11]
  %v883 = vld [vmem:[%s1 + $0xc0] sm:$0x1]
  %v912 = vunpack.c.l.b16 %v856
  %v913 = vunpack.c.h.b16 %v856
  %v914 = vunpack.c.l.b16 %v857
  %v915 = vunpack.c.h.b16 %v857
  %v916 = vunpack.c.l.b16 %v858
  %v917 = vunpack.c.h.b16 %v858
  %v918 = vunpack.c.l.b16 %v859
  %v919 = vunpack.c.l.b16 %v860
  %v920 = vunpack.c.h.b16 %v860
  %v921 = vunpack.c.l.b16 %v861
  %v922 = vunpack.c.h.b16 %v861
  %v923 = vunpack.c.l.b16 %v862
  %v924 = vunpack.c.h.b16 %v862
  %v925 = vunpack.c.l.b16 %v863
  %v926 = vunpack.c.l.b16 %v864
  %v927 = vunpack.c.h.b16 %v864
  %v928 = vunpack.c.l.b16 %v865
  %v929 = vunpack.c.h.b16 %v865
  %v930 = vunpack.c.l.b16 %v866
  %v931 = vunpack.c.h.b16 %v866
  %v932 = vunpack.c.l.b16 %v867
  %v933 = vunpack.c.l.b16 %v868
  %v934 = vunpack.c.h.b16 %v868
  %v935 = vunpack.c.l.b16 %v869
  %v936 = vunpack.c.h.b16 %v869
  %v937 = vunpack.c.l.b16 %v870
  %v938 = vunpack.c.h.b16 %v870
  %v939 = vunpack.c.l.b16 %v871
  %v940 = vunpack.c.l.b16 %v872
  %v941 = vunpack.c.h.b16 %v872
  %v942 = vunpack.c.l.b16 %v873
  %v943 = vunpack.c.h.b16 %v873
  %v944 = vunpack.c.l.b16 %v874
  %v945 = vunpack.c.h.b16 %v874
  %v946 = vunpack.c.l.b16 %v875
  %v947 = vunpack.c.l.b16 %v876
  %v948 = vunpack.c.h.b16 %v876
  %v949 = vunpack.c.l.b16 %v877
  %v950 = vunpack.c.h.b16 %v877
  %v951 = vunpack.c.l.b16 %v878
  %v952 = vunpack.c.h.b16 %v878
  %v953 = vunpack.c.l.b16 %v879
  %v954 = vunpack.c.l.b16 %v880
  %v955 = vunpack.c.h.b16 %v880
  %v956 = vunpack.c.l.b16 %v881
  %v957 = vunpack.c.h.b16 %v881
  %v958 = vunpack.c.l.b16 %v882
  %v959 = vunpack.c.h.b16 %v882
  %v960 = vunpack.c.l.b16 %v883
  %v961 = vpack.c.b16 %v919, %v912
  %v962 = vpack.c.b16 %v920, %v913
  %v963 = vpack.c.b16 %v921, %v914
  %v964 = vpack.c.b16 %v922, %v915
  %v965 = vpack.c.b16 %v923, %v916
  %v966 = vpack.c.b16 %v924, %v917
  %v967 = vpack.c.b16 %v925, %v918
  %v968 = vpack.c.b16 %v933, %v926
  %v969 = vpack.c.b16 %v934, %v927
  %v970 = vpack.c.b16 %v935, %v928
  %v971 = vpack.c.b16 %v936, %v929
  %v972 = vpack.c.b16 %v937, %v930
  %v973 = vpack.c.b16 %v938, %v931
  %v974 = vpack.c.b16 %v939, %v932
  %v975 = vpack.c.b16 %v947, %v940
  %v976 = vpack.c.b16 %v948, %v941
  %v977 = vpack.c.b16 %v949, %v942
  %v978 = vpack.c.b16 %v950, %v943
  %v979 = vpack.c.b16 %v951, %v944
  %v980 = vpack.c.b16 %v952, %v945
  %v981 = vpack.c.b16 %v953, %v946
  %v982 = vpack.c.b16 %v954, %v954
  %v983 = vpack.c.b16 %v955, %v955
  %v984 = vpack.c.b16 %v956, %v956
  %v985 = vpack.c.b16 %v957, %v957
  %v986 = vpack.c.b16 %v958, %v958
  %v987 = vpack.c.b16 %v959, %v959
  %v988 = vpack.c.b16 %v960, %v960
  %v1014 = vsel %vm587, %v967, 0
  %v1017 = vsel %vm587, %v974, 0
  %v1020 = vsel %vm587, %v981, 0
  %v1023 = vsel %vm587, %v988, 0
  %1025 = vmatprep.subr.bf16.mxu0 0
  %1026 = vmatpush1.bf16.msra.mxu0 %v487
  %1027 = vmatprep.subr.bf16.mxu0 0
  %1028 = vmatpush1.bf16.msra.mxu0 %v488
  %1029 = vmatprep.subr.bf16.mxu0 0
  %1030 = vmatpush1.bf16.msra.mxu0 %v489
  %1031 = vmatprep.subr.bf16.mxu0 0
  %1032 = vmatpush1.bf16.msra.mxu0 %v490
  %1033 = vmatprep.subr.bf16.mxu0 0
  %1034 = vmatpush1.bf16.msra.mxu0 %v491
  %1035 = vmatprep.subr.bf16.mxu0 0
  %1036 = vmatpush1.bf16.msra.mxu0 %v492
  %1037 = vmatprep.subr.bf16.mxu0 0
  %1038 = vmatpush1.bf16.msra.mxu0 %v493
  %1039 = vmatprep.subr.bf16.mxu0 0
  %1040 = vmatpush1.bf16.msra.mxu0 %v494
  %1041 = vmatprep.subr.bf16.mxu0 0
  %1042 = vmatpush1.bf16.msra.mxu0 %v495
  %1043 = vmatprep.subr.bf16.mxu0 0
  %1044 = vmatpush1.bf16.msra.mxu0 %v496
  %1045 = vmatprep.subr.bf16.mxu0 0
  %1046 = vmatpush1.bf16.msra.mxu0 %v497
  %1047 = vmatprep.subr.bf16.mxu0 0
  %1048 = vmatpush1.bf16.msra.mxu0 %v498
  %1049 = vmatprep.subr.bf16.mxu0 0
  %1050 = vmatpush1.bf16.msra.mxu0 %v499
  %1051 = vmatprep.subr.bf16.mxu0 0
  %1052 = vmatpush1.bf16.msra.mxu0 %v500
  %1053 = vmatprep.subr.bf16.mxu0 0
  %1054 = vmatpush1.bf16.msra.mxu0 %v501
  %1055 = vmatprep.subr.bf16.mxu0 0
  %1056 = vmatpush1.bf16.msra.mxu0 %v502
  %1057 = vmatprep.mubr.bf16.mxu0 %v962
  %1058 = vmatmul.mubr.bf16.gmra.mrb[0].mxu0 %v961
  %v1059 = vpop.f32.mrb[0].mxu0
  %v1060 = vadd.f32 0.0, %v1059
  %v1061 = vpop.f32.mrb[0].mxu0
  %v1062 = vpop.f32.mrb[0].mxu0
  %v1063 = vadd.f32 0.0, %v1062
  %v1064 = vpop.f32.mrb[0].mxu0
  %1065 = vmatprep.mubr.bf16.mxu0 %v969
  %1066 = vmatmul.mubr.bf16.gmra.mrb[0].mxu0 %v968
  %v1067 = vpop.f32.mrb[0].mxu0
  %v1068 = vadd.f32 0.0, %v1067
  %v1069 = vpop.f32.mrb[0].mxu0
  %v1070 = vpop.f32.mrb[0].mxu0
  %v1071 = vadd.f32 0.0, %v1070
  %v1072 = vpop.f32.mrb[0].mxu0
  %1073 = vmatprep.mubr.bf16.mxu0 %v976
  %1074 = vmatmul.mubr.bf16.gmra.mrb[0].mxu0 %v975
  %v1075 = vpop.f32.mrb[0].mxu0
  %v1076 = vadd.f32 0.0, %v1075
  %v1077 = vpop.f32.mrb[0].mxu0
  %v1078 = vpop.f32.mrb[0].mxu0
  %v1079 = vadd.f32 0.0, %v1078
  %v1080 = vpop.f32.mrb[0].mxu0
  %1081 = vmatprep.mubr.bf16.mxu0 %v983
  %1082 = vmatmul.mubr.bf16.gmra.mrb[0].mxu0 %v982
  %v1083 = vpop.f32.mrb[0].mxu0
  %v1084 = vadd.f32 0.0, %v1083
  %v1085 = vpop.f32.mrb[0].mxu0
  %v1086 = vpop.f32.mrb[0].mxu0
  %v1087 = vpop.f32.mrb[0].mxu0
  %1088 = vdwg.mxu0
  %1089 = vmatprep.subr.bf16.mxu0 0
  %1090 = vmatpush1.bf16.msra.mxu0 %v503
  %1091 = vmatprep.subr.bf16.mxu0 0
  %1092 = vmatpush1.bf16.msra.mxu0 %v504
  %1093 = vmatprep.subr.bf16.mxu0 0
  %1094 = vmatpush1.bf16.msra.mxu0 %v505
  %1095 = vmatprep.subr.bf16.mxu0 0
  %1096 = vmatpush1.bf16.msra.mxu0 %v506
  %1097 = vmatprep.subr.bf16.mxu0 0
  %1098 = vmatpush1.bf16.msra.mxu0 %v507
  %1099 = vmatprep.subr.bf16.mxu0 0
  %1100 = vmatpush1.bf16.msra.mxu0 %v508
  %1101 = vmatprep.subr.bf16.mxu0 0
  %1102 = vmatpush1.bf16.msra.mxu0 %v509
  %1103 = vmatprep.subr.bf16.mxu0 0
  %1104 = vmatpush1.bf16.msra.mxu0 %v510
  %1105 = vmatprep.subr.bf16.mxu0 0
  %1106 = vmatpush1.bf16.msra.mxu0 %v511
  %1107 = vmatprep.subr.bf16.mxu0 0
  %1108 = vmatpush1.bf16.msra.mxu0 %v512
  %1109 = vmatprep.subr.bf16.mxu0 0
  %1110 = vmatpush1.bf16.msra.mxu0 %v513
  %1111 = vmatprep.subr.bf16.mxu0 0
  %1112 = vmatpush1.bf16.msra.mxu0 %v514
  %1113 = vmatprep.subr.bf16.mxu0 0
  %1114 = vmatpush1.bf16.msra.mxu0 %v515
  %1115 = vmatprep.subr.bf16.mxu0 0
  %1116 = vmatpush1.bf16.msra.mxu0 %v516
  %1117 = vmatprep.subr.bf16.mxu0 0
  %1118 = vmatpush1.bf16.msra.mxu0 %v517
  %1119 = vmatprep.subr.bf16.mxu0 0
  %1120 = vmatpush1.bf16.msra.mxu0 %v518
  %1121 = vmatprep.mubr.bf16.mxu0 %v964
  %1122 = vmatmul.mubr.bf16.gmra.mrb[0].mxu0 %v963
  %v1123 = vpop.f32.mrb[0].mxu0
  %v1124 = vadd.f32 %v1060, %v1123
  %v1125 = vpop.f32.mrb[0].mxu0
  %v1126 = vpop.f32.mrb[0].mxu0
  %v1127 = vadd.f32 %v1063, %v1126
  %v1128 = vpop.f32.mrb[0].mxu0
  %1129 = vmatprep.mubr.bf16.mxu0 %v971
  %1130 = vmatmul.mubr.bf16.gmra.mrb[0].mxu0 %v970
  %v1131 = vpop.f32.mrb[0].mxu0
  %v1132 = vadd.f32 %v1068, %v1131
  %v1133 = vpop.f32.mrb[0].mxu0
  %v1134 = vpop.f32.mrb[0].mxu0
  %v1135 = vadd.f32 %v1071, %v1134
  %v1136 = vpop.f32.mrb[0].mxu0
  %1137 = vmatprep.mubr.bf16.mxu0 %v978
  %1138 = vmatmul.mubr.bf16.gmra.mrb[0].mxu0 %v977
  %v1139 = vpop.f32.mrb[0].mxu0
  %v1140 = vadd.f32 %v1076, %v1139
  %v1141 = vpop.f32.mrb[0].mxu0
  %v1142 = vpop.f32.mrb[0].mxu0
  %v1143 = vadd.f32 %v1079, %v1142
  %v1144 = vpop.f32.mrb[0].mxu0
  %1145 = vmatprep.mubr.bf16.mxu0 %v985
  %1146 = vmatmul.mubr.bf16.gmra.mrb[0].mxu0 %v984
  %v1147 = vpop.f32.mrb[0].mxu0
  %v1148 = vadd.f32 %v1084, %v1147
  %v1149 = vpop.f32.mrb[0].mxu0
  %v1150 = vpop.f32.mrb[0].mxu0
  %v1151 = vpop.f32.mrb[0].mxu0
  %1152 = vdwg.mxu0
  %1153 = vmatprep.subr.bf16.mxu0 0
  %1154 = vmatpush1.bf16.msra.mxu0 %v519
  %1155 = vmatprep.subr.bf16.mxu0 0
  %1156 = vmatpush1.bf16.msra.mxu0 %v520
  %1157 = vmatprep.subr.bf16.mxu0 0
  %1158 = vmatpush1.bf16.msra.mxu0 %v521
  %1159 = vmatprep.subr.bf16.mxu0 0
  %1160 = vmatpush1.bf16.msra.mxu0 %v522
  %1161 = vmatprep.subr.bf16.mxu0 0
  %1162 = vmatpush1.bf16.msra.mxu0 %v523
  %1163 = vmatprep.subr.bf16.mxu0 0
  %1164 = vmatpush1.bf16.msra.mxu0 %v524
  %1165 = vmatprep.subr.bf16.mxu0 0
  %1166 = vmatpush1.bf16.msra.mxu0 %v525
  %1167 = vmatprep.subr.bf16.mxu0 0
  %1168 = vmatpush1.bf16.msra.mxu0 %v526
  %1169 = vmatprep.subr.bf16.mxu0 0
  %1170 = vmatpush1.bf16.msra.mxu0 %v527
  %1171 = vmatprep.subr.bf16.mxu0 0
  %1172 = vmatpush1.bf16.msra.mxu0 %v528
  %1173 = vmatprep.subr.bf16.mxu0 0
  %1174 = vmatpush1.bf16.msra.mxu0 %v529
  %1175 = vmatprep.subr.bf16.mxu0 0
  %1176 = vmatpush1.bf16.msra.mxu0 %v530
  %1177 = vmatprep.subr.bf16.mxu0 0
  %1178 = vmatpush1.bf16.msra.mxu0 %v531
  %1179 = vmatprep.subr.bf16.mxu0 0
  %1180 = vmatpush1.bf16.msra.mxu0 %v532
  %1181 = vmatprep.subr.bf16.mxu0 0
  %1182 = vmatpush1.bf16.msra.mxu0 %v533
  %1183 = vmatprep.subr.bf16.mxu0 0
  %1184 = vmatpush1.bf16.msra.mxu0 %v534
  %1185 = vmatprep.mubr.bf16.mxu0 %v966
  %1186 = vmatmul.mubr.bf16.gmra.mrb[0].mxu0 %v965
  %v1187 = vpop.f32.mrb[0].mxu0
  %v1188 = vadd.f32 %v1124, %v1187
  %v1189 = vpop.f32.mrb[0].mxu0
  %v1190 = vpop.f32.mrb[0].mxu0
  %v1191 = vadd.f32 %v1127, %v1190
  %v1192 = vpop.f32.mrb[0].mxu0
  %1193 = vmatprep.mubr.bf16.mxu0 %v973
  %1194 = vmatmul.mubr.bf16.gmra.mrb[0].mxu0 %v972
  %v1195 = vpop.f32.mrb[0].mxu0
  %v1196 = vadd.f32 %v1132, %v1195
  %v1197 = vpop.f32.mrb[0].mxu0
  %v1198 = vpop.f32.mrb[0].mxu0
  %v1199 = vadd.f32 %v1135, %v1198
  %v1200 = vpop.f32.mrb[0].mxu0
  %1201 = vmatprep.mubr.bf16.mxu0 %v980
  %1202 = vmatmul.mubr.bf16.gmra.mrb[0].mxu0 %v979
  %v1203 = vpop.f32.mrb[0].mxu0
  %v1204 = vadd.f32 %v1140, %v1203
  %v1205 = vpop.f32.mrb[0].mxu0
  %v1206 = vpop.f32.mrb[0].mxu0
  %v1207 = vadd.f32 %v1143, %v1206
  %v1208 = vpop.f32.mrb[0].mxu0
  %1209 = vmatprep.mubr.bf16.mxu0 %v987
  %1210 = vmatmul.mubr.bf16.gmra.mrb[0].mxu0 %v986
  %v1211 = vpop.f32.mrb[0].mxu0
  %v1212 = vadd.f32 %v1148, %v1211
  %v1213 = vpop.f32.mrb[0].mxu0
  %v1214 = vpop.f32.mrb[0].mxu0
  %v1215 = vpop.f32.mrb[0].mxu0
  %1216 = vdwg.mxu0
  %1217 = vmatprep.subr.bf16.mxu0 0
  %1218 = vmatpush1.bf16.msra.mxu0 %v535
  %1219 = vmatprep.subr.bf16.mxu0 0
  %1220 = vmatpush1.bf16.msra.mxu0 %v536
  %1221 = vmatprep.subr.bf16.mxu0 0
  %1222 = vmatpush1.bf16.msra.mxu0 0
  %1223 = vmatprep.subr.bf16.mxu0 0
  %1224 = vmatpush1.bf16.msra.mxu0 0
  %1225 = vmatprep.subr.bf16.mxu0 0
  %1226 = vmatpush1.bf16.msra.mxu0 0
  %1227 = vmatprep.subr.bf16.mxu0 0
  %1228 = vmatpush1.bf16.msra.mxu0 0
  %1229 = vmatprep.subr.bf16.mxu0 0
  %1230 = vmatpush1.bf16.msra.mxu0 0
  %1231 = vmatprep.subr.bf16.mxu0 0
  %1232 = vmatpush1.bf16.msra.mxu0 0
  %1233 = vmatprep.subr.bf16.mxu0 0
  %1234 = vmatpush1.bf16.msra.mxu0 0
  %1235 = vmatprep.subr.bf16.mxu0 0
  %1236 = vmatpush1.bf16.msra.mxu0 0
  %1237 = vmatprep.subr.bf16.mxu0 0
  %1238 = vmatpush1.bf16.msra.mxu0 0
  %1239 = vmatprep.subr.bf16.mxu0 0
  %1240 = vmatpush1.bf16.msra.mxu0 0
  %1241 = vmatprep.subr.bf16.mxu0 0
  %1242 = vmatpush1.bf16.msra.mxu0 0
  %1243 = vmatprep.subr.bf16.mxu0 0
  %1244 = vmatpush1.bf16.msra.mxu0 0
  %1245 = vmatprep.subr.bf16.mxu0 0
  %1246 = vmatpush1.bf16.msra.mxu0 0
  %1247 = vmatprep.subr.bf16.mxu0 0
  %1248 = vmatpush1.bf16.msra.mxu0 0
  %1249 = vmatprep.mubr.bf16.mxu0 0
  %1250 = vmatmul.mubr.bf16.gmra.mrb[0].mxu0 %v1014
  %v1251 = vpop.f32.mrb[0].mxu0
  %v1252 = vadd.f32 %v1188, %v1251
  %v1253 = vpop.f32.mrb[0].mxu0
  %v1254 = vpop.f32.mrb[0].mxu0
  %v1255 = vadd.f32 %v1191, %v1254
  %v1256 = vpop.f32.mrb[0].mxu0
  %1257 = vmatprep.mubr.bf16.mxu0 0
  %1258 = vmatmul.mubr.bf16.gmra.mrb[0].mxu0 %v1017
  %v1259 = vpop.f32.mrb[0].mxu0
  %v1260 = vadd.f32 %v1196, %v1259
  %v1261 = vpop.f32.mrb[0].mxu0
  %v1262 = vpop.f32.mrb[0].mxu0
  %v1263 = vadd.f32 %v1199, %v1262
  %v1264 = vpop.f32.mrb[0].mxu0
  %1265 = vmatprep.mubr.bf16.mxu0 0
  %1266 = vmatmul.mubr.bf16.gmra.mrb[0].mxu0 %v1020
  %v1267 = vpop.f32.mrb[0].mxu0
  %v1268 = vadd.f32 %v1204, %v1267
  %v1269 = vpop.f32.mrb[0].mxu0
  %v1270 = vpop.f32.mrb[0].mxu0
  %v1271 = vadd.f32 %v1207, %v1270
  %v1272 = vpop.f32.mrb[0].mxu0
  %1273 = vmatprep.mubr.bf16.mxu0 0
  %1274 = vmatmul.mubr.bf16.gmra.mrb[0].mxu0 %v1023
  %v1275 = vpop.f32.mrb[0].mxu0
  %v1276 = vadd.f32 %v1212, %v1275
  %v1277 = vpop.f32.mrb[0].mxu0
  %v1278 = vpop.f32.mrb[0].mxu0
  %v1279 = vpop.f32.mrb[0].mxu0
  %1280 = vdwg.mxu0
  %v1281 = vmax.f32 %v827, %v1252
  %v1282 = vmax.f32 %v830, %v1255
  %v1283 = vmax.f32 %v835, %v1260
  %v1284 = vmax.f32 %v838, %v1263
  %v1285 = vmax.f32 %v843, %v1268
  %v1286 = vmax.f32 %v846, %v1271
  %v1287 = vmax.f32 %v851, %v1276
  %v1288 = vld [vmem:[%s2] sm:$0xff]
  %v1289 = vld [vmem:[%s2 + $0x8] sm:$0xff]
  %v1290 = vld [vmem:[%s2 + $0x10] sm:$0xff]
  %v1291 = vld [vmem:[%s2 + $0x18] sm:$0xf]
  %v1292 = vld [vmem:[%s2 + $0x1c] sm:$0xff]
  %v1293 = vld [vmem:[%s2 + $0x24] sm:$0xff]
  %v1294 = vld [vmem:[%s2 + $0x2c] sm:$0xff]
  %v1295 = vld [vmem:[%s2 + $0x34] sm:$0xf]
  %v1296 = vld [vmem:[%s2 + $0x38] sm:$0xff]
  %v1297 = vld [vmem:[%s2 + $0x40] sm:$0xff]
  %v1298 = vld [vmem:[%s2 + $0x48] sm:$0xff]
  %v1299 = vld [vmem:[%s2 + $0x50] sm:$0xf]
  %v1300 = vld [vmem:[%s2 + $0x54] sm:$0xff]
  %v1301 = vld [vmem:[%s2 + $0x5c] sm:$0xff]
  %v1302 = vld [vmem:[%s2 + $0x64] sm:$0xff]
  %v1303 = vld [vmem:[%s2 + $0x6c] sm:$0xf]
  %v1304 = vld [vmem:[%s2 + $0x70] sm:$0xff]
  %v1305 = vld [vmem:[%s2 + $0x78] sm:$0xff]
  %v1306 = vld [vmem:[%s2 + $0x80] sm:$0xff]
  %v1307 = vld [vmem:[%s2 + $0x88] sm:$0xf]
  %v1308 = vld [vmem:[%s2 + $0x8c] sm:$0xff]
  %v1309 = vld [vmem:[%s2 + $0x94] sm:$0xff]
  %v1310 = vld [vmem:[%s2 + $0x9c] sm:$0xff]
  %v1311 = vld [vmem:[%s2 + $0xa4] sm:$0xf]
  %v1312 = vld [vmem:[%s2 + $0xa8] sm:$0x11]
  %v1313 = vld [vmem:[%s2 + $0xb0] sm:$0x11]
  %v1314 = vld [vmem:[%s2 + $0xb8] sm:$0x11]
  %v1315 = vld [vmem:[%s2 + $0xc0] sm:$0x1]
  %v1344 = vunpack.c.l.b16 %v1288
  %v1345 = vunpack.c.h.b16 %v1288
  %v1346 = vunpack.c.l.b16 %v1289
  %v1347 = vunpack.c.h.b16 %v1289
  %v1348 = vunpack.c.l.b16 %v1290
  %v1349 = vunpack.c.h.b16 %v1290
  %v1350 = vunpack.c.l.b16 %v1291
  %v1351 = vunpack.c.l.b16 %v1292
  %v1352 = vunpack.c.h.b16 %v1292
  %v1353 = vunpack.c.l.b16 %v1293
  %v1354 = vunpack.c.h.b16 %v1293
  %v1355 = vunpack.c.l.b16 %v1294
  %v1356 = vunpack.c.h.b16 %v1294
  %v1357 = vunpack.c.l.b16 %v1295
  %v1358 = vunpack.c.l.b16 %v1296
  %v1359 = vunpack.c.h.b16 %v1296
  %v1360 = vunpack.c.l.b16 %v1297
  %v1361 = vunpack.c.h.b16 %v1297
  %v1362 = vunpack.c.l.b16 %v1298
  %v1363 = vunpack.c.h.b16 %v1298
  %v1364 = vunpack.c.l.b16 %v1299
  %v1365 = vunpack.c.l.b16 %v1300
  %v1366 = vunpack.c.h.b16 %v1300
  %v1367 = vunpack.c.l.b16 %v1301
  %v1368 = vunpack.c.h.b16 %v1301
  %v1369 = vunpack.c.l.b16 %v1302
  %v1370 = vunpack.c.h.b16 %v1302
  %v1371 = vunpack.c.l.b16 %v1303
  %v1372 = vunpack.c.l.b16 %v1304
  %v1373 = vunpack.c.h.b16 %v1304
  %v1374 = vunpack.c.l.b16 %v1305
  %v1375 = vunpack.c.h.b16 %v1305
  %v1376 = vunpack.c.l.b16 %v1306
  %v1377 = vunpack.c.h.b16 %v1306
  %v1378 = vunpack.c.l.b16 %v1307
  %v1379 = vunpack.c.l.b16 %v1308
  %v1380 = vunpack.c.h.b16 %v1308
  %v1381 = vunpack.c.l.b16 %v1309
  %v1382 = vunpack.c.h.b16 %v1309
  %v1383 = vunpack.c.l.b16 %v1310
  %v1384 = vunpack.c.h.b16 %v1310
  %v1385 = vunpack.c.l.b16 %v1311
  %v1386 = vunpack.c.l.b16 %v1312
  %v1387 = vunpack.c.h.b16 %v1312
  %v1388 = vunpack.c.l.b16 %v1313
  %v1389 = vunpack.c.h.b16 %v1313
  %v1390 = vunpack.c.l.b16 %v1314
  %v1391 = vunpack.c.h.b16 %v1314
  %v1392 = vunpack.c.l.b16 %v1315
  %v1393 = vpack.c.b16 %v1351, %v1344
  %v1394 = vpack.c.b16 %v1352, %v1345
  %v1395 = vpack.c.b16 %v1353, %v1346
  %v1396 = vpack.c.b16 %v1354, %v1347
  %v1397 = vpack.c.b16 %v1355, %v1348
  %v1398 = vpack.c.b16 %v1356, %v1349
  %v1399 = vpack.c.b16 %v1357, %v1350
  %v1400 = vpack.c.b16 %v1365, %v1358
  %v1401 = vpack.c.b16 %v1366, %v1359
  %v1402 = vpack.c.b16 %v1367, %v1360
  %v1403 = vpack.c.b16 %v1368, %v1361
  %v1404 = vpack.c.b16 %v1369, %v1362
  %v1405 = vpack.c.b16 %v1370, %v1363
  %v1406 = vpack.c.b16 %v1371, %v1364
  %v1407 = vpack.c.b16 %v1379, %v1372
  %v1408 = vpack.c.b16 %v1380, %v1373
  %v1409 = vpack.c.b16 %v1381, %v1374
  %v1410 = vpack.c.b16 %v1382, %v1375
  %v1411 = vpack.c.b16 %v1383, %v1376
  %v1412 = vpack.c.b16 %v1384, %v1377
  %v1413 = vpack.c.b16 %v1385, %v1378
  %v1414 = vpack.c.b16 %v1386, %v1386
  %v1415 = vpack.c.b16 %v1387, %v1387
  %v1416 = vpack.c.b16 %v1388, %v1388
  %v1417 = vpack.c.b16 %v1389, %v1389
  %v1418 = vpack.c.b16 %v1390, %v1390
  %v1419 = vpack.c.b16 %v1391, %v1391
  %v1420 = vpack.c.b16 %v1392, %v1392
  %v1446 = vsel %vm587, %v1399, 0
  %v1449 = vsel %vm587, %v1406, 0
  %v1452 = vsel %vm587, %v1413, 0
  %v1455 = vsel %vm587, %v1420, 0
  %1457 = vmatprep.subr.bf16.mxu0 0
  %1458 = vmatpush1.bf16.msra.mxu0 %v487
  %1459 = vmatprep.subr.bf16.mxu0 0
  %1460 = vmatpush1.bf16.msra.mxu0 %v488
  %1461 = vmatprep.subr.bf16.mxu0 0
  %1462 = vmatpush1.bf16.msra.mxu0 %v489
  %1463 = vmatprep.subr.bf16.mxu0 0
  %1464 = vmatpush1.bf16.msra.mxu0 %v490
  %1465 = vmatprep.subr.bf16.mxu0 0
  %1466 = vmatpush1.bf16.msra.mxu0 %v491
  %1467 = vmatprep.subr.bf16.mxu0 0
  %1468 = vmatpush1.bf16.msra.mxu0 %v492
  %1469 = vmatprep.subr.bf16.mxu0 0
  %1470 = vmatpush1.bf16.msra.mxu0 %v493
  %1471 = vmatprep.subr.bf16.mxu0 0
  %1472 = vmatpush1.bf16.msra.mxu0 %v494
  %1473 = vmatprep.subr.bf16.mxu0 0
  %1474 = vmatpush1.bf16.msra.mxu0 %v495
  %1475 = vmatprep.subr.bf16.mxu0 0
  %1476 = vmatpush1.bf16.msra.mxu0 %v496
  %1477 = vmatprep.subr.bf16.mxu0 0
  %1478 = vmatpush1.bf16.msra.mxu0 %v497
  %1479 = vmatprep.subr.bf16.mxu0 0
  %1480 = vmatpush1.bf16.msra.mxu0 %v498
  %1481 = vmatprep.subr.bf16.mxu0 0
  %1482 = vmatpush1.bf16.msra.mxu0 %v499
  %1483 = vmatprep.subr.bf16.mxu0 0
  %1484 = vmatpush1.bf16.msra.mxu0 %v500
  %1485 = vmatprep.subr.bf16.mxu0 0
  %1486 = vmatpush1.bf16.msra.mxu0 %v501
  %1487 = vmatprep.subr.bf16.mxu0 0
  %1488 = vmatpush1.bf16.msra.mxu0 %v502
  %1489 = vmatprep.mubr.bf16.mxu0 %v1394
  %1490 = vmatmul.mubr.bf16.gmra.mrb[0].mxu0 %v1393
  %v1491 = vpop.f32.mrb[0].mxu0
  %v1492 = vadd.f32 0.0, %v1491
  %v1493 = vpop.f32.mrb[0].mxu0
  %v1494 = vpop.f32.mrb[0].mxu0
  %v1495 = vadd.f32 0.0, %v1494
  %v1496 = vpop.f32.mrb[0].mxu0
  %1497 = vmatprep.mubr.bf16.mxu0 %v1401
  %1498 = vmatmul.mubr.bf16.gmra.mrb[0].mxu0 %v1400
  %v1499 = vpop.f32.mrb[0].mxu0
  %v1500 = vadd.f32 0.0, %v1499
  %v1501 = vpop.f32.mrb[0].mxu0
  %v1502 = vpop.f32.mrb[0].mxu0
  %v1503 = vadd.f32 0.0, %v1502
  %v1504 = vpop.f32.mrb[0].mxu0
  %1505 = vmatprep.mubr.bf16.mxu0 %v1408
  %1506 = vmatmul.mubr.bf16.gmra.mrb[0].mxu0 %v1407
  %v1507 = vpop.f32.mrb[0].mxu0
  %v1508 = vadd.f32 0.0, %v1507
  %v1509 = vpop.f32.mrb[0].mxu0
  %v1510 = vpop.f32.mrb[0].mxu0
  %v1511 = vadd.f32 0.0, %v1510
  %v1512 = vpop.f32.mrb[0].mxu0
  %1513 = vmatprep.mubr.bf16.mxu0 %v1415
  %1514 = vmatmul.mubr.bf16.gmra.mrb[0].mxu0 %v1414
  %v1515 = vpop.f32.mrb[0].mxu0
  %v1516 = vadd.f32 0.0, %v1515
  %v1517 = vpop.f32.mrb[0].mxu0
  %v1518 = vpop.f32.mrb[0].mxu0
  %v1519 = vpop.f32.mrb[0].mxu0
  %1520 = vdwg.mxu0
  %1521 = vmatprep.subr.bf16.mxu0 0
  %1522 = vmatpush1.bf16.msra.mxu0 %v503
  %1523 = vmatprep.subr.bf16.mxu0 0
  %1524 = vmatpush1.bf16.msra.mxu0 %v504
  %1525 = vmatprep.subr.bf16.mxu0 0
  %1526 = vmatpush1.bf16.msra.mxu0 %v505
  %1527 = vmatprep.subr.bf16.mxu0 0
  %1528 = vmatpush1.bf16.msra.mxu0 %v506
  %1529 = vmatprep.subr.bf16.mxu0 0
  %1530 = vmatpush1.bf16.msra.mxu0 %v507
  %1531 = vmatprep.subr.bf16.mxu0 0
  %1532 = vmatpush1.bf16.msra.mxu0 %v508
  %1533 = vmatprep.subr.bf16.mxu0 0
  %1534 = vmatpush1.bf16.msra.mxu0 %v509
  %1535 = vmatprep.subr.bf16.mxu0 0
  %1536 = vmatpush1.bf16.msra.mxu0 %v510
  %1537 = vmatprep.subr.bf16.mxu0 0
  %1538 = vmatpush1.bf16.msra.mxu0 %v511
  %1539 = vmatprep.subr.bf16.mxu0 0
  %1540 = vmatpush1.bf16.msra.mxu0 %v512
  %1541 = vmatprep.subr.bf16.mxu0 0
  %1542 = vmatpush1.bf16.msra.mxu0 %v513
  %1543 = vmatprep.subr.bf16.mxu0 0
  %1544 = vmatpush1.bf16.msra.mxu0 %v514
  %1545 = vmatprep.subr.bf16.mxu0 0
  %1546 = vmatpush1.bf16.msra.mxu0 %v515
  %1547 = vmatprep.subr.bf16.mxu0 0
  %1548 = vmatpush1.bf16.msra.mxu0 %v516
  %1549 = vmatprep.subr.bf16.mxu0 0
  %1550 = vmatpush1.bf16.msra.mxu0 %v517
  %1551 = vmatprep.subr.bf16.mxu0 0
  %1552 = vmatpush1.bf16.msra.mxu0 %v518
  %1553 = vmatprep.mubr.bf16.mxu0 %v1396
  %1554 = vmatmul.mubr.bf16.gmra.mrb[0].mxu0 %v1395
  %v1555 = vpop.f32.mrb[0].mxu0
  %v1556 = vadd.f32 %v1492, %v1555
  %v1557 = vpop.f32.mrb[0].mxu0
  %v1558 = vpop.f32.mrb[0].mxu0
  %v1559 = vadd.f32 %v1495, %v1558
  %v1560 = vpop.f32.mrb[0].mxu0
  %1561 = vmatprep.mubr.bf16.mxu0 %v1403
  %1562 = vmatmul.mubr.bf16.gmra.mrb[0].mxu0 %v1402
  %v1563 = vpop.f32.mrb[0].mxu0
  %v1564 = vadd.f32 %v1500, %v1563
  %v1565 = vpop.f32.mrb[0].mxu0
  %v1566 = vpop.f32.mrb[0].mxu0
  %v1567 = vadd.f32 %v1503, %v1566
  %v1568 = vpop.f32.mrb[0].mxu0
  %1569 = vmatprep.mubr.bf16.mxu0 %v1410
  %1570 = vmatmul.mubr.bf16.gmra.mrb[0].mxu0 %v1409
  %v1571 = vpop.f32.mrb[0].mxu0
  %v1572 = vadd.f32 %v1508, %v1571
  %v1573 = vpop.f32.mrb[0].mxu0
  %v1574 = vpop.f32.mrb[0].mxu0
  %v1575 = vadd.f32 %v1511, %v1574
  %v1576 = vpop.f32.mrb[0].mxu0
  %1577 = vmatprep.mubr.bf16.mxu0 %v1417
  %1578 = vmatmul.mubr.bf16.gmra.mrb[0].mxu0 %v1416
  %v1579 = vpop.f32.mrb[0].mxu0
  %v1580 = vadd.f32 %v1516, %v1579
  %v1581 = vpop.f32.mrb[0].mxu0
  %v1582 = vpop.f32.mrb[0].mxu0
  %v1583 = vpop.f32.mrb[0].mxu0
  %1584 = vdwg.mxu0
  %1585 = vmatprep.subr.bf16.mxu0 0
  %1586 = vmatpush1.bf16.msra.mxu0 %v519
  %1587 = vmatprep.subr.bf16.mxu0 0
  %1588 = vmatpush1.bf16.msra.mxu0 %v520
  %1589 = vmatprep.subr.bf16.mxu0 0
  %1590 = vmatpush1.bf16.msra.mxu0 %v521
  %1591 = vmatprep.subr.bf16.mxu0 0
  %1592 = vmatpush1.bf16.msra.mxu0 %v522
  %1593 = vmatprep.subr.bf16.mxu0 0
  %1594 = vmatpush1.bf16.msra.mxu0 %v523
  %1595 = vmatprep.subr.bf16.mxu0 0
  %1596 = vmatpush1.bf16.msra.mxu0 %v524
  %1597 = vmatprep.subr.bf16.mxu0 0
  %1598 = vmatpush1.bf16.msra.mxu0 %v525
  %1599 = vmatprep.subr.bf16.mxu0 0
  %1600 = vmatpush1.bf16.msra.mxu0 %v526
  %1601 = vmatprep.subr.bf16.mxu0 0
  %1602 = vmatpush1.bf16.msra.mxu0 %v527
  %1603 = vmatprep.subr.bf16.mxu0 0
  %1604 = vmatpush1.bf16.msra.mxu0 %v528
  %1605 = vmatprep.subr.bf16.mxu0 0
  %1606 = vmatpush1.bf16.msra.mxu0 %v529
  %1607 = vmatprep.subr.bf16.mxu0 0
  %1608 = vmatpush1.bf16.msra.mxu0 %v530
  %1609 = vmatprep.subr.bf16.mxu0 0
  %1610 = vmatpush1.bf16.msra.mxu0 %v531
  %1611 = vmatprep.subr.bf16.mxu0 0
  %1612 = vmatpush1.bf16.msra.mxu0 %v532
  %1613 = vmatprep.subr.bf16.mxu0 0
  %1614 = vmatpush1.bf16.msra.mxu0 %v533
  %1615 = vmatprep.subr.bf16.mxu0 0
  %1616 = vmatpush1.bf16.msra.mxu0 %v534
  %1617 = vmatprep.mubr.bf16.mxu0 %v1398
  %1618 = vmatmul.mubr.bf16.gmra.mrb[0].mxu0 %v1397
  %v1619 = vpop.f32.mrb[0].mxu0
  %v1620 = vadd.f32 %v1556, %v1619
  %v1621 = vpop.f32.mrb[0].mxu0
  %v1622 = vpop.f32.mrb[0].mxu0
  %v1623 = vadd.f32 %v1559, %v1622
  %v1624 = vpop.f32.mrb[0].mxu0
  %1625 = vmatprep.mubr.bf16.mxu0 %v1405
  %1626 = vmatmul.mubr.bf16.gmra.mrb[0].mxu0 %v1404
  %v1627 = vpop.f32.mrb[0].mxu0
  %v1628 = vadd.f32 %v1564, %v1627
  %v1629 = vpop.f32.mrb[0].mxu0
  %v1630 = vpop.f32.mrb[0].mxu0
  %v1631 = vadd.f32 %v1567, %v1630
  %v1632 = vpop.f32.mrb[0].mxu0
  %1633 = vmatprep.mubr.bf16.mxu0 %v1412
  %1634 = vmatmul.mubr.bf16.gmra.mrb[0].mxu0 %v1411
  %v1635 = vpop.f32.mrb[0].mxu0
  %v1636 = vadd.f32 %v1572, %v1635
  %v1637 = vpop.f32.mrb[0].mxu0
  %v1638 = vpop.f32.mrb[0].mxu0
  %v1639 = vadd.f32 %v1575, %v1638
  %v1640 = vpop.f32.mrb[0].mxu0
  %1641 = vmatprep.mubr.bf16.mxu0 %v1419
  %1642 = vmatmul.mubr.bf16.gmra.mrb[0].mxu0 %v1418
  %v1643 = vpop.f32.mrb[0].mxu0
  %v1644 = vadd.f32 %v1580, %v1643
  %v1645 = vpop.f32.mrb[0].mxu0
  %v1646 = vpop.f32.mrb[0].mxu0
  %v1647 = vpop.f32.mrb[0].mxu0
  %1648 = vdwg.mxu0
  %1649 = vmatprep.subr.bf16.mxu0 0
  %1650 = vmatpush1.bf16.msra.mxu0 %v535
  %1651 = vmatprep.subr.bf16.mxu0 0
  %1652 = vmatpush1.bf16.msra.mxu0 %v536
  %1653 = vmatprep.subr.bf16.mxu0 0
  %1654 = vmatpush1.bf16.msra.mxu0 0
  %1655 = vmatprep.subr.bf16.mxu0 0
  %1656 = vmatpush1.bf16.msra.mxu0 0
  %1657 = vmatprep.subr.bf16.mxu0 0
  %1658 = vmatpush1.bf16.msra.mxu0 0
  %1659 = vmatprep.subr.bf16.mxu0 0
  %1660 = vmatpush1.bf16.msra.mxu0 0
  %1661 = vmatprep.subr.bf16.mxu0 0
  %1662 = vmatpush1.bf16.msra.mxu0 0
  %1663 = vmatprep.subr.bf16.mxu0 0
  %1664 = vmatpush1.bf16.msra.mxu0 0
  %1665 = vmatprep.subr.bf16.mxu0 0
  %1666 = vmatpush1.bf16.msra.mxu0 0
  %1667 = vmatprep.subr.bf16.mxu0 0
  %1668 = vmatpush1.bf16.msra.mxu0 0
  %1669 = vmatprep.subr.bf16.mxu0 0
  %1670 = vmatpush1.bf16.msra.mxu0 0
  %1671 = vmatprep.subr.bf16.mxu0 0
  %1672 = vmatpush1.bf16.msra.mxu0 0
  %1673 = vmatprep.subr.bf16.mxu0 0
  %1674 = vmatpush1.bf16.msra.mxu0 0
  %1675 = vmatprep.subr.bf16.mxu0 0
  %1676 = vmatpush1.bf16.msra.mxu0 0
  %1677 = vmatprep.subr.bf16.mxu0 0
  %1678 = vmatpush1.bf16.msra.mxu0 0
  %1679 = vmatprep.subr.bf16.mxu0 0
  %1680 = vmatpush1.bf16.msra.mxu0 0
  %1681 = vmatprep.mubr.bf16.mxu0 0
  %1682 = vmatmul.mubr.bf16.gmra.mrb[0].mxu0 %v1446
  %v1683 = vpop.f32.mrb[0].mxu0
  %v1684 = vadd.f32 %v1620, %v1683
  %v1685 = vpop.f32.mrb[0].mxu0
  %v1686 = vpop.f32.mrb[0].mxu0
  %v1687 = vadd.f32 %v1623, %v1686
  %v1688 = vpop.f32.mrb[0].mxu0
  %1689 = vmatprep.mubr.bf16.mxu0 0
  %1690 = vmatmul.mubr.bf16.gmra.mrb[0].mxu0 %v1449
  %v1691 = vpop.f32.mrb[0].mxu0
  %v1692 = vadd.f32 %v1628, %v1691
  %v1693 = vpop.f32.mrb[0].mxu0
  %v1694 = vpop.f32.mrb[0].mxu0
  %v1695 = vadd.f32 %v1631, %v1694
  %v1696 = vpop.f32.mrb[0].mxu0
  %1697 = vmatprep.mubr.bf16.mxu0 0
  %1698 = vmatmul.mubr.bf16.gmra.mrb[0].mxu0 %v1452
  %v1699 = vpop.f32.mrb[0].mxu0
  %v1700 = vadd.f32 %v1636, %v1699
  %v1701 = vpop.f32.mrb[0].mxu0
  %v1702 = vpop.f32.mrb[0].mxu0
  %v1703 = vadd.f32 %v1639, %v1702
  %v1704 = vpop.f32.mrb[0].mxu0
  %1705 = vmatprep.mubr.bf16.mxu0 0
  %1706 = vmatmul.mubr.bf16.gmra.mrb[0].mxu0 %v1455
  %v1707 = vpop.f32.mrb[0].mxu0
  %v1708 = vadd.f32 %v1644, %v1707
  %v1709 = vpop.f32.mrb[0].mxu0
  %v1710 = vpop.f32.mrb[0].mxu0
  %v1711 = vpop.f32.mrb[0].mxu0
  %1712 = vdwg.mxu0
  %v1713 = vld [vmem:[%s3] sm:$0xff]
  %v1714 = vld [vmem:[%s3 + $0x8] sm:$0xff]
  %v1715 = vld [vmem:[%s3 + $0x10] sm:$0xff]
  %v1716 = vld [vmem:[%s3 + $0x18] sm:$0xf]
  %v1717 = vld [vmem:[%s3 + $0x1c] sm:$0xff]
  %v1718 = vld [vmem:[%s3 + $0x24] sm:$0xff]
  %v1719 = vld [vmem:[%s3 + $0x2c] sm:$0xff]
  %v1720 = vld [vmem:[%s3 + $0x34] sm:$0xf]
  %v1721 = vld [vmem:[%s3 + $0x38] sm:$0xff]
  %v1722 = vld [vmem:[%s3 + $0x40] sm:$0xff]
  %v1723 = vld [vmem:[%s3 + $0x48] sm:$0xff]
  %v1724 = vld [vmem:[%s3 + $0x50] sm:$0xf]
  %v1725 = vld [vmem:[%s3 + $0x54] sm:$0xff]
  %v1726 = vld [vmem:[%s3 + $0x5c] sm:$0xff]
  %v1727 = vld [vmem:[%s3 + $0x64] sm:$0xff]
  %v1728 = vld [vmem:[%s3 + $0x6c] sm:$0xf]
  %v1729 = vld [vmem:[%s3 + $0x70] sm:$0xff]
  %v1730 = vld [vmem:[%s3 + $0x78] sm:$0xff]
  %v1731 = vld [vmem:[%s3 + $0x80] sm:$0xff]
  %v1732 = vld [vmem:[%s3 + $0x88] sm:$0xf]
  %v1733 = vld [vmem:[%s3 + $0x8c] sm:$0xff]
  %v1734 = vld [vmem:[%s3 + $0x94] sm:$0xff]
  %v1735 = vld [vmem:[%s3 + $0x9c] sm:$0xff]
  %v1736 = vld [vmem:[%s3 + $0xa4] sm:$0xf]
  %v1737 = vld [vmem:[%s3 + $0xa8] sm:$0x11]
  %v1738 = vld [vmem:[%s3 + $0xb0] sm:$0x11]
  %v1739 = vld [vmem:[%s3 + $0xb8] sm:$0x11]
  %v1740 = vld [vmem:[%s3 + $0xc0] sm:$0x1]
  %v1769 = vunpack.c.l.b16 %v1713
  %v1770 = vunpack.c.h.b16 %v1713
  %v1771 = vunpack.c.l.b16 %v1714
  %v1772 = vunpack.c.h.b16 %v1714
  %v1773 = vunpack.c.l.b16 %v1715
  %v1774 = vunpack.c.h.b16 %v1715
  %v1775 = vunpack.c.l.b16 %v1716
  %v1776 = vunpack.c.l.b16 %v1717
  %v1777 = vunpack.c.h.b16 %v1717
  %v1778 = vunpack.c.l.b16 %v1718
  %v1779 = vunpack.c.h.b16 %v1718
  %v1780 = vunpack.c.l.b16 %v1719
  %v1781 = vunpack.c.h.b16 %v1719
  %v1782 = vunpack.c.l.b16 %v1720
  %v1783 = vunpack.c.l.b16 %v1721
  %v1784 = vunpack.c.h.b16 %v1721
  %v1785 = vunpack.c.l.b16 %v1722
  %v1786 = vunpack.c.h.b16 %v1722
  %v1787 = vunpack.c.l.b16 %v1723
  %v1788 = vunpack.c.h.b16 %v1723
  %v1789 = vunpack.c.l.b16 %v1724
  %v1790 = vunpack.c.l.b16 %v1725
  %v1791 = vunpack.c.h.b16 %v1725
  %v1792 = vunpack.c.l.b16 %v1726
  %v1793 = vunpack.c.h.b16 %v1726
  %v1794 = vunpack.c.l.b16 %v1727
  %v1795 = vunpack.c.h.b16 %v1727
  %v1796 = vunpack.c.l.b16 %v1728
  %v1797 = vunpack.c.l.b16 %v1729
  %v1798 = vunpack.c.h.b16 %v1729
  %v1799 = vunpack.c.l.b16 %v1730
  %v1800 = vunpack.c.h.b16 %v1730
  %v1801 = vunpack.c.l.b16 %v1731
  %v1802 = vunpack.c.h.b16 %v1731
  %v1803 = vunpack.c.l.b16 %v1732
  %v1804 = vunpack.c.l.b16 %v1733
  %v1805 = vunpack.c.h.b16 %v1733
  %v1806 = vunpack.c.l.b16 %v1734
  %v1807 = vunpack.c.h.b16 %v1734
  %v1808 = vunpack.c.l.b16 %v1735
  %v1809 = vunpack.c.h.b16 %v1735
  %v1810 = vunpack.c.l.b16 %v1736
  %v1811 = vunpack.c.l.b16 %v1737
  %v1812 = vunpack.c.h.b16 %v1737
  %v1813 = vunpack.c.l.b16 %v1738
  %v1814 = vunpack.c.h.b16 %v1738
  %v1815 = vunpack.c.l.b16 %v1739
  %v1816 = vunpack.c.h.b16 %v1739
  %v1817 = vunpack.c.l.b16 %v1740
  %v1818 = vpack.c.b16 %v1776, %v1769
  %v1819 = vpack.c.b16 %v1777, %v1770
  %v1820 = vpack.c.b16 %v1778, %v1771
  %v1821 = vpack.c.b16 %v1779, %v1772
  %v1822 = vpack.c.b16 %v1780, %v1773
  %v1823 = vpack.c.b16 %v1781, %v1774
  %v1824 = vpack.c.b16 %v1782, %v1775
  %v1825 = vpack.c.b16 %v1790, %v1783
  %v1826 = vpack.c.b16 %v1791, %v1784
  %v1827 = vpack.c.b16 %v1792, %v1785
  %v1828 = vpack.c.b16 %v1793, %v1786
  %v1829 = vpack.c.b16 %v1794, %v1787
  %v1830 = vpack.c.b16 %v1795, %v1788
  %v1831 = vpack.c.b16 %v1796, %v1789
  %v1832 = vpack.c.b16 %v1804, %v1797
  %v1833 = vpack.c.b16 %v1805, %v1798
  %v1834 = vpack.c.b16 %v1806, %v1799
  %v1835 = vpack.c.b16 %v1807, %v1800
  %v1836 = vpack.c.b16 %v1808, %v1801
  %v1837 = vpack.c.b16 %v1809, %v1802
  %v1838 = vpack.c.b16 %v1810, %v1803
  %v1839 = vpack.c.b16 %v1811, %v1811
  %v1840 = vpack.c.b16 %v1812, %v1812
  %v1841 = vpack.c.b16 %v1813, %v1813
  %v1842 = vpack.c.b16 %v1814, %v1814
  %v1843 = vpack.c.b16 %v1815, %v1815
  %v1844 = vpack.c.b16 %v1816, %v1816
  %v1845 = vpack.c.b16 %v1817, %v1817
  %v1871 = vsel %vm587, %v1824, 0
  %v1874 = vsel %vm587, %v1831, 0
  %v1877 = vsel %vm587, %v1838, 0
  %v1880 = vsel %vm587, %v1845, 0
  %1882 = vmatprep.subr.bf16.mxu0 0
  %1883 = vmatpush1.bf16.msra.mxu0 %v487
  %1884 = vmatprep.subr.bf16.mxu0 0
  %1885 = vmatpush1.bf16.msra.mxu0 %v488
  %1886 = vmatprep.subr.bf16.mxu0 0
  %1887 = vmatpush1.bf16.msra.mxu0 %v489
  %1888 = vmatprep.subr.bf16.mxu0 0
  %1889 = vmatpush1.bf16.msra.mxu0 %v490
  %1890 = vmatprep.subr.bf16.mxu0 0
  %1891 = vmatpush1.bf16.msra.mxu0 %v491
  %1892 = vmatprep.subr.bf16.mxu0 0
  %1893 = vmatpush1.bf16.msra.mxu0 %v492
  %1894 = vmatprep.subr.bf16.mxu0 0
  %1895 = vmatpush1.bf16.msra.mxu0 %v493
  %1896 = vmatprep.subr.bf16.mxu0 0
  %1897 = vmatpush1.bf16.msra.mxu0 %v494
  %1898 = vmatprep.subr.bf16.mxu0 0
  %1899 = vmatpush1.bf16.msra.mxu0 %v495
  %1900 = vmatprep.subr.bf16.mxu0 0
  %1901 = vmatpush1.bf16.msra.mxu0 %v496
  %1902 = vmatprep.subr.bf16.mxu0 0
  %1903 = vmatpush1.bf16.msra.mxu0 %v497
  %1904 = vmatprep.subr.bf16.mxu0 0
  %1905 = vmatpush1.bf16.msra.mxu0 %v498
  %1906 = vmatprep.subr.bf16.mxu0 0
  %1907 = vmatpush1.bf16.msra.mxu0 %v499
  %1908 = vmatprep.subr.bf16.mxu0 0
  %1909 = vmatpush1.bf16.msra.mxu0 %v500
  %1910 = vmatprep.subr.bf16.mxu0 0
  %1911 = vmatpush1.bf16.msra.mxu0 %v501
  %1912 = vmatprep.subr.bf16.mxu0 0
  %1913 = vmatpush1.bf16.msra.mxu0 %v502
  %1914 = vmatprep.mubr.bf16.mxu0 %v1819
  %1915 = vmatmul.mubr.bf16.gmra.mrb[0].mxu0 %v1818
  %v1916 = vpop.f32.mrb[0].mxu0
  %v1917 = vadd.f32 0.0, %v1916
  %v1918 = vpop.f32.mrb[0].mxu0
  %v1919 = vpop.f32.mrb[0].mxu0
  %v1920 = vadd.f32 0.0, %v1919
  %v1921 = vpop.f32.mrb[0].mxu0
  %1922 = vmatprep.mubr.bf16.mxu0 %v1826
  %1923 = vmatmul.mubr.bf16.gmra.mrb[0].mxu0 %v1825
  %v1924 = vpop.f32.mrb[0].mxu0
  %v1925 = vadd.f32 0.0, %v1924
  %v1926 = vpop.f32.mrb[0].mxu0
  %v1927 = vpop.f32.mrb[0].mxu0
  %v1928 = vadd.f32 0.0, %v1927
  %v1929 = vpop.f32.mrb[0].mxu0
  %1930 = vmatprep.mubr.bf16.mxu0 %v1833
  %1931 = vmatmul.mubr.bf16.gmra.mrb[0].mxu0 %v1832
  %v1932 = vpop.f32.mrb[0].mxu0
  %v1933 = vadd.f32 0.0, %v1932
  %v1934 = vpop.f32.mrb[0].mxu0
  %v1935 = vpop.f32.mrb[0].mxu0
  %v1936 = vadd.f32 0.0, %v1935
  %v1937 = vpop.f32.mrb[0].mxu0
  %1938 = vmatprep.mubr.bf16.mxu0 %v1840
  %1939 = vmatmul.mubr.bf16.gmra.mrb[0].mxu0 %v1839
  %v1940 = vpop.f32.mrb[0].mxu0
  %v1941 = vadd.f32 0.0, %v1940
  %v1942 = vpop.f32.mrb[0].mxu0
  %v1943 = vpop.f32.mrb[0].mxu0
  %v1944 = vpop.f32.mrb[0].mxu0
  %1945 = vdwg.mxu0
  %1946 = vmatprep.subr.bf16.mxu0 0
  %1947 = vmatpush1.bf16.msra.mxu0 %v503
  %1948 = vmatprep.subr.bf16.mxu0 0
  %1949 = vmatpush1.bf16.msra.mxu0 %v504
  %1950 = vmatprep.subr.bf16.mxu0 0
  %1951 = vmatpush1.bf16.msra.mxu0 %v505
  %1952 = vmatprep.subr.bf16.mxu0 0
  %1953 = vmatpush1.bf16.msra.mxu0 %v506
  %1954 = vmatprep.subr.bf16.mxu0 0
  %1955 = vmatpush1.bf16.msra.mxu0 %v507
  %1956 = vmatprep.subr.bf16.mxu0 0
  %1957 = vmatpush1.bf16.msra.mxu0 %v508
  %1958 = vmatprep.subr.bf16.mxu0 0
  %1959 = vmatpush1.bf16.msra.mxu0 %v509
  %1960 = vmatprep.subr.bf16.mxu0 0
  %1961 = vmatpush1.bf16.msra.mxu0 %v510
  %1962 = vmatprep.subr.bf16.mxu0 0
  %1963 = vmatpush1.bf16.msra.mxu0 %v511
  %1964 = vmatprep.subr.bf16.mxu0 0
  %1965 = vmatpush1.bf16.msra.mxu0 %v512
  %1966 = vmatprep.subr.bf16.mxu0 0
  %1967 = vmatpush1.bf16.msra.mxu0 %v513
  %1968 = vmatprep.subr.bf16.mxu0 0
  %1969 = vmatpush1.bf16.msra.mxu0 %v514
  %1970 = vmatprep.subr.bf16.mxu0 0
  %1971 = vmatpush1.bf16.msra.mxu0 %v515
  %1972 = vmatprep.subr.bf16.mxu0 0
  %1973 = vmatpush1.bf16.msra.mxu0 %v516
  %1974 = vmatprep.subr.bf16.mxu0 0
  %1975 = vmatpush1.bf16.msra.mxu0 %v517
  %1976 = vmatprep.subr.bf16.mxu0 0
  %1977 = vmatpush1.bf16.msra.mxu0 %v518
  %1978 = vmatprep.mubr.bf16.mxu0 %v1821
  %1979 = vmatmul.mubr.bf16.gmra.mrb[0].mxu0 %v1820
  %v1980 = vpop.f32.mrb[0].mxu0
  %v1981 = vadd.f32 %v1917, %v1980
  %v1982 = vpop.f32.mrb[0].mxu0
  %v1983 = vpop.f32.mrb[0].mxu0
  %v1984 = vadd.f32 %v1920, %v1983
  %v1985 = vpop.f32.mrb[0].mxu0
  %1986 = vmatprep.mubr.bf16.mxu0 %v1828
  %1987 = vmatmul.mubr.bf16.gmra.mrb[0].mxu0 %v1827
  %v1988 = vpop.f32.mrb[0].mxu0
  %v1989 = vadd.f32 %v1925, %v1988
  %v1990 = vpop.f32.mrb[0].mxu0
  %v1991 = vpop.f32.mrb[0].mxu0
  %v1992 = vadd.f32 %v1928, %v1991
  %v1993 = vpop.f32.mrb[0].mxu0
  %1994 = vmatprep.mubr.bf16.mxu0 %v1835
  %1995 = vmatmul.mubr.bf16.gmra.mrb[0].mxu0 %v1834
  %v1996 = vpop.f32.mrb[0].mxu0
  %v1997 = vadd.f32 %v1933, %v1996
  %v1998 = vpop.f32.mrb[0].mxu0
  %v1999 = vpop.f32.mrb[0].mxu0
  %v2000 = vadd.f32 %v1936, %v1999
  %v2001 = vpop.f32.mrb[0].mxu0
  %2002 = vmatprep.mubr.bf16.mxu0 %v1842
  %2003 = vmatmul.mubr.bf16.gmra.mrb[0].mxu0 %v1841
  %v2004 = vpop.f32.mrb[0].mxu0
  %v2005 = vadd.f32 %v1941, %v2004
  %v2006 = vpop.f32.mrb[0].mxu0
  %v2007 = vpop.f32.mrb[0].mxu0
  %v2008 = vpop.f32.mrb[0].mxu0
  %2009 = vdwg.mxu0
  %2010 = vmatprep.subr.bf16.mxu0 0
  %2011 = vmatpush1.bf16.msra.mxu0 %v519
  %2012 = vmatprep.subr.bf16.mxu0 0
  %2013 = vmatpush1.bf16.msra.mxu0 %v520
  %2014 = vmatprep.subr.bf16.mxu0 0
  %2015 = vmatpush1.bf16.msra.mxu0 %v521
  %2016 = vmatprep.subr.bf16.mxu0 0
  %2017 = vmatpush1.bf16.msra.mxu0 %v522
  %2018 = vmatprep.subr.bf16.mxu0 0
  %2019 = vmatpush1.bf16.msra.mxu0 %v523
  %2020 = vmatprep.subr.bf16.mxu0 0
  %2021 = vmatpush1.bf16.msra.mxu0 %v524
  %2022 = vmatprep.subr.bf16.mxu0 0
  %2023 = vmatpush1.bf16.msra.mxu0 %v525
  %2024 = vmatprep.subr.bf16.mxu0 0
  %2025 = vmatpush1.bf16.msra.mxu0 %v526
  %2026 = vmatprep.subr.bf16.mxu0 0
  %2027 = vmatpush1.bf16.msra.mxu0 %v527
  %2028 = vmatprep.subr.bf16.mxu0 0
  %2029 = vmatpush1.bf16.msra.mxu0 %v528
  %2030 = vmatprep.subr.bf16.mxu0 0
  %2031 = vmatpush1.bf16.msra.mxu0 %v529
  %2032 = vmatprep.subr.bf16.mxu0 0
  %2033 = vmatpush1.bf16.msra.mxu0 %v530
  %2034 = vmatprep.subr.bf16.mxu0 0
  %2035 = vmatpush1.bf16.msra.mxu0 %v531
  %2036 = vmatprep.subr.bf16.mxu0 0
  %2037 = vmatpush1.bf16.msra.mxu0 %v532
  %2038 = vmatprep.subr.bf16.mxu0 0
  %2039 = vmatpush1.bf16.msra.mxu0 %v533
  %2040 = vmatprep.subr.bf16.mxu0 0
  %2041 = vmatpush1.bf16.msra.mxu0 %v534
  %2042 = vmatprep.mubr.bf16.mxu0 %v1823
  %2043 = vmatmul.mubr.bf16.gmra.mrb[0].mxu0 %v1822
  %v2044 = vpop.f32.mrb[0].mxu0
  %v2045 = vadd.f32 %v1981, %v2044
  %v2046 = vpop.f32.mrb[0].mxu0
  %v2047 = vpop.f32.mrb[0].mxu0
  %v2048 = vadd.f32 %v1984, %v2047
  %v2049 = vpop.f32.mrb[0].mxu0
  %2050 = vmatprep.mubr.bf16.mxu0 %v1830
  %2051 = vmatmul.mubr.bf16.gmra.mrb[0].mxu0 %v1829
  %v2052 = vpop.f32.mrb[0].mxu0
  %v2053 = vadd.f32 %v1989, %v2052
  %v2054 = vpop.f32.mrb[0].mxu0
  %v2055 = vpop.f32.mrb[0].mxu0
  %v2056 = vadd.f32 %v1992, %v2055
  %v2057 = vpop.f32.mrb[0].mxu0
  %2058 = vmatprep.mubr.bf16.mxu0 %v1837
  %2059 = vmatmul.mubr.bf16.gmra.mrb[0].mxu0 %v1836
  %v2060 = vpop.f32.mrb[0].mxu0
  %v2061 = vadd.f32 %v1997, %v2060
  %v2062 = vpop.f32.mrb[0].mxu0
  %v2063 = vpop.f32.mrb[0].mxu0
  %v2064 = vadd.f32 %v2000, %v2063
  %v2065 = vpop.f32.mrb[0].mxu0
  %2066 = vmatprep.mubr.bf16.mxu0 %v1844
  %2067 = vmatmul.mubr.bf16.gmra.mrb[0].mxu0 %v1843
  %v2068 = vpop.f32.mrb[0].mxu0
  %v2069 = vadd.f32 %v2005, %v2068
  %v2070 = vpop.f32.mrb[0].mxu0
  %v2071 = vpop.f32.mrb[0].mxu0
  %v2072 = vpop.f32.mrb[0].mxu0
  %2073 = vdwg.mxu0
  %2074 = vmatprep.subr.bf16.mxu0 0
  %2075 = vmatpush1.bf16.msra.mxu0 %v535
  %2076 = vmatprep.subr.bf16.mxu0 0
  %2077 = vmatpush1.bf16.msra.mxu0 %v536
  %2078 = vmatprep.subr.bf16.mxu0 0
  %2079 = vmatpush1.bf16.msra.mxu0 0
  %2080 = vmatprep.subr.bf16.mxu0 0
  %2081 = vmatpush1.bf16.msra.mxu0 0
  %2082 = vmatprep.subr.bf16.mxu0 0
  %2083 = vmatpush1.bf16.msra.mxu0 0
  %2084 = vmatprep.subr.bf16.mxu0 0
  %2085 = vmatpush1.bf16.msra.mxu0 0
  %2086 = vmatprep.subr.bf16.mxu0 0
  %2087 = vmatpush1.bf16.msra.mxu0 0
  %2088 = vmatprep.subr.bf16.mxu0 0
  %2089 = vmatpush1.bf16.msra.mxu0 0
  %2090 = vmatprep.subr.bf16.mxu0 0
  %2091 = vmatpush1.bf16.msra.mxu0 0
  %2092 = vmatprep.subr.bf16.mxu0 0
  %2093 = vmatpush1.bf16.msra.mxu0 0
  %2094 = vmatprep.subr.bf16.mxu0 0
  %2095 = vmatpush1.bf16.msra.mxu0 0
  %2096 = vmatprep.subr.bf16.mxu0 0
  %2097 = vmatpush1.bf16.msra.mxu0 0
  %2098 = vmatprep.subr.bf16.mxu0 0
  %2099 = vmatpush1.bf16.msra.mxu0 0
  %2100 = vmatprep.subr.bf16.mxu0 0
  %2101 = vmatpush1.bf16.msra.mxu0 0
  %2102 = vmatprep.subr.bf16.mxu0 0
  %2103 = vmatpush1.bf16.msra.mxu0 0
  %2104 = vmatprep.subr.bf16.mxu0 0
  %2105 = vmatpush1.bf16.msra.mxu0 0
  %2106 = vmatprep.mubr.bf16.mxu0 0
  %2107 = vmatmul.mubr.bf16.gmra.mrb[0].mxu0 %v1871
  %v2108 = vpop.f32.mrb[0].mxu0
  %v2109 = vadd.f32 %v2045, %v2108
  %v2110 = vpop.f32.mrb[0].mxu0
  %v2111 = vpop.f32.mrb[0].mxu0
  %v2112 = vadd.f32 %v2048, %v2111
  %v2113 = vpop.f32.mrb[0].mxu0
  %2114 = vmatprep.mubr.bf16.mxu0 0
  %2115 = vmatmul.mubr.bf16.gmra.mrb[0].mxu0 %v1874
  %v2116 = vpop.f32.mrb[0].mxu0
  %v2117 = vadd.f32 %v2053, %v2116
  %v2118 = vpop.f32.mrb[0].mxu0
  %v2119 = vpop.f32.mrb[0].mxu0
  %v2120 = vadd.f32 %v2056, %v2119
  %v2121 = vpop.f32.mrb[0].mxu0
  %2122 = vmatprep.mubr.bf16.mxu0 0
  %2123 = vmatmul.mubr.bf16.gmra.mrb[0].mxu0 %v1877
  %v2124 = vpop.f32.mrb[0].mxu0
  %v2125 = vadd.f32 %v2061, %v2124
  %v2126 = vpop.f32.mrb[0].mxu0
  %v2127 = vpop.f32.mrb[0].mxu0
  %v2128 = vadd.f32 %v2064, %v2127
  %v2129 = vpop.f32.mrb[0].mxu0
  %2130 = vmatprep.mubr.bf16.mxu0 0
  %2131 = vmatmul.mubr.bf16.gmra.mrb[0].mxu0 %v1880
  %v2132 = vpop.f32.mrb[0].mxu0
  %v2133 = vadd.f32 %v2069, %v2132
  %v2134 = vpop.f32.mrb[0].mxu0
  %v2135 = vpop.f32.mrb[0].mxu0
  %v2136 = vpop.f32.mrb[0].mxu0
  %2137 = vdwg.mxu0
  %v2138 = vmax.f32 %v1684, %v2109
  %v2139 = vmax.f32 %v1687, %v2112
  %v2140 = vmax.f32 %v1692, %v2117
  %v2141 = vmax.f32 %v1695, %v2120
  %v2142 = vmax.f32 %v1700, %v2125
  %v2143 = vmax.f32 %v1703, %v2128
  %v2144 = vmax.f32 %v1708, %v2133
  %v2145 = vmax.f32 %v1281, %v2138
  %v2146 = vmax.f32 %v1282, %v2139
  %v2147 = vmax.f32 %v1283, %v2140
  %v2148 = vmax.f32 %v1284, %v2141
  %v2149 = vmax.f32 %v1285, %v2142
  %v2150 = vmax.f32 %v1286, %v2143
  %v2151 = vmax.f32 %v1287, %v2144
  %v2152 = vld [vmem:[%s5] sm:$0x1]
  %v2154 = vlaneseq
  %v2155 = vshrl.u32 %v2154, 7
  %v2156 = vsub.s32 0, %v2155
  %v2157 = vrot.slane %v2152, %v2156
  %v2159 = vadd.f32 %v2145, %v2157
  %v2160 = vadd.f32 %v2146, %v2157
  %v2161 = vadd.f32 %v2147, %v2157
  %v2162 = vadd.f32 %v2148, %v2157
  %v2163 = vadd.f32 %v2149, %v2157
  %v2164 = vadd.f32 %v2150, %v2157
  %v2165 = vadd.f32 %v2151, %v2157
  %v2166 = vmax.f32 %v2159, 0.0
  %v2167 = vmax.f32 %v2160, 0.0
  %v2168 = vmax.f32 %v2161, 0.0
  %v2169 = vmax.f32 %v2162, 0.0
  %v2170 = vmax.f32 %v2163, 0.0
  %v2171 = vmax.f32 %v2164, 0.0
  %v2172 = vmax.f32 %v2165, 0.0
  %v2173 = vld [vmem:[%s6] sm:$0x1]
  %v2175 = vlaneseq
  %v2176 = vshrl.u32 %v2175, 7
  %v2177 = vsub.s32 0, %v2176
  %v2178 = vrot.slane %v2173, %v2177
  %v2180 = vmul.f32 %v2166, %v2178
  %v2181 = vmul.f32 %v2167, %v2178
  %v2182 = vmul.f32 %v2168, %v2178
  %v2183 = vmul.f32 %v2169, %v2178
  %v2184 = vmul.f32 %v2170, %v2178
  %v2185 = vmul.f32 %v2171, %v2178
  %v2186 = vmul.f32 %v2172, %v2178
  %v2187 = vld [vmem:[%s7] sm:$0x1]
  %v2189 = vlaneseq
  %v2190 = vshrl.u32 %v2189, 7
  %v2191 = vsub.s32 0, %v2190
  %v2192 = vrot.slane %v2187, %v2191
  %v2194 = vadd.f32 %v2180, %v2192
  %v2195 = vadd.f32 %v2181, %v2192
  %v2196 = vadd.f32 %v2182, %v2192
  %v2197 = vadd.f32 %v2183, %v2192
  %v2198 = vadd.f32 %v2184, %v2192
  %v2199 = vadd.f32 %v2185, %v2192
  %v2200 = vadd.f32 %v2186, %v2192
  %vm2201 = vcmask 523264
  %2202 = vst.msk [vmem:[%s8] sm:$0xff] %vm2201, %v2194
  %2203 = vst.msk [vmem:[%s8 + $0x8] sm:$0xff] %vm2201, %v2195
  %2204 = vst.msk [vmem:[%s8 + $0x10] sm:$0xff] %vm2201, %v2196
  %2205 = vst.msk [vmem:[%s8 + $0x18] sm:$0xff] %vm2201, %v2197
  %2206 = vst.msk [vmem:[%s8 + $0x20] sm:$0xff] %vm2201, %v2198
  %2207 = vst.msk [vmem:[%s8 + $0x28] sm:$0xff] %vm2201, %v2199
  %vm2208 = vcmask 517120
  %2209 = vst.msk [vmem:[%s8 + $0x30] sm:$0x3] %vm2208, %v2200
  // Predicated region
  $region34: #{mnist_cnn_forward.4} parent=0 // pred_check
    _
  $region35: #{mnist_cnn_forward.4} parent=0 // pred_check_branch
    %2211 = sbr.rel (0) target = $region37
  $region36: #{mnist_cnn_forward.4} parent=0 // pred_region
    _
  $region37: #{mnist_cnn_forward.4} parent=0 // pred_fallthru
    _
  // Predicated region
  $region38: #{mnist_cnn_forward.4} parent=0 // pred_check
    _
  $region39: #{mnist_cnn_forward.4} parent=0 // pred_check_branch
    %2213 = sbr.rel (0) target = $region41
  $region40: #{mnist_cnn_forward.4} parent=0 // pred_region
    _
  $region41: #{mnist_cnn_forward.4} parent=0 // pred_fallthru
    _

// kernel: mnist_cnn_forward.5
$region0: #{mnist_cnn_forward.5}
  #allocation0 [shape = 'u32[]', space=smem, size = 0x4, offset = 0x4, fixed_abs, tag = 'smem constant byte address 0x4 - core index']
  #allocation1 [shape = 'u32[144,128]{1,0:T(1,128)}', space=vmem, size = 0x12000, scoped, tag = 'internal scratch']
  #allocation2 [shape = 'f32[2,1024]{1,0:T(2,128)}', space=vmem, size = 0x2000, scoped, tag = 'scratch operand']
  %s0 = inlined_call_operand.vmem [shape: bf16[2,1600], index: 0, kind: input, shape index: {}]
  %s1 = inlined_call_operand.vmem [shape: bf16[1600,2048], index: 1, kind: input, shape index: {}]
  %s2 = inlined_call_operand.vmem [shape: f32[1,2048], index: 2, kind: input, shape index: {}]
  %s3 = inlined_call_operand.vmem [shape: bf16[2048,1024], index: 3, kind: input, shape index: {}]
  %s4 = inlined_call_operand.vmem [shape: f32[1,1024], index: 4, kind: input, shape index: {}]
  %s5 = inlined_call_operand.vmem [shape: bf16[1024,500], index: 5, kind: input, shape index: {}]
  %s6 = inlined_call_operand.vmem [shape: f32[1,500], index: 6, kind: input, shape index: {}]
  %s7 = inlined_call_operand.vmem [shape: bf16[500,100], index: 7, kind: input, shape index: {}]
  %s8 = inlined_call_operand.vmem [shape: f32[1,100], index: 8, kind: input, shape index: {}]
  %s9 = inlined_call_operand.vmem [shape: bf16[100,10], index: 9, kind: input, shape index: {}]
  %s10 = inlined_call_operand.vmem [shape: f32[1,10], index: 10, kind: input, shape index: {}]
  %s11 = inlined_call_operand.hbm [shape: f32[2,10], index: 11, kind: output, shape index: {}]
  %s12 = sld [smem:[#allocation0]]
  $region123: #{mnist_cnn_forward.5} parent=0
    _
  %s14 = ssub.s32 1, %s12
  %s15 = scalar_select 0, %s14, %s12
  $region1: #{mnist_cnn_forward.5} parent=0
    #allocation3 [shape = 'u8[1638400]{0}', space=vmem, size = 0x190000, scoped, tag = 'input window, operand 1']
    #allocation4 [shape = 'u8[1024]{0}', space=vmem, size = 0x400, scoped, tag = 'output window, operand 0, single buffered']
    #allocation5 [shape = 's32[2]{0}', space=sflag, size = 0x8, scoped, tag = 'scoped memory for mnist_cnn_forward.5']
    %16 = vsyncpa [#allocation5], 0
    loop: start=0, step=1, limit=10
    $region2: #{mnist_cnn_forward.5} parent=1 // loop_pre_header
      _
    $region3: #{mnist_cnn_forward.5} parent=1 // loop_header
      %s18 = sphi 0, %s22
      %p19 = scmp.ge.s32.totalorder %s18, 10
      %s26 = sphi 0, %s26
      %s28 = sphi 0, %s26
      %s29 = sphi 0, %s28
      %s43 = sphi 0, %s29
      %s49 = sphi 0, %s51
      %s52 = sphi 0, %s49
      %s53 = sphi 0, %s52
      %s69 = sphi 0, %s53
      %s75 = sphi 0, %s77
      %s78 = sphi 0, %s75
      %s79 = sphi 0, %s78
      %s95 = sphi 0, %s79
      %s101 = sphi 0, %s103
      %s104 = sphi 0, %s101
      %s105 = sphi 0, %s104
      %s121 = sphi 0, %s105
      %s125 = sphi 0, %s125
      %s127 = sphi 0, %s125
      %s128 = sphi 0, %s127
      %s142 = sphi 0, %s128
      %s146 = sphi 0, %s146
      %s148 = sphi 0, %s146
      %s149 = sphi 0, %s148
      %s163 = sphi 0, %s149
      %s167 = sphi 0, %s167
      %s169 = sphi 0, %s167
      %s170 = sphi 0, %s169
      %s184 = sphi 0, %s170
      %s188 = sphi 0, %s188
      %s190 = sphi 0, %s188
      %s191 = sphi 0, %s190
      %s205 = sphi 0, %s191
      %s209 = sphi 0, %s209
      %s211 = sphi 0, %s209
      %s212 = sphi 0, %s211
      %s226 = sphi 0, %s212
      %s230 = sphi 0, %s230
      %s232 = sphi 0, %s230
      %s233 = sphi 0, %s232
      %s247 = sphi 0, %s233
      %s251 = sphi 0, %s251
      %s253 = sphi 0, %s251
      %s254 = sphi 0, %s253
      %s268 = sphi 0, %s254
      %s272 = sphi 0, %s272
      %s274 = sphi 0, %s272
      %s275 = sphi 0, %s274
      %s289 = sphi 0, %s275
    $region4: #{mnist_cnn_forward.5} parent=1 // loop_header_branch
      %21 = sbr.rel (%p19) target = $region8
    $region5: #{mnist_cnn_forward.5} parent=1 // loop_body
      %s23 = ssub.s32 %s18, 1
      %s24 = ssub.s32 %s18, 2
      %s25 = sadd.s32 %s18, 1
      %s27 = sadd.s32 %s26, 1
      %p30 = scmp.eq.s32.totalorder %s18, 7
      %p31 = scmp.ne.s32.totalorder %s26, %s28
      %p32 = scmp.eq.s32.totalorder %s18, 0
      %p33 = por %p31, %p32
      %p34 = scmp.ne.s32.totalorder %s26, %s28
      %p35 = scmp.eq.s32.totalorder %s23, 7
      %p36 = por %p34, %p35
      %p37 = scmp.ne.s32.totalorder %s28, %s29
      %p38 = scmp.eq.s32.totalorder %s23, 0
      %p39 = por %p37, %p38
      %p40 = scmp.ne.s32.totalorder %s28, %s29
      %p41 = scmp.eq.s32.totalorder %s24, 7
      %p42 = por %p40, %p41
      %p44 = scmp.ne.s32.totalorder %s29, %s43
      %p45 = scmp.eq.s32.totalorder %s24, 0
      %p46 = por %p44, %p45
      %s47 = ssub.s32 %s18, %s25
      %p48 = scmp.eq.s32.totalorder %s47, 0
      %s50 = sadd.s32 %s49, 1
      %s51 = scalar_select %p48, %s49, %s50
      %p54 = pneg %p48
      %p55 = scmp.eq.s32.totalorder %s18, 7
      %p56 = por %p54, %p55
      %p57 = scmp.ne.s32.totalorder %s49, %s52
      %p58 = scmp.eq.s32.totalorder %s18, 0
      %p59 = por %p57, %p58
      %p60 = scmp.ne.s32.totalorder %s49, %s52
      %p61 = scmp.eq.s32.totalorder %s23, 7
      %p62 = por %p60, %p61
      %p63 = scmp.ne.s32.totalorder %s52, %s53
      %p64 = scmp.eq.s32.totalorder %s23, 0
      %p65 = por %p63, %p64
      %p66 = scmp.ne.s32.totalorder %s52, %s53
      %p67 = scmp.eq.s32.totalorder %s24, 7
      %p68 = por %p66, %p67
      %p70 = scmp.ne.s32.totalorder %s53, %s69
      %p71 = scmp.eq.s32.totalorder %s24, 0
      %p72 = por %p70, %p71
      %s73 = ssub.s32 %s18, %s25
      %p74 = scmp.eq.s32.totalorder %s73, 0
      %s76 = sadd.s32 %s75, 1
      %s77 = scalar_select %p74, %s75, %s76
      %p80 = pneg %p74
      %p81 = scmp.eq.s32.totalorder %s18, 7
      %p82 = por %p80, %p81
      %p83 = scmp.ne.s32.totalorder %s75, %s78
      %p84 = scmp.eq.s32.totalorder %s18, 0
      %p85 = por %p83, %p84
      %p86 = scmp.ne.s32.totalorder %s75, %s78
      %p87 = scmp.eq.s32.totalorder %s23, 7
      %p88 = por %p86, %p87
      %p89 = scmp.ne.s32.totalorder %s78, %s79
      %p90 = scmp.eq.s32.totalorder %s23, 0
      %p91 = por %p89, %p90
      %p92 = scmp.ne.s32.totalorder %s78, %s79
      %p93 = scmp.eq.s32.totalorder %s24, 7
      %p94 = por %p92, %p93
      %p96 = scmp.ne.s32.totalorder %s79, %s95
      %p97 = scmp.eq.s32.totalorder %s24, 0
      %p98 = por %p96, %p97
      %s99 = ssub.s32 %s18, %s25
      %p100 = scmp.eq.s32.totalorder %s99, 0
      %s102 = sadd.s32 %s101, 1
      %s103 = scalar_select %p100, %s101, %s102
      %p106 = pneg %p100
      %p107 = scmp.eq.s32.totalorder %s18, 7
      %p108 = por %p106, %p107
      %p109 = scmp.ne.s32.totalorder %s101, %s104
      %p110 = scmp.eq.s32.totalorder %s18, 0
      %p111 = por %p109, %p110
      %p112 = scmp.ne.s32.totalorder %s101, %s104
      %p113 = scmp.eq.s32.totalorder %s23, 7
      %p114 = por %p112, %p113
      %p115 = scmp.ne.s32.totalorder %s104, %s105
      %p116 = scmp.eq.s32.totalorder %s23, 0
      %p117 = por %p115, %p116
      %p118 = scmp.ne.s32.totalorder %s104, %s105
      %p119 = scmp.eq.s32.totalorder %s24, 7
      %p120 = por %p118, %p119
      %p122 = scmp.ne.s32.totalorder %s105, %s121
      %p123 = scmp.eq.s32.totalorder %s24, 0
      %p124 = por %p122, %p123
      %s126 = sadd.s32 %s125, 1
      %p129 = scmp.eq.s32.totalorder %s18, 7
      %p130 = scmp.ne.s32.totalorder %s125, %s127
      %p131 = scmp.eq.s32.totalorder %s18, 0
      %p132 = por %p130, %p131
      %p133 = scmp.ne.s32.totalorder %s125, %s127
      %p134 = scmp.eq.s32.totalorder %s23, 7
      %p135 = por %p133, %p134
      %p136 = scmp.ne.s32.totalorder %s127, %s128
      %p137 = scmp.eq.s32.totalorder %s23, 0
      %p138 = por %p136, %p137
      %p139 = scmp.ne.s32.totalorder %s127, %s128
      %p140 = scmp.eq.s32.totalorder %s24, 7
      %p141 = por %p139, %p140
      %p143 = scmp.ne.s32.totalorder %s128, %s142
      %p144 = scmp.eq.s32.totalorder %s24, 0
      %p145 = por %p143, %p144
      %s147 = sadd.s32 %s146, 1
      %p150 = scmp.eq.s32.totalorder %s18, 7
      %p151 = scmp.ne.s32.totalorder %s146, %s148
      %p152 = scmp.eq.s32.totalorder %s18, 0
      %p153 = por %p151, %p152
      %p154 = scmp.ne.s32.totalorder %s146, %s148
      %p155 = scmp.eq.s32.totalorder %s23, 7
      %p156 = por %p154, %p155
      %p157 = scmp.ne.s32.totalorder %s148, %s149
      %p158 = scmp.eq.s32.totalorder %s23, 0
      %p159 = por %p157, %p158
      %p160 = scmp.ne.s32.totalorder %s148, %s149
      %p161 = scmp.eq.s32.totalorder %s24, 7
      %p162 = por %p160, %p161
      %p164 = scmp.ne.s32.totalorder %s149, %s163
      %p165 = scmp.eq.s32.totalorder %s24, 0
      %p166 = por %p164, %p165
      %s168 = sadd.s32 %s167, 1
      %p171 = scmp.eq.s32.totalorder %s18, 7
      %p172 = scmp.ne.s32.totalorder %s167, %s169
      %p173 = scmp.eq.s32.totalorder %s18, 0
      %p174 = por %p172, %p173
      %p175 = scmp.ne.s32.totalorder %s167, %s169
      %p176 = scmp.eq.s32.totalorder %s23, 7
      %p177 = por %p175, %p176
      %p178 = scmp.ne.s32.totalorder %s169, %s170
      %p179 = scmp.eq.s32.totalorder %s23, 0
      %p180 = por %p178, %p179
      %p181 = scmp.ne.s32.totalorder %s169, %s170
      %p182 = scmp.eq.s32.totalorder %s24, 7
      %p183 = por %p181, %p182
      %p185 = scmp.ne.s32.totalorder %s170, %s184
      %p186 = scmp.eq.s32.totalorder %s24, 0
      %p187 = por %p185, %p186
      %s189 = sadd.s32 %s188, 1
      %p192 = scmp.eq.s32.totalorder %s18, 7
      %p193 = scmp.ne.s32.totalorder %s188, %s190
      %p194 = scmp.eq.s32.totalorder %s18, 0
      %p195 = por %p193, %p194
      %p196 = scmp.ne.s32.totalorder %s188, %s190
      %p197 = scmp.eq.s32.totalorder %s23, 7
      %p198 = por %p196, %p197
      %p199 = scmp.ne.s32.totalorder %s190, %s191
      %p200 = scmp.eq.s32.totalorder %s23, 0
      %p201 = por %p199, %p200
      %p202 = scmp.ne.s32.totalorder %s190, %s191
      %p203 = scmp.eq.s32.totalorder %s24, 7
      %p204 = por %p202, %p203
      %p206 = scmp.ne.s32.totalorder %s191, %s205
      %p207 = scmp.eq.s32.totalorder %s24, 0
      %p208 = por %p206, %p207
      %s210 = sadd.s32 %s209, 1
      %p213 = scmp.eq.s32.totalorder %s18, 7
      %p214 = scmp.ne.s32.totalorder %s209, %s211
      %p215 = scmp.eq.s32.totalorder %s18, 0
      %p216 = por %p214, %p215
      %p217 = scmp.ne.s32.totalorder %s209, %s211
      %p218 = scmp.eq.s32.totalorder %s23, 7
      %p219 = por %p217, %p218
      %p220 = scmp.ne.s32.totalorder %s211, %s212
      %p221 = scmp.eq.s32.totalorder %s23, 0
      %p222 = por %p220, %p221
      %p223 = scmp.ne.s32.totalorder %s211, %s212
      %p224 = scmp.eq.s32.totalorder %s24, 7
      %p225 = por %p223, %p224
      %p227 = scmp.ne.s32.totalorder %s212, %s226
      %p228 = scmp.eq.s32.totalorder %s24, 0
      %p229 = por %p227, %p228
      %s231 = sadd.s32 %s230, 1
      %p234 = scmp.eq.s32.totalorder %s18, 7
      %p235 = scmp.ne.s32.totalorder %s230, %s232
      %p236 = scmp.eq.s32.totalorder %s18, 0
      %p237 = por %p235, %p236
      %p238 = scmp.ne.s32.totalorder %s230, %s232
      %p239 = scmp.eq.s32.totalorder %s23, 7
      %p240 = por %p238, %p239
      %p241 = scmp.ne.s32.totalorder %s232, %s233
      %p242 = scmp.eq.s32.totalorder %s23, 0
      %p243 = por %p241, %p242
      %p244 = scmp.ne.s32.totalorder %s232, %s233
      %p245 = scmp.eq.s32.totalorder %s24, 7
      %p246 = por %p244, %p245
      %p248 = scmp.ne.s32.totalorder %s233, %s247
      %p249 = scmp.eq.s32.totalorder %s24, 0
      %p250 = por %p248, %p249
      %s252 = sadd.s32 %s251, 1
      %p255 = scmp.eq.s32.totalorder %s18, 7
      %p256 = scmp.ne.s32.totalorder %s251, %s253
      %p257 = scmp.eq.s32.totalorder %s18, 0
      %p258 = por %p256, %p257
      %p259 = scmp.ne.s32.totalorder %s251, %s253
      %p260 = scmp.eq.s32.totalorder %s23, 7
      %p261 = por %p259, %p260
      %p262 = scmp.ne.s32.totalorder %s253, %s254
      %p263 = scmp.eq.s32.totalorder %s23, 0
      %p264 = por %p262, %p263
      %p265 = scmp.ne.s32.totalorder %s253, %s254
      %p266 = scmp.eq.s32.totalorder %s24, 7
      %p267 = por %p265, %p266
      %p269 = scmp.ne.s32.totalorder %s254, %s268
      %p270 = scmp.eq.s32.totalorder %s24, 0
      %p271 = por %p269, %p270
      %s273 = sadd.s32 %s272, 1
      %p276 = scmp.eq.s32.totalorder %s18, 7
      %p277 = scmp.ne.s32.totalorder %s272, %s274
      %p278 = scmp.eq.s32.totalorder %s18, 0
      %p279 = por %p277, %p278
      %p280 = scmp.ne.s32.totalorder %s272, %s274
      %p281 = scmp.eq.s32.totalorder %s23, 7
      %p282 = por %p280, %p281
      %p283 = scmp.ne.s32.totalorder %s274, %s275
      %p284 = scmp.eq.s32.totalorder %s23, 0
      %p285 = por %p283, %p284
      %p286 = scmp.ne.s32.totalorder %s274, %s275
      %p287 = scmp.eq.s32.totalorder %s24, 7
      %p288 = por %p286, %p287
      %p290 = scmp.ne.s32.totalorder %s275, %s289
      %p291 = scmp.eq.s32.totalorder %s24, 0
      %p292 = por %p290, %p291
      %p293 = scmp.le.s32.totalorder 1, %s18
      %p294 = scmp.lt.s32.totalorder %s18, 9
      %p295 = pnand %p293, %p294
      %p296 = pneg %p295
      // Predicated region
      $region9: #{mnist_cnn_forward.5} parent=5 // pred_check
        _
      $region10: #{mnist_cnn_forward.5} parent=5 // pred_check_branch
        %298 = sbr.rel (%p295) target = $region12
      $region11: #{mnist_cnn_forward.5} parent=5 // pred_region
        %s299 = ssub.s32 %s18, 1
        // Predicated region
        $region13: #{mnist_cnn_forward.5} parent=11 // pred_check
          %p300 = pneg %p39
        $region14: #{mnist_cnn_forward.5} parent=11 // pred_check_branch
          %302 = sbr.rel (%p300) target = $region16
        $region15: #{mnist_cnn_forward.5} parent=11 // pred_region
          _
        $region16: #{mnist_cnn_forward.5} parent=11 // pred_fallthru
          _
        // Predicated region
        $region17: #{mnist_cnn_forward.5} parent=11 // pred_check
          %p303 = pneg %p138
        $region18: #{mnist_cnn_forward.5} parent=11 // pred_check_branch
          %305 = sbr.rel (%p303) target = $region20
        $region19: #{mnist_cnn_forward.5} parent=11 // pred_region
          _
        $region20: #{mnist_cnn_forward.5} parent=11 // pred_fallthru
          _
        // Predicated region
        $region21: #{mnist_cnn_forward.5} parent=11 // pred_check
          %p306 = pneg %p159
        $region22: #{mnist_cnn_forward.5} parent=11 // pred_check_branch
          %308 = sbr.rel (%p306) target = $region24
        $region23: #{mnist_cnn_forward.5} parent=11 // pred_region
          _
        $region24: #{mnist_cnn_forward.5} parent=11 // pred_fallthru
          _
        // Predicated region
        $region25: #{mnist_cnn_forward.5} parent=11 // pred_check
          %p309 = pneg %p180
        $region26: #{mnist_cnn_forward.5} parent=11 // pred_check_branch
          %311 = sbr.rel (%p309) target = $region28
        $region27: #{mnist_cnn_forward.5} parent=11 // pred_region
          _
        $region28: #{mnist_cnn_forward.5} parent=11 // pred_fallthru
          _
        // Predicated region
        $region29: #{mnist_cnn_forward.5} parent=11 // pred_check
          %p312 = pneg %p201
        $region30: #{mnist_cnn_forward.5} parent=11 // pred_check_branch
          %314 = sbr.rel (%p312) target = $region32
        $region31: #{mnist_cnn_forward.5} parent=11 // pred_region
          _
        $region32: #{mnist_cnn_forward.5} parent=11 // pred_fallthru
          _
        // Predicated region
        $region33: #{mnist_cnn_forward.5} parent=11 // pred_check
          %p315 = pneg %p222
        $region34: #{mnist_cnn_forward.5} parent=11 // pred_check_branch
          %317 = sbr.rel (%p315) target = $region36
        $region35: #{mnist_cnn_forward.5} parent=11 // pred_region
          _
        $region36: #{mnist_cnn_forward.5} parent=11 // pred_fallthru
          _
        // Predicated region
        $region37: #{mnist_cnn_forward.5} parent=11 // pred_check
          %p318 = pneg %p243
        $region38: #{mnist_cnn_forward.5} parent=11 // pred_check_branch
          %320 = sbr.rel (%p318) target = $region40
        $region39: #{mnist_cnn_forward.5} parent=11 // pred_region
          _
        $region40: #{mnist_cnn_forward.5} parent=11 // pred_fallthru
          _
        // Predicated region
        $region41: #{mnist_cnn_forward.5} parent=11 // pred_check
          %p321 = pneg %p264
        $region42: #{mnist_cnn_forward.5} parent=11 // pred_check_branch
          %323 = sbr.rel (%p321) target = $region44
        $region43: #{mnist_cnn_forward.5} parent=11 // pred_region
          _
        $region44: #{mnist_cnn_forward.5} parent=11 // pred_fallthru
          _
      $region12: #{mnist_cnn_forward.5} parent=5 // pred_fallthru
        _
      %p324 = scmp.lt.s32.totalorder %s18, 8
      // Predicated region
      $region45: #{mnist_cnn_forward.5} parent=5 // pred_check
        %p325 = pneg %p324
      $region46: #{mnist_cnn_forward.5} parent=5 // pred_check_branch
        %327 = sbr.rel (%p325) target = $region48
      $region47: #{mnist_cnn_forward.5} parent=5 // pred_region
        // Predicated region
        $region49: #{mnist_cnn_forward.5} parent=47 // pred_check
          %p328 = pneg %p59
        $region50: #{mnist_cnn_forward.5} parent=47 // pred_check_branch
          %330 = sbr.rel (%p328) target = $region52
        $region51: #{mnist_cnn_forward.5} parent=47 // pred_region
          %s331 = sand.u32 %s49, 1
          %s332 = sand.u32 %s49, 1
          %s333 = smul.addr %s332, 1600
          %s334 = scalar_lea.vmem [#allocation3], %s333
          %s335 = smul.u32 2, %s18
          %s336 = smul.addr %s335, 4
          %s337 = scalar_lea.vmem %s1, %s336
          // Predicated region
          $region53: #{mnist_cnn_forward.5} parent=51 // pred_check
            _
          $region54: #{mnist_cnn_forward.5} parent=51 // pred_check_branch
            %339 = sbr.rel (0) target = $region56
          $region55: #{mnist_cnn_forward.5} parent=51 // pred_region
            // Predicated region
            $region57: #{mnist_cnn_forward.5} parent=55 // pred_check
              _
            $region58: #{mnist_cnn_forward.5} parent=55 // pred_check_branch
              %341 = sbr.rel (0) target = $region60
            $region59: #{mnist_cnn_forward.5} parent=55 // pred_region
              // Predicated region
              $region72: #{mnist_cnn_forward.5} parent=59 // pred_check
                _
              $region73: #{mnist_cnn_forward.5} parent=59 // pred_check_branch
                %754 = sbr.rel (0) target = $region75
              $region74: #{mnist_cnn_forward.5} parent=59 // pred_region
                loop: start=0, step=1, limit=1
                $region76: #{mnist_cnn_forward.5} parent=74 // loop_pre_header
                  _
                $region77: #{mnist_cnn_forward.5} parent=74 // loop_header
                  %s756 = sphi 0, %s760
                  %p757 = scmp.ge.s32.totalorder %s756, 1
                  %s761 = sphi %s337, %s337
                  %s762 = sphi %s334, %s334
                $region78: #{mnist_cnn_forward.5} parent=74 // loop_header_branch
                  %759 = sbr.rel (%p757) target = $region82
                $region79: #{mnist_cnn_forward.5} parent=74 // loop_body
                  %v763 = vld [vmem:[%s761] sm:$0xff]
                  %764 = vst [vmem:[%s762] sm:$0xff] %v763
                  %v765 = vld [vmem:[%s761 + $0x40] sm:$0xff]
                  %766 = vst [vmem:[%s762 + $0x8] sm:$0xff] %v765
                  %v767 = vld [vmem:[%s761 + $0x80] sm:$0xff]
                  %768 = vst [vmem:[%s762 + $0x10] sm:$0xff] %v767
                  %v769 = vld [vmem:[%s761 + $0xc0] sm:$0xff]
                  %770 = vst [vmem:[%s762 + $0x18] sm:$0xff] %v769
                  %v771 = vld [vmem:[%s761 + $0x100] sm:$0xff]
                  %772 = vst [vmem:[%s762 + $0x20] sm:$0xff] %v771
                  %v773 = vld [vmem:[%s761 + $0x140] sm:$0xff]
                  %774 = vst [vmem:[%s762 + $0x28] sm:$0xff] %v773
                  %v775 = vld [vmem:[%s761 + $0x180] sm:$0xff]
                  %776 = vst [vmem:[%s762 + $0x30] sm:$0xff] %v775
                  %v777 = vld [vmem:[%s761 + $0x1c0] sm:$0xff]
                  %778 = vst [vmem:[%s762 + $0x38] sm:$0xff] %v777
                  %v779 = vld [vmem:[%s761 + $0x200] sm:$0xff]
                  %780 = vst [vmem:[%s762 + $0x40] sm:$0xff] %v779
                  %v781 = vld [vmem:[%s761 + $0x240] sm:$0xff]
                  %782 = vst [vmem:[%s762 + $0x48] sm:$0xff] %v781
                  %v783 = vld [vmem:[%s761 + $0x280] sm:$0xff]
                  %784 = vst [vmem:[%s762 + $0x50] sm:$0xff] %v783
                  %v785 = vld [vmem:[%s761 + $0x2c0] sm:$0xff]
                  %786 = vst [vmem:[%s762 + $0x58] sm:$0xff] %v785
                  %v787 = vld [vmem:[%s761 + $0x300] sm:$0xff]
                  %788 = vst [vmem:[%s762 + $0x60] sm:$0xff] %v787
                  %v789 = vld [vmem:[%s761 + $0x340] sm:$0xff]
                  %790 = vst [vmem:[%s762 + $0x68] sm:$0xff] %v789
                  %v791 = vld [vmem:[%s761 + $0x380] sm:$0xff]
                  %792 = vst [vmem:[%s762 + $0x70] sm:$0xff] %v791
                  %v793 = vld [vmem:[%s761 + $0x3c0] sm:$0xff]
                  %794 = vst [vmem:[%s762 + $0x78] sm:$0xff] %v793
                  %v795 = vld [vmem:[%s761 + $0x400] sm:$0xff]
                  %796 = vst [vmem:[%s762 + $0x80] sm:$0xff] %v795
                  %v797 = vld [vmem:[%s761 + $0x440] sm:$0xff]
                  %798 = vst [vmem:[%s762 + $0x88] sm:$0xff] %v797
                  %v799 = vld [vmem:[%s761 + $0x480] sm:$0xff]
                  %800 = vst [vmem:[%s762 + $0x90] sm:$0xff] %v799
                  %v801 = vld [vmem:[%s761 + $0x4c0] sm:$0xff]
                  %802 = vst [vmem:[%s762 + $0x98] sm:$0xff] %v801
                  %v803 = vld [vmem:[%s761 + $0x500] sm:$0xff]
                  %804 = vst [vmem:[%s762 + $0xa0] sm:$0xff] %v803
                  %v805 = vld [vmem:[%s761 + $0x540] sm:$0xff]
                  %806 = vst [vmem:[%s762 + $0xa8] sm:$0xff] %v805
                  %v807 = vld [vmem:[%s761 + $0x580] sm:$0xff]
                  %808 = vst [vmem:[%s762 + $0xb0] sm:$0xff] %v807
                  %v809 = vld [vmem:[%s761 + $0x5c0] sm:$0xff]
                  %810 = vst [vmem:[%s762 + $0xb8] sm:$0xff] %v809
                  %v811 = vld [vmem:[%s761 + $0x600] sm:$0xff]
                  %812 = vst [vmem:[%s762 + $0xc0] sm:$0xff] %v811
                  %v813 = vld [vmem:[%s761 + $0x640] sm:$0xff]
                  %814 = vst [vmem:[%s762 + $0xc8] sm:$0xff] %v813
                  %v815 = vld [vmem:[%s761 + $0x680] sm:$0xff]
                  %816 = vst [vmem:[%s762 + $0xd0] sm:$0xff] %v815
                  %v817 = vld [vmem:[%s761 + $0x6c0] sm:$0xff]
                  %818 = vst [vmem:[%s762 + $0xd8] sm:$0xff] %v817
                  %v819 = vld [vmem:[%s761 + $0x700] sm:$0xff]
                  %820 = vst [vmem:[%s762 + $0xe0] sm:$0xff] %v819
                  %v821 = vld [vmem:[%s761 + $0x740] sm:$0xff]
                  %822 = vst [vmem:[%s762 + $0xe8] sm:$0xff] %v821
                  %v823 = vld [vmem:[%s761 + $0x780] sm:$0xff]
                  %824 = vst [vmem:[%s762 + $0xf0] sm:$0xff] %v823
                  %v825 = vld [vmem:[%s761 + $0x7c0] sm:$0xff]
                  %826 = vst [vmem:[%s762 + $0xf8] sm:$0xff] %v825
                  %v827 = vld [vmem:[%s761 + $0x800] sm:$0xff]
                  %828 = vst [vmem:[%s762 + $0x100] sm:$0xff] %v827
                  %v829 = vld [vmem:[%s761 + $0x840] sm:$0xff]
                  %830 = vst [vmem:[%s762 + $0x108] sm:$0xff] %v829
                  %v831 = vld [vmem:[%s761 + $0x880] sm:$0xff]
                  %832 = vst [vmem:[%s762 + $0x110] sm:$0xff] %v831
                  %v833 = vld [vmem:[%s761 + $0x8c0] sm:$0xff]
                  %834 = vst [vmem:[%s762 + $0x118] sm:$0xff] %v833
                  %v835 = vld [vmem:[%s761 + $0x900] sm:$0xff]
                  %836 = vst [vmem:[%s762 + $0x120] sm:$0xff] %v835
                  %v837 = vld [vmem:[%s761 + $0x940] sm:$0xff]
                  %838 = vst [vmem:[%s762 + $0x128] sm:$0xff] %v837
                  %v839 = vld [vmem:[%s761 + $0x980] sm:$0xff]
                  %840 = vst [vmem:[%s762 + $0x130] sm:$0xff] %v839
                  %v841 = vld [vmem:[%s761 + $0x9c0] sm:$0xff]
                  %842 = vst [vmem:[%s762 + $0x138] sm:$0xff] %v841
                  %v843 = vld [vmem:[%s761 + $0xa00] sm:$0xff]
                  %844 = vst [vmem:[%s762 + $0x140] sm:$0xff] %v843
                  %v845 = vld [vmem:[%s761 + $0xa40] sm:$0xff]
                  %846 = vst [vmem:[%s762 + $0x148] sm:$0xff] %v845
                  %v847 = vld [vmem:[%s761 + $0xa80] sm:$0xff]
                  %848 = vst [vmem:[%s762 + $0x150] sm:$0xff] %v847
                  %v849 = vld [vmem:[%s761 + $0xac0] sm:$0xff]
                  %850 = vst [vmem:[%s762 + $0x158] sm:$0xff] %v849
                  %v851 = vld [vmem:[%s761 + $0xb00] sm:$0xff]
                  %852 = vst [vmem:[%s762 + $0x160] sm:$0xff] %v851
                  %v853 = vld [vmem:[%s761 + $0xb40] sm:$0xff]
                  %854 = vst [vmem:[%s762 + $0x168] sm:$0xff] %v853
                  %v855 = vld [vmem:[%s761 + $0xb80] sm:$0xff]
                  %856 = vst [vmem:[%s762 + $0x170] sm:$0xff] %v855
                  %v857 = vld [vmem:[%s761 + $0xbc0] sm:$0xff]
                  %858 = vst [vmem:[%s762 + $0x178] sm:$0xff] %v857
                  %v859 = vld [vmem:[%s761 + $0xc00] sm:$0xff]
                  %860 = vst [vmem:[%s762 + $0x180] sm:$0xff] %v859
                  %v861 = vld [vmem:[%s761 + $0xc40] sm:$0xff]
                  %862 = vst [vmem:[%s762 + $0x188] sm:$0xff] %v861
                  %v863 = vld [vmem:[%s761 + $0xc80] sm:$0xff]
                  %864 = vst [vmem:[%s762 + $0x190] sm:$0xff] %v863
                  %v865 = vld [vmem:[%s761 + $0xcc0] sm:$0xff]
                  %866 = vst [vmem:[%s762 + $0x198] sm:$0xff] %v865
                  %v867 = vld [vmem:[%s761 + $0xd00] sm:$0xff]
                  %868 = vst [vmem:[%s762 + $0x1a0] sm:$0xff] %v867
                  %v869 = vld [vmem:[%s761 + $0xd40] sm:$0xff]
                  %870 = vst [vmem:[%s762 + $0x1a8] sm:$0xff] %v869
                  %v871 = vld [vmem:[%s761 + $0xd80] sm:$0xff]
                  %872 = vst [vmem:[%s762 + $0x1b0] sm:$0xff] %v871
                  %v873 = vld [vmem:[%s761 + $0xdc0] sm:$0xff]
                  %874 = vst [vmem:[%s762 + $0x1b8] sm:$0xff] %v873
                  %v875 = vld [vmem:[%s761 + $0xe00] sm:$0xff]
                  %876 = vst [vmem:[%s762 + $0x1c0] sm:$0xff] %v875
                  %v877 = vld [vmem:[%s761 + $0xe40] sm:$0xff]
                  %878 = vst [vmem:[%s762 + $0x1c8] sm:$0xff] %v877
                  %v879 = vld [vmem:[%s761 + $0xe80] sm:$0xff]
                  %880 = vst [vmem:[%s762 + $0x1d0] sm:$0xff] %v879
                  %v881 = vld [vmem:[%s761 + $0xec0] sm:$0xff]
                  %882 = vst [vmem:[%s762 + $0x1d8] sm:$0xff] %v881
                  %v883 = vld [vmem:[%s761 + $0xf00] sm:$0xff]
                  %884 = vst [vmem:[%s762 + $0x1e0] sm:$0xff] %v883
                  %v885 = vld [vmem:[%s761 + $0xf40] sm:$0xff]
                  %886 = vst [vmem:[%s762 + $0x1e8] sm:$0xff] %v885
                  %v887 = vld [vmem:[%s761 + $0xf80] sm:$0xff]
                  %888 = vst [vmem:[%s762 + $0x1f0] sm:$0xff] %v887
                  %v889 = vld [vmem:[%s761 + $0xfc0] sm:$0xff]
                  %890 = vst [vmem:[%s762 + $0x1f8] sm:$0xff] %v889
                  %v891 = vld [vmem:[%s761 + $0x1000] sm:$0xff]
                  %892 = vst [vmem:[%s762 + $0x200] sm:$0xff] %v891
                  %v893 = vld [vmem:[%s761 + $0x1040] sm:$0xff]
                  %894 = vst [vmem:[%s762 + $0x208] sm:$0xff] %v893
                  %v895 = vld [vmem:[%s761 + $0x1080] sm:$0xff]
                  %896 = vst [vmem:[%s762 + $0x210] sm:$0xff] %v895
                  %v897 = vld [vmem:[%s761 + $0x10c0] sm:$0xff]
                  %898 = vst [vmem:[%s762 + $0x218] sm:$0xff] %v897
                  %v899 = vld [vmem:[%s761 + $0x1100] sm:$0xff]
                  %900 = vst [vmem:[%s762 + $0x220] sm:$0xff] %v899
                  %v901 = vld [vmem:[%s761 + $0x1140] sm:$0xff]
                  %902 = vst [vmem:[%s762 + $0x228] sm:$0xff] %v901
                  %v903 = vld [vmem:[%s761 + $0x1180] sm:$0xff]
                  %904 = vst [vmem:[%s762 + $0x230] sm:$0xff] %v903
                  %v905 = vld [vmem:[%s761 + $0x11c0] sm:$0xff]
                  %906 = vst [vmem:[%s762 + $0x238] sm:$0xff] %v905
                  %v907 = vld [vmem:[%s761 + $0x1200] sm:$0xff]
                  %908 = vst [vmem:[%s762 + $0x240] sm:$0xff] %v907
                  %v909 = vld [vmem:[%s761 + $0x1240] sm:$0xff]
                  %910 = vst [vmem:[%s762 + $0x248] sm:$0xff] %v909
                  %v911 = vld [vmem:[%s761 + $0x1280] sm:$0xff]
                  %912 = vst [vmem:[%s762 + $0x250] sm:$0xff] %v911
                  %v913 = vld [vmem:[%s761 + $0x12c0] sm:$0xff]
                  %914 = vst [vmem:[%s762 + $0x258] sm:$0xff] %v913
                  %v915 = vld [vmem:[%s761 + $0x1300] sm:$0xff]
                  %916 = vst [vmem:[%s762 + $0x260] sm:$0xff] %v915
                  %v917 = vld [vmem:[%s761 + $0x1340] sm:$0xff]
                  %918 = vst [vmem:[%s762 + $0x268] sm:$0xff] %v917
                  %v919 = vld [vmem:[%s761 + $0x1380] sm:$0xff]
                  %920 = vst [vmem:[%s762 + $0x270] sm:$0xff] %v919
                  %v921 = vld [vmem:[%s761 + $0x13c0] sm:$0xff]
                  %922 = vst [vmem:[%s762 + $0x278] sm:$0xff] %v921
                  %v923 = vld [vmem:[%s761 + $0x1400] sm:$0xff]
                  %924 = vst [vmem:[%s762 + $0x280] sm:$0xff] %v923
                  %v925 = vld [vmem:[%s761 + $0x1440] sm:$0xff]
                  %926 = vst [vmem:[%s762 + $0x288] sm:$0xff] %v925
                  %v927 = vld [vmem:[%s761 + $0x1480] sm:$0xff]
                  %928 = vst [vmem:[%s762 + $0x290] sm:$0xff] %v927
                  %v929 = vld [vmem:[%s761 + $0x14c0] sm:$0xff]
                  %930 = vst [vmem:[%s762 + $0x298] sm:$0xff] %v929
                  %v931 = vld [vmem:[%s761 + $0x1500] sm:$0xff]
                  %932 = vst [vmem:[%s762 + $0x2a0] sm:$0xff] %v931
                  %v933 = vld [vmem:[%s761 + $0x1540] sm:$0xff]
                  %934 = vst [vmem:[%s762 + $0x2a8] sm:$0xff] %v933
                  %v935 = vld [vmem:[%s761 + $0x1580] sm:$0xff]
                  %936 = vst [vmem:[%s762 + $0x2b0] sm:$0xff] %v935
                  %v937 = vld [vmem:[%s761 + $0x15c0] sm:$0xff]
                  %938 = vst [vmem:[%s762 + $0x2b8] sm:$0xff] %v937
                  %v939 = vld [vmem:[%s761 + $0x1600] sm:$0xff]
                  %940 = vst [vmem:[%s762 + $0x2c0] sm:$0xff] %v939
                  %v941 = vld [vmem:[%s761 + $0x1640] sm:$0xff]
                  %942 = vst [vmem:[%s762 + $0x2c8] sm:$0xff] %v941
                  %v943 = vld [vmem:[%s761 + $0x1680] sm:$0xff]
                  %944 = vst [vmem:[%s762 + $0x2d0] sm:$0xff] %v943
                  %v945 = vld [vmem:[%s761 + $0x16c0] sm:$0xff]
                  %946 = vst [vmem:[%s762 + $0x2d8] sm:$0xff] %v945
                  %v947 = vld [vmem:[%s761 + $0x1700] sm:$0xff]
                  %948 = vst [vmem:[%s762 + $0x2e0] sm:$0xff] %v947
                  %v949 = vld [vmem:[%s761 + $0x1740] sm:$0xff]
                  %950 = vst [vmem:[%s762 + $0x2e8] sm:$0xff] %v949
                  %v951 = vld [vmem:[%s761 + $0x1780] sm:$0xff]
                  %952 = vst [vmem:[%s762 + $0x2f0] sm:$0xff] %v951
                  %v953 = vld [vmem:[%s761 + $0x17c0] sm:$0xff]
                  %954 = vst [vmem:[%s762 + $0x2f8] sm:$0xff] %v953
                  %v955 = vld [vmem:[%s761 + $0x1800] sm:$0xff]
                  %956 = vst [vmem:[%s762 + $0x300] sm:$0xff] %v955
                  %v957 = vld [vmem:[%s761 + $0x1840] sm:$0xff]
                  %958 = vst [vmem:[%s762 + $0x308] sm:$0xff] %v957
                  %v959 = vld [vmem:[%s761 + $0x1880] sm:$0xff]
                  %960 = vst [vmem:[%s762 + $0x310] sm:$0xff] %v959
                  %v961 = vld [vmem:[%s761 + $0x18c0] sm:$0xff]
                  %962 = vst [vmem:[%s762 + $0x318] sm:$0xff] %v961
                  %v963 = vld [vmem:[%s761 + $0x1900] sm:$0xff]
                  %964 = vst [vmem:[%s762 + $0x320] sm:$0xff] %v963
                  %v965 = vld [vmem:[%s761 + $0x1940] sm:$0xff]
                  %966 = vst [vmem:[%s762 + $0x328] sm:$0xff] %v965
                  %v967 = vld [vmem:[%s761 + $0x1980] sm:$0xff]
                  %968 = vst [vmem:[%s762 + $0x330] sm:$0xff] %v967
                  %v969 = vld [vmem:[%s761 + $0x19c0] sm:$0xff]
                  %970 = vst [vmem:[%s762 + $0x338] sm:$0xff] %v969
                  %v971 = vld [vmem:[%s761 + $0x1a00] sm:$0xff]
                  %972 = vst [vmem:[%s762 + $0x340] sm:$0xff] %v971
                  %v973 = vld [vmem:[%s761 + $0x1a40] sm:$0xff]
                  %974 = vst [vmem:[%s762 + $0x348] sm:$0xff] %v973
                  %v975 = vld [vmem:[%s761 + $0x1a80] sm:$0xff]
                  %976 = vst [vmem:[%s762 + $0x350] sm:$0xff] %v975
                  %v977 = vld [vmem:[%s761 + $0x1ac0] sm:$0xff]
                  %978 = vst [vmem:[%s762 + $0x358] sm:$0xff] %v977
                  %v979 = vld [vmem:[%s761 + $0x1b00] sm:$0xff]
                  %980 = vst [vmem:[%s762 + $0x360] sm:$0xff] %v979
                  %v981 = vld [vmem:[%s761 + $0x1b40] sm:$0xff]
                  %982 = vst [vmem:[%s762 + $0x368] sm:$0xff] %v981
                  %v983 = vld [vmem:[%s761 + $0x1b80] sm:$0xff]
                  %984 = vst [vmem:[%s762 + $0x370] sm:$0xff] %v983
                  %v985 = vld [vmem:[%s761 + $0x1bc0] sm:$0xff]
                  %986 = vst [vmem:[%s762 + $0x378] sm:$0xff] %v985
                  %v987 = vld [vmem:[%s761 + $0x1c00] sm:$0xff]
                  %988 = vst [vmem:[%s762 + $0x380] sm:$0xff] %v987
                  %v989 = vld [vmem:[%s761 + $0x1c40] sm:$0xff]
                  %990 = vst [vmem:[%s762 + $0x388] sm:$0xff] %v989
                  %v991 = vld [vmem:[%s761 + $0x1c80] sm:$0xff]
                  %992 = vst [vmem:[%s762 + $0x390] sm:$0xff] %v991
                  %v993 = vld [vmem:[%s761 + $0x1cc0] sm:$0xff]
                  %994 = vst [vmem:[%s762 + $0x398] sm:$0xff] %v993
                  %v995 = vld [vmem:[%s761 + $0x1d00] sm:$0xff]
                  %996 = vst [vmem:[%s762 + $0x3a0] sm:$0xff] %v995
                  %v997 = vld [vmem:[%s761 + $0x1d40] sm:$0xff]
                  %998 = vst [vmem:[%s762 + $0x3a8] sm:$0xff] %v997
                  %v999 = vld [vmem:[%s761 + $0x1d80] sm:$0xff]
                  %1000 = vst [vmem:[%s762 + $0x3b0] sm:$0xff] %v999
                  %v1001 = vld [vmem:[%s761 + $0x1dc0] sm:$0xff]
                  %1002 = vst [vmem:[%s762 + $0x3b8] sm:$0xff] %v1001
                  %v1003 = vld [vmem:[%s761 + $0x1e00] sm:$0xff]
                  %1004 = vst [vmem:[%s762 + $0x3c0] sm:$0xff] %v1003
                  %v1005 = vld [vmem:[%s761 + $0x1e40] sm:$0xff]
                  %1006 = vst [vmem:[%s762 + $0x3c8] sm:$0xff] %v1005
                  %v1007 = vld [vmem:[%s761 + $0x1e80] sm:$0xff]
                  %1008 = vst [vmem:[%s762 + $0x3d0] sm:$0xff] %v1007
                  %v1009 = vld [vmem:[%s761 + $0x1ec0] sm:$0xff]
                  %1010 = vst [vmem:[%s762 + $0x3d8] sm:$0xff] %v1009
                  %v1011 = vld [vmem:[%s761 + $0x1f00] sm:$0xff]
                  %1012 = vst [vmem:[%s762 + $0x3e0] sm:$0xff] %v1011
                  %v1013 = vld [vmem:[%s761 + $0x1f40] sm:$0xff]
                  %1014 = vst [vmem:[%s762 + $0x3e8] sm:$0xff] %v1013
                  %v1015 = vld [vmem:[%s761 + $0x1f80] sm:$0xff]
                  %1016 = vst [vmem:[%s762 + $0x3f0] sm:$0xff] %v1015
                  %v1017 = vld [vmem:[%s761 + $0x1fc0] sm:$0xff]
                  %1018 = vst [vmem:[%s762 + $0x3f8] sm:$0xff] %v1017
                  %v1019 = vld [vmem:[%s761 + $0x2000] sm:$0xff]
                  %1020 = vst [vmem:[%s762 + $0x400] sm:$0xff] %v1019
                  %v1021 = vld [vmem:[%s761 + $0x2040] sm:$0xff]
                  %1022 = vst [vmem:[%s762 + $0x408] sm:$0xff] %v1021
                  %v1023 = vld [vmem:[%s761 + $0x2080] sm:$0xff]
                  %1024 = vst [vmem:[%s762 + $0x410] sm:$0xff] %v1023
                  %v1025 = vld [vmem:[%s761 + $0x20c0] sm:$0xff]
                  %1026 = vst [vmem:[%s762 + $0x418] sm:$0xff] %v1025
                  %v1027 = vld [vmem:[%s761 + $0x2100] sm:$0xff]
                  %1028 = vst [vmem:[%s762 + $0x420] sm:$0xff] %v1027
                  %v1029 = vld [vmem:[%s761 + $0x2140] sm:$0xff]
                  %1030 = vst [vmem:[%s762 + $0x428] sm:$0xff] %v1029
                  %v1031 = vld [vmem:[%s761 + $0x2180] sm:$0xff]
                  %1032 = vst [vmem:[%s762 + $0x430] sm:$0xff] %v1031
                  %v1033 = vld [vmem:[%s761 + $0x21c0] sm:$0xff]
                  %1034 = vst [vmem:[%s762 + $0x438] sm:$0xff] %v1033
                  %v1035 = vld [vmem:[%s761 + $0x2200] sm:$0xff]
                  %1036 = vst [vmem:[%s762 + $0x440] sm:$0xff] %v1035
                  %v1037 = vld [vmem:[%s761 + $0x2240] sm:$0xff]
                  %1038 = vst [vmem:[%s762 + $0x448] sm:$0xff] %v1037
                  %v1039 = vld [vmem:[%s761 + $0x2280] sm:$0xff]
                  %1040 = vst [vmem:[%s762 + $0x450] sm:$0xff] %v1039
                  %v1041 = vld [vmem:[%s761 + $0x22c0] sm:$0xff]
                  %1042 = vst [vmem:[%s762 + $0x458] sm:$0xff] %v1041
                  %v1043 = vld [vmem:[%s761 + $0x2300] sm:$0xff]
                  %1044 = vst [vmem:[%s762 + $0x460] sm:$0xff] %v1043
                  %v1045 = vld [vmem:[%s761 + $0x2340] sm:$0xff]
                  %1046 = vst [vmem:[%s762 + $0x468] sm:$0xff] %v1045
                  %v1047 = vld [vmem:[%s761 + $0x2380] sm:$0xff]
                  %1048 = vst [vmem:[%s762 + $0x470] sm:$0xff] %v1047
                  %v1049 = vld [vmem:[%s761 + $0x23c0] sm:$0xff]
                  %1050 = vst [vmem:[%s762 + $0x478] sm:$0xff] %v1049
                  %v1051 = vld [vmem:[%s761 + $0x2400] sm:$0xff]
                  %1052 = vst [vmem:[%s762 + $0x480] sm:$0xff] %v1051
                  %v1053 = vld [vmem:[%s761 + $0x2440] sm:$0xff]
                  %1054 = vst [vmem:[%s762 + $0x488] sm:$0xff] %v1053
                  %v1055 = vld [vmem:[%s761 + $0x2480] sm:$0xff]
                  %1056 = vst [vmem:[%s762 + $0x490] sm:$0xff] %v1055
                  %v1057 = vld [vmem:[%s761 + $0x24c0] sm:$0xff]
                  %1058 = vst [vmem:[%s762 + $0x498] sm:$0xff] %v1057
                  %v1059 = vld [vmem:[%s761 + $0x2500] sm:$0xff]
                  %1060 = vst [vmem:[%s762 + $0x4a0] sm:$0xff] %v1059
                  %v1061 = vld [vmem:[%s761 + $0x2540] sm:$0xff]
                  %1062 = vst [vmem:[%s762 + $0x4a8] sm:$0xff] %v1061
                  %v1063 = vld [vmem:[%s761 + $0x2580] sm:$0xff]
                  %1064 = vst [vmem:[%s762 + $0x4b0] sm:$0xff] %v1063
                  %v1065 = vld [vmem:[%s761 + $0x25c0] sm:$0xff]
                  %1066 = vst [vmem:[%s762 + $0x4b8] sm:$0xff] %v1065
                  %v1067 = vld [vmem:[%s761 + $0x2600] sm:$0xff]
                  %1068 = vst [vmem:[%s762 + $0x4c0] sm:$0xff] %v1067
                  %v1069 = vld [vmem:[%s761 + $0x2640] sm:$0xff]
                  %1070 = vst [vmem:[%s762 + $0x4c8] sm:$0xff] %v1069
                  %v1071 = vld [vmem:[%s761 + $0x2680] sm:$0xff]
                  %1072 = vst [vmem:[%s762 + $0x4d0] sm:$0xff] %v1071
                  %v1073 = vld [vmem:[%s761 + $0x26c0] sm:$0xff]
                  %1074 = vst [vmem:[%s762 + $0x4d8] sm:$0xff] %v1073
                  %v1075 = vld [vmem:[%s761 + $0x2700] sm:$0xff]
                  %1076 = vst [vmem:[%s762 + $0x4e0] sm:$0xff] %v1075
                  %v1077 = vld [vmem:[%s761 + $0x2740] sm:$0xff]
                  %1078 = vst [vmem:[%s762 + $0x4e8] sm:$0xff] %v1077
                  %v1079 = vld [vmem:[%s761 + $0x2780] sm:$0xff]
                  %1080 = vst [vmem:[%s762 + $0x4f0] sm:$0xff] %v1079
                  %v1081 = vld [vmem:[%s761 + $0x27c0] sm:$0xff]
                  %1082 = vst [vmem:[%s762 + $0x4f8] sm:$0xff] %v1081
                  %v1083 = vld [vmem:[%s761 + $0x2800] sm:$0xff]
                  %1084 = vst [vmem:[%s762 + $0x500] sm:$0xff] %v1083
                  %v1085 = vld [vmem:[%s761 + $0x2840] sm:$0xff]
                  %1086 = vst [vmem:[%s762 + $0x508] sm:$0xff] %v1085
                  %v1087 = vld [vmem:[%s761 + $0x2880] sm:$0xff]
                  %1088 = vst [vmem:[%s762 + $0x510] sm:$0xff] %v1087
                  %v1089 = vld [vmem:[%s761 + $0x28c0] sm:$0xff]
                  %1090 = vst [vmem:[%s762 + $0x518] sm:$0xff] %v1089
                  %v1091 = vld [vmem:[%s761 + $0x2900] sm:$0xff]
                  %1092 = vst [vmem:[%s762 + $0x520] sm:$0xff] %v1091
                  %v1093 = vld [vmem:[%s761 + $0x2940] sm:$0xff]
                  %1094 = vst [vmem:[%s762 + $0x528] sm:$0xff] %v1093
                  %v1095 = vld [vmem:[%s761 + $0x2980] sm:$0xff]
                  %1096 = vst [vmem:[%s762 + $0x530] sm:$0xff] %v1095
                  %v1097 = vld [vmem:[%s761 + $0x29c0] sm:$0xff]
                  %1098 = vst [vmem:[%s762 + $0x538] sm:$0xff] %v1097
                  %v1099 = vld [vmem:[%s761 + $0x2a00] sm:$0xff]
                  %1100 = vst [vmem:[%s762 + $0x540] sm:$0xff] %v1099
                  %v1101 = vld [vmem:[%s761 + $0x2a40] sm:$0xff]
                  %1102 = vst [vmem:[%s762 + $0x548] sm:$0xff] %v1101
                  %v1103 = vld [vmem:[%s761 + $0x2a80] sm:$0xff]
                  %1104 = vst [vmem:[%s762 + $0x550] sm:$0xff] %v1103
                  %v1105 = vld [vmem:[%s761 + $0x2ac0] sm:$0xff]
                  %1106 = vst [vmem:[%s762 + $0x558] sm:$0xff] %v1105
                  %v1107 = vld [vmem:[%s761 + $0x2b00] sm:$0xff]
                  %1108 = vst [vmem:[%s762 + $0x560] sm:$0xff] %v1107
                  %v1109 = vld [vmem:[%s761 + $0x2b40] sm:$0xff]
                  %1110 = vst [vmem:[%s762 + $0x568] sm:$0xff] %v1109
                  %v1111 = vld [vmem:[%s761 + $0x2b80] sm:$0xff]
                  %1112 = vst [vmem:[%s762 + $0x570] sm:$0xff] %v1111
                  %v1113 = vld [vmem:[%s761 + $0x2bc0] sm:$0xff]
                  %1114 = vst [vmem:[%s762 + $0x578] sm:$0xff] %v1113
                  %v1115 = vld [vmem:[%s761 + $0x2c00] sm:$0xff]
                  %1116 = vst [vmem:[%s762 + $0x580] sm:$0xff] %v1115
                  %v1117 = vld [vmem:[%s761 + $0x2c40] sm:$0xff]
                  %1118 = vst [vmem:[%s762 + $0x588] sm:$0xff] %v1117
                  %v1119 = vld [vmem:[%s761 + $0x2c80] sm:$0xff]
                  %1120 = vst [vmem:[%s762 + $0x590] sm:$0xff] %v1119
                  %v1121 = vld [vmem:[%s761 + $0x2cc0] sm:$0xff]
                  %1122 = vst [vmem:[%s762 + $0x598] sm:$0xff] %v1121
                  %v1123 = vld [vmem:[%s761 + $0x2d00] sm:$0xff]
                  %1124 = vst [vmem:[%s762 + $0x5a0] sm:$0xff] %v1123
                  %v1125 = vld [vmem:[%s761 + $0x2d40] sm:$0xff]
                  %1126 = vst [vmem:[%s762 + $0x5a8] sm:$0xff] %v1125
                  %v1127 = vld [vmem:[%s761 + $0x2d80] sm:$0xff]
                  %1128 = vst [vmem:[%s762 + $0x5b0] sm:$0xff] %v1127
                  %v1129 = vld [vmem:[%s761 + $0x2dc0] sm:$0xff]
                  %1130 = vst [vmem:[%s762 + $0x5b8] sm:$0xff] %v1129
                  %v1131 = vld [vmem:[%s761 + $0x2e00] sm:$0xff]
                  %1132 = vst [vmem:[%s762 + $0x5c0] sm:$0xff] %v1131
                  %v1133 = vld [vmem:[%s761 + $0x2e40] sm:$0xff]
                  %1134 = vst [vmem:[%s762 + $0x5c8] sm:$0xff] %v1133
                  %v1135 = vld [vmem:[%s761 + $0x2e80] sm:$0xff]
                  %1136 = vst [vmem:[%s762 + $0x5d0] sm:$0xff] %v1135
                  %v1137 = vld [vmem:[%s761 + $0x2ec0] sm:$0xff]
                  %1138 = vst [vmem:[%s762 + $0x5d8] sm:$0xff] %v1137
                  %v1139 = vld [vmem:[%s761 + $0x2f00] sm:$0xff]
                  %1140 = vst [vmem:[%s762 + $0x5e0] sm:$0xff] %v1139
                  %v1141 = vld [vmem:[%s761 + $0x2f40] sm:$0xff]
                  %1142 = vst [vmem:[%s762 + $0x5e8] sm:$0xff] %v1141
                  %v1143 = vld [vmem:[%s761 + $0x2f80] sm:$0xff]
                  %1144 = vst [vmem:[%s762 + $0x5f0] sm:$0xff] %v1143
                  %v1145 = vld [vmem:[%s761 + $0x2fc0] sm:$0xff]
                  %1146 = vst [vmem:[%s762 + $0x5f8] sm:$0xff] %v1145
                  %v1147 = vld [vmem:[%s761 + $0x3000] sm:$0xff]
                  %1148 = vst [vmem:[%s762 + $0x600] sm:$0xff] %v1147
                  %v1149 = vld [vmem:[%s761 + $0x3040] sm:$0xff]
                  %1150 = vst [vmem:[%s762 + $0x608] sm:$0xff] %v1149
                  %v1151 = vld [vmem:[%s761 + $0x3080] sm:$0xff]
                  %1152 = vst [vmem:[%s762 + $0x610] sm:$0xff] %v1151
                  %v1153 = vld [vmem:[%s761 + $0x30c0] sm:$0xff]
                  %1154 = vst [vmem:[%s762 + $0x618] sm:$0xff] %v1153
                  %v1155 = vld [vmem:[%s761 + $0x3100] sm:$0xff]
                  %1156 = vst [vmem:[%s762 + $0x620] sm:$0xff] %v1155
                  %v1157 = vld [vmem:[%s761 + $0x3140] sm:$0xff]
                  %1158 = vst [vmem:[%s762 + $0x628] sm:$0xff] %v1157
                  %v1159 = vld [vmem:[%s761 + $0x3180] sm:$0xff]
                  %1160 = vst [vmem:[%s762 + $0x630] sm:$0xff] %v1159
                  %v1161 = vld [vmem:[%s761 + $0x31c0] sm:$0xff]
                  %1162 = vst [vmem:[%s762 + $0x638] sm:$0xff] %v1161
                $region80: #{mnist_cnn_forward.5} parent=74 // loop_footer
                  %s760 = sadd.s32 1, %s756
                $region81: #{mnist_cnn_forward.5} parent=74 // loop_footer_branch
                  %755 = sbr.rel target = $region77
                $region82: #{mnist_cnn_forward.5} parent=74 // loop_exit
                  _
              $region75: #{mnist_cnn_forward.5} parent=59 // pred_fallthru
                _
              // Predicated region
              $region83: #{mnist_cnn_forward.5} parent=59 // pred_check
                _
              $region84: #{mnist_cnn_forward.5} parent=59 // pred_check_branch
                %1164 = sbr.rel target = $region86
              $region85: #{mnist_cnn_forward.5} parent=59 // pred_region
                _
              $region86: #{mnist_cnn_forward.5} parent=59 // pred_fallthru
                _
            $region60: #{mnist_cnn_forward.5} parent=55 // pred_fallthru
              _
            // Predicated region
            $region61: #{mnist_cnn_forward.5} parent=55 // pred_check
              _
            $region62: #{mnist_cnn_forward.5} parent=55 // pred_check_branch
              %343 = sbr.rel target = $region64
            $region63: #{mnist_cnn_forward.5} parent=55 // pred_region
              loop: start=0, step=1, limit=1
              $region65: #{mnist_cnn_forward.5} parent=63 // loop_pre_header
                _
              $region66: #{mnist_cnn_forward.5} parent=63 // loop_header
                %s346 = sphi 0, %s350
                %p347 = scmp.ge.s32.totalorder %s346, 1
                %s351 = sphi %s337, %s337
                %s352 = sphi %s334, %s334
              $region67: #{mnist_cnn_forward.5} parent=63 // loop_header_branch
                %349 = sbr.rel (%p347) target = $region71
              $region68: #{mnist_cnn_forward.5} parent=63 // loop_body
                %v353 = vld [vmem:[%s351] sm:$0xff]
                %354 = vst [vmem:[%s352] sm:$0xff] %v353
                %v355 = vld [vmem:[%s351 + $0x40] sm:$0xff]
                %356 = vst [vmem:[%s352 + $0x8] sm:$0xff] %v355
                %v357 = vld [vmem:[%s351 + $0x80] sm:$0xff]
                %358 = vst [vmem:[%s352 + $0x10] sm:$0xff] %v357
                %v359 = vld [vmem:[%s351 + $0xc0] sm:$0xff]
                %360 = vst [vmem:[%s352 + $0x18] sm:$0xff] %v359
                %v361 = vld [vmem:[%s351 + $0x100] sm:$0xff]
                %362 = vst [vmem:[%s352 + $0x20] sm:$0xff] %v361
                %v363 = vld [vmem:[%s351 + $0x140] sm:$0xff]
                %364 = vst [vmem:[%s352 + $0x28] sm:$0xff] %v363
                %v365 = vld [vmem:[%s351 + $0x180] sm:$0xff]
                %366 = vst [vmem:[%s352 + $0x30] sm:$0xff] %v365
                %v367 = vld [vmem:[%s351 + $0x1c0] sm:$0xff]
                %368 = vst [vmem:[%s352 + $0x38] sm:$0xff] %v367
                %v369 = vld [vmem:[%s351 + $0x200] sm:$0xff]
                %370 = vst [vmem:[%s352 + $0x40] sm:$0xff] %v369
                %v371 = vld [vmem:[%s351 + $0x240] sm:$0xff]
                %372 = vst [vmem:[%s352 + $0x48] sm:$0xff] %v371
                %v373 = vld [vmem:[%s351 + $0x280] sm:$0xff]
                %374 = vst [vmem:[%s352 + $0x50] sm:$0xff] %v373
                %v375 = vld [vmem:[%s351 + $0x2c0] sm:$0xff]
                %376 = vst [vmem:[%s352 + $0x58] sm:$0xff] %v375
                %v377 = vld [vmem:[%s351 + $0x300] sm:$0xff]
                %378 = vst [vmem:[%s352 + $0x60] sm:$0xff] %v377
                %v379 = vld [vmem:[%s351 + $0x340] sm:$0xff]
                %380 = vst [vmem:[%s352 + $0x68] sm:$0xff] %v379
                %v381 = vld [vmem:[%s351 + $0x380] sm:$0xff]
                %382 = vst [vmem:[%s352 + $0x70] sm:$0xff] %v381
                %v383 = vld [vmem:[%s351 + $0x3c0] sm:$0xff]
                %384 = vst [vmem:[%s352 + $0x78] sm:$0xff] %v383
                %v385 = vld [vmem:[%s351 + $0x400] sm:$0xff]
                %386 = vst [vmem:[%s352 + $0x80] sm:$0xff] %v385
                %v387 = vld [vmem:[%s351 + $0x440] sm:$0xff]
                %388 = vst [vmem:[%s352 + $0x88] sm:$0xff] %v387
                %v389 = vld [vmem:[%s351 + $0x480] sm:$0xff]
                %390 = vst [vmem:[%s352 + $0x90] sm:$0xff] %v389
                %v391 = vld [vmem:[%s351 + $0x4c0] sm:$0xff]
                %392 = vst [vmem:[%s352 + $0x98] sm:$0xff] %v391
                %v393 = vld [vmem:[%s351 + $0x500] sm:$0xff]
                %394 = vst [vmem:[%s352 + $0xa0] sm:$0xff] %v393
                %v395 = vld [vmem:[%s351 + $0x540] sm:$0xff]
                %396 = vst [vmem:[%s352 + $0xa8] sm:$0xff] %v395
                %v397 = vld [vmem:[%s351 + $0x580] sm:$0xff]
                %398 = vst [vmem:[%s352 + $0xb0] sm:$0xff] %v397
                %v399 = vld [vmem:[%s351 + $0x5c0] sm:$0xff]
                %400 = vst [vmem:[%s352 + $0xb8] sm:$0xff] %v399
                %v401 = vld [vmem:[%s351 + $0x600] sm:$0xff]
                %402 = vst [vmem:[%s352 + $0xc0] sm:$0xff] %v401
                %v403 = vld [vmem:[%s351 + $0x640] sm:$0xff]
                %404 = vst [vmem:[%s352 + $0xc8] sm:$0xff] %v403
                %v405 = vld [vmem:[%s351 + $0x680] sm:$0xff]
                %406 = vst [vmem:[%s352 + $0xd0] sm:$0xff] %v405
                %v407 = vld [vmem:[%s351 + $0x6c0] sm:$0xff]
                %408 = vst [vmem:[%s352 + $0xd8] sm:$0xff] %v407
                %v409 = vld [vmem:[%s351 + $0x700] sm:$0xff]
                %410 = vst [vmem:[%s352 + $0xe0] sm:$0xff] %v409
                %v411 = vld [vmem:[%s351 + $0x740] sm:$0xff]
                %412 = vst [vmem:[%s352 + $0xe8] sm:$0xff] %v411
                %v413 = vld [vmem:[%s351 + $0x780] sm:$0xff]
                %414 = vst [vmem:[%s352 + $0xf0] sm:$0xff] %v413
                %v415 = vld [vmem:[%s351 + $0x7c0] sm:$0xff]
                %416 = vst [vmem:[%s352 + $0xf8] sm:$0xff] %v415
                %v417 = vld [vmem:[%s351 + $0x800] sm:$0xff]
                %418 = vst [vmem:[%s352 + $0x100] sm:$0xff] %v417
                %v419 = vld [vmem:[%s351 + $0x840] sm:$0xff]
                %420 = vst [vmem:[%s352 + $0x108] sm:$0xff] %v419
                %v421 = vld [vmem:[%s351 + $0x880] sm:$0xff]
                %422 = vst [vmem:[%s352 + $0x110] sm:$0xff] %v421
                %v423 = vld [vmem:[%s351 + $0x8c0] sm:$0xff]
                %424 = vst [vmem:[%s352 + $0x118] sm:$0xff] %v423
                %v425 = vld [vmem:[%s351 + $0x900] sm:$0xff]
                %426 = vst [vmem:[%s352 + $0x120] sm:$0xff] %v425
                %v427 = vld [vmem:[%s351 + $0x940] sm:$0xff]
                %428 = vst [vmem:[%s352 + $0x128] sm:$0xff] %v427
                %v429 = vld [vmem:[%s351 + $0x980] sm:$0xff]
                %430 = vst [vmem:[%s352 + $0x130] sm:$0xff] %v429
                %v431 = vld [vmem:[%s351 + $0x9c0] sm:$0xff]
                %432 = vst [vmem:[%s352 + $0x138] sm:$0xff] %v431
                %v433 = vld [vmem:[%s351 + $0xa00] sm:$0xff]
                %434 = vst [vmem:[%s352 + $0x140] sm:$0xff] %v433
                %v435 = vld [vmem:[%s351 + $0xa40] sm:$0xff]
                %436 = vst [vmem:[%s352 + $0x148] sm:$0xff] %v435
                %v437 = vld [vmem:[%s351 + $0xa80] sm:$0xff]
                %438 = vst [vmem:[%s352 + $0x150] sm:$0xff] %v437
                %v439 = vld [vmem:[%s351 + $0xac0] sm:$0xff]
                %440 = vst [vmem:[%s352 + $0x158] sm:$0xff] %v439
                %v441 = vld [vmem:[%s351 + $0xb00] sm:$0xff]
                %442 = vst [vmem:[%s352 + $0x160] sm:$0xff] %v441
                %v443 = vld [vmem:[%s351 + $0xb40] sm:$0xff]
                %444 = vst [vmem:[%s352 + $0x168] sm:$0xff] %v443
                %v445 = vld [vmem:[%s351 + $0xb80] sm:$0xff]
                %446 = vst [vmem:[%s352 + $0x170] sm:$0xff] %v445
                %v447 = vld [vmem:[%s351 + $0xbc0] sm:$0xff]
                %448 = vst [vmem:[%s352 + $0x178] sm:$0xff] %v447
                %v449 = vld [vmem:[%s351 + $0xc00] sm:$0xff]
                %450 = vst [vmem:[%s352 + $0x180] sm:$0xff] %v449
                %v451 = vld [vmem:[%s351 + $0xc40] sm:$0xff]
                %452 = vst [vmem:[%s352 + $0x188] sm:$0xff] %v451
                %v453 = vld [vmem:[%s351 + $0xc80] sm:$0xff]
                %454 = vst [vmem:[%s352 + $0x190] sm:$0xff] %v453
                %v455 = vld [vmem:[%s351 + $0xcc0] sm:$0xff]
                %456 = vst [vmem:[%s352 + $0x198] sm:$0xff] %v455
                %v457 = vld [vmem:[%s351 + $0xd00] sm:$0xff]
                %458 = vst [vmem:[%s352 + $0x1a0] sm:$0xff] %v457
                %v459 = vld [vmem:[%s351 + $0xd40] sm:$0xff]
                %460 = vst [vmem:[%s352 + $0x1a8] sm:$0xff] %v459
                %v461 = vld [vmem:[%s351 + $0xd80] sm:$0xff]
                %462 = vst [vmem:[%s352 + $0x1b0] sm:$0xff] %v461
                %v463 = vld [vmem:[%s351 + $0xdc0] sm:$0xff]
                %464 = vst [vmem:[%s352 + $0x1b8] sm:$0xff] %v463
                %v465 = vld [vmem:[%s351 + $0xe00] sm:$0xff]
                %466 = vst [vmem:[%s352 + $0x1c0] sm:$0xff] %v465
                %v467 = vld [vmem:[%s351 + $0xe40] sm:$0xff]
                %468 = vst [vmem:[%s352 + $0x1c8] sm:$0xff] %v467
                %v469 = vld [vmem:[%s351 + $0xe80] sm:$0xff]
                %470 = vst [vmem:[%s352 + $0x1d0] sm:$0xff] %v469
                %v471 = vld [vmem:[%s351 + $0xec0] sm:$0xff]
                %472 = vst [vmem:[%s352 + $0x1d8] sm:$0xff] %v471
                %v473 = vld [vmem:[%s351 + $0xf00] sm:$0xff]
                %474 = vst [vmem:[%s352 + $0x1e0] sm:$0xff] %v473
                %v475 = vld [vmem:[%s351 + $0xf40] sm:$0xff]
                %476 = vst [vmem:[%s352 + $0x1e8] sm:$0xff] %v475
                %v477 = vld [vmem:[%s351 + $0xf80] sm:$0xff]
                %478 = vst [vmem:[%s352 + $0x1f0] sm:$0xff] %v477
                %v479 = vld [vmem:[%s351 + $0xfc0] sm:$0xff]
                %480 = vst [vmem:[%s352 + $0x1f8] sm:$0xff] %v479
                %v481 = vld [vmem:[%s351 + $0x1000] sm:$0xff]
                %482 = vst [vmem:[%s352 + $0x200] sm:$0xff] %v481
                %v483 = vld [vmem:[%s351 + $0x1040] sm:$0xff]
                %484 = vst [vmem:[%s352 + $0x208] sm:$0xff] %v483
                %v485 = vld [vmem:[%s351 + $0x1080] sm:$0xff]
                %486 = vst [vmem:[%s352 + $0x210] sm:$0xff] %v485
                %v487 = vld [vmem:[%s351 + $0x10c0] sm:$0xff]
                %488 = vst [vmem:[%s352 + $0x218] sm:$0xff] %v487
                %v489 = vld [vmem:[%s351 + $0x1100] sm:$0xff]
                %490 = vst [vmem:[%s352 + $0x220] sm:$0xff] %v489
                %v491 = vld [vmem:[%s351 + $0x1140] sm:$0xff]
                %492 = vst [vmem:[%s352 + $0x228] sm:$0xff] %v491
                %v493 = vld [vmem:[%s351 + $0x1180] sm:$0xff]
                %494 = vst [vmem:[%s352 + $0x230] sm:$0xff] %v493
                %v495 = vld [vmem:[%s351 + $0x11c0] sm:$0xff]
                %496 = vst [vmem:[%s352 + $0x238] sm:$0xff] %v495
                %v497 = vld [vmem:[%s351 + $0x1200] sm:$0xff]
                %498 = vst [vmem:[%s352 + $0x240] sm:$0xff] %v497
                %v499 = vld [vmem:[%s351 + $0x1240] sm:$0xff]
                %500 = vst [vmem:[%s352 + $0x248] sm:$0xff] %v499
                %v501 = vld [vmem:[%s351 + $0x1280] sm:$0xff]
                %502 = vst [vmem:[%s352 + $0x250] sm:$0xff] %v501
                %v503 = vld [vmem:[%s351 + $0x12c0] sm:$0xff]
                %504 = vst [vmem:[%s352 + $0x258] sm:$0xff] %v503
                %v505 = vld [vmem:[%s351 + $0x1300] sm:$0xff]
                %506 = vst [vmem:[%s352 + $0x260] sm:$0xff] %v505
                %v507 = vld [vmem:[%s351 + $0x1340] sm:$0xff]
                %508 = vst [vmem:[%s352 + $0x268] sm:$0xff] %v507
                %v509 = vld [vmem:[%s351 + $0x1380] sm:$0xff]
                %510 = vst [vmem:[%s352 + $0x270] sm:$0xff] %v509
                %v511 = vld [vmem:[%s351 + $0x13c0] sm:$0xff]
                %512 = vst [vmem:[%s352 + $0x278] sm:$0xff] %v511
                %v513 = vld [vmem:[%s351 + $0x1400] sm:$0xff]
                %514 = vst [vmem:[%s352 + $0x280] sm:$0xff] %v513
                %v515 = vld [vmem:[%s351 + $0x1440] sm:$0xff]
                %516 = vst [vmem:[%s352 + $0x288] sm:$0xff] %v515
                %v517 = vld [vmem:[%s351 + $0x1480] sm:$0xff]
                %518 = vst [vmem:[%s352 + $0x290] sm:$0xff] %v517
                %v519 = vld [vmem:[%s351 + $0x14c0] sm:$0xff]
                %520 = vst [vmem:[%s352 + $0x298] sm:$0xff] %v519
                %v521 = vld [vmem:[%s351 + $0x1500] sm:$0xff]
                %522 = vst [vmem:[%s352 + $0x2a0] sm:$0xff] %v521
                %v523 = vld [vmem:[%s351 + $0x1540] sm:$0xff]
                %524 = vst [vmem:[%s352 + $0x2a8] sm:$0xff] %v523
                %v525 = vld [vmem:[%s351 + $0x1580] sm:$0xff]
                %526 = vst [vmem:[%s352 + $0x2b0] sm:$0xff] %v525
                %v527 = vld [vmem:[%s351 + $0x15c0] sm:$0xff]
                %528 = vst [vmem:[%s352 + $0x2b8] sm:$0xff] %v527
                %v529 = vld [vmem:[%s351 + $0x1600] sm:$0xff]
                %530 = vst [vmem:[%s352 + $0x2c0] sm:$0xff] %v529
                %v531 = vld [vmem:[%s351 + $0x1640] sm:$0xff]
                %532 = vst [vmem:[%s352 + $0x2c8] sm:$0xff] %v531
                %v533 = vld [vmem:[%s351 + $0x1680] sm:$0xff]
                %534 = vst [vmem:[%s352 + $0x2d0] sm:$0xff] %v533
                %v535 = vld [vmem:[%s351 + $0x16c0] sm:$0xff]
                %536 = vst [vmem:[%s352 + $0x2d8] sm:$0xff] %v535
                %v537 = vld [vmem:[%s351 + $0x1700] sm:$0xff]
                %538 = vst [vmem:[%s352 + $0x2e0] sm:$0xff] %v537
                %v539 = vld [vmem:[%s351 + $0x1740] sm:$0xff]
                %540 = vst [vmem:[%s352 + $0x2e8] sm:$0xff] %v539
                %v541 = vld [vmem:[%s351 + $0x1780] sm:$0xff]
                %542 = vst [vmem:[%s352 + $0x2f0] sm:$0xff] %v541
                %v543 = vld [vmem:[%s351 + $0x17c0] sm:$0xff]
                %544 = vst [vmem:[%s352 + $0x2f8] sm:$0xff] %v543
                %v545 = vld [vmem:[%s351 + $0x1800] sm:$0xff]
                %546 = vst [vmem:[%s352 + $0x300] sm:$0xff] %v545
                %v547 = vld [vmem:[%s351 + $0x1840] sm:$0xff]
                %548 = vst [vmem:[%s352 + $0x308] sm:$0xff] %v547
                %v549 = vld [vmem:[%s351 + $0x1880] sm:$0xff]
                %550 = vst [vmem:[%s352 + $0x310] sm:$0xff] %v549
                %v551 = vld [vmem:[%s351 + $0x18c0] sm:$0xff]
                %552 = vst [vmem:[%s352 + $0x318] sm:$0xff] %v551
                %v553 = vld [vmem:[%s351 + $0x1900] sm:$0xff]
                %554 = vst [vmem:[%s352 + $0x320] sm:$0xff] %v553
                %v555 = vld [vmem:[%s351 + $0x1940] sm:$0xff]
                %556 = vst [vmem:[%s352 + $0x328] sm:$0xff] %v555
                %v557 = vld [vmem:[%s351 + $0x1980] sm:$0xff]
                %558 = vst [vmem:[%s352 + $0x330] sm:$0xff] %v557
                %v559 = vld [vmem:[%s351 + $0x19c0] sm:$0xff]
                %560 = vst [vmem:[%s352 + $0x338] sm:$0xff] %v559
                %v561 = vld [vmem:[%s351 + $0x1a00] sm:$0xff]
                %562 = vst [vmem:[%s352 + $0x340] sm:$0xff] %v561
                %v563 = vld [vmem:[%s351 + $0x1a40] sm:$0xff]
                %564 = vst [vmem:[%s352 + $0x348] sm:$0xff] %v563
                %v565 = vld [vmem:[%s351 + $0x1a80] sm:$0xff]
                %566 = vst [vmem:[%s352 + $0x350] sm:$0xff] %v565
                %v567 = vld [vmem:[%s351 + $0x1ac0] sm:$0xff]
                %568 = vst [vmem:[%s352 + $0x358] sm:$0xff] %v567
                %v569 = vld [vmem:[%s351 + $0x1b00] sm:$0xff]
                %570 = vst [vmem:[%s352 + $0x360] sm:$0xff] %v569
                %v571 = vld [vmem:[%s351 + $0x1b40] sm:$0xff]
                %572 = vst [vmem:[%s352 + $0x368] sm:$0xff] %v571
                %v573 = vld [vmem:[%s351 + $0x1b80] sm:$0xff]
                %574 = vst [vmem:[%s352 + $0x370] sm:$0xff] %v573
                %v575 = vld [vmem:[%s351 + $0x1bc0] sm:$0xff]
                %576 = vst [vmem:[%s352 + $0x378] sm:$0xff] %v575
                %v577 = vld [vmem:[%s351 + $0x1c00] sm:$0xff]
                %578 = vst [vmem:[%s352 + $0x380] sm:$0xff] %v577
                %v579 = vld [vmem:[%s351 + $0x1c40] sm:$0xff]
                %580 = vst [vmem:[%s352 + $0x388] sm:$0xff] %v579
                %v581 = vld [vmem:[%s351 + $0x1c80] sm:$0xff]
                %582 = vst [vmem:[%s352 + $0x390] sm:$0xff] %v581
                %v583 = vld [vmem:[%s351 + $0x1cc0] sm:$0xff]
                %584 = vst [vmem:[%s352 + $0x398] sm:$0xff] %v583
                %v585 = vld [vmem:[%s351 + $0x1d00] sm:$0xff]
                %586 = vst [vmem:[%s352 + $0x3a0] sm:$0xff] %v585
                %v587 = vld [vmem:[%s351 + $0x1d40] sm:$0xff]
                %588 = vst [vmem:[%s352 + $0x3a8] sm:$0xff] %v587
                %v589 = vld [vmem:[%s351 + $0x1d80] sm:$0xff]
                %590 = vst [vmem:[%s352 + $0x3b0] sm:$0xff] %v589
                %v591 = vld [vmem:[%s351 + $0x1dc0] sm:$0xff]
                %592 = vst [vmem:[%s352 + $0x3b8] sm:$0xff] %v591
                %v593 = vld [vmem:[%s351 + $0x1e00] sm:$0xff]
                %594 = vst [vmem:[%s352 + $0x3c0] sm:$0xff] %v593
                %v595 = vld [vmem:[%s351 + $0x1e40] sm:$0xff]
                %596 = vst [vmem:[%s352 + $0x3c8] sm:$0xff] %v595
                %v597 = vld [vmem:[%s351 + $0x1e80] sm:$0xff]
                %598 = vst [vmem:[%s352 + $0x3d0] sm:$0xff] %v597
                %v599 = vld [vmem:[%s351 + $0x1ec0] sm:$0xff]
                %600 = vst [vmem:[%s352 + $0x3d8] sm:$0xff] %v599
                %v601 = vld [vmem:[%s351 + $0x1f00] sm:$0xff]
                %602 = vst [vmem:[%s352 + $0x3e0] sm:$0xff] %v601
                %v603 = vld [vmem:[%s351 + $0x1f40] sm:$0xff]
                %604 = vst [vmem:[%s352 + $0x3e8] sm:$0xff] %v603
                %v605 = vld [vmem:[%s351 + $0x1f80] sm:$0xff]
                %606 = vst [vmem:[%s352 + $0x3f0] sm:$0xff] %v605
                %v607 = vld [vmem:[%s351 + $0x1fc0] sm:$0xff]
                %608 = vst [vmem:[%s352 + $0x3f8] sm:$0xff] %v607
                %v609 = vld [vmem:[%s351 + $0x2000] sm:$0xff]
                %610 = vst [vmem:[%s352 + $0x400] sm:$0xff] %v609
                %v611 = vld [vmem:[%s351 + $0x2040] sm:$0xff]
                %612 = vst [vmem:[%s352 + $0x408] sm:$0xff] %v611
                %v613 = vld [vmem:[%s351 + $0x2080] sm:$0xff]
                %614 = vst [vmem:[%s352 + $0x410] sm:$0xff] %v613
                %v615 = vld [vmem:[%s351 + $0x20c0] sm:$0xff]
                %616 = vst [vmem:[%s352 + $0x418] sm:$0xff] %v615
                %v617 = vld [vmem:[%s351 + $0x2100] sm:$0xff]
                %618 = vst [vmem:[%s352 + $0x420] sm:$0xff] %v617
                %v619 = vld [vmem:[%s351 + $0x2140] sm:$0xff]
                %620 = vst [vmem:[%s352 + $0x428] sm:$0xff] %v619
                %v621 = vld [vmem:[%s351 + $0x2180] sm:$0xff]
                %622 = vst [vmem:[%s352 + $0x430] sm:$0xff] %v621
                %v623 = vld [vmem:[%s351 + $0x21c0] sm:$0xff]
                %624 = vst [vmem:[%s352 + $0x438] sm:$0xff] %v623
                %v625 = vld [vmem:[%s351 + $0x2200] sm:$0xff]
                %626 = vst [vmem:[%s352 + $0x440] sm:$0xff] %v625
                %v627 = vld [vmem:[%s351 + $0x2240] sm:$0xff]
                %628 = vst [vmem:[%s352 + $0x448] sm:$0xff] %v627
                %v629 = vld [vmem:[%s351 + $0x2280] sm:$0xff]
                %630 = vst [vmem:[%s352 + $0x450] sm:$0xff] %v629
                %v631 = vld [vmem:[%s351 + $0x22c0] sm:$0xff]
                %632 = vst [vmem:[%s352 + $0x458] sm:$0xff] %v631
                %v633 = vld [vmem:[%s351 + $0x2300] sm:$0xff]
                %634 = vst [vmem:[%s352 + $0x460] sm:$0xff] %v633
                %v635 = vld [vmem:[%s351 + $0x2340] sm:$0xff]
                %636 = vst [vmem:[%s352 + $0x468] sm:$0xff] %v635
                %v637 = vld [vmem:[%s351 + $0x2380] sm:$0xff]
                %638 = vst [vmem:[%s352 + $0x470] sm:$0xff] %v637
                %v639 = vld [vmem:[%s351 + $0x23c0] sm:$0xff]
                %640 = vst [vmem:[%s352 + $0x478] sm:$0xff] %v639
                %v641 = vld [vmem:[%s351 + $0x2400] sm:$0xff]
                %642 = vst [vmem:[%s352 + $0x480] sm:$0xff] %v641
                %v643 = vld [vmem:[%s351 + $0x2440] sm:$0xff]
                %644 = vst [vmem:[%s352 + $0x488] sm:$0xff] %v643
                %v645 = vld [vmem:[%s351 + $0x2480] sm:$0xff]
                %646 = vst [vmem:[%s352 + $0x490] sm:$0xff] %v645
                %v647 = vld [vmem:[%s351 + $0x24c0] sm:$0xff]
                %648 = vst [vmem:[%s352 + $0x498] sm:$0xff] %v647
                %v649 = vld [vmem:[%s351 + $0x2500] sm:$0xff]
                %650 = vst [vmem:[%s352 + $0x4a0] sm:$0xff] %v649
                %v651 = vld [vmem:[%s351 + $0x2540] sm:$0xff]
                %652 = vst [vmem:[%s352 + $0x4a8] sm:$0xff] %v651
                %v653 = vld [vmem:[%s351 + $0x2580] sm:$0xff]
                %654 = vst [vmem:[%s352 + $0x4b0] sm:$0xff] %v653
                %v655 = vld [vmem:[%s351 + $0x25c0] sm:$0xff]
                %656 = vst [vmem:[%s352 + $0x4b8] sm:$0xff] %v655
                %v657 = vld [vmem:[%s351 + $0x2600] sm:$0xff]
                %658 = vst [vmem:[%s352 + $0x4c0] sm:$0xff] %v657
                %v659 = vld [vmem:[%s351 + $0x2640] sm:$0xff]
                %660 = vst [vmem:[%s352 + $0x4c8] sm:$0xff] %v659
                %v661 = vld [vmem:[%s351 + $0x2680] sm:$0xff]
                %662 = vst [vmem:[%s352 + $0x4d0] sm:$0xff] %v661
                %v663 = vld [vmem:[%s351 + $0x26c0] sm:$0xff]
                %664 = vst [vmem:[%s352 + $0x4d8] sm:$0xff] %v663
                %v665 = vld [vmem:[%s351 + $0x2700] sm:$0xff]
                %666 = vst [vmem:[%s352 + $0x4e0] sm:$0xff] %v665
                %v667 = vld [vmem:[%s351 + $0x2740] sm:$0xff]
                %668 = vst [vmem:[%s352 + $0x4e8] sm:$0xff] %v667
                %v669 = vld [vmem:[%s351 + $0x2780] sm:$0xff]
                %670 = vst [vmem:[%s352 + $0x4f0] sm:$0xff] %v669
                %v671 = vld [vmem:[%s351 + $0x27c0] sm:$0xff]
                %672 = vst [vmem:[%s352 + $0x4f8] sm:$0xff] %v671
                %v673 = vld [vmem:[%s351 + $0x2800] sm:$0xff]
                %674 = vst [vmem:[%s352 + $0x500] sm:$0xff] %v673
                %v675 = vld [vmem:[%s351 + $0x2840] sm:$0xff]
                %676 = vst [vmem:[%s352 + $0x508] sm:$0xff] %v675
                %v677 = vld [vmem:[%s351 + $0x2880] sm:$0xff]
                %678 = vst [vmem:[%s352 + $0x510] sm:$0xff] %v677
                %v679 = vld [vmem:[%s351 + $0x28c0] sm:$0xff]
                %680 = vst [vmem:[%s352 + $0x518] sm:$0xff] %v679
                %v681 = vld [vmem:[%s351 + $0x2900] sm:$0xff]
                %682 = vst [vmem:[%s352 + $0x520] sm:$0xff] %v681
                %v683 = vld [vmem:[%s351 + $0x2940] sm:$0xff]
                %684 = vst [vmem:[%s352 + $0x528] sm:$0xff] %v683
                %v685 = vld [vmem:[%s351 + $0x2980] sm:$0xff]
                %686 = vst [vmem:[%s352 + $0x530] sm:$0xff] %v685
                %v687 = vld [vmem:[%s351 + $0x29c0] sm:$0xff]
                %688 = vst [vmem:[%s352 + $0x538] sm:$0xff] %v687
                %v689 = vld [vmem:[%s351 + $0x2a00] sm:$0xff]
                %690 = vst [vmem:[%s352 + $0x540] sm:$0xff] %v689
                %v691 = vld [vmem:[%s351 + $0x2a40] sm:$0xff]
                %692 = vst [vmem:[%s352 + $0x548] sm:$0xff] %v691
                %v693 = vld [vmem:[%s351 + $0x2a80] sm:$0xff]
                %694 = vst [vmem:[%s352 + $0x550] sm:$0xff] %v693
                %v695 = vld [vmem:[%s351 + $0x2ac0] sm:$0xff]
                %696 = vst [vmem:[%s352 + $0x558] sm:$0xff] %v695
                %v697 = vld [vmem:[%s351 + $0x2b00] sm:$0xff]
                %698 = vst [vmem:[%s352 + $0x560] sm:$0xff] %v697
                %v699 = vld [vmem:[%s351 + $0x2b40] sm:$0xff]
                %700 = vst [vmem:[%s352 + $0x568] sm:$0xff] %v699
                %v701 = vld [vmem:[%s351 + $0x2b80] sm:$0xff]
                %702 = vst [vmem:[%s352 + $0x570] sm:$0xff] %v701
                %v703 = vld [vmem:[%s351 + $0x2bc0] sm:$0xff]
                %704 = vst [vmem:[%s352 + $0x578] sm:$0xff] %v703
                %v705 = vld [vmem:[%s351 + $0x2c00] sm:$0xff]
                %706 = vst [vmem:[%s352 + $0x580] sm:$0xff] %v705
                %v707 = vld [vmem:[%s351 + $0x2c40] sm:$0xff]
                %708 = vst [vmem:[%s352 + $0x588] sm:$0xff] %v707
                %v709 = vld [vmem:[%s351 + $0x2c80] sm:$0xff]
                %710 = vst [vmem:[%s352 + $0x590] sm:$0xff] %v709
                %v711 = vld [vmem:[%s351 + $0x2cc0] sm:$0xff]
                %712 = vst [vmem:[%s352 + $0x598] sm:$0xff] %v711
                %v713 = vld [vmem:[%s351 + $0x2d00] sm:$0xff]
                %714 = vst [vmem:[%s352 + $0x5a0] sm:$0xff] %v713
                %v715 = vld [vmem:[%s351 + $0x2d40] sm:$0xff]
                %716 = vst [vmem:[%s352 + $0x5a8] sm:$0xff] %v715
                %v717 = vld [vmem:[%s351 + $0x2d80] sm:$0xff]
                %718 = vst [vmem:[%s352 + $0x5b0] sm:$0xff] %v717
                %v719 = vld [vmem:[%s351 + $0x2dc0] sm:$0xff]
                %720 = vst [vmem:[%s352 + $0x5b8] sm:$0xff] %v719
                %v721 = vld [vmem:[%s351 + $0x2e00] sm:$0xff]
                %722 = vst [vmem:[%s352 + $0x5c0] sm:$0xff] %v721
                %v723 = vld [vmem:[%s351 + $0x2e40] sm:$0xff]
                %724 = vst [vmem:[%s352 + $0x5c8] sm:$0xff] %v723
                %v725 = vld [vmem:[%s351 + $0x2e80] sm:$0xff]
                %726 = vst [vmem:[%s352 + $0x5d0] sm:$0xff] %v725
                %v727 = vld [vmem:[%s351 + $0x2ec0] sm:$0xff]
                %728 = vst [vmem:[%s352 + $0x5d8] sm:$0xff] %v727
                %v729 = vld [vmem:[%s351 + $0x2f00] sm:$0xff]
                %730 = vst [vmem:[%s352 + $0x5e0] sm:$0xff] %v729
                %v731 = vld [vmem:[%s351 + $0x2f40] sm:$0xff]
                %732 = vst [vmem:[%s352 + $0x5e8] sm:$0xff] %v731
                %v733 = vld [vmem:[%s351 + $0x2f80] sm:$0xff]
                %734 = vst [vmem:[%s352 + $0x5f0] sm:$0xff] %v733
                %v735 = vld [vmem:[%s351 + $0x2fc0] sm:$0xff]
                %736 = vst [vmem:[%s352 + $0x5f8] sm:$0xff] %v735
                %v737 = vld [vmem:[%s351 + $0x3000] sm:$0xff]
                %738 = vst [vmem:[%s352 + $0x600] sm:$0xff] %v737
                %v739 = vld [vmem:[%s351 + $0x3040] sm:$0xff]
                %740 = vst [vmem:[%s352 + $0x608] sm:$0xff] %v739
                %v741 = vld [vmem:[%s351 + $0x3080] sm:$0xff]
                %742 = vst [vmem:[%s352 + $0x610] sm:$0xff] %v741
                %v743 = vld [vmem:[%s351 + $0x30c0] sm:$0xff]
                %744 = vst [vmem:[%s352 + $0x618] sm:$0xff] %v743
                %v745 = vld [vmem:[%s351 + $0x3100] sm:$0xff]
                %746 = vst [vmem:[%s352 + $0x620] sm:$0xff] %v745
                %v747 = vld [vmem:[%s351 + $0x3140] sm:$0xff]
                %748 = vst [vmem:[%s352 + $0x628] sm:$0xff] %v747
                %v749 = vld [vmem:[%s351 + $0x3180] sm:$0xff]
                %750 = vst [vmem:[%s352 + $0x630] sm:$0xff] %v749
                %v751 = vld [vmem:[%s351 + $0x31c0] sm:$0xff]
                %752 = vst [vmem:[%s352 + $0x638] sm:$0xff] %v751
              $region69: #{mnist_cnn_forward.5} parent=63 // loop_footer
                %s350 = sadd.s32 1, %s346
              $region70: #{mnist_cnn_forward.5} parent=63 // loop_footer_branch
                %345 = sbr.rel target = $region66
              $region71: #{mnist_cnn_forward.5} parent=63 // loop_exit
                _
            $region64: #{mnist_cnn_forward.5} parent=55 // pred_fallthru
              _
          $region56: #{mnist_cnn_forward.5} parent=51 // pred_fallthru
            _
          %1165 = vnop
        $region52: #{mnist_cnn_forward.5} parent=47 // pred_fallthru
          _
        // Predicated region
        $region87: #{mnist_cnn_forward.5} parent=47 // pred_check
          %p1166 = pneg %p85
        $region88: #{mnist_cnn_forward.5} parent=47 // pred_check_branch
          %1168 = sbr.rel (%p1166) target = $region90
        $region89: #{mnist_cnn_forward.5} parent=47 // pred_region
          %s1169 = smul.u32 2, %s18
          %p1170 = scmp.lt.s32.totalorder %s1169, 15
          %s1171 = scalar_select %p1170, %s1169, 15
          %s1172 = scalar_lea.vmem %s2, %s1171
          %s1173 = smul.u32 2, %s18
        $region90: #{mnist_cnn_forward.5} parent=47 // pred_fallthru
          _
        // Predicated region
        $region91: #{mnist_cnn_forward.5} parent=47 // pred_check
          %p1174 = pneg %p111
        $region92: #{mnist_cnn_forward.5} parent=47 // pred_check_branch
          %1176 = sbr.rel (%p1174) target = $region94
        $region93: #{mnist_cnn_forward.5} parent=47 // pred_region
          %s1177 = smul.u32 32, %s18
          %p1178 = scmp.lt.s32.totalorder %s1177, 255
          %s1179 = scalar_select %p1178, %s1177, 255
          %s1180 = smul.addr %s1179, 8
          %s1181 = smul.addr %s1180, 4
          %s1182 = scalar_lea.vmem %s3, %s1181
          %s1183 = smul.u32 32, %s18
        $region94: #{mnist_cnn_forward.5} parent=47 // pred_fallthru
          _
      $region48: #{mnist_cnn_forward.5} parent=5 // pred_fallthru
        _
      %p1184 = scmp.le.s32.totalorder 1, %s18
      %p1185 = scmp.lt.s32.totalorder %s18, 9
      %p1186 = pnand %p1184, %p1185
      %p1187 = pneg %p1186
      // Predicated region
      $region95: #{mnist_cnn_forward.5} parent=5 // pred_check
        _
      $region96: #{mnist_cnn_forward.5} parent=5 // pred_check_branch
        %1189 = sbr.rel (%p1186) target = $region98
      $region97: #{mnist_cnn_forward.5} parent=5 // pred_region
        %s1190 = ssub.s32 %s18, 1
        %s1191 = sand.u32 %s52, 1
        %s1192 = sand.u32 %s52, 1
        %s1193 = smul.addr %s1192, 1600
        %s1194 = scalar_lea.vmem [#allocation3], %s1193
        // Predicated region
        $region99: #{mnist_cnn_forward.5} parent=97 // pred_check
          %p1195 = pneg %p65
        $region100: #{mnist_cnn_forward.5} parent=97 // pred_check_branch
          %1197 = sbr.rel (%p1195) target = $region102
        $region101: #{mnist_cnn_forward.5} parent=97 // pred_region
          _
        $region102: #{mnist_cnn_forward.5} parent=97 // pred_fallthru
          _
        %p1198 = pneg %p39
        %p1199 = pneg %p36
        %s1200 = sand.u32 %s52, 1
        %s1201 = sand.u32 %s52, 1
        %s1202 = smul.addr %s1201, 1600
        %s1203 = scalar_lea.vmem [#allocation3], %s1202
        %p1204 = pneg %p65
        %p1205 = pneg %p62
        %s1206 = smul.u32 2, %s23
        %p1207 = scmp.lt.s32.totalorder %s1206, 15
        %s1208 = scalar_select %p1207, %s1206, 15
        %s1209 = scalar_lea.vmem %s2, %s1208
        %p1210 = pneg %p91
        %p1211 = pneg %p88
        %s1212 = smul.u32 32, %s23
        %p1213 = scmp.lt.s32.totalorder %s1212, 255
        %s1214 = scalar_select %p1213, %s1212, 255
        %s1215 = smul.addr %s1214, 8
        %s1216 = smul.addr %s1215, 4
        %s1217 = scalar_lea.vmem %s3, %s1216
        %p1218 = pneg %p117
        %p1219 = pneg %p114
        %p1220 = pneg %p138
        %p1221 = pneg %p135
        %p1222 = pneg %p159
        %p1223 = pneg %p156
        %p1224 = pneg %p180
        %p1225 = pneg %p177
        %p1226 = pneg %p201
        %p1227 = pneg %p198
        %p1228 = pneg %p222
        %p1229 = pneg %p219
        %p1230 = pneg %p243
        %p1231 = pneg %p240
        %p1232 = pneg %p264
        %p1233 = pneg %p261
        %p1234 = pneg %p285
        %p1235 = pneg %p282
        %s1236 = smul.u32 2, %s23
        %s1237 = smul.u32 2, %s23
        %p1238 = scmp.lt.s32.totalorder %s1237, 15
        %s1239 = scalar_select %p1238, %s1237, 15
        %s1240 = scalar_lea.vmem %s2, %s1239
        %s1241 = smul.u32 2, %s23
        %s1242 = smul.u32 32, %s23
        %p1243 = scmp.lt.s32.totalorder %s1242, 255
        %s1244 = scalar_select %p1243, %s1242, 255
        %s1245 = smul.addr %s1244, 8
        %s1246 = smul.addr %s1245, 4
        %s1247 = scalar_lea.vmem %s3, %s1246
        %s1248 = smul.u32 32, %s23
        %p1250 = scmp.eq.s32.totalorder %s23, 0
        // Predicated region
        $region103: #{mnist_cnn_forward.5} parent=97 // pred_check
          %p1251 = pneg %p1250
        $region104: #{mnist_cnn_forward.5} parent=97 // pred_check_branch
          %1253 = sbr.rel (%p1251) target = $region106
        $region105: #{mnist_cnn_forward.5} parent=97 // pred_region
          %1254 = vst [vmem:[#allocation2] sm:$0xff] 0.0
          %1255 = vst [vmem:[#allocation2 + $0x8] sm:$0xff] 0.0
        $region106: #{mnist_cnn_forward.5} parent=97 // pred_fallthru
          _
        %v1256 = vld [vmem:[%s0] sm:$0xff]
        %v1257 = vld [vmem:[%s0 + $0x8] sm:$0x1f]
        %v1258 = vld [vmem:[%s1194] sm:$0xff]
        %v1259 = vld [vmem:[%s1194 + $0x8] sm:$0xff]
        %v1260 = vld [vmem:[%s1194 + $0x10] sm:$0xff]
        %v1261 = vld [vmem:[%s1194 + $0x18] sm:$0xff]
        %v1262 = vld [vmem:[%s1194 + $0x20] sm:$0xff]
        %v1263 = vld [vmem:[%s1194 + $0x28] sm:$0xff]
        %v1264 = vld [vmem:[%s1194 + $0x30] sm:$0xff]
        %v1265 = vld [vmem:[%s1194 + $0x38] sm:$0xff]
        %v1266 = vld [vmem:[%s1194 + $0x40] sm:$0xff]
        %v1267 = vld [vmem:[%s1194 + $0x48] sm:$0xff]
        %v1268 = vld [vmem:[%s1194 + $0x50] sm:$0xff]
        %v1269 = vld [vmem:[%s1194 + $0x58] sm:$0xff]
        %v1270 = vld [vmem:[%s1194 + $0x60] sm:$0xff]
        %v1271 = vld [vmem:[%s1194 + $0x68] sm:$0xff]
        %v1272 = vld [vmem:[%s1194 + $0x70] sm:$0xff]
        %v1273 = vld [vmem:[%s1194 + $0x78] sm:$0xff]
        %v1274 = vld [vmem:[%s1194 + $0x80] sm:$0xff]
        %v1275 = vld [vmem:[%s1194 + $0x88] sm:$0xff]
        %v1276 = vld [vmem:[%s1194 + $0x90] sm:$0xff]
        %v1277 = vld [vmem:[%s1194 + $0x98] sm:$0xff]
        %v1278 = vld [vmem:[%s1194 + $0xa0] sm:$0xff]
        %v1279 = vld [vmem:[%s1194 + $0xa8] sm:$0xff]
        %v1280 = vld [vmem:[%s1194 + $0xb0] sm:$0xff]
        %v1281 = vld [vmem:[%s1194 + $0xb8] sm:$0xff]
        %v1282 = vld [vmem:[%s1194 + $0xc0] sm:$0xff]
        %v1283 = vld [vmem:[%s1194 + $0xc8] sm:$0xff]
        %v1284 = vld [vmem:[%s1194 + $0xd0] sm:$0xff]
        %v1285 = vld [vmem:[%s1194 + $0xd8] sm:$0xff]
        %v1286 = vld [vmem:[%s1194 + $0xe0] sm:$0xff]
        %v1287 = vld [vmem:[%s1194 + $0xe8] sm:$0xff]
        %v1288 = vld [vmem:[%s1194 + $0xf0] sm:$0xff]
        %v1289 = vld [vmem:[%s1194 + $0xf8] sm:$0xff]
        %v1290 = vld [vmem:[%s1194 + $0x100] sm:$0xff]
        %v1291 = vld [vmem:[%s1194 + $0x108] sm:$0xff]
        %v1292 = vld [vmem:[%s1194 + $0x110] sm:$0xff]
        %v1293 = vld [vmem:[%s1194 + $0x118] sm:$0xff]
        %v1294 = vld [vmem:[%s1194 + $0x120] sm:$0xff]
        %v1295 = vld [vmem:[%s1194 + $0x128] sm:$0xff]
        %v1296 = vld [vmem:[%s1194 + $0x130] sm:$0xff]
        %v1297 = vld [vmem:[%s1194 + $0x138] sm:$0xff]
        %v1298 = vld [vmem:[%s1194 + $0x140] sm:$0xff]
        %v1299 = vld [vmem:[%s1194 + $0x148] sm:$0xff]
        %v1300 = vld [vmem:[%s1194 + $0x150] sm:$0xff]
        %v1301 = vld [vmem:[%s1194 + $0x158] sm:$0xff]
        %v1302 = vld [vmem:[%s1194 + $0x160] sm:$0xff]
        %v1303 = vld [vmem:[%s1194 + $0x168] sm:$0xff]
        %v1304 = vld [vmem:[%s1194 + $0x170] sm:$0xff]
        %v1305 = vld [vmem:[%s1194 + $0x178] sm:$0xff]
        %v1306 = vld [vmem:[%s1194 + $0x180] sm:$0xff]
        %v1307 = vld [vmem:[%s1194 + $0x188] sm:$0xff]
        %v1308 = vld [vmem:[%s1194 + $0x190] sm:$0xff]
        %v1309 = vld [vmem:[%s1194 + $0x198] sm:$0xff]
        %v1310 = vld [vmem:[%s1194 + $0x1a0] sm:$0xff]
        %v1311 = vld [vmem:[%s1194 + $0x1a8] sm:$0xff]
        %v1312 = vld [vmem:[%s1194 + $0x1b0] sm:$0xff]
        %v1313 = vld [vmem:[%s1194 + $0x1b8] sm:$0xff]
        %v1314 = vld [vmem:[%s1194 + $0x1c0] sm:$0xff]
        %v1315 = vld [vmem:[%s1194 + $0x1c8] sm:$0xff]
        %v1316 = vld [vmem:[%s1194 + $0x1d0] sm:$0xff]
        %v1317 = vld [vmem:[%s1194 + $0x1d8] sm:$0xff]
        %v1318 = vld [vmem:[%s1194 + $0x1e0] sm:$0xff]
        %v1319 = vld [vmem:[%s1194 + $0x1e8] sm:$0xff]
        %v1320 = vld [vmem:[%s1194 + $0x1f0] sm:$0xff]
        %v1321 = vld [vmem:[%s1194 + $0x1f8] sm:$0xff]
        %v1322 = vld [vmem:[%s1194 + $0x200] sm:$0xff]
        %v1323 = vld [vmem:[%s1194 + $0x208] sm:$0xff]
        %v1324 = vld [vmem:[%s1194 + $0x210] sm:$0xff]
        %v1325 = vld [vmem:[%s1194 + $0x218] sm:$0xff]
        %v1326 = vld [vmem:[%s1194 + $0x220] sm:$0xff]
        %v1327 = vld [vmem:[%s1194 + $0x228] sm:$0xff]
        %v1328 = vld [vmem:[%s1194 + $0x230] sm:$0xff]
        %v1329 = vld [vmem:[%s1194 + $0x238] sm:$0xff]
        %v1330 = vld [vmem:[%s1194 + $0x240] sm:$0xff]
        %v1331 = vld [vmem:[%s1194 + $0x248] sm:$0xff]
        %v1332 = vld [vmem:[%s1194 + $0x250] sm:$0xff]
        %v1333 = vld [vmem:[%s1194 + $0x258] sm:$0xff]
        %v1334 = vld [vmem:[%s1194 + $0x260] sm:$0xff]
        %v1335 = vld [vmem:[%s1194 + $0x268] sm:$0xff]
        %v1336 = vld [vmem:[%s1194 + $0x270] sm:$0xff]
        %v1337 = vld [vmem:[%s1194 + $0x278] sm:$0xff]
        %v1338 = vld [vmem:[%s1194 + $0x280] sm:$0xff]
        %v1339 = vld [vmem:[%s1194 + $0x288] sm:$0xff]
        %v1340 = vld [vmem:[%s1194 + $0x290] sm:$0xff]
        %v1341 = vld [vmem:[%s1194 + $0x298] sm:$0xff]
        %v1342 = vld [vmem:[%s1194 + $0x2a0] sm:$0xff]
        %v1343 = vld [vmem:[%s1194 + $0x2a8] sm:$0xff]
        %v1344 = vld [vmem:[%s1194 + $0x2b0] sm:$0xff]
        %v1345 = vld [vmem:[%s1194 + $0x2b8] sm:$0xff]
        %v1346 = vld [vmem:[%s1194 + $0x2c0] sm:$0xff]
        %v1347 = vld [vmem:[%s1194 + $0x2c8] sm:$0xff]
        %v1348 = vld [vmem:[%s1194 + $0x2d0] sm:$0xff]
        %v1349 = vld [vmem:[%s1194 + $0x2d8] sm:$0xff]
        %v1350 = vld [vmem:[%s1194 + $0x2e0] sm:$0xff]
        %v1351 = vld [vmem:[%s1194 + $0x2e8] sm:$0xff]
        %v1352 = vld [vmem:[%s1194 + $0x2f0] sm:$0xff]
        %v1353 = vld [vmem:[%s1194 + $0x2f8] sm:$0xff]
        %v1354 = vld [vmem:[%s1194 + $0x300] sm:$0xff]
        %v1355 = vld [vmem:[%s1194 + $0x308] sm:$0xff]
        %v1356 = vld [vmem:[%s1194 + $0x310] sm:$0xff]
        %v1357 = vld [vmem:[%s1194 + $0x318] sm:$0xff]
        %v1358 = vld [vmem:[%s1194 + $0x320] sm:$0xff]
        %v1359 = vld [vmem:[%s1194 + $0x328] sm:$0xff]
        %v1360 = vld [vmem:[%s1194 + $0x330] sm:$0xff]
        %v1361 = vld [vmem:[%s1194 + $0x338] sm:$0xff]
        %v1362 = vld [vmem:[%s1194 + $0x340] sm:$0xff]
        %v1363 = vld [vmem:[%s1194 + $0x348] sm:$0xff]
        %v1364 = vld [vmem:[%s1194 + $0x350] sm:$0xff]
        %v1365 = vld [vmem:[%s1194 + $0x358] sm:$0xff]
        %v1366 = vld [vmem:[%s1194 + $0x360] sm:$0xff]
        %v1367 = vld [vmem:[%s1194 + $0x368] sm:$0xff]
        %v1368 = vld [vmem:[%s1194 + $0x370] sm:$0xff]
        %v1369 = vld [vmem:[%s1194 + $0x378] sm:$0xff]
        %v1370 = vld [vmem:[%s1194 + $0x380] sm:$0xff]
        %v1371 = vld [vmem:[%s1194 + $0x388] sm:$0xff]
        %v1372 = vld [vmem:[%s1194 + $0x390] sm:$0xff]
        %v1373 = vld [vmem:[%s1194 + $0x398] sm:$0xff]
        %v1374 = vld [vmem:[%s1194 + $0x3a0] sm:$0xff]
        %v1375 = vld [vmem:[%s1194 + $0x3a8] sm:$0xff]
        %v1376 = vld [vmem:[%s1194 + $0x3b0] sm:$0xff]
        %v1377 = vld [vmem:[%s1194 + $0x3b8] sm:$0xff]
        %v1378 = vld [vmem:[%s1194 + $0x3c0] sm:$0xff]
        %v1379 = vld [vmem:[%s1194 + $0x3c8] sm:$0xff]
        %v1380 = vld [vmem:[%s1194 + $0x3d0] sm:$0xff]
        %v1381 = vld [vmem:[%s1194 + $0x3d8] sm:$0xff]
        %v1382 = vld [vmem:[%s1194 + $0x3e0] sm:$0xff]
        %v1383 = vld [vmem:[%s1194 + $0x3e8] sm:$0xff]
        %v1384 = vld [vmem:[%s1194 + $0x3f0] sm:$0xff]
        %v1385 = vld [vmem:[%s1194 + $0x3f8] sm:$0xff]
        %v1386 = vld [vmem:[%s1194 + $0x400] sm:$0xff]
        %v1387 = vld [vmem:[%s1194 + $0x408] sm:$0xff]
        %v1388 = vld [vmem:[%s1194 + $0x410] sm:$0xff]
        %v1389 = vld [vmem:[%s1194 + $0x418] sm:$0xff]
        %v1390 = vld [vmem:[%s1194 + $0x420] sm:$0xff]
        %v1391 = vld [vmem:[%s1194 + $0x428] sm:$0xff]
        %v1392 = vld [vmem:[%s1194 + $0x430] sm:$0xff]
        %v1393 = vld [vmem:[%s1194 + $0x438] sm:$0xff]
        %v1394 = vld [vmem:[%s1194 + $0x440] sm:$0xff]
        %v1395 = vld [vmem:[%s1194 + $0x448] sm:$0xff]
        %v1396 = vld [vmem:[%s1194 + $0x450] sm:$0xff]
        %v1397 = vld [vmem:[%s1194 + $0x458] sm:$0xff]
        %v1398 = vld [vmem:[%s1194 + $0x460] sm:$0xff]
        %v1399 = vld [vmem:[%s1194 + $0x468] sm:$0xff]
        %v1400 = vld [vmem:[%s1194 + $0x470] sm:$0xff]
        %v1401 = vld [vmem:[%s1194 + $0x478] sm:$0xff]
        %v1402 = vld [vmem:[%s1194 + $0x480] sm:$0xff]
        %v1403 = vld [vmem:[%s1194 + $0x488] sm:$0xff]
        %v1404 = vld [vmem:[%s1194 + $0x490] sm:$0xff]
        %v1405 = vld [vmem:[%s1194 + $0x498] sm:$0xff]
        %v1406 = vld [vmem:[%s1194 + $0x4a0] sm:$0xff]
        %v1407 = vld [vmem:[%s1194 + $0x4a8] sm:$0xff]
        %v1408 = vld [vmem:[%s1194 + $0x4b0] sm:$0xff]
        %v1409 = vld [vmem:[%s1194 + $0x4b8] sm:$0xff]
        %v1410 = vld [vmem:[%s1194 + $0x4c0] sm:$0xff]
        %v1411 = vld [vmem:[%s1194 + $0x4c8] sm:$0xff]
        %v1412 = vld [vmem:[%s1194 + $0x4d0] sm:$0xff]
        %v1413 = vld [vmem:[%s1194 + $0x4d8] sm:$0xff]
        %v1414 = vld [vmem:[%s1194 + $0x4e0] sm:$0xff]
        %v1415 = vld [vmem:[%s1194 + $0x4e8] sm:$0xff]
        %v1416 = vld [vmem:[%s1194 + $0x4f0] sm:$0xff]
        %v1417 = vld [vmem:[%s1194 + $0x4f8] sm:$0xff]
        %v1418 = vld [vmem:[%s1194 + $0x500] sm:$0xff]
        %v1419 = vld [vmem:[%s1194 + $0x508] sm:$0xff]
        %v1420 = vld [vmem:[%s1194 + $0x510] sm:$0xff]
        %v1421 = vld [vmem:[%s1194 + $0x518] sm:$0xff]
        %v1422 = vld [vmem:[%s1194 + $0x520] sm:$0xff]
        %v1423 = vld [vmem:[%s1194 + $0x528] sm:$0xff]
        %v1424 = vld [vmem:[%s1194 + $0x530] sm:$0xff]
        %v1425 = vld [vmem:[%s1194 + $0x538] sm:$0xff]
        %v1426 = vld [vmem:[%s1194 + $0x540] sm:$0xff]
        %v1427 = vld [vmem:[%s1194 + $0x548] sm:$0xff]
        %v1428 = vld [vmem:[%s1194 + $0x550] sm:$0xff]
        %v1429 = vld [vmem:[%s1194 + $0x558] sm:$0xff]
        %v1430 = vld [vmem:[%s1194 + $0x560] sm:$0xff]
        %v1431 = vld [vmem:[%s1194 + $0x568] sm:$0xff]
        %v1432 = vld [vmem:[%s1194 + $0x570] sm:$0xff]
        %v1433 = vld [vmem:[%s1194 + $0x578] sm:$0xff]
        %v1434 = vld [vmem:[%s1194 + $0x580] sm:$0xff]
        %v1435 = vld [vmem:[%s1194 + $0x588] sm:$0xff]
        %v1436 = vld [vmem:[%s1194 + $0x590] sm:$0xff]
        %v1437 = vld [vmem:[%s1194 + $0x598] sm:$0xff]
        %v1438 = vld [vmem:[%s1194 + $0x5a0] sm:$0xff]
        %v1439 = vld [vmem:[%s1194 + $0x5a8] sm:$0xff]
        %v1440 = vld [vmem:[%s1194 + $0x5b0] sm:$0xff]
        %v1441 = vld [vmem:[%s1194 + $0x5b8] sm:$0xff]
        %v1442 = vld [vmem:[%s1194 + $0x5c0] sm:$0xff]
        %v1443 = vld [vmem:[%s1194 + $0x5c8] sm:$0xff]
        %v1444 = vld [vmem:[%s1194 + $0x5d0] sm:$0xff]
        %v1445 = vld [vmem:[%s1194 + $0x5d8] sm:$0xff]
        %v1446 = vld [vmem:[%s1194 + $0x5e0] sm:$0xff]
        %v1447 = vld [vmem:[%s1194 + $0x5e8] sm:$0xff]
        %v1448 = vld [vmem:[%s1194 + $0x5f0] sm:$0xff]
        %v1449 = vld [vmem:[%s1194 + $0x5f8] sm:$0xff]
        %v1450 = vld [vmem:[%s1194 + $0x600] sm:$0xff]
        %v1451 = vld [vmem:[%s1194 + $0x608] sm:$0xff]
        %v1452 = vld [vmem:[%s1194 + $0x610] sm:$0xff]
        %v1453 = vld [vmem:[%s1194 + $0x618] sm:$0xff]
        %v1454 = vld [vmem:[%s1194 + $0x620] sm:$0xff]
        %v1455 = vld [vmem:[%s1194 + $0x628] sm:$0xff]
        %v1456 = vld [vmem:[%s1194 + $0x630] sm:$0xff]
        %v1457 = vld [vmem:[%s1194 + $0x638] sm:$0xff]
        %v1458 = vld [vmem:[%s1240] sm:$0x3]
        %v1460 = vlaneseq
        %v1461 = vshrl.u32 %v1460, 7
        %v1462 = vsub.s32 0, %v1461
        %v1463 = vrot.slane %v1458, %v1462
        %v1464 = vlaneseq
        %v1465 = vshrl.u32 %v1464, 7
        %v1466 = vsub.s32 1, %v1465
        %v1467 = vrot.slane %v1458, %v1466
        %v1472 = vcombine.high %v1256, %v1256
        %v1474 = vunpack.c.l.s4 1966171168
        %v1475 = vunpack.c.0.s8 %v1474
        %v1476 = vlaneseq
        %v1477 = vshrl.u32 %v1476, 7
        %v1478 = vsub.s32 %v1475, %v1477
        %v1479 = vrot.slane %v1256, %v1478
        %v1481 = vunpack.c.l.s4 1966171168
        %v1482 = vunpack.c.0.s8 %v1481
        %v1483 = vlaneseq
        %v1484 = vshrl.u32 %v1483, 7
        %v1485 = vsub.s32 %v1482, %v1484
        %v1486 = vrot.slane %v1472, %v1485
        %v1487 = vcombine.high %v1479, %v1479
        %v1488 = vcombine.high %v1486, %v1486
        %v1490 = vunpack.c.l.s4 1966171168
        %v1491 = vunpack.c.0.s8 %v1490
        %v1492 = vlaneseq
        %v1493 = vshrl.u32 %v1492, 7
        %v1494 = vsub.s32 %v1491, %v1493
        %v1495 = vrot.slane %v1479, %v1494
        %v1497 = vunpack.c.l.s4 1966171168
        %v1498 = vunpack.c.0.s8 %v1497
        %v1499 = vlaneseq
        %v1500 = vshrl.u32 %v1499, 7
        %v1501 = vsub.s32 %v1498, %v1500
        %v1502 = vrot.slane %v1486, %v1501
        %v1504 = vunpack.c.l.s4 1966171168
        %v1505 = vunpack.c.0.s8 %v1504
        %v1506 = vlaneseq
        %v1507 = vshrl.u32 %v1506, 7
        %v1508 = vsub.s32 %v1505, %v1507
        %v1509 = vrot.slane %v1487, %v1508
        %v1511 = vunpack.c.l.s4 1966171168
        %v1512 = vunpack.c.0.s8 %v1511
        %v1513 = vlaneseq
        %v1514 = vshrl.u32 %v1513, 7
        %v1515 = vsub.s32 %v1512, %v1514
        %v1516 = vrot.slane %v1488, %v1515
        %v1517 = vcombine.high %v1495, %v1495
        %v1518 = vcombine.high %v1502, %v1502
        %v1519 = vcombine.high %v1509, %v1509
        %v1520 = vcombine.high %v1516, %v1516
        %v1521 = vcombine.high %v1257, %v1257
        %v1523 = vunpack.c.l.s4 1966171168
        %v1524 = vunpack.c.0.s8 %v1523
        %v1525 = vlaneseq
        %v1526 = vshrl.u32 %v1525, 7
        %v1527 = vsub.s32 %v1524, %v1526
        %v1528 = vrot.slane %v1257, %v1527
        %v1530 = vunpack.c.l.s4 1966171168
        %v1531 = vunpack.c.0.s8 %v1530
        %v1532 = vlaneseq
        %v1533 = vshrl.u32 %v1532, 7
        %v1534 = vsub.s32 %v1531, %v1533
        %v1535 = vrot.slane %v1521, %v1534
        %v1536 = vcombine.high %v1528, %v1528
        %v1538 = vunpack.c.l.s4 1966171168
        %v1539 = vunpack.c.0.s8 %v1538
        %v1540 = vlaneseq
        %v1541 = vshrl.u32 %v1540, 7
        %v1542 = vsub.s32 %v1539, %v1541
        %v1543 = vrot.slane %v1528, %v1542
        %v1545 = vunpack.c.l.s4 1966171168
        %v1546 = vunpack.c.0.s8 %v1545
        %v1547 = vlaneseq
        %v1548 = vshrl.u32 %v1547, 7
        %v1549 = vsub.s32 %v1546, %v1548
        %v1550 = vrot.slane %v1535, %v1549
        %v1552 = vunpack.c.l.s4 1966171168
        %v1553 = vunpack.c.0.s8 %v1552
        %v1554 = vlaneseq
        %v1555 = vshrl.u32 %v1554, 7
        %v1556 = vsub.s32 %v1553, %v1555
        %v1557 = vrot.slane %v1536, %v1556
        %v1558 = vcombine.high %v1543, %v1543
        %v1559 = vcombine.high %v1557, %v1557
        %v1772 = vunpack.c.l.b16 %v1258
        %v1773 = vunpack.c.h.b16 %v1258
        %v1774 = vunpack.c.l.b16 %v1259
        %v1775 = vunpack.c.h.b16 %v1259
        %v1776 = vunpack.c.l.b16 %v1260
        %v1777 = vunpack.c.h.b16 %v1260
        %v1778 = vunpack.c.l.b16 %v1261
        %v1779 = vunpack.c.h.b16 %v1261
        %v1780 = vunpack.c.l.b16 %v1262
        %v1781 = vunpack.c.h.b16 %v1262
        %v1782 = vunpack.c.l.b16 %v1263
        %v1783 = vunpack.c.h.b16 %v1263
        %v1784 = vunpack.c.l.b16 %v1264
        %v1785 = vunpack.c.h.b16 %v1264
        %v1786 = vunpack.c.l.b16 %v1265
        %v1787 = vunpack.c.h.b16 %v1265
        %v1788 = vunpack.c.l.b16 %v1266
        %v1789 = vunpack.c.h.b16 %v1266
        %v1790 = vunpack.c.l.b16 %v1267
        %v1791 = vunpack.c.h.b16 %v1267
        %v1792 = vunpack.c.l.b16 %v1268
        %v1793 = vunpack.c.h.b16 %v1268
        %v1794 = vunpack.c.l.b16 %v1269
        %v1795 = vunpack.c.h.b16 %v1269
        %v1796 = vunpack.c.l.b16 %v1270
        %v1797 = vunpack.c.h.b16 %v1270
        %v1798 = vunpack.c.l.b16 %v1271
        %v1799 = vunpack.c.h.b16 %v1271
        %v1800 = vunpack.c.l.b16 %v1272
        %v1801 = vunpack.c.h.b16 %v1272
        %v1802 = vunpack.c.l.b16 %v1273
        %v1803 = vunpack.c.h.b16 %v1273
        %v1804 = vunpack.c.l.b16 %v1274
        %v1805 = vunpack.c.h.b16 %v1274
        %v1806 = vunpack.c.l.b16 %v1275
        %v1807 = vunpack.c.h.b16 %v1275
        %v1808 = vunpack.c.l.b16 %v1276
        %v1809 = vunpack.c.h.b16 %v1276
        %v1810 = vunpack.c.l.b16 %v1277
        %v1811 = vunpack.c.h.b16 %v1277
        %v1812 = vunpack.c.l.b16 %v1278
        %v1813 = vunpack.c.h.b16 %v1278
        %v1814 = vunpack.c.l.b16 %v1279
        %v1815 = vunpack.c.h.b16 %v1279
        %v1816 = vunpack.c.l.b16 %v1280
        %v1817 = vunpack.c.h.b16 %v1280
        %v1818 = vunpack.c.l.b16 %v1281
        %v1819 = vunpack.c.h.b16 %v1281
        %v1820 = vunpack.c.l.b16 %v1282
        %v1821 = vunpack.c.h.b16 %v1282
        %v1822 = vunpack.c.l.b16 %v1283
        %v1823 = vunpack.c.h.b16 %v1283
        %v1824 = vunpack.c.l.b16 %v1284
        %v1825 = vunpack.c.h.b16 %v1284
        %v1826 = vunpack.c.l.b16 %v1285
        %v1827 = vunpack.c.h.b16 %v1285
        %v1828 = vunpack.c.l.b16 %v1286
        %v1829 = vunpack.c.h.b16 %v1286
        %v1830 = vunpack.c.l.b16 %v1287
        %v1831 = vunpack.c.h.b16 %v1287
        %v1832 = vunpack.c.l.b16 %v1288
        %v1833 = vunpack.c.h.b16 %v1288
        %v1834 = vunpack.c.l.b16 %v1289
        %v1835 = vunpack.c.h.b16 %v1289
        %v1836 = vunpack.c.l.b16 %v1290
        %v1837 = vunpack.c.h.b16 %v1290
        %v1838 = vunpack.c.l.b16 %v1291
        %v1839 = vunpack.c.h.b16 %v1291
        %v1840 = vunpack.c.l.b16 %v1292
        %v1841 = vunpack.c.h.b16 %v1292
        %v1842 = vunpack.c.l.b16 %v1293
        %v1843 = vunpack.c.h.b16 %v1293
        %v1844 = vunpack.c.l.b16 %v1294
        %v1845 = vunpack.c.h.b16 %v1294
        %v1846 = vunpack.c.l.b16 %v1295
        %v1847 = vunpack.c.h.b16 %v1295
        %v1848 = vunpack.c.l.b16 %v1296
        %v1849 = vunpack.c.h.b16 %v1296
        %v1850 = vunpack.c.l.b16 %v1297
        %v1851 = vunpack.c.h.b16 %v1297
        %v1852 = vunpack.c.l.b16 %v1298
        %v1853 = vunpack.c.h.b16 %v1298
        %v1854 = vunpack.c.l.b16 %v1299
        %v1855 = vunpack.c.h.b16 %v1299
        %v1856 = vunpack.c.l.b16 %v1300
        %v1857 = vunpack.c.h.b16 %v1300
        %v1858 = vunpack.c.l.b16 %v1301
        %v1859 = vunpack.c.h.b16 %v1301
        %v1860 = vunpack.c.l.b16 %v1302
        %v1861 = vunpack.c.h.b16 %v1302
        %v1862 = vunpack.c.l.b16 %v1303
        %v1863 = vunpack.c.h.b16 %v1303
        %v1864 = vunpack.c.l.b16 %v1304
        %v1865 = vunpack.c.h.b16 %v1304
        %v1866 = vunpack.c.l.b16 %v1305
        %v1867 = vunpack.c.h.b16 %v1305
        %v1868 = vunpack.c.l.b16 %v1306
        %v1869 = vunpack.c.h.b16 %v1306
        %v1870 = vunpack.c.l.b16 %v1307
        %v1871 = vunpack.c.h.b16 %v1307
        %v1872 = vunpack.c.l.b16 %v1308
        %v1873 = vunpack.c.h.b16 %v1308
        %v1874 = vunpack.c.l.b16 %v1309
        %v1875 = vunpack.c.h.b16 %v1309
        %v1876 = vunpack.c.l.b16 %v1310
        %v1877 = vunpack.c.h.b16 %v1310
        %v1878 = vunpack.c.l.b16 %v1311
        %v1879 = vunpack.c.h.b16 %v1311
        %v1880 = vunpack.c.l.b16 %v1312
        %v1881 = vunpack.c.h.b16 %v1312
        %v1882 = vunpack.c.l.b16 %v1313
        %v1883 = vunpack.c.h.b16 %v1313
        %v1884 = vunpack.c.l.b16 %v1314
        %v1885 = vunpack.c.h.b16 %v1314
        %v1886 = vunpack.c.l.b16 %v1315
        %v1887 = vunpack.c.h.b16 %v1315
        %v1888 = vunpack.c.l.b16 %v1316
        %v1889 = vunpack.c.h.b16 %v1316
        %v1890 = vunpack.c.l.b16 %v1317
        %v1891 = vunpack.c.h.b16 %v1317
        %v1892 = vunpack.c.l.b16 %v1318
        %v1893 = vunpack.c.h.b16 %v1318
        %v1894 = vunpack.c.l.b16 %v1319
        %v1895 = vunpack.c.h.b16 %v1319
        %v1896 = vunpack.c.l.b16 %v1320
        %v1897 = vunpack.c.h.b16 %v1320
        %v1898 = vunpack.c.l.b16 %v1321
        %v1899 = vunpack.c.h.b16 %v1321
        %v1900 = vunpack.c.l.b16 %v1322
        %v1901 = vunpack.c.h.b16 %v1322
        %v1902 = vunpack.c.l.b16 %v1323
        %v1903 = vunpack.c.h.b16 %v1323
        %v1904 = vunpack.c.l.b16 %v1324
        %v1905 = vunpack.c.h.b16 %v1324
        %v1906 = vunpack.c.l.b16 %v1325
        %v1907 = vunpack.c.h.b16 %v1325
        %v1908 = vunpack.c.l.b16 %v1326
        %v1909 = vunpack.c.h.b16 %v1326
        %v1910 = vunpack.c.l.b16 %v1327
        %v1911 = vunpack.c.h.b16 %v1327
        %v1912 = vunpack.c.l.b16 %v1328
        %v1913 = vunpack.c.h.b16 %v1328
        %v1914 = vunpack.c.l.b16 %v1329
        %v1915 = vunpack.c.h.b16 %v1329
        %v1916 = vunpack.c.l.b16 %v1330
        %v1917 = vunpack.c.h.b16 %v1330
        %v1918 = vunpack.c.l.b16 %v1331
        %v1919 = vunpack.c.h.b16 %v1331
        %v1920 = vunpack.c.l.b16 %v1332
        %v1921 = vunpack.c.h.b16 %v1332
        %v1922 = vunpack.c.l.b16 %v1333
        %v1923 = vunpack.c.h.b16 %v1333
        %v1924 = vunpack.c.l.b16 %v1334
        %v1925 = vunpack.c.h.b16 %v1334
        %v1926 = vunpack.c.l.b16 %v1335
        %v1927 = vunpack.c.h.b16 %v1335
        %v1928 = vunpack.c.l.b16 %v1336
        %v1929 = vunpack.c.h.b16 %v1336
        %v1930 = vunpack.c.l.b16 %v1337
        %v1931 = vunpack.c.h.b16 %v1337
        %v1932 = vunpack.c.l.b16 %v1338
        %v1933 = vunpack.c.h.b16 %v1338
        %v1934 = vunpack.c.l.b16 %v1339
        %v1935 = vunpack.c.h.b16 %v1339
        %v1936 = vunpack.c.l.b16 %v1340
        %v1937 = vunpack.c.h.b16 %v1340
        %v1938 = vunpack.c.l.b16 %v1341
        %v1939 = vunpack.c.h.b16 %v1341
        %v1940 = vunpack.c.l.b16 %v1342
        %v1941 = vunpack.c.h.b16 %v1342
        %v1942 = vunpack.c.l.b16 %v1343
        %v1943 = vunpack.c.h.b16 %v1343
        %v1944 = vunpack.c.l.b16 %v1344
        %v1945 = vunpack.c.h.b16 %v1344
        %v1946 = vunpack.c.l.b16 %v1345
        %v1947 = vunpack.c.h.b16 %v1345
        %v1948 = vunpack.c.l.b16 %v1346
        %v1949 = vunpack.c.h.b16 %v1346
        %v1950 = vunpack.c.l.b16 %v1347
        %v1951 = vunpack.c.h.b16 %v1347
        %v1952 = vunpack.c.l.b16 %v1348
        %v1953 = vunpack.c.h.b16 %v1348
        %v1954 = vunpack.c.l.b16 %v1349
        %v1955 = vunpack.c.h.b16 %v1349
        %v1956 = vunpack.c.l.b16 %v1350
        %v1957 = vunpack.c.h.b16 %v1350
        %v1958 = vunpack.c.l.b16 %v1351
        %v1959 = vunpack.c.h.b16 %v1351
        %v1960 = vunpack.c.l.b16 %v1352
        %v1961 = vunpack.c.h.b16 %v1352
        %v1962 = vunpack.c.l.b16 %v1353
        %v1963 = vunpack.c.h.b16 %v1353
        %v1964 = vunpack.c.l.b16 %v1354
        %v1965 = vunpack.c.h.b16 %v1354
        %v1966 = vunpack.c.l.b16 %v1355
        %v1967 = vunpack.c.h.b16 %v1355
        %v1968 = vunpack.c.l.b16 %v1356
        %v1969 = vunpack.c.h.b16 %v1356
        %v1970 = vunpack.c.l.b16 %v1357
        %v1971 = vunpack.c.h.b16 %v1357
        %v1972 = vunpack.c.l.b16 %v1358
        %v1973 = vunpack.c.h.b16 %v1358
        %v1974 = vunpack.c.l.b16 %v1359
        %v1975 = vunpack.c.h.b16 %v1359
        %v1976 = vunpack.c.l.b16 %v1360
        %v1977 = vunpack.c.h.b16 %v1360
        %v1978 = vunpack.c.l.b16 %v1361
        %v1979 = vunpack.c.h.b16 %v1361
        %v1980 = vunpack.c.l.b16 %v1362
        %v1981 = vunpack.c.h.b16 %v1362
        %v1982 = vunpack.c.l.b16 %v1363
        %v1983 = vunpack.c.h.b16 %v1363
        %v1984 = vunpack.c.l.b16 %v1364
        %v1985 = vunpack.c.h.b16 %v1364
        %v1986 = vunpack.c.l.b16 %v1365
        %v1987 = vunpack.c.h.b16 %v1365
        %v1988 = vunpack.c.l.b16 %v1366
        %v1989 = vunpack.c.h.b16 %v1366
        %v1990 = vunpack.c.l.b16 %v1367
        %v1991 = vunpack.c.h.b16 %v1367
        %v1992 = vunpack.c.l.b16 %v1368
        %v1993 = vunpack.c.h.b16 %v1368
        %v1994 = vunpack.c.l.b16 %v1369
        %v1995 = vunpack.c.h.b16 %v1369
        %v1996 = vunpack.c.l.b16 %v1370
        %v1997 = vunpack.c.h.b16 %v1370
        %v1998 = vunpack.c.l.b16 %v1371
        %v1999 = vunpack.c.h.b16 %v1371
        %v2000 = vunpack.c.l.b16 %v1372
        %v2001 = vunpack.c.h.b16 %v1372
        %v2002 = vunpack.c.l.b16 %v1373
        %v2003 = vunpack.c.h.b16 %v1373
        %v2004 = vunpack.c.l.b16 %v1374
        %v2005 = vunpack.c.h.b16 %v1374
        %v2006 = vunpack.c.l.b16 %v1375
        %v2007 = vunpack.c.h.b16 %v1375
        %v2008 = vunpack.c.l.b16 %v1376
        %v2009 = vunpack.c.h.b16 %v1376
        %v2010 = vunpack.c.l.b16 %v1377
        %v2011 = vunpack.c.h.b16 %v1377
        %v2012 = vunpack.c.l.b16 %v1378
        %v2013 = vunpack.c.h.b16 %v1378
        %v2014 = vunpack.c.l.b16 %v1379
        %v2015 = vunpack.c.h.b16 %v1379
        %v2016 = vunpack.c.l.b16 %v1380
        %v2017 = vunpack.c.h.b16 %v1380
        %v2018 = vunpack.c.l.b16 %v1381
        %v2019 = vunpack.c.h.b16 %v1381
        %v2020 = vunpack.c.l.b16 %v1382
        %v2021 = vunpack.c.h.b16 %v1382
        %v2022 = vunpack.c.l.b16 %v1383
        %v2023 = vunpack.c.h.b16 %v1383
        %v2024 = vunpack.c.l.b16 %v1384
        %v2025 = vunpack.c.h.b16 %v1384
        %v2026 = vunpack.c.l.b16 %v1385
        %v2027 = vunpack.c.h.b16 %v1385
        %v2028 = vunpack.c.l.b16 %v1386
        %v2029 = vunpack.c.h.b16 %v1386
        %v2030 = vunpack.c.l.b16 %v1387
        %v2031 = vunpack.c.h.b16 %v1387
        %v2032 = vunpack.c.l.b16 %v1388
        %v2033 = vunpack.c.h.b16 %v1388
        %v2034 = vunpack.c.l.b16 %v1389
        %v2035 = vunpack.c.h.b16 %v1389
        %v2036 = vunpack.c.l.b16 %v1390
        %v2037 = vunpack.c.h.b16 %v1390
        %v2038 = vunpack.c.l.b16 %v1391
        %v2039 = vunpack.c.h.b16 %v1391
        %v2040 = vunpack.c.l.b16 %v1392
        %v2041 = vunpack.c.h.b16 %v1392
        %v2042 = vunpack.c.l.b16 %v1393
        %v2043 = vunpack.c.h.b16 %v1393
        %v2044 = vunpack.c.l.b16 %v1394
        %v2045 = vunpack.c.h.b16 %v1394
        %v2046 = vunpack.c.l.b16 %v1395
        %v2047 = vunpack.c.h.b16 %v1395
        %v2048 = vunpack.c.l.b16 %v1396
        %v2049 = vunpack.c.h.b16 %v1396
        %v2050 = vunpack.c.l.b16 %v1397
        %v2051 = vunpack.c.h.b16 %v1397
        %v2052 = vunpack.c.l.b16 %v1398
        %v2053 = vunpack.c.h.b16 %v1398
        %v2054 = vunpack.c.l.b16 %v1399
        %v2055 = vunpack.c.h.b16 %v1399
        %v2056 = vunpack.c.l.b16 %v1400
        %v2057 = vunpack.c.h.b16 %v1400
        %v2058 = vunpack.c.l.b16 %v1401
        %v2059 = vunpack.c.h.b16 %v1401
        %v2060 = vunpack.c.l.b16 %v1402
        %v2061 = vunpack.c.h.b16 %v1402
        %v2062 = vunpack.c.l.b16 %v1403
        %v2063 = vunpack.c.h.b16 %v1403
        %v2064 = vunpack.c.l.b16 %v1404
        %v2065 = vunpack.c.h.b16 %v1404
        %v2066 = vunpack.c.l.b16 %v1405
        %v2067 = vunpack.c.h.b16 %v1405
        %v2068 = vunpack.c.l.b16 %v1406
        %v2069 = vunpack.c.h.b16 %v1406
        %v2070 = vunpack.c.l.b16 %v1407
        %v2071 = vunpack.c.h.b16 %v1407
        %v2072 = vunpack.c.l.b16 %v1408
        %v2073 = vunpack.c.h.b16 %v1408
        %v2074 = vunpack.c.l.b16 %v1409
        %v2075 = vunpack.c.h.b16 %v1409
        %v2076 = vunpack.c.l.b16 %v1410
        %v2077 = vunpack.c.h.b16 %v1410
        %v2078 = vunpack.c.l.b16 %v1411
        %v2079 = vunpack.c.h.b16 %v1411
        %v2080 = vunpack.c.l.b16 %v1412
        %v2081 = vunpack.c.h.b16 %v1412
        %v2082 = vunpack.c.l.b16 %v1413
        %v2083 = vunpack.c.h.b16 %v1413
        %v2084 = vunpack.c.l.b16 %v1414
        %v2085 = vunpack.c.h.b16 %v1414
        %v2086 = vunpack.c.l.b16 %v1415
        %v2087 = vunpack.c.h.b16 %v1415
        %v2088 = vunpack.c.l.b16 %v1416
        %v2089 = vunpack.c.h.b16 %v1416
        %v2090 = vunpack.c.l.b16 %v1417
        %v2091 = vunpack.c.h.b16 %v1417
        %v2092 = vunpack.c.l.b16 %v1418
        %v2093 = vunpack.c.h.b16 %v1418
        %v2094 = vunpack.c.l.b16 %v1419
        %v2095 = vunpack.c.h.b16 %v1419
        %v2096 = vunpack.c.l.b16 %v1420
        %v2097 = vunpack.c.h.b16 %v1420
        %v2098 = vunpack.c.l.b16 %v1421
        %v2099 = vunpack.c.h.b16 %v1421
        %v2100 = vunpack.c.l.b16 %v1422
        %v2101 = vunpack.c.h.b16 %v1422
        %v2102 = vunpack.c.l.b16 %v1423
        %v2103 = vunpack.c.h.b16 %v1423
        %v2104 = vunpack.c.l.b16 %v1424
        %v2105 = vunpack.c.h.b16 %v1424
        %v2106 = vunpack.c.l.b16 %v1425
        %v2107 = vunpack.c.h.b16 %v1425
        %v2108 = vunpack.c.l.b16 %v1426
        %v2109 = vunpack.c.h.b16 %v1426
        %v2110 = vunpack.c.l.b16 %v1427
        %v2111 = vunpack.c.h.b16 %v1427
        %v2112 = vunpack.c.l.b16 %v1428
        %v2113 = vunpack.c.h.b16 %v1428
        %v2114 = vunpack.c.l.b16 %v1429
        %v2115 = vunpack.c.h.b16 %v1429
        %v2116 = vunpack.c.l.b16 %v1430
        %v2117 = vunpack.c.h.b16 %v1430
        %v2118 = vunpack.c.l.b16 %v1431
        %v2119 = vunpack.c.h.b16 %v1431
        %v2120 = vunpack.c.l.b16 %v1432
        %v2121 = vunpack.c.h.b16 %v1432
        %v2122 = vunpack.c.l.b16 %v1433
        %v2123 = vunpack.c.h.b16 %v1433
        %v2124 = vunpack.c.l.b16 %v1434
        %v2125 = vunpack.c.h.b16 %v1434
        %v2126 = vunpack.c.l.b16 %v1435
        %v2127 = vunpack.c.h.b16 %v1435
        %v2128 = vunpack.c.l.b16 %v1436
        %v2129 = vunpack.c.h.b16 %v1436
        %v2130 = vunpack.c.l.b16 %v1437
        %v2131 = vunpack.c.h.b16 %v1437
        %v2132 = vunpack.c.l.b16 %v1438
        %v2133 = vunpack.c.h.b16 %v1438
        %v2134 = vunpack.c.l.b16 %v1439
        %v2135 = vunpack.c.h.b16 %v1439
        %v2136 = vunpack.c.l.b16 %v1440
        %v2137 = vunpack.c.h.b16 %v1440
        %v2138 = vunpack.c.l.b16 %v1441
        %v2139 = vunpack.c.h.b16 %v1441
        %v2140 = vunpack.c.l.b16 %v1442
        %v2141 = vunpack.c.h.b16 %v1442
        %v2142 = vunpack.c.l.b16 %v1443
        %v2143 = vunpack.c.h.b16 %v1443
        %v2144 = vunpack.c.l.b16 %v1444
        %v2145 = vunpack.c.h.b16 %v1444
        %v2146 = vunpack.c.l.b16 %v1445
        %v2147 = vunpack.c.h.b16 %v1445
        %v2148 = vunpack.c.l.b16 %v1446
        %v2149 = vunpack.c.h.b16 %v1446
        %v2150 = vunpack.c.l.b16 %v1447
        %v2151 = vunpack.c.h.b16 %v1447
        %v2152 = vunpack.c.l.b16 %v1448
        %v2153 = vunpack.c.h.b16 %v1448
        %v2154 = vunpack.c.l.b16 %v1449
        %v2155 = vunpack.c.h.b16 %v1449
        %v2156 = vunpack.c.l.b16 %v1450
        %v2157 = vunpack.c.h.b16 %v1450
        %v2158 = vunpack.c.l.b16 %v1451
        %v2159 = vunpack.c.h.b16 %v1451
        %v2160 = vunpack.c.l.b16 %v1452
        %v2161 = vunpack.c.h.b16 %v1452
        %v2162 = vunpack.c.l.b16 %v1453
        %v2163 = vunpack.c.h.b16 %v1453
        %v2164 = vunpack.c.l.b16 %v1454
        %v2165 = vunpack.c.h.b16 %v1454
        %v2166 = vunpack.c.l.b16 %v1455
        %v2167 = vunpack.c.h.b16 %v1455
        %v2168 = vunpack.c.l.b16 %v1456
        %v2169 = vunpack.c.h.b16 %v1456
        %v2170 = vunpack.c.l.b16 %v1457
        %v2171 = vunpack.c.h.b16 %v1457
        %v2172 = vpack.c.b16 %v1774, %v1772
        %v2173 = vpack.c.b16 %v1775, %v1773
        %v2174 = vpack.c.b16 %v1778, %v1776
        %v2175 = vpack.c.b16 %v1779, %v1777
        %v2176 = vpack.c.b16 %v1782, %v1780
        %v2177 = vpack.c.b16 %v1783, %v1781
        %v2178 = vpack.c.b16 %v1786, %v1784
        %v2179 = vpack.c.b16 %v1787, %v1785
        %v2180 = vpack.c.b16 %v1790, %v1788
        %v2181 = vpack.c.b16 %v1791, %v1789
        %v2182 = vpack.c.b16 %v1794, %v1792
        %v2183 = vpack.c.b16 %v1795, %v1793
        %v2184 = vpack.c.b16 %v1798, %v1796
        %v2185 = vpack.c.b16 %v1799, %v1797
        %v2186 = vpack.c.b16 %v1802, %v1800
        %v2187 = vpack.c.b16 %v1803, %v1801
        %v2188 = vpack.c.b16 %v1806, %v1804
        %v2189 = vpack.c.b16 %v1807, %v1805
        %v2190 = vpack.c.b16 %v1810, %v1808
        %v2191 = vpack.c.b16 %v1811, %v1809
        %v2192 = vpack.c.b16 %v1814, %v1812
        %v2193 = vpack.c.b16 %v1815, %v1813
        %v2194 = vpack.c.b16 %v1818, %v1816
        %v2195 = vpack.c.b16 %v1819, %v1817
        %v2196 = vpack.c.b16 %v1822, %v1820
        %v2197 = vpack.c.b16 %v1823, %v1821
        %v2198 = vpack.c.b16 %v1826, %v1824
        %v2199 = vpack.c.b16 %v1827, %v1825
        %v2200 = vpack.c.b16 %v1830, %v1828
        %v2201 = vpack.c.b16 %v1831, %v1829
        %v2202 = vpack.c.b16 %v1834, %v1832
        %v2203 = vpack.c.b16 %v1835, %v1833
        %v2204 = vpack.c.b16 %v1838, %v1836
        %v2205 = vpack.c.b16 %v1839, %v1837
        %v2206 = vpack.c.b16 %v1842, %v1840
        %v2207 = vpack.c.b16 %v1843, %v1841
        %v2208 = vpack.c.b16 %v1846, %v1844
        %v2209 = vpack.c.b16 %v1847, %v1845
        %v2210 = vpack.c.b16 %v1850, %v1848
        %v2211 = vpack.c.b16 %v1851, %v1849
        %v2212 = vpack.c.b16 %v1854, %v1852
        %v2213 = vpack.c.b16 %v1855, %v1853
        %v2214 = vpack.c.b16 %v1858, %v1856
        %v2215 = vpack.c.b16 %v1859, %v1857
        %v2216 = vpack.c.b16 %v1862, %v1860
        %v2217 = vpack.c.b16 %v1863, %v1861
        %v2218 = vpack.c.b16 %v1866, %v1864
        %v2219 = vpack.c.b16 %v1867, %v1865
        %v2220 = vpack.c.b16 %v1870, %v1868
        %v2221 = vpack.c.b16 %v1871, %v1869
        %v2222 = vpack.c.b16 %v1874, %v1872
        %v2223 = vpack.c.b16 %v1875, %v1873
        %v2224 = vpack.c.b16 %v1878, %v1876
        %v2225 = vpack.c.b16 %v1879, %v1877
        %v2226 = vpack.c.b16 %v1882, %v1880
        %v2227 = vpack.c.b16 %v1883, %v1881
        %v2228 = vpack.c.b16 %v1886, %v1884
        %v2229 = vpack.c.b16 %v1887, %v1885
        %v2230 = vpack.c.b16 %v1890, %v1888
        %v2231 = vpack.c.b16 %v1891, %v1889
        %v2232 = vpack.c.b16 %v1894, %v1892
        %v2233 = vpack.c.b16 %v1895, %v1893
        %v2234 = vpack.c.b16 %v1898, %v1896
        %v2235 = vpack.c.b16 %v1899, %v1897
        %v2236 = vpack.c.b16 %v1902, %v1900
        %v2237 = vpack.c.b16 %v1903, %v1901
        %v2238 = vpack.c.b16 %v1906, %v1904
        %v2239 = vpack.c.b16 %v1907, %v1905
        %v2240 = vpack.c.b16 %v1910, %v1908
        %v2241 = vpack.c.b16 %v1911, %v1909
        %v2242 = vpack.c.b16 %v1914, %v1912
        %v2243 = vpack.c.b16 %v1915, %v1913
        %v2244 = vpack.c.b16 %v1918, %v1916
        %v2245 = vpack.c.b16 %v1919, %v1917
        %v2246 = vpack.c.b16 %v1922, %v1920
        %v2247 = vpack.c.b16 %v1923, %v1921
        %v2248 = vpack.c.b16 %v1926, %v1924
        %v2249 = vpack.c.b16 %v1927, %v1925
        %v2250 = vpack.c.b16 %v1930, %v1928
        %v2251 = vpack.c.b16 %v1931, %v1929
        %v2252 = vpack.c.b16 %v1934, %v1932
        %v2253 = vpack.c.b16 %v1935, %v1933
        %v2254 = vpack.c.b16 %v1938, %v1936
        %v2255 = vpack.c.b16 %v1939, %v1937
        %v2256 = vpack.c.b16 %v1942, %v1940
        %v2257 = vpack.c.b16 %v1943, %v1941
        %v2258 = vpack.c.b16 %v1946, %v1944
        %v2259 = vpack.c.b16 %v1947, %v1945
        %v2260 = vpack.c.b16 %v1950, %v1948
        %v2261 = vpack.c.b16 %v1951, %v1949
        %v2262 = vpack.c.b16 %v1954, %v1952
        %v2263 = vpack.c.b16 %v1955, %v1953
        %v2264 = vpack.c.b16 %v1958, %v1956
        %v2265 = vpack.c.b16 %v1959, %v1957
        %v2266 = vpack.c.b16 %v1962, %v1960
        %v2267 = vpack.c.b16 %v1963, %v1961
        %v2268 = vpack.c.b16 %v1966, %v1964
        %v2269 = vpack.c.b16 %v1967, %v1965
        %v2270 = vpack.c.b16 %v1970, %v1968
        %v2271 = vpack.c.b16 %v1971, %v1969
        %v2272 = vpack.c.b16 %v1974, %v1972
        %v2273 = vpack.c.b16 %v1975, %v1973
        %v2274 = vpack.c.b16 %v1978, %v1976
        %v2275 = vpack.c.b16 %v1979, %v1977
        %v2276 = vpack.c.b16 %v1982, %v1980
        %v2277 = vpack.c.b16 %v1983, %v1981
        %v2278 = vpack.c.b16 %v1986, %v1984
        %v2279 = vpack.c.b16 %v1987, %v1985
        %v2280 = vpack.c.b16 %v1990, %v1988
        %v2281 = vpack.c.b16 %v1991, %v1989
        %v2282 = vpack.c.b16 %v1994, %v1992
        %v2283 = vpack.c.b16 %v1995, %v1993
        %v2284 = vpack.c.b16 %v1998, %v1996
        %v2285 = vpack.c.b16 %v1999, %v1997
        %v2286 = vpack.c.b16 %v2002, %v2000
        %v2287 = vpack.c.b16 %v2003, %v2001
        %v2288 = vpack.c.b16 %v2006, %v2004
        %v2289 = vpack.c.b16 %v2007, %v2005
        %v2290 = vpack.c.b16 %v2010, %v2008
        %v2291 = vpack.c.b16 %v2011, %v2009
        %v2292 = vpack.c.b16 %v2014, %v2012
        %v2293 = vpack.c.b16 %v2015, %v2013
        %v2294 = vpack.c.b16 %v2018, %v2016
        %v2295 = vpack.c.b16 %v2019, %v2017
        %v2296 = vpack.c.b16 %v2022, %v2020
        %v2297 = vpack.c.b16 %v2023, %v2021
        %v2298 = vpack.c.b16 %v2026, %v2024
        %v2299 = vpack.c.b16 %v2027, %v2025
        %v2300 = vpack.c.b16 %v2030, %v2028
        %v2301 = vpack.c.b16 %v2031, %v2029
        %v2302 = vpack.c.b16 %v2034, %v2032
        %v2303 = vpack.c.b16 %v2035, %v2033
        %v2304 = vpack.c.b16 %v2038, %v2036
        %v2305 = vpack.c.b16 %v2039, %v2037
        %v2306 = vpack.c.b16 %v2042, %v2040
        %v2307 = vpack.c.b16 %v2043, %v2041
        %v2308 = vpack.c.b16 %v2046, %v2044
        %v2309 = vpack.c.b16 %v2047, %v2045
        %v2310 = vpack.c.b16 %v2050, %v2048
        %v2311 = vpack.c.b16 %v2051, %v2049
        %v2312 = vpack.c.b16 %v2054, %v2052
        %v2313 = vpack.c.b16 %v2055, %v2053
        %v2314 = vpack.c.b16 %v2058, %v2056
        %v2315 = vpack.c.b16 %v2059, %v2057
        %v2316 = vpack.c.b16 %v2062, %v2060
        %v2317 = vpack.c.b16 %v2063, %v2061
        %v2318 = vpack.c.b16 %v2066, %v2064
        %v2319 = vpack.c.b16 %v2067, %v2065
        %v2320 = vpack.c.b16 %v2070, %v2068
        %v2321 = vpack.c.b16 %v2071, %v2069
        %v2322 = vpack.c.b16 %v2074, %v2072
        %v2323 = vpack.c.b16 %v2075, %v2073
        %v2324 = vpack.c.b16 %v2078, %v2076
        %v2325 = vpack.c.b16 %v2079, %v2077
        %v2326 = vpack.c.b16 %v2082, %v2080
        %v2327 = vpack.c.b16 %v2083, %v2081
        %v2328 = vpack.c.b16 %v2086, %v2084
        %v2329 = vpack.c.b16 %v2087, %v2085
        %v2330 = vpack.c.b16 %v2090, %v2088
        %v2331 = vpack.c.b16 %v2091, %v2089
        %v2332 = vpack.c.b16 %v2094, %v2092
        %v2333 = vpack.c.b16 %v2095, %v2093
        %v2334 = vpack.c.b16 %v2098, %v2096
        %v2335 = vpack.c.b16 %v2099, %v2097
        %v2336 = vpack.c.b16 %v2102, %v2100
        %v2337 = vpack.c.b16 %v2103, %v2101
        %v2338 = vpack.c.b16 %v2106, %v2104
        %v2339 = vpack.c.b16 %v2107, %v2105
        %v2340 = vpack.c.b16 %v2110, %v2108
        %v2341 = vpack.c.b16 %v2111, %v2109
        %v2342 = vpack.c.b16 %v2114, %v2112
        %v2343 = vpack.c.b16 %v2115, %v2113
        %v2344 = vpack.c.b16 %v2118, %v2116
        %v2345 = vpack.c.b16 %v2119, %v2117
        %v2346 = vpack.c.b16 %v2122, %v2120
        %v2347 = vpack.c.b16 %v2123, %v2121
        %v2348 = vpack.c.b16 %v2126, %v2124
        %v2349 = vpack.c.b16 %v2127, %v2125
        %v2350 = vpack.c.b16 %v2130, %v2128
        %v2351 = vpack.c.b16 %v2131, %v2129
        %v2352 = vpack.c.b16 %v2134, %v2132
        %v2353 = vpack.c.b16 %v2135, %v2133
        %v2354 = vpack.c.b16 %v2138, %v2136
        %v2355 = vpack.c.b16 %v2139, %v2137
        %v2356 = vpack.c.b16 %v2142, %v2140
        %v2357 = vpack.c.b16 %v2143, %v2141
        %v2358 = vpack.c.b16 %v2146, %v2144
        %v2359 = vpack.c.b16 %v2147, %v2145
        %v2360 = vpack.c.b16 %v2150, %v2148
        %v2361 = vpack.c.b16 %v2151, %v2149
        %v2362 = vpack.c.b16 %v2154, %v2152
        %v2363 = vpack.c.b16 %v2155, %v2153
        %v2364 = vpack.c.b16 %v2158, %v2156
        %v2365 = vpack.c.b16 %v2159, %v2157
        %v2366 = vpack.c.b16 %v2162, %v2160
        %v2367 = vpack.c.b16 %v2163, %v2161
        %v2368 = vpack.c.b16 %v2166, %v2164
        %v2369 = vpack.c.b16 %v2167, %v2165
        %v2370 = vpack.c.b16 %v2170, %v2168
        %v2371 = vpack.c.b16 %v2171, %v2169
        %vm2572 = vcmask 523264
        %v2574 = vsel %vm2572, %v1550, 0
        %2576 = vmatprep.subr.bf16.mxu0 %v2173
        %2577 = vmatpush1.bf16.msra.mxu0 %v2172
        %2578 = vmatprep.subr.bf16.mxu0 %v2175
        %2579 = vmatpush1.bf16.msra.mxu0 %v2174
        %2580 = vmatprep.subr.bf16.mxu0 %v2177
        %2581 = vmatpush1.bf16.msra.mxu0 %v2176
        %2582 = vmatprep.subr.bf16.mxu0 %v2179
        %2583 = vmatpush1.bf16.msra.mxu0 %v2178
        %2584 = vmatprep.subr.bf16.mxu0 %v2181
        %2585 = vmatpush1.bf16.msra.mxu0 %v2180
        %2586 = vmatprep.subr.bf16.mxu0 %v2183
        %2587 = vmatpush1.bf16.msra.mxu0 %v2182
        %2588 = vmatprep.subr.bf16.mxu0 %v2185
        %2589 = vmatpush1.bf16.msra.mxu0 %v2184
        %2590 = vmatprep.subr.bf16.mxu0 %v2187
        %2591 = vmatpush1.bf16.msra.mxu0 %v2186
        %2592 = vmatprep.subr.bf16.mxu0 %v2189
        %2593 = vmatpush1.bf16.msra.mxu0 %v2188
        %2594 = vmatprep.subr.bf16.mxu0 %v2191
        %2595 = vmatpush1.bf16.msra.mxu0 %v2190
        %2596 = vmatprep.subr.bf16.mxu0 %v2193
        %2597 = vmatpush1.bf16.msra.mxu0 %v2192
        %2598 = vmatprep.subr.bf16.mxu0 %v2195
        %2599 = vmatpush1.bf16.msra.mxu0 %v2194
        %2600 = vmatprep.subr.bf16.mxu0 %v2197
        %2601 = vmatpush1.bf16.msra.mxu0 %v2196
        %2602 = vmatprep.subr.bf16.mxu0 %v2199
        %2603 = vmatpush1.bf16.msra.mxu0 %v2198
        %2604 = vmatprep.subr.bf16.mxu0 %v2201
        %2605 = vmatpush1.bf16.msra.mxu0 %v2200
        %2606 = vmatprep.subr.bf16.mxu0 %v2203
        %2607 = vmatpush1.bf16.msra.mxu0 %v2202
        %2608 = vmatprep.mubr.bf16.mxu0 %v1509
        %2609 = vmatmul.mubr.bf16.gmra.mrb[0].mxu0 %v1495
        %v2610 = vpop.f32.mrb[0].mxu0
        %v2611 = vadd.f32 %v1463, %v2610
        %v2612 = vpop.f32.mrb[0].mxu0
        %v2613 = vadd.f32 %v1467, %v2612
        %v2614 = vpop.f32.mrb[0].mxu0
        %v2615 = vpop.f32.mrb[0].mxu0
        %2616 = vdwg.mxu0
        %2617 = vmatprep.subr.bf16.mxu0 %v2205
        %2618 = vmatpush1.bf16.msra.mxu0 %v2204
        %2619 = vmatprep.subr.bf16.mxu0 %v2207
        %2620 = vmatpush1.bf16.msra.mxu0 %v2206
        %2621 = vmatprep.subr.bf16.mxu0 %v2209
        %2622 = vmatpush1.bf16.msra.mxu0 %v2208
        %2623 = vmatprep.subr.bf16.mxu0 %v2211
        %2624 = vmatpush1.bf16.msra.mxu0 %v2210
        %2625 = vmatprep.subr.bf16.mxu0 %v2213
        %2626 = vmatpush1.bf16.msra.mxu0 %v2212
        %2627 = vmatprep.subr.bf16.mxu0 %v2215
        %2628 = vmatpush1.bf16.msra.mxu0 %v2214
        %2629 = vmatprep.subr.bf16.mxu0 %v2217
        %2630 = vmatpush1.bf16.msra.mxu0 %v2216
        %2631 = vmatprep.subr.bf16.mxu0 %v2219
        %2632 = vmatpush1.bf16.msra.mxu0 %v2218
        %2633 = vmatprep.subr.bf16.mxu0 %v2221
        %2634 = vmatpush1.bf16.msra.mxu0 %v2220
        %2635 = vmatprep.subr.bf16.mxu0 %v2223
        %2636 = vmatpush1.bf16.msra.mxu0 %v2222
        %2637 = vmatprep.subr.bf16.mxu0 %v2225
        %2638 = vmatpush1.bf16.msra.mxu0 %v2224
        %2639 = vmatprep.subr.bf16.mxu0 %v2227
        %2640 = vmatpush1.bf16.msra.mxu0 %v2226
        %2641 = vmatprep.subr.bf16.mxu0 %v2229
        %2642 = vmatpush1.bf16.msra.mxu0 %v2228
        %2643 = vmatprep.subr.bf16.mxu0 %v2231
        %2644 = vmatpush1.bf16.msra.mxu0 %v2230
        %2645 = vmatprep.subr.bf16.mxu0 %v2233
        %2646 = vmatpush1.bf16.msra.mxu0 %v2232
        %2647 = vmatprep.subr.bf16.mxu0 %v2235
        %2648 = vmatpush1.bf16.msra.mxu0 %v2234
        %2649 = vmatprep.mubr.bf16.mxu0 %v1519
        %2650 = vmatmul.mubr.bf16.gmra.mrb[0].mxu0 %v1517
        %v2651 = vpop.f32.mrb[0].mxu0
        %v2652 = vadd.f32 %v2611, %v2651
        %v2653 = vpop.f32.mrb[0].mxu0
        %v2654 = vadd.f32 %v2613, %v2653
        %v2655 = vpop.f32.mrb[0].mxu0
        %v2656 = vpop.f32.mrb[0].mxu0
        %2657 = vdwg.mxu0
        %2658 = vmatprep.subr.bf16.mxu0 %v2237
        %2659 = vmatpush1.bf16.msra.mxu0 %v2236
        %2660 = vmatprep.subr.bf16.mxu0 %v2239
        %2661 = vmatpush1.bf16.msra.mxu0 %v2238
        %2662 = vmatprep.subr.bf16.mxu0 %v2241
        %2663 = vmatpush1.bf16.msra.mxu0 %v2240
        %2664 = vmatprep.subr.bf16.mxu0 %v2243
        %2665 = vmatpush1.bf16.msra.mxu0 %v2242
        %2666 = vmatprep.subr.bf16.mxu0 %v2245
        %2667 = vmatpush1.bf16.msra.mxu0 %v2244
        %2668 = vmatprep.subr.bf16.mxu0 %v2247
        %2669 = vmatpush1.bf16.msra.mxu0 %v2246
        %2670 = vmatprep.subr.bf16.mxu0 %v2249
        %2671 = vmatpush1.bf16.msra.mxu0 %v2248
        %2672 = vmatprep.subr.bf16.mxu0 %v2251
        %2673 = vmatpush1.bf16.msra.mxu0 %v2250
        %2674 = vmatprep.subr.bf16.mxu0 %v2253
        %2675 = vmatpush1.bf16.msra.mxu0 %v2252
        %2676 = vmatprep.subr.bf16.mxu0 %v2255
        %2677 = vmatpush1.bf16.msra.mxu0 %v2254
        %2678 = vmatprep.subr.bf16.mxu0 %v2257
        %2679 = vmatpush1.bf16.msra.mxu0 %v2256
        %2680 = vmatprep.subr.bf16.mxu0 %v2259
        %2681 = vmatpush1.bf16.msra.mxu0 %v2258
        %2682 = vmatprep.subr.bf16.mxu0 %v2261
        %2683 = vmatpush1.bf16.msra.mxu0 %v2260
        %2684 = vmatprep.subr.bf16.mxu0 %v2263
        %2685 = vmatpush1.bf16.msra.mxu0 %v2262
        %2686 = vmatprep.subr.bf16.mxu0 %v2265
        %2687 = vmatpush1.bf16.msra.mxu0 %v2264
        %2688 = vmatprep.subr.bf16.mxu0 %v2267
        %2689 = vmatpush1.bf16.msra.mxu0 %v2266
        %2690 = vmatprep.mubr.bf16.mxu0 %v1516
        %2691 = vmatmul.mubr.bf16.gmra.mrb[0].mxu0 %v1502
        %v2692 = vpop.f32.mrb[0].mxu0
        %v2693 = vadd.f32 %v2652, %v2692
        %v2694 = vpop.f32.mrb[0].mxu0
        %v2695 = vadd.f32 %v2654, %v2694
        %v2696 = vpop.f32.mrb[0].mxu0
        %v2697 = vpop.f32.mrb[0].mxu0
        %2698 = vdwg.mxu0
        %2699 = vmatprep.subr.bf16.mxu0 %v2269
        %2700 = vmatpush1.bf16.msra.mxu0 %v2268
        %2701 = vmatprep.subr.bf16.mxu0 %v2271
        %2702 = vmatpush1.bf16.msra.mxu0 %v2270
        %2703 = vmatprep.subr.bf16.mxu0 %v2273
        %2704 = vmatpush1.bf16.msra.mxu0 %v2272
        %2705 = vmatprep.subr.bf16.mxu0 %v2275
        %2706 = vmatpush1.bf16.msra.mxu0 %v2274
        %2707 = vmatprep.subr.bf16.mxu0 %v2277
        %2708 = vmatpush1.bf16.msra.mxu0 %v2276
        %2709 = vmatprep.subr.bf16.mxu0 %v2279
        %2710 = vmatpush1.bf16.msra.mxu0 %v2278
        %2711 = vmatprep.subr.bf16.mxu0 %v2281
        %2712 = vmatpush1.bf16.msra.mxu0 %v2280
        %2713 = vmatprep.subr.bf16.mxu0 %v2283
        %2714 = vmatpush1.bf16.msra.mxu0 %v2282
        %2715 = vmatprep.subr.bf16.mxu0 %v2285
        %2716 = vmatpush1.bf16.msra.mxu0 %v2284
        %2717 = vmatprep.subr.bf16.mxu0 %v2287
        %2718 = vmatpush1.bf16.msra.mxu0 %v2286
        %2719 = vmatprep.subr.bf16.mxu0 %v2289
        %2720 = vmatpush1.bf16.msra.mxu0 %v2288
        %2721 = vmatprep.subr.bf16.mxu0 %v2291
        %2722 = vmatpush1.bf16.msra.mxu0 %v2290
        %2723 = vmatprep.subr.bf16.mxu0 %v2293
        %2724 = vmatpush1.bf16.msra.mxu0 %v2292
        %2725 = vmatprep.subr.bf16.mxu0 %v2295
        %2726 = vmatpush1.bf16.msra.mxu0 %v2294
        %2727 = vmatprep.subr.bf16.mxu0 %v2297
        %2728 = vmatpush1.bf16.msra.mxu0 %v2296
        %2729 = vmatprep.subr.bf16.mxu0 %v2299
        %2730 = vmatpush1.bf16.msra.mxu0 %v2298
        %2731 = vmatprep.mubr.bf16.mxu0 %v1520
        %2732 = vmatmul.mubr.bf16.gmra.mrb[0].mxu0 %v1518
        %v2733 = vpop.f32.mrb[0].mxu0
        %v2734 = vadd.f32 %v2693, %v2733
        %v2735 = vpop.f32.mrb[0].mxu0
        %v2736 = vadd.f32 %v2695, %v2735
        %v2737 = vpop.f32.mrb[0].mxu0
        %v2738 = vpop.f32.mrb[0].mxu0
        %2739 = vdwg.mxu0
        %2740 = vmatprep.subr.bf16.mxu0 %v2301
        %2741 = vmatpush1.bf16.msra.mxu0 %v2300
        %2742 = vmatprep.subr.bf16.mxu0 %v2303
        %2743 = vmatpush1.bf16.msra.mxu0 %v2302
        %2744 = vmatprep.subr.bf16.mxu0 %v2305
        %2745 = vmatpush1.bf16.msra.mxu0 %v2304
        %2746 = vmatprep.subr.bf16.mxu0 %v2307
        %2747 = vmatpush1.bf16.msra.mxu0 %v2306
        %2748 = vmatprep.subr.bf16.mxu0 %v2309
        %2749 = vmatpush1.bf16.msra.mxu0 %v2308
        %2750 = vmatprep.subr.bf16.mxu0 %v2311
        %2751 = vmatpush1.bf16.msra.mxu0 %v2310
        %2752 = vmatprep.subr.bf16.mxu0 %v2313
        %2753 = vmatpush1.bf16.msra.mxu0 %v2312
        %2754 = vmatprep.subr.bf16.mxu0 %v2315
        %2755 = vmatpush1.bf16.msra.mxu0 %v2314
        %2756 = vmatprep.subr.bf16.mxu0 %v2317
        %2757 = vmatpush1.bf16.msra.mxu0 %v2316
        %2758 = vmatprep.subr.bf16.mxu0 %v2319
        %2759 = vmatpush1.bf16.msra.mxu0 %v2318
        %2760 = vmatprep.subr.bf16.mxu0 %v2321
        %2761 = vmatpush1.bf16.msra.mxu0 %v2320
        %2762 = vmatprep.subr.bf16.mxu0 %v2323
        %2763 = vmatpush1.bf16.msra.mxu0 %v2322
        %2764 = vmatprep.subr.bf16.mxu0 %v2325
        %2765 = vmatpush1.bf16.msra.mxu0 %v2324
        %2766 = vmatprep.subr.bf16.mxu0 %v2327
        %2767 = vmatpush1.bf16.msra.mxu0 %v2326
        %2768 = vmatprep.subr.bf16.mxu0 %v2329
        %2769 = vmatpush1.bf16.msra.mxu0 %v2328
        %2770 = vmatprep.subr.bf16.mxu0 %v2331
        %2771 = vmatpush1.bf16.msra.mxu0 %v2330
        %2772 = vmatprep.mubr.bf16.mxu0 %v1557
        %2773 = vmatmul.mubr.bf16.gmra.mrb[0].mxu0 %v1543
        %v2774 = vpop.f32.mrb[0].mxu0
        %v2775 = vadd.f32 %v2734, %v2774
        %v2776 = vpop.f32.mrb[0].mxu0
        %v2777 = vadd.f32 %v2736, %v2776
        %v2778 = vpop.f32.mrb[0].mxu0
        %v2779 = vpop.f32.mrb[0].mxu0
        %2780 = vdwg.mxu0
        %2781 = vmatprep.subr.bf16.mxu0 %v2333
        %2782 = vmatpush1.bf16.msra.mxu0 %v2332
        %2783 = vmatprep.subr.bf16.mxu0 %v2335
        %2784 = vmatpush1.bf16.msra.mxu0 %v2334
        %2785 = vmatprep.subr.bf16.mxu0 %v2337
        %2786 = vmatpush1.bf16.msra.mxu0 %v2336
        %2787 = vmatprep.subr.bf16.mxu0 %v2339
        %2788 = vmatpush1.bf16.msra.mxu0 %v2338
        %2789 = vmatprep.subr.bf16.mxu0 %v2341
        %2790 = vmatpush1.bf16.msra.mxu0 %v2340
        %2791 = vmatprep.subr.bf16.mxu0 %v2343
        %2792 = vmatpush1.bf16.msra.mxu0 %v2342
        %2793 = vmatprep.subr.bf16.mxu0 %v2345
        %2794 = vmatpush1.bf16.msra.mxu0 %v2344
        %2795 = vmatprep.subr.bf16.mxu0 %v2347
        %2796 = vmatpush1.bf16.msra.mxu0 %v2346
        %2797 = vmatprep.subr.bf16.mxu0 %v2349
        %2798 = vmatpush1.bf16.msra.mxu0 %v2348
        %2799 = vmatprep.subr.bf16.mxu0 %v2351
        %2800 = vmatpush1.bf16.msra.mxu0 %v2350
        %2801 = vmatprep.subr.bf16.mxu0 %v2353
        %2802 = vmatpush1.bf16.msra.mxu0 %v2352
        %2803 = vmatprep.subr.bf16.mxu0 %v2355
        %2804 = vmatpush1.bf16.msra.mxu0 %v2354
        %2805 = vmatprep.subr.bf16.mxu0 %v2357
        %2806 = vmatpush1.bf16.msra.mxu0 %v2356
        %2807 = vmatprep.subr.bf16.mxu0 %v2359
        %2808 = vmatpush1.bf16.msra.mxu0 %v2358
        %2809 = vmatprep.subr.bf16.mxu0 %v2361
        %2810 = vmatpush1.bf16.msra.mxu0 %v2360
        %2811 = vmatprep.subr.bf16.mxu0 %v2363
        %2812 = vmatpush1.bf16.msra.mxu0 %v2362
        %2813 = vmatprep.mubr.bf16.mxu0 %v1559
        %2814 = vmatmul.mubr.bf16.gmra.mrb[0].mxu0 %v1558
        %v2815 = vpop.f32.mrb[0].mxu0
        %v2816 = vadd.f32 %v2775, %v2815
        %v2817 = vpop.f32.mrb[0].mxu0
        %v2818 = vadd.f32 %v2777, %v2817
        %v2819 = vpop.f32.mrb[0].mxu0
        %v2820 = vpop.f32.mrb[0].mxu0
        %2821 = vdwg.mxu0
        %2822 = vmatprep.subr.bf16.mxu0 %v2365
        %2823 = vmatpush1.bf16.msra.mxu0 %v2364
        %2824 = vmatprep.subr.bf16.mxu0 %v2367
        %2825 = vmatpush1.bf16.msra.mxu0 %v2366
        %2826 = vmatprep.subr.bf16.mxu0 %v2369
        %2827 = vmatpush1.bf16.msra.mxu0 %v2368
        %2828 = vmatprep.subr.bf16.mxu0 %v2371
        %2829 = vmatpush1.bf16.msra.mxu0 %v2370
        %2830 = vmatprep.subr.bf16.mxu0 0
        %2831 = vmatpush1.bf16.msra.mxu0 0
        %2832 = vmatprep.subr.bf16.mxu0 0
        %2833 = vmatpush1.bf16.msra.mxu0 0
        %2834 = vmatprep.subr.bf16.mxu0 0
        %2835 = vmatpush1.bf16.msra.mxu0 0
        %2836 = vmatprep.subr.bf16.mxu0 0
        %2837 = vmatpush1.bf16.msra.mxu0 0
        %2838 = vmatprep.subr.bf16.mxu0 0
        %2839 = vmatpush1.bf16.msra.mxu0 0
        %2840 = vmatprep.subr.bf16.mxu0 0
        %2841 = vmatpush1.bf16.msra.mxu0 0
        %2842 = vmatprep.subr.bf16.mxu0 0
        %2843 = vmatpush1.bf16.msra.mxu0 0
        %2844 = vmatprep.subr.bf16.mxu0 0
        %2845 = vmatpush1.bf16.msra.mxu0 0
        %2846 = vmatprep.subr.bf16.mxu0 0
        %2847 = vmatpush1.bf16.msra.mxu0 0
        %2848 = vmatprep.subr.bf16.mxu0 0
        %2849 = vmatpush1.bf16.msra.mxu0 0
        %2850 = vmatprep.subr.bf16.mxu0 0
        %2851 = vmatpush1.bf16.msra.mxu0 0
        %2852 = vmatprep.subr.bf16.mxu0 0
        %2853 = vmatpush1.bf16.msra.mxu0 0
        %2854 = vmatprep.mubr.bf16.mxu0 0
        %2855 = vmatmul.mubr.bf16.gmra.mrb[0].mxu0 %v2574
        %v2856 = vpop.f32.mrb[0].mxu0
        %v2857 = vadd.f32 %v2816, %v2856
        %v2858 = vpop.f32.mrb[0].mxu0
        %v2859 = vadd.f32 %v2818, %v2858
        %v2860 = vpop.f32.mrb[0].mxu0
        %v2861 = vpop.f32.mrb[0].mxu0
        %2862 = vdwg.mxu0
        %v2863 = vmax.f32 %v2857, 0.0
        %v2864 = vmax.f32 %v2859, 0.0
        %v2865 = vld [vmem:[#allocation2] sm:$0xff]
        %v2866 = vld [vmem:[#allocation2 + $0x8] sm:$0xff]
        %v2867 = vpack.c.bf16 %v2863, %v2863
        %v2868 = vpack.c.bf16 %v2864, %v2864
        %v2869 = vld [vmem:[%s1247] sm:$0xff]
        %v2870 = vld [vmem:[%s1247 + $0x8] sm:$0xff]
        %v2871 = vld [vmem:[%s1247 + $0x10] sm:$0xff]
        %v2872 = vld [vmem:[%s1247 + $0x18] sm:$0xff]
        %v2873 = vld [vmem:[%s1247 + $0x20] sm:$0xff]
        %v2874 = vld [vmem:[%s1247 + $0x28] sm:$0xff]
        %v2875 = vld [vmem:[%s1247 + $0x30] sm:$0xff]
        %v2876 = vld [vmem:[%s1247 + $0x38] sm:$0xff]
        %v2877 = vld [vmem:[%s1247 + $0x40] sm:$0xff]
        %v2878 = vld [vmem:[%s1247 + $0x48] sm:$0xff]
        %v2879 = vld [vmem:[%s1247 + $0x50] sm:$0xff]
        %v2880 = vld [vmem:[%s1247 + $0x58] sm:$0xff]
        %v2881 = vld [vmem:[%s1247 + $0x60] sm:$0xff]
        %v2882 = vld [vmem:[%s1247 + $0x68] sm:$0xff]
        %v2883 = vld [vmem:[%s1247 + $0x70] sm:$0xff]
        %v2884 = vld [vmem:[%s1247 + $0x78] sm:$0xff]
        %v2885 = vld [vmem:[%s1247 + $0x80] sm:$0xff]
        %v2886 = vld [vmem:[%s1247 + $0x88] sm:$0xff]
        %v2887 = vld [vmem:[%s1247 + $0x90] sm:$0xff]
        %v2888 = vld [vmem:[%s1247 + $0x98] sm:$0xff]
        %v2889 = vld [vmem:[%s1247 + $0xa0] sm:$0xff]
        %v2890 = vld [vmem:[%s1247 + $0xa8] sm:$0xff]
        %v2891 = vld [vmem:[%s1247 + $0xb0] sm:$0xff]
        %v2892 = vld [vmem:[%s1247 + $0xb8] sm:$0xff]
        %v2893 = vld [vmem:[%s1247 + $0xc0] sm:$0xff]
        %v2894 = vld [vmem:[%s1247 + $0xc8] sm:$0xff]
        %v2895 = vld [vmem:[%s1247 + $0xd0] sm:$0xff]
        %v2896 = vld [vmem:[%s1247 + $0xd8] sm:$0xff]
        %v2897 = vld [vmem:[%s1247 + $0xe0] sm:$0xff]
        %v2898 = vld [vmem:[%s1247 + $0xe8] sm:$0xff]
        %v2899 = vld [vmem:[%s1247 + $0xf0] sm:$0xff]
        %v2900 = vld [vmem:[%s1247 + $0xf8] sm:$0xff]
        %v2901 = vld [vmem:[%s1247 + $0x100] sm:$0xff]
        %v2902 = vld [vmem:[%s1247 + $0x108] sm:$0xff]
        %v2903 = vld [vmem:[%s1247 + $0x110] sm:$0xff]
        %v2904 = vld [vmem:[%s1247 + $0x118] sm:$0xff]
        %v2905 = vld [vmem:[%s1247 + $0x120] sm:$0xff]
        %v2906 = vld [vmem:[%s1247 + $0x128] sm:$0xff]
        %v2907 = vld [vmem:[%s1247 + $0x130] sm:$0xff]
        %v2908 = vld [vmem:[%s1247 + $0x138] sm:$0xff]
        %v2909 = vld [vmem:[%s1247 + $0x140] sm:$0xff]
        %v2910 = vld [vmem:[%s1247 + $0x148] sm:$0xff]
        %v2911 = vld [vmem:[%s1247 + $0x150] sm:$0xff]
        %v2912 = vld [vmem:[%s1247 + $0x158] sm:$0xff]
        %v2913 = vld [vmem:[%s1247 + $0x160] sm:$0xff]
        %v2914 = vld [vmem:[%s1247 + $0x168] sm:$0xff]
        %v2915 = vld [vmem:[%s1247 + $0x170] sm:$0xff]
        %v2916 = vld [vmem:[%s1247 + $0x178] sm:$0xff]
        %v2917 = vld [vmem:[%s1247 + $0x180] sm:$0xff]
        %v2918 = vld [vmem:[%s1247 + $0x188] sm:$0xff]
        %v2919 = vld [vmem:[%s1247 + $0x190] sm:$0xff]
        %v2920 = vld [vmem:[%s1247 + $0x198] sm:$0xff]
        %v2921 = vld [vmem:[%s1247 + $0x1a0] sm:$0xff]
        %v2922 = vld [vmem:[%s1247 + $0x1a8] sm:$0xff]
        %v2923 = vld [vmem:[%s1247 + $0x1b0] sm:$0xff]
        %v2924 = vld [vmem:[%s1247 + $0x1b8] sm:$0xff]
        %v2925 = vld [vmem:[%s1247 + $0x1c0] sm:$0xff]
        %v2926 = vld [vmem:[%s1247 + $0x1c8] sm:$0xff]
        %v2927 = vld [vmem:[%s1247 + $0x1d0] sm:$0xff]
        %v2928 = vld [vmem:[%s1247 + $0x1d8] sm:$0xff]
        %v2929 = vld [vmem:[%s1247 + $0x1e0] sm:$0xff]
        %v2930 = vld [vmem:[%s1247 + $0x1e8] sm:$0xff]
        %v2931 = vld [vmem:[%s1247 + $0x1f0] sm:$0xff]
        %v2932 = vld [vmem:[%s1247 + $0x1f8] sm:$0xff]
        %v2933 = vld [vmem:[%s1247 + $0x200] sm:$0xff]
        %v2934 = vld [vmem:[%s1247 + $0x208] sm:$0xff]
        %v2935 = vld [vmem:[%s1247 + $0x210] sm:$0xff]
        %v2936 = vld [vmem:[%s1247 + $0x218] sm:$0xff]
        %v2937 = vld [vmem:[%s1247 + $0x220] sm:$0xff]
        %v2938 = vld [vmem:[%s1247 + $0x228] sm:$0xff]
        %v2939 = vld [vmem:[%s1247 + $0x230] sm:$0xff]
        %v2940 = vld [vmem:[%s1247 + $0x238] sm:$0xff]
        %v2941 = vld [vmem:[%s1247 + $0x240] sm:$0xff]
        %v2942 = vld [vmem:[%s1247 + $0x248] sm:$0xff]
        %v2943 = vld [vmem:[%s1247 + $0x250] sm:$0xff]
        %v2944 = vld [vmem:[%s1247 + $0x258] sm:$0xff]
        %v2945 = vld [vmem:[%s1247 + $0x260] sm:$0xff]
        %v2946 = vld [vmem:[%s1247 + $0x268] sm:$0xff]
        %v2947 = vld [vmem:[%s1247 + $0x270] sm:$0xff]
        %v2948 = vld [vmem:[%s1247 + $0x278] sm:$0xff]
        %v2949 = vld [vmem:[%s1247 + $0x280] sm:$0xff]
        %v2950 = vld [vmem:[%s1247 + $0x288] sm:$0xff]
        %v2951 = vld [vmem:[%s1247 + $0x290] sm:$0xff]
        %v2952 = vld [vmem:[%s1247 + $0x298] sm:$0xff]
        %v2953 = vld [vmem:[%s1247 + $0x2a0] sm:$0xff]
        %v2954 = vld [vmem:[%s1247 + $0x2a8] sm:$0xff]
        %v2955 = vld [vmem:[%s1247 + $0x2b0] sm:$0xff]
        %v2956 = vld [vmem:[%s1247 + $0x2b8] sm:$0xff]
        %v2957 = vld [vmem:[%s1247 + $0x2c0] sm:$0xff]
        %v2958 = vld [vmem:[%s1247 + $0x2c8] sm:$0xff]
        %v2959 = vld [vmem:[%s1247 + $0x2d0] sm:$0xff]
        %v2960 = vld [vmem:[%s1247 + $0x2d8] sm:$0xff]
        %v2961 = vld [vmem:[%s1247 + $0x2e0] sm:$0xff]
        %v2962 = vld [vmem:[%s1247 + $0x2e8] sm:$0xff]
        %v2963 = vld [vmem:[%s1247 + $0x2f0] sm:$0xff]
        %v2964 = vld [vmem:[%s1247 + $0x2f8] sm:$0xff]
        %v2965 = vld [vmem:[%s1247 + $0x300] sm:$0xff]
        %v2966 = vld [vmem:[%s1247 + $0x308] sm:$0xff]
        %v2967 = vld [vmem:[%s1247 + $0x310] sm:$0xff]
        %v2968 = vld [vmem:[%s1247 + $0x318] sm:$0xff]
        %v2969 = vld [vmem:[%s1247 + $0x320] sm:$0xff]
        %v2970 = vld [vmem:[%s1247 + $0x328] sm:$0xff]
        %v2971 = vld [vmem:[%s1247 + $0x330] sm:$0xff]
        %v2972 = vld [vmem:[%s1247 + $0x338] sm:$0xff]
        %v2973 = vld [vmem:[%s1247 + $0x340] sm:$0xff]
        %v2974 = vld [vmem:[%s1247 + $0x348] sm:$0xff]
        %v2975 = vld [vmem:[%s1247 + $0x350] sm:$0xff]
        %v2976 = vld [vmem:[%s1247 + $0x358] sm:$0xff]
        %v2977 = vld [vmem:[%s1247 + $0x360] sm:$0xff]
        %v2978 = vld [vmem:[%s1247 + $0x368] sm:$0xff]
        %v2979 = vld [vmem:[%s1247 + $0x370] sm:$0xff]
        %v2980 = vld [vmem:[%s1247 + $0x378] sm:$0xff]
        %v2981 = vld [vmem:[%s1247 + $0x380] sm:$0xff]
        %v2982 = vld [vmem:[%s1247 + $0x388] sm:$0xff]
        %v2983 = vld [vmem:[%s1247 + $0x390] sm:$0xff]
        %v2984 = vld [vmem:[%s1247 + $0x398] sm:$0xff]
        %v2985 = vld [vmem:[%s1247 + $0x3a0] sm:$0xff]
        %v2986 = vld [vmem:[%s1247 + $0x3a8] sm:$0xff]
        %v2987 = vld [vmem:[%s1247 + $0x3b0] sm:$0xff]
        %v2988 = vld [vmem:[%s1247 + $0x3b8] sm:$0xff]
        %v2989 = vld [vmem:[%s1247 + $0x3c0] sm:$0xff]
        %v2990 = vld [vmem:[%s1247 + $0x3c8] sm:$0xff]
        %v2991 = vld [vmem:[%s1247 + $0x3d0] sm:$0xff]
        %v2992 = vld [vmem:[%s1247 + $0x3d8] sm:$0xff]
        %v2993 = vld [vmem:[%s1247 + $0x3e0] sm:$0xff]
        %v2994 = vld [vmem:[%s1247 + $0x3e8] sm:$0xff]
        %v2995 = vld [vmem:[%s1247 + $0x3f0] sm:$0xff]
        %v2996 = vld [vmem:[%s1247 + $0x3f8] sm:$0xff]
        %v3125 = vunpack.c.l.b16 %v2869
        %v3126 = vunpack.c.h.b16 %v2869
        %v3127 = vunpack.c.l.b16 %v2870
        %v3128 = vunpack.c.h.b16 %v2870
        %v3129 = vunpack.c.l.b16 %v2871
        %v3130 = vunpack.c.h.b16 %v2871
        %v3131 = vunpack.c.l.b16 %v2872
        %v3132 = vunpack.c.h.b16 %v2872
        %v3133 = vunpack.c.l.b16 %v2873
        %v3134 = vunpack.c.h.b16 %v2873
        %v3135 = vunpack.c.l.b16 %v2874
        %v3136 = vunpack.c.h.b16 %v2874
        %v3137 = vunpack.c.l.b16 %v2875
        %v3138 = vunpack.c.h.b16 %v2875
        %v3139 = vunpack.c.l.b16 %v2876
        %v3140 = vunpack.c.h.b16 %v2876
        %v3141 = vunpack.c.l.b16 %v2877
        %v3142 = vunpack.c.h.b16 %v2877
        %v3143 = vunpack.c.l.b16 %v2878
        %v3144 = vunpack.c.h.b16 %v2878
        %v3145 = vunpack.c.l.b16 %v2879
        %v3146 = vunpack.c.h.b16 %v2879
        %v3147 = vunpack.c.l.b16 %v2880
        %v3148 = vunpack.c.h.b16 %v2880
        %v3149 = vunpack.c.l.b16 %v2881
        %v3150 = vunpack.c.h.b16 %v2881
        %v3151 = vunpack.c.l.b16 %v2882
        %v3152 = vunpack.c.h.b16 %v2882
        %v3153 = vunpack.c.l.b16 %v2883
        %v3154 = vunpack.c.h.b16 %v2883
        %v3155 = vunpack.c.l.b16 %v2884
        %v3156 = vunpack.c.h.b16 %v2884
        %v3157 = vunpack.c.l.b16 %v2885
        %v3158 = vunpack.c.h.b16 %v2885
        %v3159 = vunpack.c.l.b16 %v2886
        %v3160 = vunpack.c.h.b16 %v2886
        %v3161 = vunpack.c.l.b16 %v2887
        %v3162 = vunpack.c.h.b16 %v2887
        %v3163 = vunpack.c.l.b16 %v2888
        %v3164 = vunpack.c.h.b16 %v2888
        %v3165 = vunpack.c.l.b16 %v2889
        %v3166 = vunpack.c.h.b16 %v2889
        %v3167 = vunpack.c.l.b16 %v2890
        %v3168 = vunpack.c.h.b16 %v2890
        %v3169 = vunpack.c.l.b16 %v2891
        %v3170 = vunpack.c.h.b16 %v2891
        %v3171 = vunpack.c.l.b16 %v2892
        %v3172 = vunpack.c.h.b16 %v2892
        %v3173 = vunpack.c.l.b16 %v2893
        %v3174 = vunpack.c.h.b16 %v2893
        %v3175 = vunpack.c.l.b16 %v2894
        %v3176 = vunpack.c.h.b16 %v2894
        %v3177 = vunpack.c.l.b16 %v2895
        %v3178 = vunpack.c.h.b16 %v2895
        %v3179 = vunpack.c.l.b16 %v2896
        %v3180 = vunpack.c.h.b16 %v2896
        %v3181 = vunpack.c.l.b16 %v2897
        %v3182 = vunpack.c.h.b16 %v2897
        %v3183 = vunpack.c.l.b16 %v2898
        %v3184 = vunpack.c.h.b16 %v2898
        %v3185 = vunpack.c.l.b16 %v2899
        %v3186 = vunpack.c.h.b16 %v2899
        %v3187 = vunpack.c.l.b16 %v2900
        %v3188 = vunpack.c.h.b16 %v2900
        %v3189 = vunpack.c.l.b16 %v2901
        %v3190 = vunpack.c.h.b16 %v2901
        %v3191 = vunpack.c.l.b16 %v2902
        %v3192 = vunpack.c.h.b16 %v2902
        %v3193 = vunpack.c.l.b16 %v2903
        %v3194 = vunpack.c.h.b16 %v2903
        %v3195 = vunpack.c.l.b16 %v2904
        %v3196 = vunpack.c.h.b16 %v2904
        %v3197 = vunpack.c.l.b16 %v2905
        %v3198 = vunpack.c.h.b16 %v2905
        %v3199 = vunpack.c.l.b16 %v2906
        %v3200 = vunpack.c.h.b16 %v2906
        %v3201 = vunpack.c.l.b16 %v2907
        %v3202 = vunpack.c.h.b16 %v2907
        %v3203 = vunpack.c.l.b16 %v2908
        %v3204 = vunpack.c.h.b16 %v2908
        %v3205 = vunpack.c.l.b16 %v2909
        %v3206 = vunpack.c.h.b16 %v2909
        %v3207 = vunpack.c.l.b16 %v2910
        %v3208 = vunpack.c.h.b16 %v2910
        %v3209 = vunpack.c.l.b16 %v2911
        %v3210 = vunpack.c.h.b16 %v2911
        %v3211 = vunpack.c.l.b16 %v2912
        %v3212 = vunpack.c.h.b16 %v2912
        %v3213 = vunpack.c.l.b16 %v2913
        %v3214 = vunpack.c.h.b16 %v2913
        %v3215 = vunpack.c.l.b16 %v2914
        %v3216 = vunpack.c.h.b16 %v2914
        %v3217 = vunpack.c.l.b16 %v2915
        %v3218 = vunpack.c.h.b16 %v2915
        %v3219 = vunpack.c.l.b16 %v2916
        %v3220 = vunpack.c.h.b16 %v2916
        %v3221 = vunpack.c.l.b16 %v2917
        %v3222 = vunpack.c.h.b16 %v2917
        %v3223 = vunpack.c.l.b16 %v2918
        %v3224 = vunpack.c.h.b16 %v2918
        %v3225 = vunpack.c.l.b16 %v2919
        %v3226 = vunpack.c.h.b16 %v2919
        %v3227 = vunpack.c.l.b16 %v2920
        %v3228 = vunpack.c.h.b16 %v2920
        %v3229 = vunpack.c.l.b16 %v2921
        %v3230 = vunpack.c.h.b16 %v2921
        %v3231 = vunpack.c.l.b16 %v2922
        %v3232 = vunpack.c.h.b16 %v2922
        %v3233 = vunpack.c.l.b16 %v2923
        %v3234 = vunpack.c.h.b16 %v2923
        %v3235 = vunpack.c.l.b16 %v2924
        %v3236 = vunpack.c.h.b16 %v2924
        %v3237 = vunpack.c.l.b16 %v2925
        %v3238 = vunpack.c.h.b16 %v2925
        %v3239 = vunpack.c.l.b16 %v2926
        %v3240 = vunpack.c.h.b16 %v2926
        %v3241 = vunpack.c.l.b16 %v2927
        %v3242 = vunpack.c.h.b16 %v2927
        %v3243 = vunpack.c.l.b16 %v2928
        %v3244 = vunpack.c.h.b16 %v2928
        %v3245 = vunpack.c.l.b16 %v2929
        %v3246 = vunpack.c.h.b16 %v2929
        %v3247 = vunpack.c.l.b16 %v2930
        %v3248 = vunpack.c.h.b16 %v2930
        %v3249 = vunpack.c.l.b16 %v2931
        %v3250 = vunpack.c.h.b16 %v2931
        %v3251 = vunpack.c.l.b16 %v2932
        %v3252 = vunpack.c.h.b16 %v2932
        %v3253 = vunpack.c.l.b16 %v2933
        %v3254 = vunpack.c.h.b16 %v2933
        %v3255 = vunpack.c.l.b16 %v2934
        %v3256 = vunpack.c.h.b16 %v2934
        %v3257 = vunpack.c.l.b16 %v2935
        %v3258 = vunpack.c.h.b16 %v2935
        %v3259 = vunpack.c.l.b16 %v2936
        %v3260 = vunpack.c.h.b16 %v2936
        %v3261 = vunpack.c.l.b16 %v2937
        %v3262 = vunpack.c.h.b16 %v2937
        %v3263 = vunpack.c.l.b16 %v2938
        %v3264 = vunpack.c.h.b16 %v2938
        %v3265 = vunpack.c.l.b16 %v2939
        %v3266 = vunpack.c.h.b16 %v2939
        %v3267 = vunpack.c.l.b16 %v2940
        %v3268 = vunpack.c.h.b16 %v2940
        %v3269 = vunpack.c.l.b16 %v2941
        %v3270 = vunpack.c.h.b16 %v2941
        %v3271 = vunpack.c.l.b16 %v2942
        %v3272 = vunpack.c.h.b16 %v2942
        %v3273 = vunpack.c.l.b16 %v2943
        %v3274 = vunpack.c.h.b16 %v2943
        %v3275 = vunpack.c.l.b16 %v2944
        %v3276 = vunpack.c.h.b16 %v2944
        %v3277 = vunpack.c.l.b16 %v2945
        %v3278 = vunpack.c.h.b16 %v2945
        %v3279 = vunpack.c.l.b16 %v2946
        %v3280 = vunpack.c.h.b16 %v2946
        %v3281 = vunpack.c.l.b16 %v2947
        %v3282 = vunpack.c.h.b16 %v2947
        %v3283 = vunpack.c.l.b16 %v2948
        %v3284 = vunpack.c.h.b16 %v2948
        %v3285 = vunpack.c.l.b16 %v2949
        %v3286 = vunpack.c.h.b16 %v2949
        %v3287 = vunpack.c.l.b16 %v2950
        %v3288 = vunpack.c.h.b16 %v2950
        %v3289 = vunpack.c.l.b16 %v2951
        %v3290 = vunpack.c.h.b16 %v2951
        %v3291 = vunpack.c.l.b16 %v2952
        %v3292 = vunpack.c.h.b16 %v2952
        %v3293 = vunpack.c.l.b16 %v2953
        %v3294 = vunpack.c.h.b16 %v2953
        %v3295 = vunpack.c.l.b16 %v2954
        %v3296 = vunpack.c.h.b16 %v2954
        %v3297 = vunpack.c.l.b16 %v2955
        %v3298 = vunpack.c.h.b16 %v2955
        %v3299 = vunpack.c.l.b16 %v2956
        %v3300 = vunpack.c.h.b16 %v2956
        %v3301 = vunpack.c.l.b16 %v2957
        %v3302 = vunpack.c.h.b16 %v2957
        %v3303 = vunpack.c.l.b16 %v2958
        %v3304 = vunpack.c.h.b16 %v2958
        %v3305 = vunpack.c.l.b16 %v2959
        %v3306 = vunpack.c.h.b16 %v2959
        %v3307 = vunpack.c.l.b16 %v2960
        %v3308 = vunpack.c.h.b16 %v2960
        %v3309 = vunpack.c.l.b16 %v2961
        %v3310 = vunpack.c.h.b16 %v2961
        %v3311 = vunpack.c.l.b16 %v2962
        %v3312 = vunpack.c.h.b16 %v2962
        %v3313 = vunpack.c.l.b16 %v2963
        %v3314 = vunpack.c.h.b16 %v2963
        %v3315 = vunpack.c.l.b16 %v2964
        %v3316 = vunpack.c.h.b16 %v2964
        %v3317 = vunpack.c.l.b16 %v2965
        %v3318 = vunpack.c.h.b16 %v2965
        %v3319 = vunpack.c.l.b16 %v2966
        %v3320 = vunpack.c.h.b16 %v2966
        %v3321 = vunpack.c.l.b16 %v2967
        %v3322 = vunpack.c.h.b16 %v2967
        %v3323 = vunpack.c.l.b16 %v2968
        %v3324 = vunpack.c.h.b16 %v2968
        %v3325 = vunpack.c.l.b16 %v2969
        %v3326 = vunpack.c.h.b16 %v2969
        %v3327 = vunpack.c.l.b16 %v2970
        %v3328 = vunpack.c.h.b16 %v2970
        %v3329 = vunpack.c.l.b16 %v2971
        %v3330 = vunpack.c.h.b16 %v2971
        %v3331 = vunpack.c.l.b16 %v2972
        %v3332 = vunpack.c.h.b16 %v2972
        %v3333 = vunpack.c.l.b16 %v2973
        %v3334 = vunpack.c.h.b16 %v2973
        %v3335 = vunpack.c.l.b16 %v2974
        %v3336 = vunpack.c.h.b16 %v2974
        %v3337 = vunpack.c.l.b16 %v2975
        %v3338 = vunpack.c.h.b16 %v2975
        %v3339 = vunpack.c.l.b16 %v2976
        %v3340 = vunpack.c.h.b16 %v2976
        %v3341 = vunpack.c.l.b16 %v2977
        %v3342 = vunpack.c.h.b16 %v2977
        %v3343 = vunpack.c.l.b16 %v2978
        %v3344 = vunpack.c.h.b16 %v2978
        %v3345 = vunpack.c.l.b16 %v2979
        %v3346 = vunpack.c.h.b16 %v2979
        %v3347 = vunpack.c.l.b16 %v2980
        %v3348 = vunpack.c.h.b16 %v2980
        %v3349 = vunpack.c.l.b16 %v2981
        %v3350 = vunpack.c.h.b16 %v2981
        %v3351 = vunpack.c.l.b16 %v2982
        %v3352 = vunpack.c.h.b16 %v2982
        %v3353 = vunpack.c.l.b16 %v2983
        %v3354 = vunpack.c.h.b16 %v2983
        %v3355 = vunpack.c.l.b16 %v2984
        %v3356 = vunpack.c.h.b16 %v2984
        %v3357 = vunpack.c.l.b16 %v2985
        %v3358 = vunpack.c.h.b16 %v2985
        %v3359 = vunpack.c.l.b16 %v2986
        %v3360 = vunpack.c.h.b16 %v2986
        %v3361 = vunpack.c.l.b16 %v2987
        %v3362 = vunpack.c.h.b16 %v2987
        %v3363 = vunpack.c.l.b16 %v2988
        %v3364 = vunpack.c.h.b16 %v2988
        %v3365 = vunpack.c.l.b16 %v2989
        %v3366 = vunpack.c.h.b16 %v2989
        %v3367 = vunpack.c.l.b16 %v2990
        %v3368 = vunpack.c.h.b16 %v2990
        %v3369 = vunpack.c.l.b16 %v2991
        %v3370 = vunpack.c.h.b16 %v2991
        %v3371 = vunpack.c.l.b16 %v2992
        %v3372 = vunpack.c.h.b16 %v2992
        %v3373 = vunpack.c.l.b16 %v2993
        %v3374 = vunpack.c.h.b16 %v2993
        %v3375 = vunpack.c.l.b16 %v2994
        %v3376 = vunpack.c.h.b16 %v2994
        %v3377 = vunpack.c.l.b16 %v2995
        %v3378 = vunpack.c.h.b16 %v2995
        %v3379 = vunpack.c.l.b16 %v2996
        %v3380 = vunpack.c.h.b16 %v2996
        %v3381 = vpack.c.b16 %v3133, %v3125
        %v3382 = vpack.c.b16 %v3134, %v3126
        %v3383 = vpack.c.b16 %v3135, %v3127
        %v3384 = vpack.c.b16 %v3136, %v3128
        %v3385 = vpack.c.b16 %v3137, %v3129
        %v3386 = vpack.c.b16 %v3138, %v3130
        %v3387 = vpack.c.b16 %v3139, %v3131
        %v3388 = vpack.c.b16 %v3140, %v3132
        %v3389 = vpack.c.b16 %v3149, %v3141
        %v3390 = vpack.c.b16 %v3150, %v3142
        %v3391 = vpack.c.b16 %v3151, %v3143
        %v3392 = vpack.c.b16 %v3152, %v3144
        %v3393 = vpack.c.b16 %v3153, %v3145
        %v3394 = vpack.c.b16 %v3154, %v3146
        %v3395 = vpack.c.b16 %v3155, %v3147
        %v3396 = vpack.c.b16 %v3156, %v3148
        %v3397 = vpack.c.b16 %v3165, %v3157
        %v3398 = vpack.c.b16 %v3166, %v3158
        %v3399 = vpack.c.b16 %v3167, %v3159
        %v3400 = vpack.c.b16 %v3168, %v3160
        %v3401 = vpack.c.b16 %v3169, %v3161
        %v3402 = vpack.c.b16 %v3170, %v3162
        %v3403 = vpack.c.b16 %v3171, %v3163
        %v3404 = vpack.c.b16 %v3172, %v3164
        %v3405 = vpack.c.b16 %v3181, %v3173
        %v3406 = vpack.c.b16 %v3182, %v3174
        %v3407 = vpack.c.b16 %v3183, %v3175
        %v3408 = vpack.c.b16 %v3184, %v3176
        %v3409 = vpack.c.b16 %v3185, %v3177
        %v3410 = vpack.c.b16 %v3186, %v3178
        %v3411 = vpack.c.b16 %v3187, %v3179
        %v3412 = vpack.c.b16 %v3188, %v3180
        %v3413 = vpack.c.b16 %v3197, %v3189
        %v3414 = vpack.c.b16 %v3198, %v3190
        %v3415 = vpack.c.b16 %v3199, %v3191
        %v3416 = vpack.c.b16 %v3200, %v3192
        %v3417 = vpack.c.b16 %v3201, %v3193
        %v3418 = vpack.c.b16 %v3202, %v3194
        %v3419 = vpack.c.b16 %v3203, %v3195
        %v3420 = vpack.c.b16 %v3204, %v3196
        %v3421 = vpack.c.b16 %v3213, %v3205
        %v3422 = vpack.c.b16 %v3214, %v3206
        %v3423 = vpack.c.b16 %v3215, %v3207
        %v3424 = vpack.c.b16 %v3216, %v3208
        %v3425 = vpack.c.b16 %v3217, %v3209
        %v3426 = vpack.c.b16 %v3218, %v3210
        %v3427 = vpack.c.b16 %v3219, %v3211
        %v3428 = vpack.c.b16 %v3220, %v3212
        %v3429 = vpack.c.b16 %v3229, %v3221
        %v3430 = vpack.c.b16 %v3230, %v3222
        %v3431 = vpack.c.b16 %v3231, %v3223
        %v3432 = vpack.c.b16 %v3232, %v3224
        %v3433 = vpack.c.b16 %v3233, %v3225
        %v3434 = vpack.c.b16 %v3234, %v3226
        %v3435 = vpack.c.b16 %v3235, %v3227
        %v3436 = vpack.c.b16 %v3236, %v3228
        %v3437 = vpack.c.b16 %v3245, %v3237
        %v3438 = vpack.c.b16 %v3246, %v3238
        %v3439 = vpack.c.b16 %v3247, %v3239
        %v3440 = vpack.c.b16 %v3248, %v3240
        %v3441 = vpack.c.b16 %v3249, %v3241
        %v3442 = vpack.c.b16 %v3250, %v3242
        %v3443 = vpack.c.b16 %v3251, %v3243
        %v3444 = vpack.c.b16 %v3252, %v3244
        %v3445 = vpack.c.b16 %v3261, %v3253
        %v3446 = vpack.c.b16 %v3262, %v3254
        %v3447 = vpack.c.b16 %v3263, %v3255
        %v3448 = vpack.c.b16 %v3264, %v3256
        %v3449 = vpack.c.b16 %v3265, %v3257
        %v3450 = vpack.c.b16 %v3266, %v3258
        %v3451 = vpack.c.b16 %v3267, %v3259
        %v3452 = vpack.c.b16 %v3268, %v3260
        %v3453 = vpack.c.b16 %v3277, %v3269
        %v3454 = vpack.c.b16 %v3278, %v3270
        %v3455 = vpack.c.b16 %v3279, %v3271
        %v3456 = vpack.c.b16 %v3280, %v3272
        %v3457 = vpack.c.b16 %v3281, %v3273
        %v3458 = vpack.c.b16 %v3282, %v3274
        %v3459 = vpack.c.b16 %v3283, %v3275
        %v3460 = vpack.c.b16 %v3284, %v3276
        %v3461 = vpack.c.b16 %v3293, %v3285
        %v3462 = vpack.c.b16 %v3294, %v3286
        %v3463 = vpack.c.b16 %v3295, %v3287
        %v3464 = vpack.c.b16 %v3296, %v3288
        %v3465 = vpack.c.b16 %v3297, %v3289
        %v3466 = vpack.c.b16 %v3298, %v3290
        %v3467 = vpack.c.b16 %v3299, %v3291
        %v3468 = vpack.c.b16 %v3300, %v3292
        %v3469 = vpack.c.b16 %v3309, %v3301
        %v3470 = vpack.c.b16 %v3310, %v3302
        %v3471 = vpack.c.b16 %v3311, %v3303
        %v3472 = vpack.c.b16 %v3312, %v3304
        %v3473 = vpack.c.b16 %v3313, %v3305
        %v3474 = vpack.c.b16 %v3314, %v3306
        %v3475 = vpack.c.b16 %v3315, %v3307
        %v3476 = vpack.c.b16 %v3316, %v3308
        %v3477 = vpack.c.b16 %v3325, %v3317
        %v3478 = vpack.c.b16 %v3326, %v3318
        %v3479 = vpack.c.b16 %v3327, %v3319
        %v3480 = vpack.c.b16 %v3328, %v3320
        %v3481 = vpack.c.b16 %v3329, %v3321
        %v3482 = vpack.c.b16 %v3330, %v3322
        %v3483 = vpack.c.b16 %v3331, %v3323
        %v3484 = vpack.c.b16 %v3332, %v3324
        %v3485 = vpack.c.b16 %v3341, %v3333
        %v3486 = vpack.c.b16 %v3342, %v3334
        %v3487 = vpack.c.b16 %v3343, %v3335
        %v3488 = vpack.c.b16 %v3344, %v3336
        %v3489 = vpack.c.b16 %v3345, %v3337
        %v3490 = vpack.c.b16 %v3346, %v3338
        %v3491 = vpack.c.b16 %v3347, %v3339
        %v3492 = vpack.c.b16 %v3348, %v3340
        %v3493 = vpack.c.b16 %v3357, %v3349
        %v3494 = vpack.c.b16 %v3358, %v3350
        %v3495 = vpack.c.b16 %v3359, %v3351
        %v3496 = vpack.c.b16 %v3360, %v3352
        %v3497 = vpack.c.b16 %v3361, %v3353
        %v3498 = vpack.c.b16 %v3362, %v3354
        %v3499 = vpack.c.b16 %v3363, %v3355
        %v3500 = vpack.c.b16 %v3364, %v3356
        %v3501 = vpack.c.b16 %v3373, %v3365
        %v3502 = vpack.c.b16 %v3374, %v3366
        %v3503 = vpack.c.b16 %v3375, %v3367
        %v3504 = vpack.c.b16 %v3376, %v3368
        %v3505 = vpack.c.b16 %v3377, %v3369
        %v3506 = vpack.c.b16 %v3378, %v3370
        %v3507 = vpack.c.b16 %v3379, %v3371
        %v3508 = vpack.c.b16 %v3380, %v3372
        %3637 = vmatprep.subr.bf16.mxu0 %v3382
        %3638 = vmatpush1.bf16.msra.mxu0 %v3381
        %3639 = vmatprep.subr.bf16.mxu0 %v3390
        %3640 = vmatpush1.bf16.msra.mxu0 %v3389
        %3641 = vmatprep.subr.bf16.mxu0 %v3398
        %3642 = vmatpush1.bf16.msra.mxu0 %v3397
        %3643 = vmatprep.subr.bf16.mxu0 %v3406
        %3644 = vmatpush1.bf16.msra.mxu0 %v3405
        %3645 = vmatprep.subr.bf16.mxu0 %v3414
        %3646 = vmatpush1.bf16.msra.mxu0 %v3413
        %3647 = vmatprep.subr.bf16.mxu0 %v3422
        %3648 = vmatpush1.bf16.msra.mxu0 %v3421
        %3649 = vmatprep.subr.bf16.mxu0 %v3430
        %3650 = vmatpush1.bf16.msra.mxu0 %v3429
        %3651 = vmatprep.subr.bf16.mxu0 %v3438
        %3652 = vmatpush1.bf16.msra.mxu0 %v3437
        %3653 = vmatprep.subr.bf16.mxu0 %v3446
        %3654 = vmatpush1.bf16.msra.mxu0 %v3445
        %3655 = vmatprep.subr.bf16.mxu0 %v3454
        %3656 = vmatpush1.bf16.msra.mxu0 %v3453
        %3657 = vmatprep.subr.bf16.mxu0 %v3462
        %3658 = vmatpush1.bf16.msra.mxu0 %v3461
        %3659 = vmatprep.subr.bf16.mxu0 %v3470
        %3660 = vmatpush1.bf16.msra.mxu0 %v3469
        %3661 = vmatprep.subr.bf16.mxu0 %v3478
        %3662 = vmatpush1.bf16.msra.mxu0 %v3477
        %3663 = vmatprep.subr.bf16.mxu0 %v3486
        %3664 = vmatpush1.bf16.msra.mxu0 %v3485
        %3665 = vmatprep.subr.bf16.mxu0 %v3494
        %3666 = vmatpush1.bf16.msra.mxu0 %v3493
        %3667 = vmatprep.subr.bf16.mxu0 %v3502
        %3668 = vmatpush1.bf16.msra.mxu0 %v3501
        %3669 = vmatprep.mubr.bf16.mxu0 %v2868
        %3670 = vmatmul.mubr.bf16.gmra.mrb[0].mxu0 %v2867
        %v3671 = vpop.f32.mrb[0].mxu0
        %v3672 = vadd.f32 0.0, %v3671
        %v3673 = vpop.f32.mrb[0].mxu0
        %v3674 = vadd.f32 0.0, %v3673
        %v3675 = vpop.f32.mrb[0].mxu0
        %v3676 = vpop.f32.mrb[0].mxu0
        %3677 = vdwg.mxu0
        %3678 = vmatprep.subr.bf16.mxu0 %v3384
        %3679 = vmatpush1.bf16.msra.mxu0 %v3383
        %3680 = vmatprep.subr.bf16.mxu0 %v3392
        %3681 = vmatpush1.bf16.msra.mxu0 %v3391
        %3682 = vmatprep.subr.bf16.mxu0 %v3400
        %3683 = vmatpush1.bf16.msra.mxu0 %v3399
        %3684 = vmatprep.subr.bf16.mxu0 %v3408
        %3685 = vmatpush1.bf16.msra.mxu0 %v3407
        %3686 = vmatprep.subr.bf16.mxu0 %v3416
        %3687 = vmatpush1.bf16.msra.mxu0 %v3415
        %3688 = vmatprep.subr.bf16.mxu0 %v3424
        %3689 = vmatpush1.bf16.msra.mxu0 %v3423
        %3690 = vmatprep.subr.bf16.mxu0 %v3432
        %3691 = vmatpush1.bf16.msra.mxu0 %v3431
        %3692 = vmatprep.subr.bf16.mxu0 %v3440
        %3693 = vmatpush1.bf16.msra.mxu0 %v3439
        %3694 = vmatprep.subr.bf16.mxu0 %v3448
        %3695 = vmatpush1.bf16.msra.mxu0 %v3447
        %3696 = vmatprep.subr.bf16.mxu0 %v3456
        %3697 = vmatpush1.bf16.msra.mxu0 %v3455
        %3698 = vmatprep.subr.bf16.mxu0 %v3464
        %3699 = vmatpush1.bf16.msra.mxu0 %v3463
        %3700 = vmatprep.subr.bf16.mxu0 %v3472
        %3701 = vmatpush1.bf16.msra.mxu0 %v3471
        %3702 = vmatprep.subr.bf16.mxu0 %v3480
        %3703 = vmatpush1.bf16.msra.mxu0 %v3479
        %3704 = vmatprep.subr.bf16.mxu0 %v3488
        %3705 = vmatpush1.bf16.msra.mxu0 %v3487
        %3706 = vmatprep.subr.bf16.mxu0 %v3496
        %3707 = vmatpush1.bf16.msra.mxu0 %v3495
        %3708 = vmatprep.subr.bf16.mxu0 %v3504
        %3709 = vmatpush1.bf16.msra.mxu0 %v3503
        %3710 = vmatprep.mubr.bf16.mxu0 %v2868
        %3711 = vmatmul.mubr.bf16.gmra.mrb[0].mxu0 %v2867
        %v3712 = vpop.f32.mrb[0].mxu0
        %v3713 = vadd.f32 0.0, %v3712
        %v3714 = vpop.f32.mrb[0].mxu0
        %v3715 = vadd.f32 0.0, %v3714
        %v3716 = vpop.f32.mrb[0].mxu0
        %v3717 = vpop.f32.mrb[0].mxu0
        %3718 = vdwg.mxu0
        %3719 = vmatprep.subr.bf16.mxu0 %v3386
        %3720 = vmatpush1.bf16.msra.mxu0 %v3385
        %3721 = vmatprep.subr.bf16.mxu0 %v3394
        %3722 = vmatpush1.bf16.msra.mxu0 %v3393
        %3723 = vmatprep.subr.bf16.mxu0 %v3402
        %3724 = vmatpush1.bf16.msra.mxu0 %v3401
        %3725 = vmatprep.subr.bf16.mxu0 %v3410
        %3726 = vmatpush1.bf16.msra.mxu0 %v3409
        %3727 = vmatprep.subr.bf16.mxu0 %v3418
        %3728 = vmatpush1.bf16.msra.mxu0 %v3417
        %3729 = vmatprep.subr.bf16.mxu0 %v3426
        %3730 = vmatpush1.bf16.msra.mxu0 %v3425
        %3731 = vmatprep.subr.bf16.mxu0 %v3434
        %3732 = vmatpush1.bf16.msra.mxu0 %v3433
        %3733 = vmatprep.subr.bf16.mxu0 %v3442
        %3734 = vmatpush1.bf16.msra.mxu0 %v3441
        %3735 = vmatprep.subr.bf16.mxu0 %v3450
        %3736 = vmatpush1.bf16.msra.mxu0 %v3449
        %3737 = vmatprep.subr.bf16.mxu0 %v3458
        %3738 = vmatpush1.bf16.msra.mxu0 %v3457
        %3739 = vmatprep.subr.bf16.mxu0 %v3466
        %3740 = vmatpush1.bf16.msra.mxu0 %v3465
        %3741 = vmatprep.subr.bf16.mxu0 %v3474
        %3742 = vmatpush1.bf16.msra.mxu0 %v3473
        %3743 = vmatprep.subr.bf16.mxu0 %v3482
        %3744 = vmatpush1.bf16.msra.mxu0 %v3481
        %3745 = vmatprep.subr.bf16.mxu0 %v3490
        %3746 = vmatpush1.bf16.msra.mxu0 %v3489
        %3747 = vmatprep.subr.bf16.mxu0 %v3498
        %3748 = vmatpush1.bf16.msra.mxu0 %v3497
        %3749 = vmatprep.subr.bf16.mxu0 %v3506
        %3750 = vmatpush1.bf16.msra.mxu0 %v3505
        %3751 = vmatprep.mubr.bf16.mxu0 %v2868
        %3752 = vmatmul.mubr.bf16.gmra.mrb[0].mxu0 %v2867
        %v3753 = vpop.f32.mrb[0].mxu0
        %v3754 = vadd.f32 0.0, %v3753
        %v3755 = vpop.f32.mrb[0].mxu0
        %v3756 = vadd.f32 0.0, %v3755
        %v3757 = vpop.f32.mrb[0].mxu0
        %v3758 = vpop.f32.mrb[0].mxu0
        %3759 = vdwg.mxu0
        %3760 = vmatprep.subr.bf16.mxu0 %v3388
        %3761 = vmatpush1.bf16.msra.mxu0 %v3387
        %3762 = vmatprep.subr.bf16.mxu0 %v3396
        %3763 = vmatpush1.bf16.msra.mxu0 %v3395
        %3764 = vmatprep.subr.bf16.mxu0 %v3404
        %3765 = vmatpush1.bf16.msra.mxu0 %v3403
        %3766 = vmatprep.subr.bf16.mxu0 %v3412
        %3767 = vmatpush1.bf16.msra.mxu0 %v3411
        %3768 = vmatprep.subr.bf16.mxu0 %v3420
        %3769 = vmatpush1.bf16.msra.mxu0 %v3419
        %3770 = vmatprep.subr.bf16.mxu0 %v3428
        %3771 = vmatpush1.bf16.msra.mxu0 %v3427
        %3772 = vmatprep.subr.bf16.mxu0 %v3436
        %3773 = vmatpush1.bf16.msra.mxu0 %v3435
        %3774 = vmatprep.subr.bf16.mxu0 %v3444
        %3775 = vmatpush1.bf16.msra.mxu0 %v3443
        %3776 = vmatprep.subr.bf16.mxu0 %v3452
        %3777 = vmatpush1.bf16.msra.mxu0 %v3451
        %3778 = vmatprep.subr.bf16.mxu0 %v3460
        %3779 = vmatpush1.bf16.msra.mxu0 %v3459
        %3780 = vmatprep.subr.bf16.mxu0 %v3468
        %3781 = vmatpush1.bf16.msra.mxu0 %v3467
        %3782 = vmatprep.subr.bf16.mxu0 %v3476
        %3783 = vmatpush1.bf16.msra.mxu0 %v3475
        %3784 = vmatprep.subr.bf16.mxu0 %v3484
        %3785 = vmatpush1.bf16.msra.mxu0 %v3483
        %3786 = vmatprep.subr.bf16.mxu0 %v3492
        %3787 = vmatpush1.bf16.msra.mxu0 %v3491
        %3788 = vmatprep.subr.bf16.mxu0 %v3500
        %3789 = vmatpush1.bf16.msra.mxu0 %v3499
        %3790 = vmatprep.subr.bf16.mxu0 %v3508
        %3791 = vmatpush1.bf16.msra.mxu0 %v3507
        %3792 = vmatprep.mubr.bf16.mxu0 %v2868
        %3793 = vmatmul.mubr.bf16.gmra.mrb[0].mxu0 %v2867
        %v3794 = vpop.f32.mrb[0].mxu0
        %v3795 = vadd.f32 0.0, %v3794
        %v3796 = vpop.f32.mrb[0].mxu0
        %v3797 = vadd.f32 0.0, %v3796
        %v3798 = vpop.f32.mrb[0].mxu0
        %v3799 = vpop.f32.mrb[0].mxu0
        %3800 = vdwg.mxu0
        %v3809 = vcombine.low %v3672, %v3674
        %v3810 = vcombine.low %v3713, %v3715
        %v3812 = vunpack.c.l.s4 1983009808
        %v3813 = vunpack.c.0.s8 %v3812
        %v3814 = vlaneseq
        %v3815 = vshrl.u32 %v3814, 7
        %v3816 = vsub.s32 %v3813, %v3815
        %v3817 = vrot.slane %v3809, %v3816
        %v3819 = vunpack.c.l.s4 1983009808
        %v3820 = vunpack.c.0.s8 %v3819
        %v3821 = vlaneseq
        %v3822 = vshrl.u32 %v3821, 7
        %v3823 = vsub.s32 %v3820, %v3822
        %v3824 = vrot.slane %v3810, %v3823
        %v3825 = vcombine.low %v3817, %v3824
        %v3826 = vcombine.low %v3754, %v3756
        %v3827 = vcombine.low %v3795, %v3797
        %v3829 = vunpack.c.l.s4 1983009808
        %v3830 = vunpack.c.0.s8 %v3829
        %v3831 = vlaneseq
        %v3832 = vshrl.u32 %v3831, 7
        %v3833 = vsub.s32 %v3830, %v3832
        %v3834 = vrot.slane %v3826, %v3833
        %v3836 = vunpack.c.l.s4 1983009808
        %v3837 = vunpack.c.0.s8 %v3836
        %v3838 = vlaneseq
        %v3839 = vshrl.u32 %v3838, 7
        %v3840 = vsub.s32 %v3837, %v3839
        %v3841 = vrot.slane %v3827, %v3840
        %v3842 = vcombine.low %v3834, %v3841
        %v3845 = vadd.f32 %v2865, %v3825
        %v3846 = vadd.f32 %v2866, %v3842
        %3847 = vst [vmem:[#allocation2] sm:$0xff] %v3845
        %3848 = vst [vmem:[#allocation2 + $0x8] sm:$0xff] %v3846
        %p3849 = scmp.eq.s32.totalorder %s23, 7
        // Predicated region
        $region107: #{mnist_cnn_forward.5} parent=97 // pred_check
          %p3850 = pneg %p3849
        $region108: #{mnist_cnn_forward.5} parent=97 // pred_check_branch
          %3852 = sbr.rel (%p3850) target = $region110
        $region109: #{mnist_cnn_forward.5} parent=97 // pred_region
          %v3853 = vld [vmem:[#allocation2] sm:$0xff]
          %v3854 = vld [vmem:[#allocation2 + $0x8] sm:$0xff]
          %v3855 = vld [vmem:[%s4] sm:$0xff]
          %v3857 = vlaneseq
          %v3858 = vshrl.u32 %v3857, 7
          %v3859 = vsub.s32 0, %v3858
          %v3860 = vrot.slane %v3855, %v3859
          %v3861 = vlaneseq
          %v3862 = vshrl.u32 %v3861, 7
          %v3863 = vsub.s32 1, %v3862
          %v3864 = vrot.slane %v3855, %v3863
          %v3865 = vlaneseq
          %v3866 = vshrl.u32 %v3865, 7
          %v3867 = vsub.s32 2, %v3866
          %v3868 = vrot.slane %v3855, %v3867
          %v3869 = vlaneseq
          %v3870 = vshrl.u32 %v3869, 7
          %v3871 = vsub.s32 3, %v3870
          %v3872 = vrot.slane %v3855, %v3871
          %v3873 = vlaneseq
          %v3874 = vshrl.u32 %v3873, 7
          %v3875 = vsub.s32 4, %v3874
          %v3876 = vrot.slane %v3855, %v3875
          %v3877 = vlaneseq
          %v3878 = vshrl.u32 %v3877, 7
          %v3879 = vsub.s32 5, %v3878
          %v3880 = vrot.slane %v3855, %v3879
          %v3881 = vlaneseq
          %v3882 = vshrl.u32 %v3881, 7
          %v3883 = vsub.s32 6, %v3882
          %v3884 = vrot.slane %v3855, %v3883
          %v3885 = vlaneseq
          %v3886 = vshrl.u32 %v3885, 7
          %v3887 = vsub.s32 7, %v3886
          %v3888 = vrot.slane %v3855, %v3887
          %v3889 = vcombine.low %v3860, %v3864
          %v3890 = vcombine.low %v3868, %v3872
          %v3892 = vunpack.c.l.s4 1983009808
          %v3893 = vunpack.c.0.s8 %v3892
          %v3894 = vlaneseq
          %v3895 = vshrl.u32 %v3894, 7
          %v3896 = vsub.s32 %v3893, %v3895
          %v3897 = vrot.slane %v3889, %v3896
          %v3899 = vunpack.c.l.s4 1983009808
          %v3900 = vunpack.c.0.s8 %v3899
          %v3901 = vlaneseq
          %v3902 = vshrl.u32 %v3901, 7
          %v3903 = vsub.s32 %v3900, %v3902
          %v3904 = vrot.slane %v3890, %v3903
          %v3905 = vcombine.low %v3897, %v3904
          %v3906 = vcombine.low %v3876, %v3880
          %v3907 = vcombine.low %v3884, %v3888
          %v3909 = vunpack.c.l.s4 1983009808
          %v3910 = vunpack.c.0.s8 %v3909
          %v3911 = vlaneseq
          %v3912 = vshrl.u32 %v3911, 7
          %v3913 = vsub.s32 %v3910, %v3912
          %v3914 = vrot.slane %v3906, %v3913
          %v3916 = vunpack.c.l.s4 1983009808
          %v3917 = vunpack.c.0.s8 %v3916
          %v3918 = vlaneseq
          %v3919 = vshrl.u32 %v3918, 7
          %v3920 = vsub.s32 %v3917, %v3919
          %v3921 = vrot.slane %v3907, %v3920
          %v3922 = vcombine.low %v3914, %v3921
          %v3925 = vadd.f32 %v3853, %v3905
          %v3926 = vadd.f32 %v3854, %v3922
          %v3927 = vmax.f32 %v3925, 0.0
          %v3928 = vmax.f32 %v3926, 0.0
          %v3931 = vcombine.high %v3927, %v3927
          %v3933 = vunpack.c.l.s4 1983009808
          %v3934 = vunpack.c.0.s8 %v3933
          %v3935 = vlaneseq
          %v3936 = vshrl.u32 %v3935, 7
          %v3937 = vsub.s32 %v3934, %v3936
          %v3938 = vrot.slane %v3927, %v3937
          %v3940 = vunpack.c.l.s4 1983009808
          %v3941 = vunpack.c.0.s8 %v3940
          %v3942 = vlaneseq
          %v3943 = vshrl.u32 %v3942, 7
          %v3944 = vsub.s32 %v3941, %v3943
          %v3945 = vrot.slane %v3931, %v3944
          %v3946 = vcombine.high %v3938, %v3938
          %v3947 = vcombine.high %v3945, %v3945
          %v3948 = vcombine.high %v3928, %v3928
          %v3950 = vunpack.c.l.s4 1983009808
          %v3951 = vunpack.c.0.s8 %v3950
          %v3952 = vlaneseq
          %v3953 = vshrl.u32 %v3952, 7
          %v3954 = vsub.s32 %v3951, %v3953
          %v3955 = vrot.slane %v3928, %v3954
          %v3957 = vunpack.c.l.s4 1983009808
          %v3958 = vunpack.c.0.s8 %v3957
          %v3959 = vlaneseq
          %v3960 = vshrl.u32 %v3959, 7
          %v3961 = vsub.s32 %v3958, %v3960
          %v3962 = vrot.slane %v3948, %v3961
          %v3963 = vcombine.high %v3955, %v3955
          %v3964 = vcombine.high %v3962, %v3962
          %v3973 = vpack.c.bf16 %v3938, %v3938
          %v3974 = vpack.c.bf16 %v3946, %v3946
          %v3975 = vpack.c.bf16 %v3945, %v3945
          %v3976 = vpack.c.bf16 %v3947, %v3947
          %v3977 = vpack.c.bf16 %v3955, %v3955
          %v3978 = vpack.c.bf16 %v3963, %v3963
          %v3979 = vpack.c.bf16 %v3962, %v3962
          %v3980 = vpack.c.bf16 %v3964, %v3964
          %v3981 = vld [vmem:[%s5] sm:$0xff]
          %v3982 = vld [vmem:[%s5 + $0x8] sm:$0xff]
          %v3983 = vld [vmem:[%s5 + $0x10] sm:$0xff]
          %v3984 = vld [vmem:[%s5 + $0x18] sm:$0xff]
          %v3985 = vld [vmem:[%s5 + $0x20] sm:$0xff]
          %v3986 = vld [vmem:[%s5 + $0x28] sm:$0xff]
          %v3987 = vld [vmem:[%s5 + $0x30] sm:$0xff]
          %v3988 = vld [vmem:[%s5 + $0x38] sm:$0xff]
          %v3989 = vld [vmem:[%s5 + $0x40] sm:$0xff]
          %v3990 = vld [vmem:[%s5 + $0x48] sm:$0xff]
          %v3991 = vld [vmem:[%s5 + $0x50] sm:$0xff]
          %v3992 = vld [vmem:[%s5 + $0x58] sm:$0xff]
          %v3993 = vld [vmem:[%s5 + $0x60] sm:$0xff]
          %v3994 = vld [vmem:[%s5 + $0x68] sm:$0xff]
          %v3995 = vld [vmem:[%s5 + $0x70] sm:$0xff]
          %v3996 = vld [vmem:[%s5 + $0x78] sm:$0xff]
          %v3997 = vld [vmem:[%s5 + $0x80] sm:$0xff]
          %v3998 = vld [vmem:[%s5 + $0x88] sm:$0xff]
          %v3999 = vld [vmem:[%s5 + $0x90] sm:$0xff]
          %v4000 = vld [vmem:[%s5 + $0x98] sm:$0xff]
          %v4001 = vld [vmem:[%s5 + $0xa0] sm:$0xff]
          %v4002 = vld [vmem:[%s5 + $0xa8] sm:$0xff]
          %v4003 = vld [vmem:[%s5 + $0xb0] sm:$0xff]
          %v4004 = vld [vmem:[%s5 + $0xb8] sm:$0xff]
          %v4005 = vld [vmem:[%s5 + $0xc0] sm:$0xff]
          %v4006 = vld [vmem:[%s5 + $0xc8] sm:$0xff]
          %v4007 = vld [vmem:[%s5 + $0xd0] sm:$0xff]
          %v4008 = vld [vmem:[%s5 + $0xd8] sm:$0xff]
          %v4009 = vld [vmem:[%s5 + $0xe0] sm:$0xff]
          %v4010 = vld [vmem:[%s5 + $0xe8] sm:$0xff]
          %v4011 = vld [vmem:[%s5 + $0xf0] sm:$0xff]
          %v4012 = vld [vmem:[%s5 + $0xf8] sm:$0xff]
          %v4013 = vld [vmem:[%s5 + $0x100] sm:$0xff]
          %v4014 = vld [vmem:[%s5 + $0x108] sm:$0xff]
          %v4015 = vld [vmem:[%s5 + $0x110] sm:$0xff]
          %v4016 = vld [vmem:[%s5 + $0x118] sm:$0xff]
          %v4017 = vld [vmem:[%s5 + $0x120] sm:$0xff]
          %v4018 = vld [vmem:[%s5 + $0x128] sm:$0xff]
          %v4019 = vld [vmem:[%s5 + $0x130] sm:$0xff]
          %v4020 = vld [vmem:[%s5 + $0x138] sm:$0xff]
          %v4021 = vld [vmem:[%s5 + $0x140] sm:$0xff]
          %v4022 = vld [vmem:[%s5 + $0x148] sm:$0xff]
          %v4023 = vld [vmem:[%s5 + $0x150] sm:$0xff]
          %v4024 = vld [vmem:[%s5 + $0x158] sm:$0xff]
          %v4025 = vld [vmem:[%s5 + $0x160] sm:$0xff]
          %v4026 = vld [vmem:[%s5 + $0x168] sm:$0xff]
          %v4027 = vld [vmem:[%s5 + $0x170] sm:$0xff]
          %v4028 = vld [vmem:[%s5 + $0x178] sm:$0xff]
          %v4029 = vld [vmem:[%s5 + $0x180] sm:$0xff]
          %v4030 = vld [vmem:[%s5 + $0x188] sm:$0xff]
          %v4031 = vld [vmem:[%s5 + $0x190] sm:$0xff]
          %v4032 = vld [vmem:[%s5 + $0x198] sm:$0xff]
          %v4033 = vld [vmem:[%s5 + $0x1a0] sm:$0xff]
          %v4034 = vld [vmem:[%s5 + $0x1a8] sm:$0xff]
          %v4035 = vld [vmem:[%s5 + $0x1b0] sm:$0xff]
          %v4036 = vld [vmem:[%s5 + $0x1b8] sm:$0xff]
          %v4037 = vld [vmem:[%s5 + $0x1c0] sm:$0xff]
          %v4038 = vld [vmem:[%s5 + $0x1c8] sm:$0xff]
          %v4039 = vld [vmem:[%s5 + $0x1d0] sm:$0xff]
          %v4040 = vld [vmem:[%s5 + $0x1d8] sm:$0xff]
          %v4041 = vld [vmem:[%s5 + $0x1e0] sm:$0xff]
          %v4042 = vld [vmem:[%s5 + $0x1e8] sm:$0xff]
          %v4043 = vld [vmem:[%s5 + $0x1f0] sm:$0xff]
          %v4044 = vld [vmem:[%s5 + $0x1f8] sm:$0xff]
          %v4045 = vld [vmem:[%s5 + $0x200] sm:$0xff]
          %v4046 = vld [vmem:[%s5 + $0x208] sm:$0xff]
          %v4047 = vld [vmem:[%s5 + $0x210] sm:$0xff]
          %v4048 = vld [vmem:[%s5 + $0x218] sm:$0xff]
          %v4049 = vld [vmem:[%s5 + $0x220] sm:$0xff]
          %v4050 = vld [vmem:[%s5 + $0x228] sm:$0xff]
          %v4051 = vld [vmem:[%s5 + $0x230] sm:$0xff]
          %v4052 = vld [vmem:[%s5 + $0x238] sm:$0xff]
          %v4053 = vld [vmem:[%s5 + $0x240] sm:$0xff]
          %v4054 = vld [vmem:[%s5 + $0x248] sm:$0xff]
          %v4055 = vld [vmem:[%s5 + $0x250] sm:$0xff]
          %v4056 = vld [vmem:[%s5 + $0x258] sm:$0xff]
          %v4057 = vld [vmem:[%s5 + $0x260] sm:$0xff]
          %v4058 = vld [vmem:[%s5 + $0x268] sm:$0xff]
          %v4059 = vld [vmem:[%s5 + $0x270] sm:$0xff]
          %v4060 = vld [vmem:[%s5 + $0x278] sm:$0xff]
          %v4061 = vld [vmem:[%s5 + $0x280] sm:$0xff]
          %v4062 = vld [vmem:[%s5 + $0x288] sm:$0xff]
          %v4063 = vld [vmem:[%s5 + $0x290] sm:$0xff]
          %v4064 = vld [vmem:[%s5 + $0x298] sm:$0xff]
          %v4065 = vld [vmem:[%s5 + $0x2a0] sm:$0xff]
          %v4066 = vld [vmem:[%s5 + $0x2a8] sm:$0xff]
          %v4067 = vld [vmem:[%s5 + $0x2b0] sm:$0xff]
          %v4068 = vld [vmem:[%s5 + $0x2b8] sm:$0xff]
          %v4069 = vld [vmem:[%s5 + $0x2c0] sm:$0xff]
          %v4070 = vld [vmem:[%s5 + $0x2c8] sm:$0xff]
          %v4071 = vld [vmem:[%s5 + $0x2d0] sm:$0xff]
          %v4072 = vld [vmem:[%s5 + $0x2d8] sm:$0xff]
          %v4073 = vld [vmem:[%s5 + $0x2e0] sm:$0xff]
          %v4074 = vld [vmem:[%s5 + $0x2e8] sm:$0xff]
          %v4075 = vld [vmem:[%s5 + $0x2f0] sm:$0xff]
          %v4076 = vld [vmem:[%s5 + $0x2f8] sm:$0xff]
          %v4077 = vld [vmem:[%s5 + $0x300] sm:$0xff]
          %v4078 = vld [vmem:[%s5 + $0x308] sm:$0xff]
          %v4079 = vld [vmem:[%s5 + $0x310] sm:$0xff]
          %v4080 = vld [vmem:[%s5 + $0x318] sm:$0xff]
          %v4081 = vld [vmem:[%s5 + $0x320] sm:$0xff]
          %v4082 = vld [vmem:[%s5 + $0x328] sm:$0xff]
          %v4083 = vld [vmem:[%s5 + $0x330] sm:$0xff]
          %v4084 = vld [vmem:[%s5 + $0x338] sm:$0xff]
          %v4085 = vld [vmem:[%s5 + $0x340] sm:$0xff]
          %v4086 = vld [vmem:[%s5 + $0x348] sm:$0xff]
          %v4087 = vld [vmem:[%s5 + $0x350] sm:$0xff]
          %v4088 = vld [vmem:[%s5 + $0x358] sm:$0xff]
          %v4089 = vld [vmem:[%s5 + $0x360] sm:$0xff]
          %v4090 = vld [vmem:[%s5 + $0x368] sm:$0xff]
          %v4091 = vld [vmem:[%s5 + $0x370] sm:$0xff]
          %v4092 = vld [vmem:[%s5 + $0x378] sm:$0xff]
          %v4093 = vld [vmem:[%s5 + $0x380] sm:$0xff]
          %v4094 = vld [vmem:[%s5 + $0x388] sm:$0xff]
          %v4095 = vld [vmem:[%s5 + $0x390] sm:$0xff]
          %v4096 = vld [vmem:[%s5 + $0x398] sm:$0xff]
          %v4097 = vld [vmem:[%s5 + $0x3a0] sm:$0xff]
          %v4098 = vld [vmem:[%s5 + $0x3a8] sm:$0xff]
          %v4099 = vld [vmem:[%s5 + $0x3b0] sm:$0xff]
          %v4100 = vld [vmem:[%s5 + $0x3b8] sm:$0xff]
          %v4101 = vld [vmem:[%s5 + $0x3c0] sm:$0xff]
          %v4102 = vld [vmem:[%s5 + $0x3c8] sm:$0xff]
          %v4103 = vld [vmem:[%s5 + $0x3d0] sm:$0xff]
          %v4104 = vld [vmem:[%s5 + $0x3d8] sm:$0xff]
          %v4105 = vld [vmem:[%s5 + $0x3e0] sm:$0xff]
          %v4106 = vld [vmem:[%s5 + $0x3e8] sm:$0xff]
          %v4107 = vld [vmem:[%s5 + $0x3f0] sm:$0xff]
          %v4108 = vld [vmem:[%s5 + $0x3f8] sm:$0xff]
          %v4109 = vld [vmem:[%s5 + $0x400] sm:$0xff]
          %v4110 = vld [vmem:[%s5 + $0x408] sm:$0xff]
          %v4111 = vld [vmem:[%s5 + $0x410] sm:$0xff]
          %v4112 = vld [vmem:[%s5 + $0x418] sm:$0xff]
          %v4113 = vld [vmem:[%s5 + $0x420] sm:$0xff]
          %v4114 = vld [vmem:[%s5 + $0x428] sm:$0xff]
          %v4115 = vld [vmem:[%s5 + $0x430] sm:$0xff]
          %v4116 = vld [vmem:[%s5 + $0x438] sm:$0xff]
          %v4117 = vld [vmem:[%s5 + $0x440] sm:$0xff]
          %v4118 = vld [vmem:[%s5 + $0x448] sm:$0xff]
          %v4119 = vld [vmem:[%s5 + $0x450] sm:$0xff]
          %v4120 = vld [vmem:[%s5 + $0x458] sm:$0xff]
          %v4121 = vld [vmem:[%s5 + $0x460] sm:$0xff]
          %v4122 = vld [vmem:[%s5 + $0x468] sm:$0xff]
          %v4123 = vld [vmem:[%s5 + $0x470] sm:$0xff]
          %v4124 = vld [vmem:[%s5 + $0x478] sm:$0xff]
          %v4125 = vld [vmem:[%s5 + $0x480] sm:$0xff]
          %v4126 = vld [vmem:[%s5 + $0x488] sm:$0xff]
          %v4127 = vld [vmem:[%s5 + $0x490] sm:$0xff]
          %v4128 = vld [vmem:[%s5 + $0x498] sm:$0xff]
          %v4129 = vld [vmem:[%s5 + $0x4a0] sm:$0xff]
          %v4130 = vld [vmem:[%s5 + $0x4a8] sm:$0xff]
          %v4131 = vld [vmem:[%s5 + $0x4b0] sm:$0xff]
          %v4132 = vld [vmem:[%s5 + $0x4b8] sm:$0xff]
          %v4133 = vld [vmem:[%s5 + $0x4c0] sm:$0xff]
          %v4134 = vld [vmem:[%s5 + $0x4c8] sm:$0xff]
          %v4135 = vld [vmem:[%s5 + $0x4d0] sm:$0xff]
          %v4136 = vld [vmem:[%s5 + $0x4d8] sm:$0xff]
          %v4137 = vld [vmem:[%s5 + $0x4e0] sm:$0xff]
          %v4138 = vld [vmem:[%s5 + $0x4e8] sm:$0xff]
          %v4139 = vld [vmem:[%s5 + $0x4f0] sm:$0xff]
          %v4140 = vld [vmem:[%s5 + $0x4f8] sm:$0xff]
          %v4141 = vld [vmem:[%s5 + $0x500] sm:$0xff]
          %v4142 = vld [vmem:[%s5 + $0x508] sm:$0xff]
          %v4143 = vld [vmem:[%s5 + $0x510] sm:$0xff]
          %v4144 = vld [vmem:[%s5 + $0x518] sm:$0xff]
          %v4145 = vld [vmem:[%s5 + $0x520] sm:$0xff]
          %v4146 = vld [vmem:[%s5 + $0x528] sm:$0xff]
          %v4147 = vld [vmem:[%s5 + $0x530] sm:$0xff]
          %v4148 = vld [vmem:[%s5 + $0x538] sm:$0xff]
          %v4149 = vld [vmem:[%s5 + $0x540] sm:$0xff]
          %v4150 = vld [vmem:[%s5 + $0x548] sm:$0xff]
          %v4151 = vld [vmem:[%s5 + $0x550] sm:$0xff]
          %v4152 = vld [vmem:[%s5 + $0x558] sm:$0xff]
          %v4153 = vld [vmem:[%s5 + $0x560] sm:$0xff]
          %v4154 = vld [vmem:[%s5 + $0x568] sm:$0xff]
          %v4155 = vld [vmem:[%s5 + $0x570] sm:$0xff]
          %v4156 = vld [vmem:[%s5 + $0x578] sm:$0xff]
          %v4157 = vld [vmem:[%s5 + $0x580] sm:$0xff]
          %v4158 = vld [vmem:[%s5 + $0x588] sm:$0xff]
          %v4159 = vld [vmem:[%s5 + $0x590] sm:$0xff]
          %v4160 = vld [vmem:[%s5 + $0x598] sm:$0xff]
          %v4161 = vld [vmem:[%s5 + $0x5a0] sm:$0xff]
          %v4162 = vld [vmem:[%s5 + $0x5a8] sm:$0xff]
          %v4163 = vld [vmem:[%s5 + $0x5b0] sm:$0xff]
          %v4164 = vld [vmem:[%s5 + $0x5b8] sm:$0xff]
          %v4165 = vld [vmem:[%s5 + $0x5c0] sm:$0xff]
          %v4166 = vld [vmem:[%s5 + $0x5c8] sm:$0xff]
          %v4167 = vld [vmem:[%s5 + $0x5d0] sm:$0xff]
          %v4168 = vld [vmem:[%s5 + $0x5d8] sm:$0xff]
          %v4169 = vld [vmem:[%s5 + $0x5e0] sm:$0xff]
          %v4170 = vld [vmem:[%s5 + $0x5e8] sm:$0xff]
          %v4171 = vld [vmem:[%s5 + $0x5f0] sm:$0xff]
          %v4172 = vld [vmem:[%s5 + $0x5f8] sm:$0xff]
          %v4173 = vld [vmem:[%s5 + $0x600] sm:$0xff]
          %v4174 = vld [vmem:[%s5 + $0x608] sm:$0xff]
          %v4175 = vld [vmem:[%s5 + $0x610] sm:$0xff]
          %v4176 = vld [vmem:[%s5 + $0x618] sm:$0xff]
          %v4177 = vld [vmem:[%s5 + $0x620] sm:$0xff]
          %v4178 = vld [vmem:[%s5 + $0x628] sm:$0xff]
          %v4179 = vld [vmem:[%s5 + $0x630] sm:$0xff]
          %v4180 = vld [vmem:[%s5 + $0x638] sm:$0xff]
          %v4181 = vld [vmem:[%s5 + $0x640] sm:$0xff]
          %v4182 = vld [vmem:[%s5 + $0x648] sm:$0xff]
          %v4183 = vld [vmem:[%s5 + $0x650] sm:$0xff]
          %v4184 = vld [vmem:[%s5 + $0x658] sm:$0xff]
          %v4185 = vld [vmem:[%s5 + $0x660] sm:$0xff]
          %v4186 = vld [vmem:[%s5 + $0x668] sm:$0xff]
          %v4187 = vld [vmem:[%s5 + $0x670] sm:$0xff]
          %v4188 = vld [vmem:[%s5 + $0x678] sm:$0xff]
          %v4189 = vld [vmem:[%s5 + $0x680] sm:$0xff]
          %v4190 = vld [vmem:[%s5 + $0x688] sm:$0xff]
          %v4191 = vld [vmem:[%s5 + $0x690] sm:$0xff]
          %v4192 = vld [vmem:[%s5 + $0x698] sm:$0xff]
          %v4193 = vld [vmem:[%s5 + $0x6a0] sm:$0xff]
          %v4194 = vld [vmem:[%s5 + $0x6a8] sm:$0xff]
          %v4195 = vld [vmem:[%s5 + $0x6b0] sm:$0xff]
          %v4196 = vld [vmem:[%s5 + $0x6b8] sm:$0xff]
          %v4197 = vld [vmem:[%s5 + $0x6c0] sm:$0xff]
          %v4198 = vld [vmem:[%s5 + $0x6c8] sm:$0xff]
          %v4199 = vld [vmem:[%s5 + $0x6d0] sm:$0xff]
          %v4200 = vld [vmem:[%s5 + $0x6d8] sm:$0xff]
          %v4201 = vld [vmem:[%s5 + $0x6e0] sm:$0xff]
          %v4202 = vld [vmem:[%s5 + $0x6e8] sm:$0xff]
          %v4203 = vld [vmem:[%s5 + $0x6f0] sm:$0xff]
          %v4204 = vld [vmem:[%s5 + $0x6f8] sm:$0xff]
          %v4205 = vld [vmem:[%s5 + $0x700] sm:$0xff]
          %v4206 = vld [vmem:[%s5 + $0x708] sm:$0xff]
          %v4207 = vld [vmem:[%s5 + $0x710] sm:$0xff]
          %v4208 = vld [vmem:[%s5 + $0x718] sm:$0xff]
          %v4209 = vld [vmem:[%s5 + $0x720] sm:$0xff]
          %v4210 = vld [vmem:[%s5 + $0x728] sm:$0xff]
          %v4211 = vld [vmem:[%s5 + $0x730] sm:$0xff]
          %v4212 = vld [vmem:[%s5 + $0x738] sm:$0xff]
          %v4213 = vld [vmem:[%s5 + $0x740] sm:$0xff]
          %v4214 = vld [vmem:[%s5 + $0x748] sm:$0xff]
          %v4215 = vld [vmem:[%s5 + $0x750] sm:$0xff]
          %v4216 = vld [vmem:[%s5 + $0x758] sm:$0xff]
          %v4217 = vld [vmem:[%s5 + $0x760] sm:$0xff]
          %v4218 = vld [vmem:[%s5 + $0x768] sm:$0xff]
          %v4219 = vld [vmem:[%s5 + $0x770] sm:$0xff]
          %v4220 = vld [vmem:[%s5 + $0x778] sm:$0xff]
          %v4221 = vld [vmem:[%s5 + $0x780] sm:$0xff]
          %v4222 = vld [vmem:[%s5 + $0x788] sm:$0xff]
          %v4223 = vld [vmem:[%s5 + $0x790] sm:$0xff]
          %v4224 = vld [vmem:[%s5 + $0x798] sm:$0xff]
          %v4225 = vld [vmem:[%s5 + $0x7a0] sm:$0xff]
          %v4226 = vld [vmem:[%s5 + $0x7a8] sm:$0xff]
          %v4227 = vld [vmem:[%s5 + $0x7b0] sm:$0xff]
          %v4228 = vld [vmem:[%s5 + $0x7b8] sm:$0xff]
          %v4229 = vld [vmem:[%s5 + $0x7c0] sm:$0xff]
          %v4230 = vld [vmem:[%s5 + $0x7c8] sm:$0xff]
          %v4231 = vld [vmem:[%s5 + $0x7d0] sm:$0xff]
          %v4232 = vld [vmem:[%s5 + $0x7d8] sm:$0xff]
          %v4233 = vld [vmem:[%s5 + $0x7e0] sm:$0xff]
          %v4234 = vld [vmem:[%s5 + $0x7e8] sm:$0xff]
          %v4235 = vld [vmem:[%s5 + $0x7f0] sm:$0xff]
          %v4236 = vld [vmem:[%s5 + $0x7f8] sm:$0xff]
          %v4237 = vld [vmem:[%s6] sm:$0xf]
          %v4239 = vlaneseq
          %v4240 = vshrl.u32 %v4239, 7
          %v4241 = vsub.s32 0, %v4240
          %v4242 = vrot.slane %v4237, %v4241
          %v4243 = vlaneseq
          %v4244 = vshrl.u32 %v4243, 7
          %v4245 = vsub.s32 1, %v4244
          %v4246 = vrot.slane %v4237, %v4245
          %v4247 = vlaneseq
          %v4248 = vshrl.u32 %v4247, 7
          %v4249 = vsub.s32 2, %v4248
          %v4250 = vrot.slane %v4237, %v4249
          %v4251 = vlaneseq
          %v4252 = vshrl.u32 %v4251, 7
          %v4253 = vsub.s32 3, %v4252
          %v4254 = vrot.slane %v4237, %v4253
          %v4515 = vunpack.c.l.b16 %v3981
          %v4516 = vunpack.c.h.b16 %v3981
          %v4517 = vunpack.c.l.b16 %v3982
          %v4518 = vunpack.c.h.b16 %v3982
          %v4519 = vunpack.c.l.b16 %v3983
          %v4520 = vunpack.c.h.b16 %v3983
          %v4521 = vunpack.c.l.b16 %v3984
          %v4522 = vunpack.c.h.b16 %v3984
          %v4523 = vunpack.c.l.b16 %v3985
          %v4524 = vunpack.c.h.b16 %v3985
          %v4525 = vunpack.c.l.b16 %v3986
          %v4526 = vunpack.c.h.b16 %v3986
          %v4527 = vunpack.c.l.b16 %v3987
          %v4528 = vunpack.c.h.b16 %v3987
          %v4529 = vunpack.c.l.b16 %v3988
          %v4530 = vunpack.c.h.b16 %v3988
          %v4531 = vunpack.c.l.b16 %v3989
          %v4532 = vunpack.c.h.b16 %v3989
          %v4533 = vunpack.c.l.b16 %v3990
          %v4534 = vunpack.c.h.b16 %v3990
          %v4535 = vunpack.c.l.b16 %v3991
          %v4536 = vunpack.c.h.b16 %v3991
          %v4537 = vunpack.c.l.b16 %v3992
          %v4538 = vunpack.c.h.b16 %v3992
          %v4539 = vunpack.c.l.b16 %v3993
          %v4540 = vunpack.c.h.b16 %v3993
          %v4541 = vunpack.c.l.b16 %v3994
          %v4542 = vunpack.c.h.b16 %v3994
          %v4543 = vunpack.c.l.b16 %v3995
          %v4544 = vunpack.c.h.b16 %v3995
          %v4545 = vunpack.c.l.b16 %v3996
          %v4546 = vunpack.c.h.b16 %v3996
          %v4547 = vunpack.c.l.b16 %v3997
          %v4548 = vunpack.c.h.b16 %v3997
          %v4549 = vunpack.c.l.b16 %v3998
          %v4550 = vunpack.c.h.b16 %v3998
          %v4551 = vunpack.c.l.b16 %v3999
          %v4552 = vunpack.c.h.b16 %v3999
          %v4553 = vunpack.c.l.b16 %v4000
          %v4554 = vunpack.c.h.b16 %v4000
          %v4555 = vunpack.c.l.b16 %v4001
          %v4556 = vunpack.c.h.b16 %v4001
          %v4557 = vunpack.c.l.b16 %v4002
          %v4558 = vunpack.c.h.b16 %v4002
          %v4559 = vunpack.c.l.b16 %v4003
          %v4560 = vunpack.c.h.b16 %v4003
          %v4561 = vunpack.c.l.b16 %v4004
          %v4562 = vunpack.c.h.b16 %v4004
          %v4563 = vunpack.c.l.b16 %v4005
          %v4564 = vunpack.c.h.b16 %v4005
          %v4565 = vunpack.c.l.b16 %v4006
          %v4566 = vunpack.c.h.b16 %v4006
          %v4567 = vunpack.c.l.b16 %v4007
          %v4568 = vunpack.c.h.b16 %v4007
          %v4569 = vunpack.c.l.b16 %v4008
          %v4570 = vunpack.c.h.b16 %v4008
          %v4571 = vunpack.c.l.b16 %v4009
          %v4572 = vunpack.c.h.b16 %v4009
          %v4573 = vunpack.c.l.b16 %v4010
          %v4574 = vunpack.c.h.b16 %v4010
          %v4575 = vunpack.c.l.b16 %v4011
          %v4576 = vunpack.c.h.b16 %v4011
          %v4577 = vunpack.c.l.b16 %v4012
          %v4578 = vunpack.c.h.b16 %v4012
          %v4579 = vunpack.c.l.b16 %v4013
          %v4580 = vunpack.c.h.b16 %v4013
          %v4581 = vunpack.c.l.b16 %v4014
          %v4582 = vunpack.c.h.b16 %v4014
          %v4583 = vunpack.c.l.b16 %v4015
          %v4584 = vunpack.c.h.b16 %v4015
          %v4585 = vunpack.c.l.b16 %v4016
          %v4586 = vunpack.c.h.b16 %v4016
          %v4587 = vunpack.c.l.b16 %v4017
          %v4588 = vunpack.c.h.b16 %v4017
          %v4589 = vunpack.c.l.b16 %v4018
          %v4590 = vunpack.c.h.b16 %v4018
          %v4591 = vunpack.c.l.b16 %v4019
          %v4592 = vunpack.c.h.b16 %v4019
          %v4593 = vunpack.c.l.b16 %v4020
          %v4594 = vunpack.c.h.b16 %v4020
          %v4595 = vunpack.c.l.b16 %v4021
          %v4596 = vunpack.c.h.b16 %v4021
          %v4597 = vunpack.c.l.b16 %v4022
          %v4598 = vunpack.c.h.b16 %v4022
          %v4599 = vunpack.c.l.b16 %v4023
          %v4600 = vunpack.c.h.b16 %v4023
          %v4601 = vunpack.c.l.b16 %v4024
          %v4602 = vunpack.c.h.b16 %v4024
          %v4603 = vunpack.c.l.b16 %v4025
          %v4604 = vunpack.c.h.b16 %v4025
          %v4605 = vunpack.c.l.b16 %v4026
          %v4606 = vunpack.c.h.b16 %v4026
          %v4607 = vunpack.c.l.b16 %v4027
          %v4608 = vunpack.c.h.b16 %v4027
          %v4609 = vunpack.c.l.b16 %v4028
          %v4610 = vunpack.c.h.b16 %v4028
          %v4611 = vunpack.c.l.b16 %v4029
          %v4612 = vunpack.c.h.b16 %v4029
          %v4613 = vunpack.c.l.b16 %v4030
          %v4614 = vunpack.c.h.b16 %v4030
          %v4615 = vunpack.c.l.b16 %v4031
          %v4616 = vunpack.c.h.b16 %v4031
          %v4617 = vunpack.c.l.b16 %v4032
          %v4618 = vunpack.c.h.b16 %v4032
          %v4619 = vunpack.c.l.b16 %v4033
          %v4620 = vunpack.c.h.b16 %v4033
          %v4621 = vunpack.c.l.b16 %v4034
          %v4622 = vunpack.c.h.b16 %v4034
          %v4623 = vunpack.c.l.b16 %v4035
          %v4624 = vunpack.c.h.b16 %v4035
          %v4625 = vunpack.c.l.b16 %v4036
          %v4626 = vunpack.c.h.b16 %v4036
          %v4627 = vunpack.c.l.b16 %v4037
          %v4628 = vunpack.c.h.b16 %v4037
          %v4629 = vunpack.c.l.b16 %v4038
          %v4630 = vunpack.c.h.b16 %v4038
          %v4631 = vunpack.c.l.b16 %v4039
          %v4632 = vunpack.c.h.b16 %v4039
          %v4633 = vunpack.c.l.b16 %v4040
          %v4634 = vunpack.c.h.b16 %v4040
          %v4635 = vunpack.c.l.b16 %v4041
          %v4636 = vunpack.c.h.b16 %v4041
          %v4637 = vunpack.c.l.b16 %v4042
          %v4638 = vunpack.c.h.b16 %v4042
          %v4639 = vunpack.c.l.b16 %v4043
          %v4640 = vunpack.c.h.b16 %v4043
          %v4641 = vunpack.c.l.b16 %v4044
          %v4642 = vunpack.c.h.b16 %v4044
          %v4643 = vunpack.c.l.b16 %v4045
          %v4644 = vunpack.c.h.b16 %v4045
          %v4645 = vunpack.c.l.b16 %v4046
          %v4646 = vunpack.c.h.b16 %v4046
          %v4647 = vunpack.c.l.b16 %v4047
          %v4648 = vunpack.c.h.b16 %v4047
          %v4649 = vunpack.c.l.b16 %v4048
          %v4650 = vunpack.c.h.b16 %v4048
          %v4651 = vunpack.c.l.b16 %v4049
          %v4652 = vunpack.c.h.b16 %v4049
          %v4653 = vunpack.c.l.b16 %v4050
          %v4654 = vunpack.c.h.b16 %v4050
          %v4655 = vunpack.c.l.b16 %v4051
          %v4656 = vunpack.c.h.b16 %v4051
          %v4657 = vunpack.c.l.b16 %v4052
          %v4658 = vunpack.c.h.b16 %v4052
          %v4659 = vunpack.c.l.b16 %v4053
          %v4660 = vunpack.c.h.b16 %v4053
          %v4661 = vunpack.c.l.b16 %v4054
          %v4662 = vunpack.c.h.b16 %v4054
          %v4663 = vunpack.c.l.b16 %v4055
          %v4664 = vunpack.c.h.b16 %v4055
          %v4665 = vunpack.c.l.b16 %v4056
          %v4666 = vunpack.c.h.b16 %v4056
          %v4667 = vunpack.c.l.b16 %v4057
          %v4668 = vunpack.c.h.b16 %v4057
          %v4669 = vunpack.c.l.b16 %v4058
          %v4670 = vunpack.c.h.b16 %v4058
          %v4671 = vunpack.c.l.b16 %v4059
          %v4672 = vunpack.c.h.b16 %v4059
          %v4673 = vunpack.c.l.b16 %v4060
          %v4674 = vunpack.c.h.b16 %v4060
          %v4675 = vunpack.c.l.b16 %v4061
          %v4676 = vunpack.c.h.b16 %v4061
          %v4677 = vunpack.c.l.b16 %v4062
          %v4678 = vunpack.c.h.b16 %v4062
          %v4679 = vunpack.c.l.b16 %v4063
          %v4680 = vunpack.c.h.b16 %v4063
          %v4681 = vunpack.c.l.b16 %v4064
          %v4682 = vunpack.c.h.b16 %v4064
          %v4683 = vunpack.c.l.b16 %v4065
          %v4684 = vunpack.c.h.b16 %v4065
          %v4685 = vunpack.c.l.b16 %v4066
          %v4686 = vunpack.c.h.b16 %v4066
          %v4687 = vunpack.c.l.b16 %v4067
          %v4688 = vunpack.c.h.b16 %v4067
          %v4689 = vunpack.c.l.b16 %v4068
          %v4690 = vunpack.c.h.b16 %v4068
          %v4691 = vunpack.c.l.b16 %v4069
          %v4692 = vunpack.c.h.b16 %v4069
          %v4693 = vunpack.c.l.b16 %v4070
          %v4694 = vunpack.c.h.b16 %v4070
          %v4695 = vunpack.c.l.b16 %v4071
          %v4696 = vunpack.c.h.b16 %v4071
          %v4697 = vunpack.c.l.b16 %v4072
          %v4698 = vunpack.c.h.b16 %v4072
          %v4699 = vunpack.c.l.b16 %v4073
          %v4700 = vunpack.c.h.b16 %v4073
          %v4701 = vunpack.c.l.b16 %v4074
          %v4702 = vunpack.c.h.b16 %v4074
          %v4703 = vunpack.c.l.b16 %v4075
          %v4704 = vunpack.c.h.b16 %v4075
          %v4705 = vunpack.c.l.b16 %v4076
          %v4706 = vunpack.c.h.b16 %v4076
          %v4707 = vunpack.c.l.b16 %v4077
          %v4708 = vunpack.c.h.b16 %v4077
          %v4709 = vunpack.c.l.b16 %v4078
          %v4710 = vunpack.c.h.b16 %v4078
          %v4711 = vunpack.c.l.b16 %v4079
          %v4712 = vunpack.c.h.b16 %v4079
          %v4713 = vunpack.c.l.b16 %v4080
          %v4714 = vunpack.c.h.b16 %v4080
          %v4715 = vunpack.c.l.b16 %v4081
          %v4716 = vunpack.c.h.b16 %v4081
          %v4717 = vunpack.c.l.b16 %v4082
          %v4718 = vunpack.c.h.b16 %v4082
          %v4719 = vunpack.c.l.b16 %v4083
          %v4720 = vunpack.c.h.b16 %v4083
          %v4721 = vunpack.c.l.b16 %v4084
          %v4722 = vunpack.c.h.b16 %v4084
          %v4723 = vunpack.c.l.b16 %v4085
          %v4724 = vunpack.c.h.b16 %v4085
          %v4725 = vunpack.c.l.b16 %v4086
          %v4726 = vunpack.c.h.b16 %v4086
          %v4727 = vunpack.c.l.b16 %v4087
          %v4728 = vunpack.c.h.b16 %v4087
          %v4729 = vunpack.c.l.b16 %v4088
          %v4730 = vunpack.c.h.b16 %v4088
          %v4731 = vunpack.c.l.b16 %v4089
          %v4732 = vunpack.c.h.b16 %v4089
          %v4733 = vunpack.c.l.b16 %v4090
          %v4734 = vunpack.c.h.b16 %v4090
          %v4735 = vunpack.c.l.b16 %v4091
          %v4736 = vunpack.c.h.b16 %v4091
          %v4737 = vunpack.c.l.b16 %v4092
          %v4738 = vunpack.c.h.b16 %v4092
          %v4739 = vunpack.c.l.b16 %v4093
          %v4740 = vunpack.c.h.b16 %v4093
          %v4741 = vunpack.c.l.b16 %v4094
          %v4742 = vunpack.c.h.b16 %v4094
          %v4743 = vunpack.c.l.b16 %v4095
          %v4744 = vunpack.c.h.b16 %v4095
          %v4745 = vunpack.c.l.b16 %v4096
          %v4746 = vunpack.c.h.b16 %v4096
          %v4747 = vunpack.c.l.b16 %v4097
          %v4748 = vunpack.c.h.b16 %v4097
          %v4749 = vunpack.c.l.b16 %v4098
          %v4750 = vunpack.c.h.b16 %v4098
          %v4751 = vunpack.c.l.b16 %v4099
          %v4752 = vunpack.c.h.b16 %v4099
          %v4753 = vunpack.c.l.b16 %v4100
          %v4754 = vunpack.c.h.b16 %v4100
          %v4755 = vunpack.c.l.b16 %v4101
          %v4756 = vunpack.c.h.b16 %v4101
          %v4757 = vunpack.c.l.b16 %v4102
          %v4758 = vunpack.c.h.b16 %v4102
          %v4759 = vunpack.c.l.b16 %v4103
          %v4760 = vunpack.c.h.b16 %v4103
          %v4761 = vunpack.c.l.b16 %v4104
          %v4762 = vunpack.c.h.b16 %v4104
          %v4763 = vunpack.c.l.b16 %v4105
          %v4764 = vunpack.c.h.b16 %v4105
          %v4765 = vunpack.c.l.b16 %v4106
          %v4766 = vunpack.c.h.b16 %v4106
          %v4767 = vunpack.c.l.b16 %v4107
          %v4768 = vunpack.c.h.b16 %v4107
          %v4769 = vunpack.c.l.b16 %v4108
          %v4770 = vunpack.c.h.b16 %v4108
          %v4771 = vunpack.c.l.b16 %v4109
          %v4772 = vunpack.c.h.b16 %v4109
          %v4773 = vunpack.c.l.b16 %v4110
          %v4774 = vunpack.c.h.b16 %v4110
          %v4775 = vunpack.c.l.b16 %v4111
          %v4776 = vunpack.c.h.b16 %v4111
          %v4777 = vunpack.c.l.b16 %v4112
          %v4778 = vunpack.c.h.b16 %v4112
          %v4779 = vunpack.c.l.b16 %v4113
          %v4780 = vunpack.c.h.b16 %v4113
          %v4781 = vunpack.c.l.b16 %v4114
          %v4782 = vunpack.c.h.b16 %v4114
          %v4783 = vunpack.c.l.b16 %v4115
          %v4784 = vunpack.c.h.b16 %v4115
          %v4785 = vunpack.c.l.b16 %v4116
          %v4786 = vunpack.c.h.b16 %v4116
          %v4787 = vunpack.c.l.b16 %v4117
          %v4788 = vunpack.c.h.b16 %v4117
          %v4789 = vunpack.c.l.b16 %v4118
          %v4790 = vunpack.c.h.b16 %v4118
          %v4791 = vunpack.c.l.b16 %v4119
          %v4792 = vunpack.c.h.b16 %v4119
          %v4793 = vunpack.c.l.b16 %v4120
          %v4794 = vunpack.c.h.b16 %v4120
          %v4795 = vunpack.c.l.b16 %v4121
          %v4796 = vunpack.c.h.b16 %v4121
          %v4797 = vunpack.c.l.b16 %v4122
          %v4798 = vunpack.c.h.b16 %v4122
          %v4799 = vunpack.c.l.b16 %v4123
          %v4800 = vunpack.c.h.b16 %v4123
          %v4801 = vunpack.c.l.b16 %v4124
          %v4802 = vunpack.c.h.b16 %v4124
          %v4803 = vunpack.c.l.b16 %v4125
          %v4804 = vunpack.c.h.b16 %v4125
          %v4805 = vunpack.c.l.b16 %v4126
          %v4806 = vunpack.c.h.b16 %v4126
          %v4807 = vunpack.c.l.b16 %v4127
          %v4808 = vunpack.c.h.b16 %v4127
          %v4809 = vunpack.c.l.b16 %v4128
          %v4810 = vunpack.c.h.b16 %v4128
          %v4811 = vunpack.c.l.b16 %v4129
          %v4812 = vunpack.c.h.b16 %v4129
          %v4813 = vunpack.c.l.b16 %v4130
          %v4814 = vunpack.c.h.b16 %v4130
          %v4815 = vunpack.c.l.b16 %v4131
          %v4816 = vunpack.c.h.b16 %v4131
          %v4817 = vunpack.c.l.b16 %v4132
          %v4818 = vunpack.c.h.b16 %v4132
          %v4819 = vunpack.c.l.b16 %v4133
          %v4820 = vunpack.c.h.b16 %v4133
          %v4821 = vunpack.c.l.b16 %v4134
          %v4822 = vunpack.c.h.b16 %v4134
          %v4823 = vunpack.c.l.b16 %v4135
          %v4824 = vunpack.c.h.b16 %v4135
          %v4825 = vunpack.c.l.b16 %v4136
          %v4826 = vunpack.c.h.b16 %v4136
          %v4827 = vunpack.c.l.b16 %v4137
          %v4828 = vunpack.c.h.b16 %v4137
          %v4829 = vunpack.c.l.b16 %v4138
          %v4830 = vunpack.c.h.b16 %v4138
          %v4831 = vunpack.c.l.b16 %v4139
          %v4832 = vunpack.c.h.b16 %v4139
          %v4833 = vunpack.c.l.b16 %v4140
          %v4834 = vunpack.c.h.b16 %v4140
          %v4835 = vunpack.c.l.b16 %v4141
          %v4836 = vunpack.c.h.b16 %v4141
          %v4837 = vunpack.c.l.b16 %v4142
          %v4838 = vunpack.c.h.b16 %v4142
          %v4839 = vunpack.c.l.b16 %v4143
          %v4840 = vunpack.c.h.b16 %v4143
          %v4841 = vunpack.c.l.b16 %v4144
          %v4842 = vunpack.c.h.b16 %v4144
          %v4843 = vunpack.c.l.b16 %v4145
          %v4844 = vunpack.c.h.b16 %v4145
          %v4845 = vunpack.c.l.b16 %v4146
          %v4846 = vunpack.c.h.b16 %v4146
          %v4847 = vunpack.c.l.b16 %v4147
          %v4848 = vunpack.c.h.b16 %v4147
          %v4849 = vunpack.c.l.b16 %v4148
          %v4850 = vunpack.c.h.b16 %v4148
          %v4851 = vunpack.c.l.b16 %v4149
          %v4852 = vunpack.c.h.b16 %v4149
          %v4853 = vunpack.c.l.b16 %v4150
          %v4854 = vunpack.c.h.b16 %v4150
          %v4855 = vunpack.c.l.b16 %v4151
          %v4856 = vunpack.c.h.b16 %v4151
          %v4857 = vunpack.c.l.b16 %v4152
          %v4858 = vunpack.c.h.b16 %v4152
          %v4859 = vunpack.c.l.b16 %v4153
          %v4860 = vunpack.c.h.b16 %v4153
          %v4861 = vunpack.c.l.b16 %v4154
          %v4862 = vunpack.c.h.b16 %v4154
          %v4863 = vunpack.c.l.b16 %v4155
          %v4864 = vunpack.c.h.b16 %v4155
          %v4865 = vunpack.c.l.b16 %v4156
          %v4866 = vunpack.c.h.b16 %v4156
          %v4867 = vunpack.c.l.b16 %v4157
          %v4868 = vunpack.c.h.b16 %v4157
          %v4869 = vunpack.c.l.b16 %v4158
          %v4870 = vunpack.c.h.b16 %v4158
          %v4871 = vunpack.c.l.b16 %v4159
          %v4872 = vunpack.c.h.b16 %v4159
          %v4873 = vunpack.c.l.b16 %v4160
          %v4874 = vunpack.c.h.b16 %v4160
          %v4875 = vunpack.c.l.b16 %v4161
          %v4876 = vunpack.c.h.b16 %v4161
          %v4877 = vunpack.c.l.b16 %v4162
          %v4878 = vunpack.c.h.b16 %v4162
          %v4879 = vunpack.c.l.b16 %v4163
          %v4880 = vunpack.c.h.b16 %v4163
          %v4881 = vunpack.c.l.b16 %v4164
          %v4882 = vunpack.c.h.b16 %v4164
          %v4883 = vunpack.c.l.b16 %v4165
          %v4884 = vunpack.c.h.b16 %v4165
          %v4885 = vunpack.c.l.b16 %v4166
          %v4886 = vunpack.c.h.b16 %v4166
          %v4887 = vunpack.c.l.b16 %v4167
          %v4888 = vunpack.c.h.b16 %v4167
          %v4889 = vunpack.c.l.b16 %v4168
          %v4890 = vunpack.c.h.b16 %v4168
          %v4891 = vunpack.c.l.b16 %v4169
          %v4892 = vunpack.c.h.b16 %v4169
          %v4893 = vunpack.c.l.b16 %v4170
          %v4894 = vunpack.c.h.b16 %v4170
          %v4895 = vunpack.c.l.b16 %v4171
          %v4896 = vunpack.c.h.b16 %v4171
          %v4897 = vunpack.c.l.b16 %v4172
          %v4898 = vunpack.c.h.b16 %v4172
          %v4899 = vunpack.c.l.b16 %v4173
          %v4900 = vunpack.c.h.b16 %v4173
          %v4901 = vunpack.c.l.b16 %v4174
          %v4902 = vunpack.c.h.b16 %v4174
          %v4903 = vunpack.c.l.b16 %v4175
          %v4904 = vunpack.c.h.b16 %v4175
          %v4905 = vunpack.c.l.b16 %v4176
          %v4906 = vunpack.c.h.b16 %v4176
          %v4907 = vunpack.c.l.b16 %v4177
          %v4908 = vunpack.c.h.b16 %v4177
          %v4909 = vunpack.c.l.b16 %v4178
          %v4910 = vunpack.c.h.b16 %v4178
          %v4911 = vunpack.c.l.b16 %v4179
          %v4912 = vunpack.c.h.b16 %v4179
          %v4913 = vunpack.c.l.b16 %v4180
          %v4914 = vunpack.c.h.b16 %v4180
          %v4915 = vunpack.c.l.b16 %v4181
          %v4916 = vunpack.c.h.b16 %v4181
          %v4917 = vunpack.c.l.b16 %v4182
          %v4918 = vunpack.c.h.b16 %v4182
          %v4919 = vunpack.c.l.b16 %v4183
          %v4920 = vunpack.c.h.b16 %v4183
          %v4921 = vunpack.c.l.b16 %v4184
          %v4922 = vunpack.c.h.b16 %v4184
          %v4923 = vunpack.c.l.b16 %v4185
          %v4924 = vunpack.c.h.b16 %v4185
          %v4925 = vunpack.c.l.b16 %v4186
          %v4926 = vunpack.c.h.b16 %v4186
          %v4927 = vunpack.c.l.b16 %v4187
          %v4928 = vunpack.c.h.b16 %v4187
          %v4929 = vunpack.c.l.b16 %v4188
          %v4930 = vunpack.c.h.b16 %v4188
          %v4931 = vunpack.c.l.b16 %v4189
          %v4932 = vunpack.c.h.b16 %v4189
          %v4933 = vunpack.c.l.b16 %v4190
          %v4934 = vunpack.c.h.b16 %v4190
          %v4935 = vunpack.c.l.b16 %v4191
          %v4936 = vunpack.c.h.b16 %v4191
          %v4937 = vunpack.c.l.b16 %v4192
          %v4938 = vunpack.c.h.b16 %v4192
          %v4939 = vunpack.c.l.b16 %v4193
          %v4940 = vunpack.c.h.b16 %v4193
          %v4941 = vunpack.c.l.b16 %v4194
          %v4942 = vunpack.c.h.b16 %v4194
          %v4943 = vunpack.c.l.b16 %v4195
          %v4944 = vunpack.c.h.b16 %v4195
          %v4945 = vunpack.c.l.b16 %v4196
          %v4946 = vunpack.c.h.b16 %v4196
          %v4947 = vunpack.c.l.b16 %v4197
          %v4948 = vunpack.c.h.b16 %v4197
          %v4949 = vunpack.c.l.b16 %v4198
          %v4950 = vunpack.c.h.b16 %v4198
          %v4951 = vunpack.c.l.b16 %v4199
          %v4952 = vunpack.c.h.b16 %v4199
          %v4953 = vunpack.c.l.b16 %v4200
          %v4954 = vunpack.c.h.b16 %v4200
          %v4955 = vunpack.c.l.b16 %v4201
          %v4956 = vunpack.c.h.b16 %v4201
          %v4957 = vunpack.c.l.b16 %v4202
          %v4958 = vunpack.c.h.b16 %v4202
          %v4959 = vunpack.c.l.b16 %v4203
          %v4960 = vunpack.c.h.b16 %v4203
          %v4961 = vunpack.c.l.b16 %v4204
          %v4962 = vunpack.c.h.b16 %v4204
          %v4963 = vunpack.c.l.b16 %v4205
          %v4964 = vunpack.c.h.b16 %v4205
          %v4965 = vunpack.c.l.b16 %v4206
          %v4966 = vunpack.c.h.b16 %v4206
          %v4967 = vunpack.c.l.b16 %v4207
          %v4968 = vunpack.c.h.b16 %v4207
          %v4969 = vunpack.c.l.b16 %v4208
          %v4970 = vunpack.c.h.b16 %v4208
          %v4971 = vunpack.c.l.b16 %v4209
          %v4972 = vunpack.c.h.b16 %v4209
          %v4973 = vunpack.c.l.b16 %v4210
          %v4974 = vunpack.c.h.b16 %v4210
          %v4975 = vunpack.c.l.b16 %v4211
          %v4976 = vunpack.c.h.b16 %v4211
          %v4977 = vunpack.c.l.b16 %v4212
          %v4978 = vunpack.c.h.b16 %v4212
          %v4979 = vunpack.c.l.b16 %v4213
          %v4980 = vunpack.c.h.b16 %v4213
          %v4981 = vunpack.c.l.b16 %v4214
          %v4982 = vunpack.c.h.b16 %v4214
          %v4983 = vunpack.c.l.b16 %v4215
          %v4984 = vunpack.c.h.b16 %v4215
          %v4985 = vunpack.c.l.b16 %v4216
          %v4986 = vunpack.c.h.b16 %v4216
          %v4987 = vunpack.c.l.b16 %v4217
          %v4988 = vunpack.c.h.b16 %v4217
          %v4989 = vunpack.c.l.b16 %v4218
          %v4990 = vunpack.c.h.b16 %v4218
          %v4991 = vunpack.c.l.b16 %v4219
          %v4992 = vunpack.c.h.b16 %v4219
          %v4993 = vunpack.c.l.b16 %v4220
          %v4994 = vunpack.c.h.b16 %v4220
          %v4995 = vunpack.c.l.b16 %v4221
          %v4996 = vunpack.c.h.b16 %v4221
          %v4997 = vunpack.c.l.b16 %v4222
          %v4998 = vunpack.c.h.b16 %v4222
          %v4999 = vunpack.c.l.b16 %v4223
          %v5000 = vunpack.c.h.b16 %v4223
          %v5001 = vunpack.c.l.b16 %v4224
          %v5002 = vunpack.c.h.b16 %v4224
          %v5003 = vunpack.c.l.b16 %v4225
          %v5004 = vunpack.c.h.b16 %v4225
          %v5005 = vunpack.c.l.b16 %v4226
          %v5006 = vunpack.c.h.b16 %v4226
          %v5007 = vunpack.c.l.b16 %v4227
          %v5008 = vunpack.c.h.b16 %v4227
          %v5009 = vunpack.c.l.b16 %v4228
          %v5010 = vunpack.c.h.b16 %v4228
          %v5011 = vunpack.c.l.b16 %v4229
          %v5012 = vunpack.c.h.b16 %v4229
          %v5013 = vunpack.c.l.b16 %v4230
          %v5014 = vunpack.c.h.b16 %v4230
          %v5015 = vunpack.c.l.b16 %v4231
          %v5016 = vunpack.c.h.b16 %v4231
          %v5017 = vunpack.c.l.b16 %v4232
          %v5018 = vunpack.c.h.b16 %v4232
          %v5019 = vunpack.c.l.b16 %v4233
          %v5020 = vunpack.c.h.b16 %v4233
          %v5021 = vunpack.c.l.b16 %v4234
          %v5022 = vunpack.c.h.b16 %v4234
          %v5023 = vunpack.c.l.b16 %v4235
          %v5024 = vunpack.c.h.b16 %v4235
          %v5025 = vunpack.c.l.b16 %v4236
          %v5026 = vunpack.c.h.b16 %v4236
          %v5027 = vpack.c.b16 %v4519, %v4515
          %v5028 = vpack.c.b16 %v4520, %v4516
          %v5029 = vpack.c.b16 %v4521, %v4517
          %v5030 = vpack.c.b16 %v4522, %v4518
          %v5031 = vpack.c.b16 %v4527, %v4523
          %v5032 = vpack.c.b16 %v4528, %v4524
          %v5033 = vpack.c.b16 %v4529, %v4525
          %v5034 = vpack.c.b16 %v4530, %v4526
          %v5035 = vpack.c.b16 %v4535, %v4531
          %v5036 = vpack.c.b16 %v4536, %v4532
          %v5037 = vpack.c.b16 %v4537, %v4533
          %v5038 = vpack.c.b16 %v4538, %v4534
          %v5039 = vpack.c.b16 %v4543, %v4539
          %v5040 = vpack.c.b16 %v4544, %v4540
          %v5041 = vpack.c.b16 %v4545, %v4541
          %v5042 = vpack.c.b16 %v4546, %v4542
          %v5043 = vpack.c.b16 %v4551, %v4547
          %v5044 = vpack.c.b16 %v4552, %v4548
          %v5045 = vpack.c.b16 %v4553, %v4549
          %v5046 = vpack.c.b16 %v4554, %v4550
          %v5047 = vpack.c.b16 %v4559, %v4555
          %v5048 = vpack.c.b16 %v4560, %v4556
          %v5049 = vpack.c.b16 %v4561, %v4557
          %v5050 = vpack.c.b16 %v4562, %v4558
          %v5051 = vpack.c.b16 %v4567, %v4563
          %v5052 = vpack.c.b16 %v4568, %v4564
          %v5053 = vpack.c.b16 %v4569, %v4565
          %v5054 = vpack.c.b16 %v4570, %v4566
          %v5055 = vpack.c.b16 %v4575, %v4571
          %v5056 = vpack.c.b16 %v4576, %v4572
          %v5057 = vpack.c.b16 %v4577, %v4573
          %v5058 = vpack.c.b16 %v4578, %v4574
          %v5059 = vpack.c.b16 %v4583, %v4579
          %v5060 = vpack.c.b16 %v4584, %v4580
          %v5061 = vpack.c.b16 %v4585, %v4581
          %v5062 = vpack.c.b16 %v4586, %v4582
          %v5063 = vpack.c.b16 %v4591, %v4587
          %v5064 = vpack.c.b16 %v4592, %v4588
          %v5065 = vpack.c.b16 %v4593, %v4589
          %v5066 = vpack.c.b16 %v4594, %v4590
          %v5067 = vpack.c.b16 %v4599, %v4595
          %v5068 = vpack.c.b16 %v4600, %v4596
          %v5069 = vpack.c.b16 %v4601, %v4597
          %v5070 = vpack.c.b16 %v4602, %v4598
          %v5071 = vpack.c.b16 %v4607, %v4603
          %v5072 = vpack.c.b16 %v4608, %v4604
          %v5073 = vpack.c.b16 %v4609, %v4605
          %v5074 = vpack.c.b16 %v4610, %v4606
          %v5075 = vpack.c.b16 %v4615, %v4611
          %v5076 = vpack.c.b16 %v4616, %v4612
          %v5077 = vpack.c.b16 %v4617, %v4613
          %v5078 = vpack.c.b16 %v4618, %v4614
          %v5079 = vpack.c.b16 %v4623, %v4619
          %v5080 = vpack.c.b16 %v4624, %v4620
          %v5081 = vpack.c.b16 %v4625, %v4621
          %v5082 = vpack.c.b16 %v4626, %v4622
          %v5083 = vpack.c.b16 %v4631, %v4627
          %v5084 = vpack.c.b16 %v4632, %v4628
          %v5085 = vpack.c.b16 %v4633, %v4629
          %v5086 = vpack.c.b16 %v4634, %v4630
          %v5087 = vpack.c.b16 %v4639, %v4635
          %v5088 = vpack.c.b16 %v4640, %v4636
          %v5089 = vpack.c.b16 %v4641, %v4637
          %v5090 = vpack.c.b16 %v4642, %v4638
          %v5091 = vpack.c.b16 %v4647, %v4643
          %v5092 = vpack.c.b16 %v4648, %v4644
          %v5093 = vpack.c.b16 %v4649, %v4645
          %v5094 = vpack.c.b16 %v4650, %v4646
          %v5095 = vpack.c.b16 %v4655, %v4651
          %v5096 = vpack.c.b16 %v4656, %v4652
          %v5097 = vpack.c.b16 %v4657, %v4653
          %v5098 = vpack.c.b16 %v4658, %v4654
          %v5099 = vpack.c.b16 %v4663, %v4659
          %v5100 = vpack.c.b16 %v4664, %v4660
          %v5101 = vpack.c.b16 %v4665, %v4661
          %v5102 = vpack.c.b16 %v4666, %v4662
          %v5103 = vpack.c.b16 %v4671, %v4667
          %v5104 = vpack.c.b16 %v4672, %v4668
          %v5105 = vpack.c.b16 %v4673, %v4669
          %v5106 = vpack.c.b16 %v4674, %v4670
          %v5107 = vpack.c.b16 %v4679, %v4675
          %v5108 = vpack.c.b16 %v4680, %v4676
          %v5109 = vpack.c.b16 %v4681, %v4677
          %v5110 = vpack.c.b16 %v4682, %v4678
          %v5111 = vpack.c.b16 %v4687, %v4683
          %v5112 = vpack.c.b16 %v4688, %v4684
          %v5113 = vpack.c.b16 %v4689, %v4685
          %v5114 = vpack.c.b16 %v4690, %v4686
          %v5115 = vpack.c.b16 %v4695, %v4691
          %v5116 = vpack.c.b16 %v4696, %v4692
          %v5117 = vpack.c.b16 %v4697, %v4693
          %v5118 = vpack.c.b16 %v4698, %v4694
          %v5119 = vpack.c.b16 %v4703, %v4699
          %v5120 = vpack.c.b16 %v4704, %v4700
          %v5121 = vpack.c.b16 %v4705, %v4701
          %v5122 = vpack.c.b16 %v4706, %v4702
          %v5123 = vpack.c.b16 %v4711, %v4707
          %v5124 = vpack.c.b16 %v4712, %v4708
          %v5125 = vpack.c.b16 %v4713, %v4709
          %v5126 = vpack.c.b16 %v4714, %v4710
          %v5127 = vpack.c.b16 %v4719, %v4715
          %v5128 = vpack.c.b16 %v4720, %v4716
          %v5129 = vpack.c.b16 %v4721, %v4717
          %v5130 = vpack.c.b16 %v4722, %v4718
          %v5131 = vpack.c.b16 %v4727, %v4723
          %v5132 = vpack.c.b16 %v4728, %v4724
          %v5133 = vpack.c.b16 %v4729, %v4725
          %v5134 = vpack.c.b16 %v4730, %v4726
          %v5135 = vpack.c.b16 %v4735, %v4731
          %v5136 = vpack.c.b16 %v4736, %v4732
          %v5137 = vpack.c.b16 %v4737, %v4733
          %v5138 = vpack.c.b16 %v4738, %v4734
          %v5139 = vpack.c.b16 %v4743, %v4739
          %v5140 = vpack.c.b16 %v4744, %v4740
          %v5141 = vpack.c.b16 %v4745, %v4741
          %v5142 = vpack.c.b16 %v4746, %v4742
          %v5143 = vpack.c.b16 %v4751, %v4747
          %v5144 = vpack.c.b16 %v4752, %v4748
          %v5145 = vpack.c.b16 %v4753, %v4749
          %v5146 = vpack.c.b16 %v4754, %v4750
          %v5147 = vpack.c.b16 %v4759, %v4755
          %v5148 = vpack.c.b16 %v4760, %v4756
          %v5149 = vpack.c.b16 %v4761, %v4757
          %v5150 = vpack.c.b16 %v4762, %v4758
          %v5151 = vpack.c.b16 %v4767, %v4763
          %v5152 = vpack.c.b16 %v4768, %v4764
          %v5153 = vpack.c.b16 %v4769, %v4765
          %v5154 = vpack.c.b16 %v4770, %v4766
          %v5155 = vpack.c.b16 %v4775, %v4771
          %v5156 = vpack.c.b16 %v4776, %v4772
          %v5157 = vpack.c.b16 %v4777, %v4773
          %v5158 = vpack.c.b16 %v4778, %v4774
          %v5159 = vpack.c.b16 %v4783, %v4779
          %v5160 = vpack.c.b16 %v4784, %v4780
          %v5161 = vpack.c.b16 %v4785, %v4781
          %v5162 = vpack.c.b16 %v4786, %v4782
          %v5163 = vpack.c.b16 %v4791, %v4787
          %v5164 = vpack.c.b16 %v4792, %v4788
          %v5165 = vpack.c.b16 %v4793, %v4789
          %v5166 = vpack.c.b16 %v4794, %v4790
          %v5167 = vpack.c.b16 %v4799, %v4795
          %v5168 = vpack.c.b16 %v4800, %v4796
          %v5169 = vpack.c.b16 %v4801, %v4797
          %v5170 = vpack.c.b16 %v4802, %v4798
          %v5171 = vpack.c.b16 %v4807, %v4803
          %v5172 = vpack.c.b16 %v4808, %v4804
          %v5173 = vpack.c.b16 %v4809, %v4805
          %v5174 = vpack.c.b16 %v4810, %v4806
          %v5175 = vpack.c.b16 %v4815, %v4811
          %v5176 = vpack.c.b16 %v4816, %v4812
          %v5177 = vpack.c.b16 %v4817, %v4813
          %v5178 = vpack.c.b16 %v4818, %v4814
          %v5179 = vpack.c.b16 %v4823, %v4819
          %v5180 = vpack.c.b16 %v4824, %v4820
          %v5181 = vpack.c.b16 %v4825, %v4821
          %v5182 = vpack.c.b16 %v4826, %v4822
          %v5183 = vpack.c.b16 %v4831, %v4827
          %v5184 = vpack.c.b16 %v4832, %v4828
          %v5185 = vpack.c.b16 %v4833, %v4829
          %v5186 = vpack.c.b16 %v4834, %v4830
          %v5187 = vpack.c.b16 %v4839, %v4835
          %v5188 = vpack.c.b16 %v4840, %v4836
          %v5189 = vpack.c.b16 %v4841, %v4837
          %v5190 = vpack.c.b16 %v4842, %v4838
          %v5191 = vpack.c.b16 %v4847, %v4843
          %v5192 = vpack.c.b16 %v4848, %v4844
          %v5193 = vpack.c.b16 %v4849, %v4845
          %v5194 = vpack.c.b16 %v4850, %v4846
          %v5195 = vpack.c.b16 %v4855, %v4851
          %v5196 = vpack.c.b16 %v4856, %v4852
          %v5197 = vpack.c.b16 %v4857, %v4853
          %v5198 = vpack.c.b16 %v4858, %v4854
          %v5199 = vpack.c.b16 %v4863, %v4859
          %v5200 = vpack.c.b16 %v4864, %v4860
          %v5201 = vpack.c.b16 %v4865, %v4861
          %v5202 = vpack.c.b16 %v4866, %v4862
          %v5203 = vpack.c.b16 %v4871, %v4867
          %v5204 = vpack.c.b16 %v4872, %v4868
          %v5205 = vpack.c.b16 %v4873, %v4869
          %v5206 = vpack.c.b16 %v4874, %v4870
          %v5207 = vpack.c.b16 %v4879, %v4875
          %v5208 = vpack.c.b16 %v4880, %v4876
          %v5209 = vpack.c.b16 %v4881, %v4877
          %v5210 = vpack.c.b16 %v4882, %v4878
          %v5211 = vpack.c.b16 %v4887, %v4883
          %v5212 = vpack.c.b16 %v4888, %v4884
          %v5213 = vpack.c.b16 %v4889, %v4885
          %v5214 = vpack.c.b16 %v4890, %v4886
          %v5215 = vpack.c.b16 %v4895, %v4891
          %v5216 = vpack.c.b16 %v4896, %v4892
          %v5217 = vpack.c.b16 %v4897, %v4893
          %v5218 = vpack.c.b16 %v4898, %v4894
          %v5219 = vpack.c.b16 %v4903, %v4899
          %v5220 = vpack.c.b16 %v4904, %v4900
          %v5221 = vpack.c.b16 %v4905, %v4901
          %v5222 = vpack.c.b16 %v4906, %v4902
          %v5223 = vpack.c.b16 %v4911, %v4907
          %v5224 = vpack.c.b16 %v4912, %v4908
          %v5225 = vpack.c.b16 %v4913, %v4909
          %v5226 = vpack.c.b16 %v4914, %v4910
          %v5227 = vpack.c.b16 %v4919, %v4915
          %v5228 = vpack.c.b16 %v4920, %v4916
          %v5229 = vpack.c.b16 %v4921, %v4917
          %v5230 = vpack.c.b16 %v4922, %v4918
          %v5231 = vpack.c.b16 %v4927, %v4923
          %v5232 = vpack.c.b16 %v4928, %v4924
          %v5233 = vpack.c.b16 %v4929, %v4925
          %v5234 = vpack.c.b16 %v4930, %v4926
          %v5235 = vpack.c.b16 %v4935, %v4931
          %v5236 = vpack.c.b16 %v4936, %v4932
          %v5237 = vpack.c.b16 %v4937, %v4933
          %v5238 = vpack.c.b16 %v4938, %v4934
          %v5239 = vpack.c.b16 %v4943, %v4939
          %v5240 = vpack.c.b16 %v4944, %v4940
          %v5241 = vpack.c.b16 %v4945, %v4941
          %v5242 = vpack.c.b16 %v4946, %v4942
          %v5243 = vpack.c.b16 %v4951, %v4947
          %v5244 = vpack.c.b16 %v4952, %v4948
          %v5245 = vpack.c.b16 %v4953, %v4949
          %v5246 = vpack.c.b16 %v4954, %v4950
          %v5247 = vpack.c.b16 %v4959, %v4955
          %v5248 = vpack.c.b16 %v4960, %v4956
          %v5249 = vpack.c.b16 %v4961, %v4957
          %v5250 = vpack.c.b16 %v4962, %v4958
          %v5251 = vpack.c.b16 %v4967, %v4963
          %v5252 = vpack.c.b16 %v4968, %v4964
          %v5253 = vpack.c.b16 %v4969, %v4965
          %v5254 = vpack.c.b16 %v4970, %v4966
          %v5255 = vpack.c.b16 %v4975, %v4971
          %v5256 = vpack.c.b16 %v4976, %v4972
          %v5257 = vpack.c.b16 %v4977, %v4973
          %v5258 = vpack.c.b16 %v4978, %v4974
          %v5259 = vpack.c.b16 %v4983, %v4979
          %v5260 = vpack.c.b16 %v4984, %v4980
          %v5261 = vpack.c.b16 %v4985, %v4981
          %v5262 = vpack.c.b16 %v4986, %v4982
          %v5263 = vpack.c.b16 %v4991, %v4987
          %v5264 = vpack.c.b16 %v4992, %v4988
          %v5265 = vpack.c.b16 %v4993, %v4989
          %v5266 = vpack.c.b16 %v4994, %v4990
          %v5267 = vpack.c.b16 %v4999, %v4995
          %v5268 = vpack.c.b16 %v5000, %v4996
          %v5269 = vpack.c.b16 %v5001, %v4997
          %v5270 = vpack.c.b16 %v5002, %v4998
          %v5271 = vpack.c.b16 %v5007, %v5003
          %v5272 = vpack.c.b16 %v5008, %v5004
          %v5273 = vpack.c.b16 %v5009, %v5005
          %v5274 = vpack.c.b16 %v5010, %v5006
          %v5275 = vpack.c.b16 %v5015, %v5011
          %v5276 = vpack.c.b16 %v5016, %v5012
          %v5277 = vpack.c.b16 %v5017, %v5013
          %v5278 = vpack.c.b16 %v5018, %v5014
          %v5279 = vpack.c.b16 %v5023, %v5019
          %v5280 = vpack.c.b16 %v5024, %v5020
          %v5281 = vpack.c.b16 %v5025, %v5021
          %v5282 = vpack.c.b16 %v5026, %v5022
          %5539 = vmatprep.subr.bf16.mxu0 %v5028
          %5540 = vmatpush1.bf16.msra.mxu0 %v5027
          %5541 = vmatprep.subr.bf16.mxu0 %v5032
          %5542 = vmatpush1.bf16.msra.mxu0 %v5031
          %5543 = vmatprep.subr.bf16.mxu0 %v5036
          %5544 = vmatpush1.bf16.msra.mxu0 %v5035
          %5545 = vmatprep.subr.bf16.mxu0 %v5040
          %5546 = vmatpush1.bf16.msra.mxu0 %v5039
          %5547 = vmatprep.subr.bf16.mxu0 %v5044
          %5548 = vmatpush1.bf16.msra.mxu0 %v5043
          %5549 = vmatprep.subr.bf16.mxu0 %v5048
          %5550 = vmatpush1.bf16.msra.mxu0 %v5047
          %5551 = vmatprep.subr.bf16.mxu0 %v5052
          %5552 = vmatpush1.bf16.msra.mxu0 %v5051
          %5553 = vmatprep.subr.bf16.mxu0 %v5056
          %5554 = vmatpush1.bf16.msra.mxu0 %v5055
          %5555 = vmatprep.subr.bf16.mxu0 %v5060
          %5556 = vmatpush1.bf16.msra.mxu0 %v5059
          %5557 = vmatprep.subr.bf16.mxu0 %v5064
          %5558 = vmatpush1.bf16.msra.mxu0 %v5063
          %5559 = vmatprep.subr.bf16.mxu0 %v5068
          %5560 = vmatpush1.bf16.msra.mxu0 %v5067
          %5561 = vmatprep.subr.bf16.mxu0 %v5072
          %5562 = vmatpush1.bf16.msra.mxu0 %v5071
          %5563 = vmatprep.subr.bf16.mxu0 %v5076
          %5564 = vmatpush1.bf16.msra.mxu0 %v5075
          %5565 = vmatprep.subr.bf16.mxu0 %v5080
          %5566 = vmatpush1.bf16.msra.mxu0 %v5079
          %5567 = vmatprep.subr.bf16.mxu0 %v5084
          %5568 = vmatpush1.bf16.msra.mxu0 %v5083
          %5569 = vmatprep.subr.bf16.mxu0 %v5088
          %5570 = vmatpush1.bf16.msra.mxu0 %v5087
          %5571 = vmatprep.mubr.bf16.mxu0 %v3974
          %5572 = vmatmul.mubr.bf16.gmra.mrb[0].mxu0 %v3973
          %v5573 = vpop.f32.mrb[0].mxu0
          %v5574 = vadd.f32 %v4242, %v5573
          %v5575 = vpop.f32.mrb[0].mxu0
          %v5576 = vadd.f32 %v4246, %v5575
          %v5577 = vpop.f32.mrb[0].mxu0
          %v5578 = vpop.f32.mrb[0].mxu0
          %5579 = vdwg.mxu0
          %5580 = vmatprep.subr.bf16.mxu0 %v5092
          %5581 = vmatpush1.bf16.msra.mxu0 %v5091
          %5582 = vmatprep.subr.bf16.mxu0 %v5096
          %5583 = vmatpush1.bf16.msra.mxu0 %v5095
          %5584 = vmatprep.subr.bf16.mxu0 %v5100
          %5585 = vmatpush1.bf16.msra.mxu0 %v5099
          %5586 = vmatprep.subr.bf16.mxu0 %v5104
          %5587 = vmatpush1.bf16.msra.mxu0 %v5103
          %5588 = vmatprep.subr.bf16.mxu0 %v5108
          %5589 = vmatpush1.bf16.msra.mxu0 %v5107
          %5590 = vmatprep.subr.bf16.mxu0 %v5112
          %5591 = vmatpush1.bf16.msra.mxu0 %v5111
          %5592 = vmatprep.subr.bf16.mxu0 %v5116
          %5593 = vmatpush1.bf16.msra.mxu0 %v5115
          %5594 = vmatprep.subr.bf16.mxu0 %v5120
          %5595 = vmatpush1.bf16.msra.mxu0 %v5119
          %5596 = vmatprep.subr.bf16.mxu0 %v5124
          %5597 = vmatpush1.bf16.msra.mxu0 %v5123
          %5598 = vmatprep.subr.bf16.mxu0 %v5128
          %5599 = vmatpush1.bf16.msra.mxu0 %v5127
          %5600 = vmatprep.subr.bf16.mxu0 %v5132
          %5601 = vmatpush1.bf16.msra.mxu0 %v5131
          %5602 = vmatprep.subr.bf16.mxu0 %v5136
          %5603 = vmatpush1.bf16.msra.mxu0 %v5135
          %5604 = vmatprep.subr.bf16.mxu0 %v5140
          %5605 = vmatpush1.bf16.msra.mxu0 %v5139
          %5606 = vmatprep.subr.bf16.mxu0 %v5144
          %5607 = vmatpush1.bf16.msra.mxu0 %v5143
          %5608 = vmatprep.subr.bf16.mxu0 %v5148
          %5609 = vmatpush1.bf16.msra.mxu0 %v5147
          %5610 = vmatprep.subr.bf16.mxu0 %v5152
          %5611 = vmatpush1.bf16.msra.mxu0 %v5151
          %5612 = vmatprep.mubr.bf16.mxu0 %v3976
          %5613 = vmatmul.mubr.bf16.gmra.mrb[0].mxu0 %v3975
          %v5614 = vpop.f32.mrb[0].mxu0
          %v5615 = vadd.f32 %v5574, %v5614
          %v5616 = vpop.f32.mrb[0].mxu0
          %v5617 = vadd.f32 %v5576, %v5616
          %v5618 = vpop.f32.mrb[0].mxu0
          %v5619 = vpop.f32.mrb[0].mxu0
          %5620 = vdwg.mxu0
          %5621 = vmatprep.subr.bf16.mxu0 %v5156
          %5622 = vmatpush1.bf16.msra.mxu0 %v5155
          %5623 = vmatprep.subr.bf16.mxu0 %v5160
          %5624 = vmatpush1.bf16.msra.mxu0 %v5159
          %5625 = vmatprep.subr.bf16.mxu0 %v5164
          %5626 = vmatpush1.bf16.msra.mxu0 %v5163
          %5627 = vmatprep.subr.bf16.mxu0 %v5168
          %5628 = vmatpush1.bf16.msra.mxu0 %v5167
          %5629 = vmatprep.subr.bf16.mxu0 %v5172
          %5630 = vmatpush1.bf16.msra.mxu0 %v5171
          %5631 = vmatprep.subr.bf16.mxu0 %v5176
          %5632 = vmatpush1.bf16.msra.mxu0 %v5175
          %5633 = vmatprep.subr.bf16.mxu0 %v5180
          %5634 = vmatpush1.bf16.msra.mxu0 %v5179
          %5635 = vmatprep.subr.bf16.mxu0 %v5184
          %5636 = vmatpush1.bf16.msra.mxu0 %v5183
          %5637 = vmatprep.subr.bf16.mxu0 %v5188
          %5638 = vmatpush1.bf16.msra.mxu0 %v5187
          %5639 = vmatprep.subr.bf16.mxu0 %v5192
          %5640 = vmatpush1.bf16.msra.mxu0 %v5191
          %5641 = vmatprep.subr.bf16.mxu0 %v5196
          %5642 = vmatpush1.bf16.msra.mxu0 %v5195
          %5643 = vmatprep.subr.bf16.mxu0 %v5200
          %5644 = vmatpush1.bf16.msra.mxu0 %v5199
          %5645 = vmatprep.subr.bf16.mxu0 %v5204
          %5646 = vmatpush1.bf16.msra.mxu0 %v5203
          %5647 = vmatprep.subr.bf16.mxu0 %v5208
          %5648 = vmatpush1.bf16.msra.mxu0 %v5207
          %5649 = vmatprep.subr.bf16.mxu0 %v5212
          %5650 = vmatpush1.bf16.msra.mxu0 %v5211
          %5651 = vmatprep.subr.bf16.mxu0 %v5216
          %5652 = vmatpush1.bf16.msra.mxu0 %v5215
          %5653 = vmatprep.mubr.bf16.mxu0 %v3978
          %5654 = vmatmul.mubr.bf16.gmra.mrb[0].mxu0 %v3977
          %v5655 = vpop.f32.mrb[0].mxu0
          %v5656 = vadd.f32 %v5615, %v5655
          %v5657 = vpop.f32.mrb[0].mxu0
          %v5658 = vadd.f32 %v5617, %v5657
          %v5659 = vpop.f32.mrb[0].mxu0
          %v5660 = vpop.f32.mrb[0].mxu0
          %5661 = vdwg.mxu0
          %5662 = vmatprep.subr.bf16.mxu0 %v5220
          %5663 = vmatpush1.bf16.msra.mxu0 %v5219
          %5664 = vmatprep.subr.bf16.mxu0 %v5224
          %5665 = vmatpush1.bf16.msra.mxu0 %v5223
          %5666 = vmatprep.subr.bf16.mxu0 %v5228
          %5667 = vmatpush1.bf16.msra.mxu0 %v5227
          %5668 = vmatprep.subr.bf16.mxu0 %v5232
          %5669 = vmatpush1.bf16.msra.mxu0 %v5231
          %5670 = vmatprep.subr.bf16.mxu0 %v5236
          %5671 = vmatpush1.bf16.msra.mxu0 %v5235
          %5672 = vmatprep.subr.bf16.mxu0 %v5240
          %5673 = vmatpush1.bf16.msra.mxu0 %v5239
          %5674 = vmatprep.subr.bf16.mxu0 %v5244
          %5675 = vmatpush1.bf16.msra.mxu0 %v5243
          %5676 = vmatprep.subr.bf16.mxu0 %v5248
          %5677 = vmatpush1.bf16.msra.mxu0 %v5247
          %5678 = vmatprep.subr.bf16.mxu0 %v5252
          %5679 = vmatpush1.bf16.msra.mxu0 %v5251
          %5680 = vmatprep.subr.bf16.mxu0 %v5256
          %5681 = vmatpush1.bf16.msra.mxu0 %v5255
          %5682 = vmatprep.subr.bf16.mxu0 %v5260
          %5683 = vmatpush1.bf16.msra.mxu0 %v5259
          %5684 = vmatprep.subr.bf16.mxu0 %v5264
          %5685 = vmatpush1.bf16.msra.mxu0 %v5263
          %5686 = vmatprep.subr.bf16.mxu0 %v5268
          %5687 = vmatpush1.bf16.msra.mxu0 %v5267
          %5688 = vmatprep.subr.bf16.mxu0 %v5272
          %5689 = vmatpush1.bf16.msra.mxu0 %v5271
          %5690 = vmatprep.subr.bf16.mxu0 %v5276
          %5691 = vmatpush1.bf16.msra.mxu0 %v5275
          %5692 = vmatprep.subr.bf16.mxu0 %v5280
          %5693 = vmatpush1.bf16.msra.mxu0 %v5279
          %5694 = vmatprep.mubr.bf16.mxu0 %v3980
          %5695 = vmatmul.mubr.bf16.gmra.mrb[0].mxu0 %v3979
          %v5696 = vpop.f32.mrb[0].mxu0
          %v5697 = vadd.f32 %v5656, %v5696
          %v5698 = vpop.f32.mrb[0].mxu0
          %v5699 = vadd.f32 %v5658, %v5698
          %v5700 = vpop.f32.mrb[0].mxu0
          %v5701 = vpop.f32.mrb[0].mxu0
          %5702 = vdwg.mxu0
          %5703 = vmatprep.subr.bf16.mxu0 %v5030
          %5704 = vmatpush1.bf16.msra.mxu0 %v5029
          %5705 = vmatprep.subr.bf16.mxu0 %v5034
          %5706 = vmatpush1.bf16.msra.mxu0 %v5033
          %5707 = vmatprep.subr.bf16.mxu0 %v5038
          %5708 = vmatpush1.bf16.msra.mxu0 %v5037
          %5709 = vmatprep.subr.bf16.mxu0 %v5042
          %5710 = vmatpush1.bf16.msra.mxu0 %v5041
          %5711 = vmatprep.subr.bf16.mxu0 %v5046
          %5712 = vmatpush1.bf16.msra.mxu0 %v5045
          %5713 = vmatprep.subr.bf16.mxu0 %v5050
          %5714 = vmatpush1.bf16.msra.mxu0 %v5049
          %5715 = vmatprep.subr.bf16.mxu0 %v5054
          %5716 = vmatpush1.bf16.msra.mxu0 %v5053
          %5717 = vmatprep.subr.bf16.mxu0 %v5058
          %5718 = vmatpush1.bf16.msra.mxu0 %v5057
          %5719 = vmatprep.subr.bf16.mxu0 %v5062
          %5720 = vmatpush1.bf16.msra.mxu0 %v5061
          %5721 = vmatprep.subr.bf16.mxu0 %v5066
          %5722 = vmatpush1.bf16.msra.mxu0 %v5065
          %5723 = vmatprep.subr.bf16.mxu0 %v5070
          %5724 = vmatpush1.bf16.msra.mxu0 %v5069
          %5725 = vmatprep.subr.bf16.mxu0 %v5074
          %5726 = vmatpush1.bf16.msra.mxu0 %v5073
          %5727 = vmatprep.subr.bf16.mxu0 %v5078
          %5728 = vmatpush1.bf16.msra.mxu0 %v5077
          %5729 = vmatprep.subr.bf16.mxu0 %v5082
          %5730 = vmatpush1.bf16.msra.mxu0 %v5081
          %5731 = vmatprep.subr.bf16.mxu0 %v5086
          %5732 = vmatpush1.bf16.msra.mxu0 %v5085
          %5733 = vmatprep.subr.bf16.mxu0 %v5090
          %5734 = vmatpush1.bf16.msra.mxu0 %v5089
          %5735 = vmatprep.mubr.bf16.mxu0 %v3974
          %5736 = vmatmul.mubr.bf16.gmra.mrb[0].mxu0 %v3973
          %v5737 = vpop.f32.mrb[0].mxu0
          %v5738 = vadd.f32 %v4250, %v5737
          %v5739 = vpop.f32.mrb[0].mxu0
          %v5740 = vadd.f32 %v4254, %v5739
          %v5741 = vpop.f32.mrb[0].mxu0
          %v5742 = vpop.f32.mrb[0].mxu0
          %5743 = vdwg.mxu0
          %5744 = vmatprep.subr.bf16.mxu0 %v5094
          %5745 = vmatpush1.bf16.msra.mxu0 %v5093
          %5746 = vmatprep.subr.bf16.mxu0 %v5098
          %5747 = vmatpush1.bf16.msra.mxu0 %v5097
          %5748 = vmatprep.subr.bf16.mxu0 %v5102
          %5749 = vmatpush1.bf16.msra.mxu0 %v5101
          %5750 = vmatprep.subr.bf16.mxu0 %v5106
          %5751 = vmatpush1.bf16.msra.mxu0 %v5105
          %5752 = vmatprep.subr.bf16.mxu0 %v5110
          %5753 = vmatpush1.bf16.msra.mxu0 %v5109
          %5754 = vmatprep.subr.bf16.mxu0 %v5114
          %5755 = vmatpush1.bf16.msra.mxu0 %v5113
          %5756 = vmatprep.subr.bf16.mxu0 %v5118
          %5757 = vmatpush1.bf16.msra.mxu0 %v5117
          %5758 = vmatprep.subr.bf16.mxu0 %v5122
          %5759 = vmatpush1.bf16.msra.mxu0 %v5121
          %5760 = vmatprep.subr.bf16.mxu0 %v5126
          %5761 = vmatpush1.bf16.msra.mxu0 %v5125
          %5762 = vmatprep.subr.bf16.mxu0 %v5130
          %5763 = vmatpush1.bf16.msra.mxu0 %v5129
          %5764 = vmatprep.subr.bf16.mxu0 %v5134
          %5765 = vmatpush1.bf16.msra.mxu0 %v5133
          %5766 = vmatprep.subr.bf16.mxu0 %v5138
          %5767 = vmatpush1.bf16.msra.mxu0 %v5137
          %5768 = vmatprep.subr.bf16.mxu0 %v5142
          %5769 = vmatpush1.bf16.msra.mxu0 %v5141
          %5770 = vmatprep.subr.bf16.mxu0 %v5146
          %5771 = vmatpush1.bf16.msra.mxu0 %v5145
          %5772 = vmatprep.subr.bf16.mxu0 %v5150
          %5773 = vmatpush1.bf16.msra.mxu0 %v5149
          %5774 = vmatprep.subr.bf16.mxu0 %v5154
          %5775 = vmatpush1.bf16.msra.mxu0 %v5153
          %5776 = vmatprep.mubr.bf16.mxu0 %v3976
          %5777 = vmatmul.mubr.bf16.gmra.mrb[0].mxu0 %v3975
          %v5778 = vpop.f32.mrb[0].mxu0
          %v5779 = vadd.f32 %v5738, %v5778
          %v5780 = vpop.f32.mrb[0].mxu0
          %v5781 = vadd.f32 %v5740, %v5780
          %v5782 = vpop.f32.mrb[0].mxu0
          %v5783 = vpop.f32.mrb[0].mxu0
          %5784 = vdwg.mxu0
          %5785 = vmatprep.subr.bf16.mxu0 %v5158
          %5786 = vmatpush1.bf16.msra.mxu0 %v5157
          %5787 = vmatprep.subr.bf16.mxu0 %v5162
          %5788 = vmatpush1.bf16.msra.mxu0 %v5161
          %5789 = vmatprep.subr.bf16.mxu0 %v5166
          %5790 = vmatpush1.bf16.msra.mxu0 %v5165
          %5791 = vmatprep.subr.bf16.mxu0 %v5170
          %5792 = vmatpush1.bf16.msra.mxu0 %v5169
          %5793 = vmatprep.subr.bf16.mxu0 %v5174
          %5794 = vmatpush1.bf16.msra.mxu0 %v5173
          %5795 = vmatprep.subr.bf16.mxu0 %v5178
          %5796 = vmatpush1.bf16.msra.mxu0 %v5177
          %5797 = vmatprep.subr.bf16.mxu0 %v5182
          %5798 = vmatpush1.bf16.msra.mxu0 %v5181
          %5799 = vmatprep.subr.bf16.mxu0 %v5186
          %5800 = vmatpush1.bf16.msra.mxu0 %v5185
          %5801 = vmatprep.subr.bf16.mxu0 %v5190
          %5802 = vmatpush1.bf16.msra.mxu0 %v5189
          %5803 = vmatprep.subr.bf16.mxu0 %v5194
          %5804 = vmatpush1.bf16.msra.mxu0 %v5193
          %5805 = vmatprep.subr.bf16.mxu0 %v5198
          %5806 = vmatpush1.bf16.msra.mxu0 %v5197
          %5807 = vmatprep.subr.bf16.mxu0 %v5202
          %5808 = vmatpush1.bf16.msra.mxu0 %v5201
          %5809 = vmatprep.subr.bf16.mxu0 %v5206
          %5810 = vmatpush1.bf16.msra.mxu0 %v5205
          %5811 = vmatprep.subr.bf16.mxu0 %v5210
          %5812 = vmatpush1.bf16.msra.mxu0 %v5209
          %5813 = vmatprep.subr.bf16.mxu0 %v5214
          %5814 = vmatpush1.bf16.msra.mxu0 %v5213
          %5815 = vmatprep.subr.bf16.mxu0 %v5218
          %5816 = vmatpush1.bf16.msra.mxu0 %v5217
          %5817 = vmatprep.mubr.bf16.mxu0 %v3978
          %5818 = vmatmul.mubr.bf16.gmra.mrb[0].mxu0 %v3977
          %v5819 = vpop.f32.mrb[0].mxu0
          %v5820 = vadd.f32 %v5779, %v5819
          %v5821 = vpop.f32.mrb[0].mxu0
          %v5822 = vadd.f32 %v5781, %v5821
          %v5823 = vpop.f32.mrb[0].mxu0
          %v5824 = vpop.f32.mrb[0].mxu0
          %5825 = vdwg.mxu0
          %5826 = vmatprep.subr.bf16.mxu0 %v5222
          %5827 = vmatpush1.bf16.msra.mxu0 %v5221
          %5828 = vmatprep.subr.bf16.mxu0 %v5226
          %5829 = vmatpush1.bf16.msra.mxu0 %v5225
          %5830 = vmatprep.subr.bf16.mxu0 %v5230
          %5831 = vmatpush1.bf16.msra.mxu0 %v5229
          %5832 = vmatprep.subr.bf16.mxu0 %v5234
          %5833 = vmatpush1.bf16.msra.mxu0 %v5233
          %5834 = vmatprep.subr.bf16.mxu0 %v5238
          %5835 = vmatpush1.bf16.msra.mxu0 %v5237
          %5836 = vmatprep.subr.bf16.mxu0 %v5242
          %5837 = vmatpush1.bf16.msra.mxu0 %v5241
          %5838 = vmatprep.subr.bf16.mxu0 %v5246
          %5839 = vmatpush1.bf16.msra.mxu0 %v5245
          %5840 = vmatprep.subr.bf16.mxu0 %v5250
          %5841 = vmatpush1.bf16.msra.mxu0 %v5249
          %5842 = vmatprep.subr.bf16.mxu0 %v5254
          %5843 = vmatpush1.bf16.msra.mxu0 %v5253
          %5844 = vmatprep.subr.bf16.mxu0 %v5258
          %5845 = vmatpush1.bf16.msra.mxu0 %v5257
          %5846 = vmatprep.subr.bf16.mxu0 %v5262
          %5847 = vmatpush1.bf16.msra.mxu0 %v5261
          %5848 = vmatprep.subr.bf16.mxu0 %v5266
          %5849 = vmatpush1.bf16.msra.mxu0 %v5265
          %5850 = vmatprep.subr.bf16.mxu0 %v5270
          %5851 = vmatpush1.bf16.msra.mxu0 %v5269
          %5852 = vmatprep.subr.bf16.mxu0 %v5274
          %5853 = vmatpush1.bf16.msra.mxu0 %v5273
          %5854 = vmatprep.subr.bf16.mxu0 %v5278
          %5855 = vmatpush1.bf16.msra.mxu0 %v5277
          %5856 = vmatprep.subr.bf16.mxu0 %v5282
          %5857 = vmatpush1.bf16.msra.mxu0 %v5281
          %5858 = vmatprep.mubr.bf16.mxu0 %v3980
          %5859 = vmatmul.mubr.bf16.gmra.mrb[0].mxu0 %v3979
          %v5860 = vpop.f32.mrb[0].mxu0
          %v5861 = vadd.f32 %v5820, %v5860
          %v5862 = vpop.f32.mrb[0].mxu0
          %v5863 = vadd.f32 %v5822, %v5862
          %v5864 = vpop.f32.mrb[0].mxu0
          %v5865 = vpop.f32.mrb[0].mxu0
          %5866 = vdwg.mxu0
          %v5867 = vmax.f32 %v5697, 0.0
          %v5868 = vmax.f32 %v5699, 0.0
          %v5869 = vmax.f32 %v5861, 0.0
          %v5870 = vmax.f32 %v5863, 0.0
          %v5871 = vpack.c.bf16 %v5867, %v5867
          %v5872 = vpack.c.bf16 %v5868, %v5868
          %v5873 = vpack.c.bf16 %v5869, %v5869
          %v5874 = vpack.c.bf16 %v5870, %v5870
          %v5875 = vld [vmem:[%s7] sm:$0xf]
          %v5876 = vld [vmem:[%s7 + $0x4] sm:$0xf]
          %v5877 = vld [vmem:[%s7 + $0x8] sm:$0xf]
          %v5878 = vld [vmem:[%s7 + $0xc] sm:$0xf]
          %v5879 = vld [vmem:[%s7 + $0x10] sm:$0xf]
          %v5880 = vld [vmem:[%s7 + $0x14] sm:$0xf]
          %v5881 = vld [vmem:[%s7 + $0x18] sm:$0xf]
          %v5882 = vld [vmem:[%s7 + $0x1c] sm:$0xf]
          %v5883 = vld [vmem:[%s7 + $0x20] sm:$0xf]
          %v5884 = vld [vmem:[%s7 + $0x24] sm:$0xf]
          %v5885 = vld [vmem:[%s7 + $0x28] sm:$0xf]
          %v5886 = vld [vmem:[%s7 + $0x2c] sm:$0xf]
          %v5887 = vld [vmem:[%s7 + $0x30] sm:$0xf]
          %v5888 = vld [vmem:[%s7 + $0x34] sm:$0xf]
          %v5889 = vld [vmem:[%s7 + $0x38] sm:$0xf]
          %v5890 = vld [vmem:[%s7 + $0x3c] sm:$0xf]
          %v5891 = vld [vmem:[%s7 + $0x40] sm:$0xf]
          %v5892 = vld [vmem:[%s7 + $0x44] sm:$0xf]
          %v5893 = vld [vmem:[%s7 + $0x48] sm:$0xf]
          %v5894 = vld [vmem:[%s7 + $0x4c] sm:$0xf]
          %v5895 = vld [vmem:[%s7 + $0x50] sm:$0xf]
          %v5896 = vld [vmem:[%s7 + $0x54] sm:$0xf]
          %v5897 = vld [vmem:[%s7 + $0x58] sm:$0xf]
          %v5898 = vld [vmem:[%s7 + $0x5c] sm:$0xf]
          %v5899 = vld [vmem:[%s7 + $0x60] sm:$0xf]
          %v5900 = vld [vmem:[%s7 + $0x64] sm:$0xf]
          %v5901 = vld [vmem:[%s7 + $0x68] sm:$0xf]
          %v5902 = vld [vmem:[%s7 + $0x6c] sm:$0xf]
          %v5903 = vld [vmem:[%s7 + $0x70] sm:$0xf]
          %v5904 = vld [vmem:[%s7 + $0x74] sm:$0xf]
          %v5905 = vld [vmem:[%s7 + $0x78] sm:$0xf]
          %v5906 = vld [vmem:[%s7 + $0x7c] sm:$0xf]
          %v5907 = vld [vmem:[%s7 + $0x80] sm:$0xf]
          %v5908 = vld [vmem:[%s7 + $0x84] sm:$0xf]
          %v5909 = vld [vmem:[%s7 + $0x88] sm:$0xf]
          %v5910 = vld [vmem:[%s7 + $0x8c] sm:$0xf]
          %v5911 = vld [vmem:[%s7 + $0x90] sm:$0xf]
          %v5912 = vld [vmem:[%s7 + $0x94] sm:$0xf]
          %v5913 = vld [vmem:[%s7 + $0x98] sm:$0xf]
          %v5914 = vld [vmem:[%s7 + $0x9c] sm:$0xf]
          %v5915 = vld [vmem:[%s7 + $0xa0] sm:$0xf]
          %v5916 = vld [vmem:[%s7 + $0xa4] sm:$0xf]
          %v5917 = vld [vmem:[%s7 + $0xa8] sm:$0xf]
          %v5918 = vld [vmem:[%s7 + $0xac] sm:$0xf]
          %v5919 = vld [vmem:[%s7 + $0xb0] sm:$0xf]
          %v5920 = vld [vmem:[%s7 + $0xb4] sm:$0xf]
          %v5921 = vld [vmem:[%s7 + $0xb8] sm:$0xf]
          %v5922 = vld [vmem:[%s7 + $0xbc] sm:$0xf]
          %v5923 = vld [vmem:[%s7 + $0xc0] sm:$0xf]
          %v5924 = vld [vmem:[%s7 + $0xc4] sm:$0xf]
          %v5925 = vld [vmem:[%s7 + $0xc8] sm:$0xf]
          %v5926 = vld [vmem:[%s7 + $0xcc] sm:$0xf]
          %v5927 = vld [vmem:[%s7 + $0xd0] sm:$0xf]
          %v5928 = vld [vmem:[%s7 + $0xd4] sm:$0xf]
          %v5929 = vld [vmem:[%s7 + $0xd8] sm:$0xf]
          %v5930 = vld [vmem:[%s7 + $0xdc] sm:$0xf]
          %v5931 = vld [vmem:[%s7 + $0xe0] sm:$0xf]
          %v5932 = vld [vmem:[%s7 + $0xe4] sm:$0xf]
          %v5933 = vld [vmem:[%s7 + $0xe8] sm:$0xf]
          %v5934 = vld [vmem:[%s7 + $0xec] sm:$0xf]
          %v5935 = vld [vmem:[%s7 + $0xf0] sm:$0xf]
          %v5936 = vld [vmem:[%s7 + $0xf4] sm:$0xf]
          %v5937 = vld [vmem:[%s7 + $0xf8] sm:$0x3]
          %v5938 = vld [vmem:[%s8] sm:$0x1]
          %v5940 = vlaneseq
          %v5941 = vshrl.u32 %v5940, 7
          %v5942 = vsub.s32 0, %v5941
          %v5943 = vrot.slane %v5938, %v5942
          %v6008 = vunpack.c.l.b16 %v5875
          %v6009 = vunpack.c.l.b16 %v5876
          %v6010 = vunpack.c.l.b16 %v5877
          %v6011 = vunpack.c.l.b16 %v5878
          %v6012 = vunpack.c.l.b16 %v5879
          %v6013 = vunpack.c.l.b16 %v5880
          %v6014 = vunpack.c.l.b16 %v5881
          %v6015 = vunpack.c.l.b16 %v5882
          %v6016 = vunpack.c.l.b16 %v5883
          %v6017 = vunpack.c.l.b16 %v5884
          %v6018 = vunpack.c.l.b16 %v5885
          %v6019 = vunpack.c.l.b16 %v5886
          %v6020 = vunpack.c.l.b16 %v5887
          %v6021 = vunpack.c.l.b16 %v5888
          %v6022 = vunpack.c.l.b16 %v5889
          %v6023 = vunpack.c.l.b16 %v5890
          %v6024 = vunpack.c.l.b16 %v5891
          %v6025 = vunpack.c.l.b16 %v5892
          %v6026 = vunpack.c.l.b16 %v5893
          %v6027 = vunpack.c.l.b16 %v5894
          %v6028 = vunpack.c.l.b16 %v5895
          %v6029 = vunpack.c.l.b16 %v5896
          %v6030 = vunpack.c.l.b16 %v5897
          %v6031 = vunpack.c.l.b16 %v5898
          %v6032 = vunpack.c.l.b16 %v5899
          %v6033 = vunpack.c.l.b16 %v5900
          %v6034 = vunpack.c.l.b16 %v5901
          %v6035 = vunpack.c.l.b16 %v5902
          %v6036 = vunpack.c.l.b16 %v5903
          %v6037 = vunpack.c.l.b16 %v5904
          %v6038 = vunpack.c.l.b16 %v5905
          %v6039 = vunpack.c.l.b16 %v5906
          %v6040 = vunpack.c.l.b16 %v5907
          %v6041 = vunpack.c.l.b16 %v5908
          %v6042 = vunpack.c.l.b16 %v5909
          %v6043 = vunpack.c.l.b16 %v5910
          %v6044 = vunpack.c.l.b16 %v5911
          %v6045 = vunpack.c.l.b16 %v5912
          %v6046 = vunpack.c.l.b16 %v5913
          %v6047 = vunpack.c.l.b16 %v5914
          %v6048 = vunpack.c.l.b16 %v5915
          %v6049 = vunpack.c.l.b16 %v5916
          %v6050 = vunpack.c.l.b16 %v5917
          %v6051 = vunpack.c.l.b16 %v5918
          %v6052 = vunpack.c.l.b16 %v5919
          %v6053 = vunpack.c.l.b16 %v5920
          %v6054 = vunpack.c.l.b16 %v5921
          %v6055 = vunpack.c.l.b16 %v5922
          %v6056 = vunpack.c.l.b16 %v5923
          %v6057 = vunpack.c.l.b16 %v5924
          %v6058 = vunpack.c.l.b16 %v5925
          %v6059 = vunpack.c.l.b16 %v5926
          %v6060 = vunpack.c.l.b16 %v5927
          %v6061 = vunpack.c.l.b16 %v5928
          %v6062 = vunpack.c.l.b16 %v5929
          %v6063 = vunpack.c.l.b16 %v5930
          %v6064 = vunpack.c.l.b16 %v5931
          %v6065 = vunpack.c.l.b16 %v5932
          %v6066 = vunpack.c.l.b16 %v5933
          %v6067 = vunpack.c.l.b16 %v5934
          %v6068 = vunpack.c.l.b16 %v5935
          %v6069 = vunpack.c.l.b16 %v5936
          %v6070 = vunpack.c.l.b16 %v5937
          %v6071 = vpack.c.b16 %v6009, %v6008
          %v6072 = vpack.c.b16 %v6011, %v6010
          %v6073 = vpack.c.b16 %v6013, %v6012
          %v6074 = vpack.c.b16 %v6015, %v6014
          %v6075 = vpack.c.b16 %v6017, %v6016
          %v6076 = vpack.c.b16 %v6019, %v6018
          %v6077 = vpack.c.b16 %v6021, %v6020
          %v6078 = vpack.c.b16 %v6023, %v6022
          %v6079 = vpack.c.b16 %v6025, %v6024
          %v6080 = vpack.c.b16 %v6027, %v6026
          %v6081 = vpack.c.b16 %v6029, %v6028
          %v6082 = vpack.c.b16 %v6031, %v6030
          %v6083 = vpack.c.b16 %v6033, %v6032
          %v6084 = vpack.c.b16 %v6035, %v6034
          %v6085 = vpack.c.b16 %v6037, %v6036
          %v6086 = vpack.c.b16 %v6039, %v6038
          %v6087 = vpack.c.b16 %v6041, %v6040
          %v6088 = vpack.c.b16 %v6043, %v6042
          %v6089 = vpack.c.b16 %v6045, %v6044
          %v6090 = vpack.c.b16 %v6047, %v6046
          %v6091 = vpack.c.b16 %v6049, %v6048
          %v6092 = vpack.c.b16 %v6051, %v6050
          %v6093 = vpack.c.b16 %v6053, %v6052
          %v6094 = vpack.c.b16 %v6055, %v6054
          %v6095 = vpack.c.b16 %v6057, %v6056
          %v6096 = vpack.c.b16 %v6059, %v6058
          %v6097 = vpack.c.b16 %v6061, %v6060
          %v6098 = vpack.c.b16 %v6063, %v6062
          %v6099 = vpack.c.b16 %v6065, %v6064
          %v6100 = vpack.c.b16 %v6067, %v6066
          %v6101 = vpack.c.b16 %v6069, %v6068
          %v6102 = vpack.c.b16 %v6070, %v6070
          %vm6134 = vcmask 949248
          %v6136 = vsel %vm6134, %v5874, 0
          %vm6138 = vcmask 1041408
          %v6140 = vsel %vm6138, %v6102, 0
          %6142 = vmatprep.subr.bf16.mxu0 0
          %6143 = vmatpush1.bf16.msra.mxu0 %v6071
          %6144 = vmatprep.subr.bf16.mxu0 0
          %6145 = vmatpush1.bf16.msra.mxu0 %v6072
          %6146 = vmatprep.subr.bf16.mxu0 0
          %6147 = vmatpush1.bf16.msra.mxu0 %v6073
          %6148 = vmatprep.subr.bf16.mxu0 0
          %6149 = vmatpush1.bf16.msra.mxu0 %v6074
          %6150 = vmatprep.subr.bf16.mxu0 0
          %6151 = vmatpush1.bf16.msra.mxu0 %v6075
          %6152 = vmatprep.subr.bf16.mxu0 0
          %6153 = vmatpush1.bf16.msra.mxu0 %v6076
          %6154 = vmatprep.subr.bf16.mxu0 0
          %6155 = vmatpush1.bf16.msra.mxu0 %v6077
          %6156 = vmatprep.subr.bf16.mxu0 0
          %6157 = vmatpush1.bf16.msra.mxu0 %v6078
          %6158 = vmatprep.subr.bf16.mxu0 0
          %6159 = vmatpush1.bf16.msra.mxu0 %v6079
          %6160 = vmatprep.subr.bf16.mxu0 0
          %6161 = vmatpush1.bf16.msra.mxu0 %v6080
          %6162 = vmatprep.subr.bf16.mxu0 0
          %6163 = vmatpush1.bf16.msra.mxu0 %v6081
          %6164 = vmatprep.subr.bf16.mxu0 0
          %6165 = vmatpush1.bf16.msra.mxu0 %v6082
          %6166 = vmatprep.subr.bf16.mxu0 0
          %6167 = vmatpush1.bf16.msra.mxu0 %v6083
          %6168 = vmatprep.subr.bf16.mxu0 0
          %6169 = vmatpush1.bf16.msra.mxu0 %v6084
          %6170 = vmatprep.subr.bf16.mxu0 0
          %6171 = vmatpush1.bf16.msra.mxu0 %v6085
          %6172 = vmatprep.subr.bf16.mxu0 0
          %6173 = vmatpush1.bf16.msra.mxu0 %v6086
          %6174 = vmatprep.mubr.bf16.mxu0 %v5872
          %6175 = vmatmul.mubr.bf16.gmra.mrb[0].mxu0 %v5871
          %v6176 = vpop.f32.mrb[0].mxu0
          %v6177 = vadd.f32 %v5943, %v6176
          %v6178 = vpop.f32.mrb[0].mxu0
          %v6179 = vpop.f32.mrb[0].mxu0
          %v6180 = vpop.f32.mrb[0].mxu0
          %6181 = vdwg.mxu0
          %6182 = vmatprep.subr.bf16.mxu0 0
          %6183 = vmatpush1.bf16.msra.mxu0 %v6087
          %6184 = vmatprep.subr.bf16.mxu0 0
          %6185 = vmatpush1.bf16.msra.mxu0 %v6088
          %6186 = vmatprep.subr.bf16.mxu0 0
          %6187 = vmatpush1.bf16.msra.mxu0 %v6089
          %6188 = vmatprep.subr.bf16.mxu0 0
          %6189 = vmatpush1.bf16.msra.mxu0 %v6090
          %6190 = vmatprep.subr.bf16.mxu0 0
          %6191 = vmatpush1.bf16.msra.mxu0 %v6091
          %6192 = vmatprep.subr.bf16.mxu0 0
          %6193 = vmatpush1.bf16.msra.mxu0 %v6092
          %6194 = vmatprep.subr.bf16.mxu0 0
          %6195 = vmatpush1.bf16.msra.mxu0 %v6093
          %6196 = vmatprep.subr.bf16.mxu0 0
          %6197 = vmatpush1.bf16.msra.mxu0 %v6094
          %6198 = vmatprep.subr.bf16.mxu0 0
          %6199 = vmatpush1.bf16.msra.mxu0 %v6095
          %6200 = vmatprep.subr.bf16.mxu0 0
          %6201 = vmatpush1.bf16.msra.mxu0 %v6096
          %6202 = vmatprep.subr.bf16.mxu0 0
          %6203 = vmatpush1.bf16.msra.mxu0 %v6097
          %6204 = vmatprep.subr.bf16.mxu0 0
          %6205 = vmatpush1.bf16.msra.mxu0 %v6098
          %6206 = vmatprep.subr.bf16.mxu0 0
          %6207 = vmatpush1.bf16.msra.mxu0 %v6099
          %6208 = vmatprep.subr.bf16.mxu0 0
          %6209 = vmatpush1.bf16.msra.mxu0 %v6100
          %6210 = vmatprep.subr.bf16.mxu0 0
          %6211 = vmatpush1.bf16.msra.mxu0 %v6101
          %6212 = vmatprep.subr.bf16.mxu0 0
          %6213 = vmatpush1.bf16.msra.mxu0 %v6140
          %6214 = vmatprep.mubr.bf16.mxu0 %v6136
          %6215 = vmatmul.mubr.bf16.gmra.mrb[0].mxu0 %v5873
          %v6216 = vpop.f32.mrb[0].mxu0
          %v6217 = vadd.f32 %v6177, %v6216
          %v6218 = vpop.f32.mrb[0].mxu0
          %v6219 = vpop.f32.mrb[0].mxu0
          %v6220 = vpop.f32.mrb[0].mxu0
          %6221 = vdwg.mxu0
          %v6222 = vmax.f32 %v6217, 0.0
          %v6223 = vpack.c.bf16 %v6222, %v6222
          %v6224 = vld [vmem:[%s9] sm:$0xf]
          %v6225 = vld [vmem:[%s9 + $0x4] sm:$0xf]
          %v6226 = vld [vmem:[%s9 + $0x8] sm:$0xf]
          %v6227 = vld [vmem:[%s9 + $0xc] sm:$0xf]
          %v6228 = vld [vmem:[%s9 + $0x10] sm:$0xf]
          %v6229 = vld [vmem:[%s9 + $0x14] sm:$0xf]
          %v6230 = vld [vmem:[%s9 + $0x18] sm:$0xf]
          %v6231 = vld [vmem:[%s9 + $0x1c] sm:$0xf]
          %v6232 = vld [vmem:[%s9 + $0x20] sm:$0xf]
          %v6233 = vld [vmem:[%s9 + $0x24] sm:$0xf]
          %v6234 = vld [vmem:[%s9 + $0x28] sm:$0xf]
          %v6235 = vld [vmem:[%s9 + $0x2c] sm:$0xf]
          %v6236 = vld [vmem:[%s9 + $0x30] sm:$0x3]
          %v6237 = vld [vmem:[%s10] sm:$0x1]
          %v6239 = vlaneseq
          %v6240 = vshrl.u32 %v6239, 7
          %v6241 = vsub.s32 0, %v6240
          %v6242 = vrot.slane %v6237, %v6241
          %v6257 = vunpack.c.l.b16 %v6224
          %v6258 = vunpack.c.l.b16 %v6225
          %v6259 = vunpack.c.l.b16 %v6226
          %v6260 = vunpack.c.l.b16 %v6227
          %v6261 = vunpack.c.l.b16 %v6228
          %v6262 = vunpack.c.l.b16 %v6229
          %v6263 = vunpack.c.l.b16 %v6230
          %v6264 = vunpack.c.l.b16 %v6231
          %v6265 = vunpack.c.l.b16 %v6232
          %v6266 = vunpack.c.l.b16 %v6233
          %v6267 = vunpack.c.l.b16 %v6234
          %v6268 = vunpack.c.l.b16 %v6235
          %v6269 = vunpack.c.l.b16 %v6236
          %v6270 = vpack.c.b16 %v6258, %v6257
          %v6271 = vpack.c.b16 %v6260, %v6259
          %v6272 = vpack.c.b16 %v6262, %v6261
          %v6273 = vpack.c.b16 %v6264, %v6263
          %v6274 = vpack.c.b16 %v6266, %v6265
          %v6275 = vpack.c.b16 %v6268, %v6267
          %v6276 = vpack.c.b16 %v6269, %v6269
          %vm6283 = vcmask 818176
          %v6285 = vsel %vm6283, %v6223, 0
          %v6288 = vsel %vm6138, %v6276, 0
          %6290 = vmatprep.subr.bf16.mxu0 0
          %6291 = vmatpush1.bf16.msra.mxu0 %v6270
          %6292 = vmatprep.subr.bf16.mxu0 0
          %6293 = vmatpush1.bf16.msra.mxu0 %v6271
          %6294 = vmatprep.subr.bf16.mxu0 0
          %6295 = vmatpush1.bf16.msra.mxu0 %v6272
          %6296 = vmatprep.subr.bf16.mxu0 0
          %6297 = vmatpush1.bf16.msra.mxu0 %v6273
          %6298 = vmatprep.subr.bf16.mxu0 0
          %6299 = vmatpush1.bf16.msra.mxu0 %v6274
          %6300 = vmatprep.subr.bf16.mxu0 0
          %6301 = vmatpush1.bf16.msra.mxu0 %v6275
          %6302 = vmatprep.subr.bf16.mxu0 0
          %6303 = vmatpush1.bf16.msra.mxu0 %v6288
          %6304 = vmatprep.subr.bf16.mxu0 0
          %6305 = vmatpush1.bf16.msra.mxu0 0
          %6306 = vmatprep.subr.bf16.mxu0 0
          %6307 = vmatpush1.bf16.msra.mxu0 0
          %6308 = vmatprep.subr.bf16.mxu0 0
          %6309 = vmatpush1.bf16.msra.mxu0 0
          %6310 = vmatprep.subr.bf16.mxu0 0
          %6311 = vmatpush1.bf16.msra.mxu0 0
          %6312 = vmatprep.subr.bf16.mxu0 0
          %6313 = vmatpush1.bf16.msra.mxu0 0
          %6314 = vmatprep.subr.bf16.mxu0 0
          %6315 = vmatpush1.bf16.msra.mxu0 0
          %6316 = vmatprep.subr.bf16.mxu0 0
          %6317 = vmatpush1.bf16.msra.mxu0 0
          %6318 = vmatprep.subr.bf16.mxu0 0
          %6319 = vmatpush1.bf16.msra.mxu0 0
          %6320 = vmatprep.subr.bf16.mxu0 0
          %6321 = vmatpush1.bf16.msra.mxu0 0
          %6322 = vmatprep.mubr.bf16.mxu0 0
          %6323 = vmatmul.mubr.bf16.gmra.mrb[0].mxu0 %v6285
          %v6324 = vpop.f32.mrb[0].mxu0
          %v6325 = vadd.f32 %v6242, %v6324
          %v6326 = vpop.f32.mrb[0].mxu0
          %v6327 = vpop.f32.mrb[0].mxu0
          %v6328 = vpop.f32.mrb[0].mxu0
          %6329 = vdwg.mxu0
          %vm6330 = vcmask 74752
          %6331 = vst.msk [vmem:[#allocation4] sm:$0x3] %vm6330, %v6325
        $region110: #{mnist_cnn_forward.5} parent=97 // pred_fallthru
          _
        // Predicated region
        $region111: #{mnist_cnn_forward.5} parent=97 // pred_check
          %p6332 = pneg %p282
        $region112: #{mnist_cnn_forward.5} parent=97 // pred_check_branch
          %6334 = sbr.rel (%p6332) target = $region114
        $region113: #{mnist_cnn_forward.5} parent=97 // pred_region
          %s6336 = ssub.s32 32, 32
          %6337 = vsyncadd [#allocation5], %s6336
          %s6339 = sshll.u32 [#allocation4], 4
          %s6340 = int_to_ptr.vmem [resolvable:$true] %s6339
          %6342 = dma.vmem_to_hbm [thread:$0]  %s6340, 32, %s11, [#allocation5]
        $region114: #{mnist_cnn_forward.5} parent=97 // pred_fallthru
          _
        // Predicated region
        $region115: #{mnist_cnn_forward.5} parent=97 // pred_check
          %p6343 = pneg %p282
        $region116: #{mnist_cnn_forward.5} parent=97 // pred_check_branch
          %6345 = sbr.rel (%p6343) target = $region118
        $region117: #{mnist_cnn_forward.5} parent=97 // pred_region
          %6346 = dma.done [#allocation5], 32
        $region118: #{mnist_cnn_forward.5} parent=97 // pred_fallthru
          _
      $region98: #{mnist_cnn_forward.5} parent=5 // pred_fallthru
        _
      %p6347 = scmp.le.s32.totalorder 2, %s18
      // Predicated region
      $region119: #{mnist_cnn_forward.5} parent=5 // pred_check
        %p6348 = pneg %p6347
      $region120: #{mnist_cnn_forward.5} parent=5 // pred_check_branch
        %6350 = sbr.rel (%p6348) target = $region122
      $region121: #{mnist_cnn_forward.5} parent=5 // pred_region
        %s6351 = ssub.s32 %s18, 2
      $region122: #{mnist_cnn_forward.5} parent=5 // pred_fallthru
        _
    $region6: #{mnist_cnn_forward.5} parent=1 // loop_footer
      %s22 = sadd.s32 1, %s18
    $region7: #{mnist_cnn_forward.5} parent=1 // loop_footer_branch
      %17 = sbr.rel target = $region3
    $region8: #{mnist_cnn_forward.5} parent=1 // loop_exit
      _
    %6352 = vsyncpa [#allocation5], 1
    %s6353 = scalar_lea.sflag [#allocation5], 1
    %6354 = vsyncpa %s6353, 1

</llo_original>
